<compile_context>
chip_gen: v7x
topology: tpu7x:2x2x1
jax: 0.10.0
libtpu: 0.0.40
codegen_flags: <defaults>
</compile_context>

<pallas_src>
import functools

import jax
import jax.numpy as jnp
from jax.experimental import pallas as pl
from jax.experimental.pallas import tpu as pltpu


LANE = 128
SUBLANE = 8


def _round_up(x, m):
    return (x + m - 1) // m * m


@functools.lru_cache(maxsize=None)
def _vmem_limit_bytes():
    """Generation-aware VMEM budget (stays below physical capacity)."""
    try:
        cap = pltpu.get_tpu_info().vmem_capacity_bytes
    except Exception:
        cap = 64 * 1024 * 1024          # conservative (v7x-sized) fallback
    return int(min(cap - cap // 8, 100 * 1024 * 1024))


@functools.lru_cache(maxsize=None)
def _single_buffer_supported():
    """Runtime probe: is pipeline_mode=pl.Buffered(1) accepted on this jax/TPU?"""
    try:
        with jax.ensure_compile_time_eval():
            w_spec = pl.BlockSpec((8, 128), lambda i: (0, 0),
                                  pipeline_mode=pl.Buffered(1))
            x_spec = pl.BlockSpec((8, 128), lambda i: (i, 0))

            def k(x_ref, w_ref, o_ref):
                o_ref[...] = x_ref[...] + w_ref[...]

            out = pl.pallas_call(
                k,
                out_shape=jax.ShapeDtypeStruct((16, 128), jnp.float32),
                grid=(2,),
                in_specs=[x_spec, w_spec],
                out_specs=x_spec,
            )(jnp.zeros((16, 128), jnp.float32), jnp.zeros((8, 128), jnp.float32))
            jax.block_until_ready(out)
        return True
    except Exception:
        return False


def _const_spec(shape):
    """Full-array block with a constant index map (resident weights).

    Single-buffered when supported: the block index never changes, so a second
    pipeline buffer is pure VMEM waste.
    """
    index_map = lambda *_: (0,) * len(shape)
    if _single_buffer_supported():
        return pl.BlockSpec(shape, index_map, pipeline_mode=pl.Buffered(1))
    return pl.BlockSpec(shape, index_map)


def _pick_block_batch(n, s_pad, target_rows=256, max_rows=512):
    """Samples per grid step: feed the MXU (>=256 rows) but cap VMEM footprint
    (<=512 rows) and keep >=2 grid steps for megacore sharding when possible."""
    best = 1
    for cand in range(1, n + 1):
        if n % cand:
            continue
        if cand * s_pad > max_rows:
            break
        if cand > 1 and n // cand < 2:
            break
        best = cand
        if cand * s_pad >= target_rows:
            break
    return best


def _layernorm(v, w, b, eps=1e-6):
    # f32 statistics (matches nn.LayerNorm(eps=1e-6), biased variance).
    mu = jnp.mean(v, axis=-1, keepdims=True)
    var = jnp.mean((v - mu) ** 2, axis=-1, keepdims=True)
    return (v - mu) * jax.lax.rsqrt(var + eps) * w + b


def _erf(x):
    # Abramowitz & Stegun 7.1.26, |err| < 1.5e-7.  Uses only mul/add/div/exp,
    # which are guaranteed to lower inside Mosaic (no reliance on a native erf).
    a1, a2, a3, a4, a5 = (0.254829592, -0.284496736, 1.421413741,
                          -1.453152027, 1.061405429)
    p = 0.3275911
    sgn = jnp.where(x >= 0.0, 1.0, -1.0)
    ax = jnp.abs(x)
    t = 1.0 / (1.0 + p * ax)
    poly = ((((a5 * t + a4) * t + a3) * t + a2) * t + a1) * t
    return sgn * (1.0 - poly * jnp.exp(-ax * ax))


def _gelu_exact(x):
    # Exact (erf-based) GELU, matching torch.nn.GELU default.
    return x * 0.5 * (1.0 + _erf(x * 0.7071067811865476))


# ----------------------------- kernel 1: patch embed ------------------------
def _patch_embed_kernel(p_ref, w_ref, b_ref, o_ref):
    # p_ref: (tm, K_pad) bf16, w_ref: (K_pad, D) bf16, b_ref: (1, D) f32
    o_ref[...] = (
        jnp.dot(p_ref[...], w_ref[...], preferred_element_type=jnp.float32)
        + b_ref[...]
    ).astype(o_ref.dtype)


def patch_embed(x, conv_w, conv_b, patch_size):
    # x: (N, C, H, W) NCHW.  conv_w: (D, C, p, p), conv_b: (D,)
    N, C, H, W = x.shape
    p = patch_size
    D = conv_w.shape[0]
    n_patches = (H // p) * (W // p)
    # non-overlapping patches, channel-major flatten (C, ph, pw) == Conv2d layout
    patches = x.reshape(N, C, H // p, p, W // p, p)
    patches = patches.transpose(0, 2, 4, 1, 3, 5)            # (N, H/p, W/p, C, p, p)
    patches = patches.reshape(N * n_patches, C * p * p)       # (M, K)
    w_flat = conv_w.reshape(D, C * p * p).T                   # (K, D)

    M, K = patches.shape
    K_pad = _round_up(K, LANE)
    tm = min(512, _round_up(M, SUBLANE))                      # big mem-bound tile
    M_pad = _round_up(M, tm)
    patches = jnp.pad(patches, ((0, M_pad - M), (0, K_pad - K))).astype(jnp.bfloat16)
    w_flat = jnp.pad(w_flat, ((0, K_pad - K), (0, 0))).astype(jnp.bfloat16)
    b_2d = conv_b.reshape(1, D).astype(jnp.float32)

    out = pl.pallas_call(
        _patch_embed_kernel,
        out_shape=jax.ShapeDtypeStruct((M_pad, D), jnp.bfloat16),   # bf16 writeback
        grid=(M_pad // tm,),
        in_specs=[
            pl.BlockSpec((tm, K_pad), lambda i: (i, 0)),
            _const_spec((K_pad, D)),
            _const_spec((1, D)),
        ],
        out_specs=pl.BlockSpec((tm, D), lambda i: (i, 0)),
        compiler_params=pltpu.CompilerParams(
            dimension_semantics=("parallel",),
            vmem_limit_bytes=_vmem_limit_bytes()),
    )(patches, w_flat, b_2d)
    return out[:M].reshape(N, n_patches, D)


# ------------------- kernel 2: fused transformer block ----------------------
def _block_kernel(
    x_ref,
    ln1w_ref, ln1b_ref, wqkv_ref, bqkv_ref, wproj_ref, bproj_ref,
    ln2w_ref, ln2b_ref, wfc1_ref, bfc1_ref, wfc2_ref, bfc2_ref,
    o_ref,
    q_scr, k_scr, v_scr, ctx_scr,
    *, n_heads, head_dim, s_actual,
):
    nb, S, D = x_ref.shape
    Hp = q_scr.shape[-1]              # n_heads * P, P = lane-padded head dim
    P = Hp // n_heads                 # multiple of 128
    scale = float(head_dim) ** -0.5   # scale uses the REAL head dim

    # ---------------- attention half ----------------
    x = x_ref[...]                                   # (nb, S, D) f32 residual
    x2 = x.reshape(nb * S, D)
    xn = _layernorm(x2, ln1w_ref[...], ln1b_ref[...]).astype(jnp.bfloat16)

    # QKV projection; output columns are per-head, each head zero-padded to
    # P=128 lanes (padding cols are exactly zero -> numerics unchanged).
    qkv = (
        jnp.dot(xn, wqkv_ref[...], preferred_element_type=jnp.float32)
        + bqkv_ref[...]
    ).astype(jnp.bfloat16)                            # cast once, then slice
    q_scr[...] = qkv[:, 0 * Hp:1 * Hp].reshape(nb, S, Hp)
    k_scr[...] = qkv[:, 1 * Hp:2 * Hp].reshape(nb, S, Hp)
    v_scr[...] = qkv[:, 2 * Hp:3 * Hp].reshape(nb, S, Hp)

    # additive key-padding mask: key positions >= s_actual are padding
    key_idx = jax.lax.broadcasted_iota(jnp.int32, (1, 1, S), 2)
    key_bias = jnp.where(key_idx < s_actual, 0.0, -1e30).astype(jnp.float32)

    def head_body(h, carry):
        off = pl.multiple_of(h * P, LANE)             # lane-aligned slice start
        qh = q_scr[:, :, pl.ds(off, P)]               # (nb, S, P) bf16
        kh = k_scr[:, :, pl.ds(off, P)]
        vh = v_scr[:, :, pl.ds(off, P)]
        s = jnp.einsum('bqd,bkd->bqk', qh, kh,
                       preferred_element_type=jnp.float32) * scale + key_bias
        s = s - jnp.max(s, axis=-1, keepdims=True)
        e = jnp.exp(s)
        inv = pl.reciprocal(jnp.sum(e, axis=-1, keepdims=True), approx=True)
        ctx_scr[:, :, pl.ds(off, P)] = jnp.einsum(
            'bqk,bkd->bqd', (e * inv).astype(jnp.bfloat16), vh,
            preferred_element_type=jnp.float32).astype(jnp.bfloat16)
        return carry

    jax.lax.fori_loop(0, n_heads, head_body, 0)

    ctx = ctx_scr[...].reshape(nb * S, Hp)            # bf16, lane-dense
    attn_out = (
        jnp.dot(ctx, wproj_ref[...], preferred_element_type=jnp.float32)
        + bproj_ref[...]
    ).reshape(nb, S, D)
    x = x + attn_out                                  # residual 1 (f32)

    # ---------------- MLP half ----------------
    x2 = x.reshape(nb * S, D)
    xn2 = _layernorm(x2, ln2w_ref[...], ln2b_ref[...]).astype(jnp.bfloat16)
    h1 = (
        jnp.dot(xn2, wfc1_ref[...], preferred_element_type=jnp.float32)
        + bfc1_ref[...]
    )
    h1 = _gelu_exact(h1).astype(jnp.bfloat16)         # exact (erf) GELU in f32
    mlp_out = (
        jnp.dot(h1, wfc2_ref[...], preferred_element_type=jnp.float32)
        + bfc2_ref[...]
    ).reshape(nb, S, D)
    o_ref[...] = x + mlp_out                          # residual 2 (f32)


def _prep_attn_weights(bp, n_heads, hd, P):
    """Re-lay-out QKV / proj weights so each head owns a 128-lane-padded slot."""
    D = bp["w_proj"].shape[1]

    def pad_cols(w):                                   # (D, n_heads*hd) -> (D, n_heads*P)
        w = w.reshape(D, n_heads, hd)
        w = jnp.pad(w, ((0, 0), (0, 0), (0, P - hd)))
        return w.reshape(D, n_heads * P)

    def pad_cols_b(b):
        b = b.reshape(1, n_heads, hd)
        b = jnp.pad(b, ((0, 0), (0, 0), (0, P - hd)))
        return b.reshape(1, n_heads * P)

    wq, wk, wv = (bp["w_qkv"][:, i * D:(i + 1) * D] for i in range(3))
    bq, bk, bv = (bp["b_qkv"][:, i * D:(i + 1) * D] for i in range(3))
    w_qkv = jnp.concatenate([pad_cols(wq), pad_cols(wk), pad_cols(wv)], axis=1)
    b_qkv = jnp.concatenate([pad_cols_b(bq), pad_cols_b(bk), pad_cols_b(bv)], axis=1)
    w_proj = bp["w_proj"].reshape(n_heads, hd, D)
    w_proj = jnp.pad(w_proj, ((0, 0), (0, P - hd), (0, 0))).reshape(n_heads * P, D)
    return (w_qkv.astype(jnp.bfloat16), b_qkv.astype(jnp.float32),
            w_proj.astype(jnp.bfloat16))


def vit_block(x, bp, n_heads, s_actual, nb):
    # x: (N, S_pad, D) f32 residual stream
    N, S_pad, D = x.shape
    assert D % n_heads == 0
    hd = D // n_heads
    P = _round_up(hd, LANE)
    Hp = n_heads * P

    w_qkv, b_qkv, w_proj = _prep_attn_weights(bp, n_heads, hd, P)
    args = [
        bp["ln1_w"], bp["ln1_b"], w_qkv, b_qkv, w_proj, bp["b_proj"],
        bp["ln2_w"], bp["ln2_b"],
        bp["w_fc1"].astype(jnp.bfloat16), bp["b_fc1"],
        bp["w_fc2"].astype(jnp.bfloat16), bp["b_fc2"],
    ]

    x_spec = pl.BlockSpec((nb, S_pad, D), lambda b: (b, 0, 0))
    return pl.pallas_call(
        functools.partial(_block_kernel, n_heads=n_heads, head_dim=hd,
                          s_actual=s_actual),
        out_shape=jax.ShapeDtypeStruct((N, S_pad, D), jnp.float32),
        grid=(N // nb,),
        in_specs=[x_spec] + [_const_spec(a.shape) for a in args],
        out_specs=x_spec,
        scratch_shapes=[
            pltpu.VMEM((nb, S_pad, Hp), jnp.bfloat16),   # q (head-padded)
            pltpu.VMEM((nb, S_pad, Hp), jnp.bfloat16),   # k
            pltpu.VMEM((nb, S_pad, Hp), jnp.bfloat16),   # v
            pltpu.VMEM((nb, S_pad, Hp), jnp.bfloat16),   # ctx
        ],
        input_output_aliases={0: 0},                     # residual stream in-place
        compiler_params=pltpu.CompilerParams(
            dimension_semantics=("parallel",),
            vmem_limit_bytes=_vmem_limit_bytes()),
    )(x, *args)


# ----------------------------- kernel 3: final norm + head ------------------
def _head_kernel(
    cls_ref, lnw_ref, lnb_ref,
    w1_ref, b1_ref, w2_ref, b2_ref, w3_ref, b3_ref,
    o_ref,
):
    x = _layernorm(cls_ref[...], lnw_ref[...], lnb_ref[...]).astype(jnp.bfloat16)
    h = jnp.dot(x, w1_ref[...], preferred_element_type=jnp.float32) + b1_ref[...]
    h = jnp.maximum(h, 0.0).astype(jnp.bfloat16)
    h = jnp.dot(h, w2_ref[...], preferred_element_type=jnp.float32) + b2_ref[...]
    h = jnp.maximum(h, 0.0).astype(jnp.bfloat16)
    h = jnp.dot(h, w3_ref[...], preferred_element_type=jnp.float32) + b3_ref[...]
    o_ref[...] = 1.0 / (1.0 + jnp.exp(-h))             # sigmoid


def vit_head(cls_tok, hp):
    # Hidden dims D//5, D//10, 1 are zero-padded to 128 lanes (lane-dense
    # stores, no nearly-empty MXU passes); padding rows/cols are exact zeros.
    N, D = cls_tok.shape
    d1, d2 = hp["w1"].shape[1], hp["w2"].shape[1]
    P1, P2, P3 = _round_up(d1, LANE), _round_up(d2, LANE), LANE
    N_pad = _round_up(N, SUBLANE)

    cls_p = jnp.pad(cls_tok, ((0, N_pad - N), (0, 0)))
    w1 = jnp.pad(hp["w1"], ((0, 0), (0, P1 - d1))).astype(jnp.bfloat16)
    b1 = jnp.pad(hp["b1"], ((0, 0), (0, P1 - d1)))
    w2 = jnp.pad(hp["w2"], ((0, P1 - d1), (0, P2 - d2))).astype(jnp.bfloat16)
    b2 = jnp.pad(hp["b2"], ((0, 0), (0, P2 - d2)))
    w3 = jnp.pad(hp["w3"], ((0, P2 - d2), (0, P3 - 1))).astype(jnp.bfloat16)
    b3 = jnp.pad(hp["b3"], ((0, 0), (0, P3 - 1)))

    out = pl.pallas_call(
        _head_kernel,
        out_shape=jax.ShapeDtypeStruct((N_pad, P3), jnp.float32),
        compiler_params=pltpu.CompilerParams(
            vmem_limit_bytes=_vmem_limit_bytes()),
    )(cls_p, hp["norm_w"], hp["norm_b"], w1, b1, w2, b2, w3, b3)
    return out[:N, :1]


# ----------------------------- full forward ---------------------------------
def vision_transformer_forward(x, params, *, patch_size, n_heads):
    N = x.shape[0]
    tok = patch_embed(x, params["conv_w"], params["conv_b"], patch_size)  # (N,P,D) bf16
    tok = tok.astype(jnp.float32)
    D = tok.shape[-1]
    cls = jnp.broadcast_to(params["cls_token"], (N, 1, D))
    tok = jnp.concatenate([cls, tok], axis=1)                             # (N, S, D)
    tok = tok + params["pos_embed"]
    # (pos_drop: identity in eval mode)

    S = tok.shape[1]
    S_pad = _round_up(S, LANE)           # lane-aligned token count (masked in softmax)
    tok = jnp.pad(tok, ((0, 0), (0, S_pad - S), (0, 0)))
    nb = _pick_block_batch(N, S_pad)

    for bp in params["blocks"]:
        tok = vit_block(tok, bp, n_heads, s_actual=S, nb=nb)

    cls_final = tok[:, 0]                                                 # (N, D)
    return vit_head(cls_final, params["head"])                            # (N, 1)


# ----------------------------- pure-JAX reference ---------------------------
def _reference_forward(x, params, *, patch_size, n_heads):
    N, C, H, W = x.shape
    p = patch_size
    D = params["conv_w"].shape[0]
    patches = x.reshape(N, C, H // p, p, W // p, p).transpose(0, 2, 4, 1, 3, 5)
    patches = patches.reshape(N, -1, C * p * p)
    tok = patches @ params["conv_w"].reshape(D, -1).T + params["conv_b"]
    cls = jnp.broadcast_to(params["cls_token"], (N, 1, D))
    tok = jnp.concatenate([cls, tok], axis=1) + params["pos_embed"]

    def ln(v, w, b):
        mu = v.mean(-1, keepdims=True)
        var = ((v - mu) ** 2).mean(-1, keepdims=True)
        return (v - mu) / jnp.sqrt(var + 1e-6) * w + b

    hd = D // n_heads
    for bp in params["blocks"]:
        xn = ln(tok, bp["ln1_w"], bp["ln1_b"])
        qkv = xn @ bp["w_qkv"] + bp["b_qkv"]
        q, k, v = jnp.split(qkv, 3, axis=-1)
        heads = lambda t: t.reshape(N, -1, n_heads, hd).transpose(0, 2, 1, 3)
        q, k, v = heads(q), heads(k), heads(v)
        att = jax.nn.softmax(q @ k.transpose(0, 1, 3, 2) * hd ** -0.5, axis=-1)
        ctx = (att @ v).transpose(0, 2, 1, 3).reshape(N, -1, D)
        tok = tok + ctx @ bp["w_proj"] + bp["b_proj"]
        xn2 = ln(tok, bp["ln2_w"], bp["ln2_b"])
        h1 = jax.nn.gelu(xn2 @ bp["w_fc1"] + bp["b_fc1"], approximate=False)
        tok = tok + h1 @ bp["w_fc2"] + bp["b_fc2"]

    hp = params["head"]
    cls_f = ln(tok, hp["norm_w"], hp["norm_b"])[:, 0]
    h = jnp.maximum(cls_f @ hp["w1"] + hp["b1"], 0.0)
    h = jnp.maximum(h @ hp["w2"] + hp["b2"], 0.0)
    h = h @ hp["w3"] + hp["b3"]
    return jax.nn.sigmoid(h)


# ----------------------------- parameter init -------------------------------
def init_params(key, *, img_size, patch_size, in_chans, embed_dim, depth,
                n_heads, mlp_ratio):
    D = embed_dim
    hidden = int(D * mlp_ratio)
    n_patches = (img_size // patch_size) ** 2
    keys = iter(jax.random.split(key, 128))

    def rnd(shape, scale=0.02):
        return (scale * jax.random.normal(next(keys), shape)).astype(jnp.float32)

    params = {
        "conv_w": rnd((D, in_chans, patch_size, patch_size)),
        "conv_b": rnd((D,), 0.01),
        "cls_token": rnd((1, 1, D)),
        "pos_embed": rnd((1, 1 + n_patches, D)),
        "blocks": [],
        "head": {
            "norm_w": jnp.ones((1, D), jnp.float32),
            "norm_b": jnp.zeros((1, D), jnp.float32),
            "w1": rnd((D, D // 5)), "b1": rnd((1, D // 5), 0.01),
            "w2": rnd((D // 5, D // 10)), "b2": rnd((1, D // 10), 0.01),
            "w3": rnd((D // 10, 1)), "b3": rnd((1, 1), 0.01),
        },
    }
    for _ in range(depth):
        params["blocks"].append({
            "ln1_w": jnp.ones((1, D), jnp.float32),
            "ln1_b": jnp.zeros((1, D), jnp.float32),
            "w_qkv": rnd((D, 3 * D)), "b_qkv": rnd((1, 3 * D), 0.01),
            "w_proj": rnd((D, D)), "b_proj": rnd((1, D), 0.01),
            "ln2_w": jnp.ones((1, D), jnp.float32),
            "ln2_b": jnp.zeros((1, D), jnp.float32),
            "w_fc1": rnd((D, hidden)), "b_fc1": rnd((1, hidden), 0.01),
            "w_fc2": rnd((hidden, D)), "b_fc2": rnd((1, D), 0.01),
        })
    return params


if __name__ == "__main__":
    # small, shape-consistent configuration (D multiple of 128, hd=64 -> padded)
    IMG, PATCH, CIN = 16, 4, 3
    EMBED, DEPTH, HEADS, MLP_RATIO = 128, 2, 2, 4.0
    N = 4

    # prime the runtime probes outside of jit tracing
    _ = _single_buffer_supported()
    _ = _vmem_limit_bytes()

    key = jax.random.PRNGKey(0)
    k_param, k_x = jax.random.split(key)
    params = init_params(
        k_param, img_size=IMG, patch_size=PATCH, in_chans=CIN,
        embed_dim=EMBED, depth=DEPTH, n_heads=HEADS, mlp_ratio=MLP_RATIO,
    )
    x = jax.random.normal(k_x, (N, CIN, IMG, IMG), dtype=jnp.float32)  # NCHW

    fwd = jax.jit(functools.partial(
        vision_transformer_forward, patch_size=PATCH, n_heads=HEADS))
    out = fwd(x, params)
    jax.block_until_ready(out)

    assert out.shape == (N, 1), out.shape
    assert bool(jnp.all(jnp.isfinite(out)))

    # pure-JAX f32 reference; bf16 MXU + approx reciprocal -> loose tolerance
    ref = _reference_forward(x, params, patch_size=PATCH, n_heads=HEADS)
    max_err = float(jnp.max(jnp.abs(out - ref)))
    assert max_err < 2e-2, f"max |pallas - reference| = {max_err}"
    print("KERNEL_OK")
</pallas_src>

<mosaic_0001>
module attributes {stable_mosaic.version = 11 : i64} {
  func.func @k(%arg0: i32, %arg1: memref<8x128xf32, #tpu.memory_space<vmem>>, %arg2: memref<8x128xf32, #tpu.memory_space<vmem>>, %arg3: memref<8x128xf32, #tpu.memory_space<vmem>>) attributes {dimension_semantics = [#tpu.dimension_semantics<arbitrary>], iteration_bounds = array<i64: 2>, scalar_prefetch = 0 : i64, scratch_operands = 0 : i64, tpu.core_type = #tpu.core_type<tc>, window_params = [{transform_indices = @transform_0, window_bounds = array<i64: 8, 128>}, {pipeline_mode = #tpu.pipeline_mode<synchronous>, transform_indices = @transform_1, window_bounds = array<i64: 8, 128>}, {transform_indices = @transform_2, window_bounds = array<i64: 8, 128>}]} {
    %c0 = arith.constant 0 : index
    %c0_0 = arith.constant 0 : index
    %0 = vector.load %arg1[%c0, %c0_0] : memref<8x128xf32, #tpu.memory_space<vmem>>, vector<8x128xf32>
    %c0_1 = arith.constant 0 : index
    %c0_2 = arith.constant 0 : index
    %1 = vector.load %arg2[%c0_1, %c0_2] : memref<8x128xf32, #tpu.memory_space<vmem>>, vector<8x128xf32>
    %2 = arith.addf %0, %1 : vector<8x128xf32>
    %c0_3 = arith.constant 0 : index
    %c0_4 = arith.constant 0 : index
    %3 = vector.load %arg3[%c0_3, %c0_4] : memref<8x128xf32, #tpu.memory_space<vmem>>, vector<8x128xf32>
    tpu.vector_store %arg3[%c0_3, %c0_4], %2 {strides = array<i32>} : memref<8x128xf32, #tpu.memory_space<vmem>>, vector<8x128xf32>,
    return
  }
  func.func @transform_0(%arg0: i32) -> (i32, i32) {
    %c0_i32 = arith.constant 0 : i32
    %c0_i32_0 = arith.constant 0 : i32
    return %arg0, %c0_i32 : i32, i32
  }
  func.func @transform_1(%arg0: i32) -> (i32, i32) {
    %c0_i32 = arith.constant 0 : i32
    %c0_i32_0 = arith.constant 0 : i32
    %c0_i32_1 = arith.constant 0 : i32
    return %c0_i32, %c0_i32_0 : i32, i32
  }
  func.func @transform_2(%arg0: i32) -> (i32, i32) {
    %c0_i32 = arith.constant 0 : i32
    %c0_i32_0 = arith.constant 0 : i32
    return %arg0, %c0_i32 : i32, i32
  }
}

module attributes {stable_mosaic.version = 11 : i64} {
  func.func @_patch_embed_kernel(%arg0: i32, %arg1: memref<64x128xbf16, #tpu.memory_space<vmem>>, %arg2: memref<128x128xbf16, #tpu.memory_space<vmem>>, %arg3: memref<1x128xf32, #tpu.memory_space<vmem>>, %arg4: memref<64x128xbf16, #tpu.memory_space<vmem>>) attributes {dimension_semantics = [#tpu.dimension_semantics<parallel>], iteration_bounds = array<i64: 1>, scalar_prefetch = 0 : i64, scratch_operands = 0 : i64, tpu.core_type = #tpu.core_type<tc>, window_params = [{transform_indices = @transform_0, window_bounds = array<i64: 64, 128>}, {pipeline_mode = #tpu.pipeline_mode<synchronous>, transform_indices = @transform_1, window_bounds = array<i64: 128, 128>}, {pipeline_mode = #tpu.pipeline_mode<synchronous>, transform_indices = @transform_2, window_bounds = array<i64: 1, 128>}, {transform_indices = @transform_3, window_bounds = array<i64: 64, 128>}]} {
    %c0 = arith.constant 0 : index
    %c0_0 = arith.constant 0 : index
    %0 = vector.load %arg1[%c0, %c0_0] : memref<64x128xbf16, #tpu.memory_space<vmem>>, vector<64x128xbf16>
    %c0_1 = arith.constant 0 : index
    %c0_2 = arith.constant 0 : index
    %1 = vector.load %arg2[%c0_1, %c0_2] : memref<128x128xbf16, #tpu.memory_space<vmem>>, vector<128x128xbf16>
    %cst = arith.constant dense<0.000000e+00> : vector<64x128xf32>
    %2 = tpu.matmul %0, %1, %cst {dimension_numbers = #tpu.dot_dimension_numbers<[1], [0], [0], [1], [0, 0, 1, 1], [], []>} : vector<64x128xbf16>, vector<128x128xbf16>, vector<64x128xf32> -> vector<64x128xf32>
    %c0_3 = arith.constant 0 : index
    %c0_4 = arith.constant 0 : index
    %3 = vector.load %arg3[%c0_3, %c0_4] : memref<1x128xf32, #tpu.memory_space<vmem>>, vector<1x128xf32>
    %4 = vector.broadcast %3 : vector<1x128xf32> to vector<64x128xf32>
    %5 = arith.addf %2, %4 : vector<64x128xf32>
    %6 = arith.truncf %5 : vector<64x128xf32> to vector<64x128xbf16>
    %c0_5 = arith.constant 0 : index
    %c0_6 = arith.constant 0 : index
    %7 = vector.load %arg4[%c0_5, %c0_6] : memref<64x128xbf16, #tpu.memory_space<vmem>>, vector<64x128xbf16>
    tpu.vector_store %arg4[%c0_5, %c0_6], %6 {strides = array<i32>} : memref<64x128xbf16, #tpu.memory_space<vmem>>, vector<64x128xbf16>,
    return
  }
  func.func @transform_0(%arg0: i32) -> (i32, i32) {
    %c0_i32 = arith.constant 0 : i32
    %c0_i32_0 = arith.constant 0 : i32
    return %arg0, %c0_i32 : i32, i32
  }
  func.func @transform_1(%arg0: i32) -> (i32, i32) {
    %c0_i32 = arith.constant 0 : i32
    %c0_i32_0 = arith.constant 0 : i32
    %c0_i32_1 = arith.constant 0 : i32
    return %c0_i32, %c0_i32_0 : i32, i32
  }
  func.func @transform_2(%arg0: i32) -> (i32, i32) {
    %c0_i32 = arith.constant 0 : i32
    %c0_i32_0 = arith.constant 0 : i32
    %c0_i32_1 = arith.constant 0 : i32
    return %c0_i32, %c0_i32_0 : i32, i32
  }
  func.func @transform_3(%arg0: i32) -> (i32, i32) {
    %c0_i32 = arith.constant 0 : i32
    %c0_i32_0 = arith.constant 0 : i32
    return %arg0, %c0_i32 : i32, i32
  }
}

module attributes {stable_mosaic.version = 11 : i64} {
  func.func @_block_kernel(%arg0: i32, %arg1: memref<2x128x128xf32, #tpu.memory_space<vmem>>, %arg2: memref<1x128xf32, #tpu.memory_space<vmem>>, %arg3: memref<1x128xf32, #tpu.memory_space<vmem>>, %arg4: memref<128x768xbf16, #tpu.memory_space<vmem>>, %arg5: memref<1x768xf32, #tpu.memory_space<vmem>>, %arg6: memref<256x128xbf16, #tpu.memory_space<vmem>>, %arg7: memref<1x128xf32, #tpu.memory_space<vmem>>, %arg8: memref<1x128xf32, #tpu.memory_space<vmem>>, %arg9: memref<1x128xf32, #tpu.memory_space<vmem>>, %arg10: memref<128x512xbf16, #tpu.memory_space<vmem>>, %arg11: memref<1x512xf32, #tpu.memory_space<vmem>>, %arg12: memref<512x128xbf16, #tpu.memory_space<vmem>>, %arg13: memref<1x128xf32, #tpu.memory_space<vmem>>, %arg14: memref<2x128x128xf32, #tpu.memory_space<vmem>>, %arg15: memref<2x128x256xbf16, #tpu.memory_space<vmem>>, %arg16: memref<2x128x256xbf16, #tpu.memory_space<vmem>>, %arg17: memref<2x128x256xbf16, #tpu.memory_space<vmem>>, %arg18: memref<2x128x256xbf16, #tpu.memory_space<vmem>>) attributes {dimension_semantics = [#tpu.dimension_semantics<parallel>], iteration_bounds = array<i64: 2>, scalar_prefetch = 0 : i64, scratch_operands = 4 : i64, tpu.core_type = #tpu.core_type<tc>, window_params = [{transform_indices = @transform_0, window_bounds = array<i64: 2, 128, 128>}, {pipeline_mode = #tpu.pipeline_mode<synchronous>, transform_indices = @transform_1, window_bounds = array<i64: 1, 128>}, {pipeline_mode = #tpu.pipeline_mode<synchronous>, transform_indices = @transform_2, window_bounds = array<i64: 1, 128>}, {pipeline_mode = #tpu.pipeline_mode<synchronous>, transform_indices = @transform_3, window_bounds = array<i64: 128, 768>}, {pipeline_mode = #tpu.pipeline_mode<synchronous>, transform_indices = @transform_4, window_bounds = array<i64: 1, 768>}, {pipeline_mode = #tpu.pipeline_mode<synchronous>, transform_indices = @transform_5, window_bounds = array<i64: 256, 128>}, {pipeline_mode = #tpu.pipeline_mode<synchronous>, transform_indices = @transform_6, window_bounds = array<i64: 1, 128>}, {pipeline_mode = #tpu.pipeline_mode<synchronous>, transform_indices = @transform_7, window_bounds = array<i64: 1, 128>}, {pipeline_mode = #tpu.pipeline_mode<synchronous>, transform_indices = @transform_8, window_bounds = array<i64: 1, 128>}, {pipeline_mode = #tpu.pipeline_mode<synchronous>, transform_indices = @transform_9, window_bounds = array<i64: 128, 512>}, {pipeline_mode = #tpu.pipeline_mode<synchronous>, transform_indices = @transform_10, window_bounds = array<i64: 1, 512>}, {pipeline_mode = #tpu.pipeline_mode<synchronous>, transform_indices = @transform_11, window_bounds = array<i64: 512, 128>}, {pipeline_mode = #tpu.pipeline_mode<synchronous>, transform_indices = @transform_12, window_bounds = array<i64: 1, 128>}, {transform_indices = @transform_13, window_bounds = array<i64: 2, 128, 128>}]} {
    %c0 = arith.constant 0 : index
    %c0_0 = arith.constant 0 : index
    %c0_1 = arith.constant 0 : index
    %0 = vector.load %arg1[%c0, %c0_0, %c0_1] : memref<2x128x128xf32, #tpu.memory_space<vmem>>, vector<2x128x128xf32>
    %1 = vector.shape_cast %0 : vector<2x128x128xf32> to vector<256x128xf32>
    %c0_2 = arith.constant 0 : index
    %c0_3 = arith.constant 0 : index
    %2 = vector.load %arg2[%c0_2, %c0_3] : memref<1x128xf32, #tpu.memory_space<vmem>>, vector<1x128xf32>
    %c0_4 = arith.constant 0 : index
    %c0_5 = arith.constant 0 : index
    %3 = vector.load %arg3[%c0_4, %c0_5] : memref<1x128xf32, #tpu.memory_space<vmem>>, vector<1x128xf32>
    %cst = arith.constant dense<0.000000e+00> : vector<256xf32>
    %4 = vector.multi_reduction <add>, %1, %cst [1] : vector<256x128xf32> to vector<256xf32>
    %5 = vector.shape_cast %4 : vector<256xf32> to vector<256x1xf32>
    %cst_6 = arith.constant 1.280000e+02 : f32
    %6 = vector.broadcast %cst_6 : f32 to vector<256x1xf32>
    %7 = arith.divf %5, %6 : vector<256x1xf32>
    %8 = vector.broadcast %7 : vector<256x1xf32> to vector<256x128xf32>
    %9 = arith.subf %1, %8 : vector<256x128xf32>
    %10 = arith.mulf %9, %9 : vector<256x128xf32>
    %cst_7 = arith.constant dense<0.000000e+00> : vector<256xf32>
    %11 = vector.multi_reduction <add>, %10, %cst_7 [1] : vector<256x128xf32> to vector<256xf32>
    %12 = vector.shape_cast %11 : vector<256xf32> to vector<256x1xf32>
    %cst_8 = arith.constant 1.280000e+02 : f32
    %13 = vector.broadcast %cst_8 : f32 to vector<256x1xf32>
    %14 = arith.divf %12, %13 : vector<256x1xf32>
    %15 = vector.broadcast %7 : vector<256x1xf32> to vector<256x128xf32>
    %16 = arith.subf %1, %15 : vector<256x128xf32>
    %cst_9 = arith.constant 9.99999997E-7 : f32
    %17 = vector.broadcast %cst_9 : f32 to vector<256x1xf32>
    %18 = arith.addf %14, %17 : vector<256x1xf32>
    %19 = math.rsqrt %18 : vector<256x1xf32>
    %20 = vector.broadcast %19 : vector<256x1xf32> to vector<256x128xf32>
    %21 = arith.mulf %16, %20 : vector<256x128xf32>
    %22 = vector.broadcast %2 : vector<1x128xf32> to vector<256x128xf32>
    %23 = arith.mulf %21, %22 : vector<256x128xf32>
    %24 = vector.broadcast %3 : vector<1x128xf32> to vector<256x128xf32>
    %25 = arith.addf %23, %24 : vector<256x128xf32>
    %26 = arith.truncf %25 : vector<256x128xf32> to vector<256x128xbf16>
    %c0_10 = arith.constant 0 : index
    %c0_11 = arith.constant 0 : index
    %27 = vector.load %arg4[%c0_10, %c0_11] : memref<128x768xbf16, #tpu.memory_space<vmem>>, vector<128x768xbf16>
    %cst_12 = arith.constant dense<0.000000e+00> : vector<256x768xf32>
    %28 = tpu.matmul %26, %27, %cst_12 {dimension_numbers = #tpu.dot_dimension_numbers<[1], [0], [0], [1], [0, 0, 1, 1], [], []>} : vector<256x128xbf16>, vector<128x768xbf16>, vector<256x768xf32> -> vector<256x768xf32>
    %c0_13 = arith.constant 0 : index
    %c0_14 = arith.constant 0 : index
    %29 = vector.load %arg5[%c0_13, %c0_14] : memref<1x768xf32, #tpu.memory_space<vmem>>, vector<1x768xf32>
    %30 = vector.broadcast %29 : vector<1x768xf32> to vector<256x768xf32>
    %31 = arith.addf %28, %30 : vector<256x768xf32>
    %32 = arith.truncf %31 : vector<256x768xf32> to vector<256x768xbf16>
    %33 = vector.extract_strided_slice %32 {offsets = [0, 0], sizes = [256, 256], strides = [1, 1]} : vector<256x768xbf16> to vector<256x256xbf16>
    %34 = vector.shape_cast %33 : vector<256x256xbf16> to vector<2x128x256xbf16>
    %c0_15 = arith.constant 0 : index
    %c0_16 = arith.constant 0 : index
    %c0_17 = arith.constant 0 : index
    %35 = vector.load %arg15[%c0_15, %c0_16, %c0_17] : memref<2x128x256xbf16, #tpu.memory_space<vmem>>, vector<2x128x256xbf16>
    tpu.vector_store %arg15[%c0_15, %c0_16, %c0_17], %34 {strides = array<i32>} : memref<2x128x256xbf16, #tpu.memory_space<vmem>>, vector<2x128x256xbf16>,
    %36 = vector.extract_strided_slice %32 {offsets = [0, 256], sizes = [256, 256], strides = [1, 1]} : vector<256x768xbf16> to vector<256x256xbf16>
    %37 = vector.shape_cast %36 : vector<256x256xbf16> to vector<2x128x256xbf16>
    %c0_18 = arith.constant 0 : index
    %c0_19 = arith.constant 0 : index
    %c0_20 = arith.constant 0 : index
    %38 = vector.load %arg16[%c0_18, %c0_19, %c0_20] : memref<2x128x256xbf16, #tpu.memory_space<vmem>>, vector<2x128x256xbf16>
    tpu.vector_store %arg16[%c0_18, %c0_19, %c0_20], %37 {strides = array<i32>} : memref<2x128x256xbf16, #tpu.memory_space<vmem>>, vector<2x128x256xbf16>,
    %39 = vector.extract_strided_slice %32 {offsets = [0, 512], sizes = [256, 256], strides = [1, 1]} : vector<256x768xbf16> to vector<256x256xbf16>
    %40 = vector.shape_cast %39 : vector<256x256xbf16> to vector<2x128x256xbf16>
    %c0_21 = arith.constant 0 : index
    %c0_22 = arith.constant 0 : index
    %c0_23 = arith.constant 0 : index
    %41 = vector.load %arg17[%c0_21, %c0_22, %c0_23] : memref<2x128x256xbf16, #tpu.memory_space<vmem>>, vector<2x128x256xbf16>
    tpu.vector_store %arg17[%c0_21, %c0_22, %c0_23], %40 {strides = array<i32>} : memref<2x128x256xbf16, #tpu.memory_space<vmem>>, vector<2x128x256xbf16>,
    %42 = tpu.iota {dimensions = array<i32: 2>} : vector<1x1x128xi32>
    %c17_i32 = arith.constant 17 : i32
    %43 = vector.broadcast %c17_i32 : i32 to vector<1x1x128xi32>
    %44 = arith.cmpi slt, %42, %43 : vector<1x1x128xi32>
    %cst_24 = arith.constant 0.000000e+00 : f32
    %cst_25 = arith.constant -1.000000e+30 : f32
    %45 = vector.broadcast %cst_24 : f32 to vector<1x1x128xf32>
    %46 = vector.broadcast %cst_25 : f32 to vector<1x1x128xf32>
    %47 = arith.select %44, %45, %46 : vector<1x1x128xi1>, vector<1x1x128xf32>
    %c0_i32 = arith.constant 0 : i32
    %c2_i32 = arith.constant 2 : i32
    %48 = arith.addi %c0_i32, %c2_i32 : i32
    %c1_i32 = arith.constant 1 : i32
    scf.for %arg19 = %c0_i32 to %48 step %c1_i32  : i32 {
      %c128_i32 = arith.constant 128 : i32
      %139 = arith.muli %arg19, %c128_i32 : i32
      %140 = tpu.assume_multiple %139, 128 : i32
      %c0_73 = arith.constant 0 : index
      %c0_74 = arith.constant 0 : index
      %141 = arith.index_cast %140 : i32 to index
      %142 = vector.load %arg15[%c0_73, %c0_74, %141] : memref<2x128x256xbf16, #tpu.memory_space<vmem>>, vector<2x128x128xbf16>
      %c0_75 = arith.constant 0 : index
      %c0_76 = arith.constant 0 : index
      %143 = arith.index_cast %140 : i32 to index
      %144 = vector.load %arg16[%c0_75, %c0_76, %143] : memref<2x128x256xbf16, #tpu.memory_space<vmem>>, vector<2x128x128xbf16>
      %c0_77 = arith.constant 0 : index
      %c0_78 = arith.constant 0 : index
      %145 = arith.index_cast %140 : i32 to index
      %146 = vector.load %arg17[%c0_77, %c0_78, %145] : memref<2x128x256xbf16, #tpu.memory_space<vmem>>, vector<2x128x128xbf16>
      "tpu.trace_start"() <{level = 10 : i32, message = "bqd,bkd->bqk"}> : () -> ()
      %cst_79 = arith.constant dense<0.000000e+00> : vector<2x128x128xf32>
      %147 = tpu.matmul %142, %144, %cst_79 {dimension_numbers = #tpu.dot_dimension_numbers<[2], [2], [1], [1], [0, 0, 0, 1, 1, 1], [0], [0]>} : vector<2x128x128xbf16>, vector<2x128x128xbf16>, vector<2x128x128xf32> -> vector<2x128x128xf32>
      "tpu.trace_stop"() : () -> ()
      %cst_80 = arith.constant 1.250000e-01 : f32
      %148 = vector.broadcast %cst_80 : f32 to vector<2x128x128xf32>
      %149 = arith.mulf %147, %148 : vector<2x128x128xf32>
      %150 = vector.broadcast %47 : vector<1x1x128xf32> to vector<2x128x128xf32>
      %151 = arith.addf %149, %150 : vector<2x128x128xf32>
      %cst_81 = arith.constant dense<0xFF800000> : vector<2x128xf32>
      %152 = vector.multi_reduction <maximumf>, %151, %cst_81 [2] : vector<2x128x128xf32> to vector<2x128xf32>
      %153 = vector.shape_cast %152 : vector<2x128xf32> to vector<2x128x1xf32>
      %154 = vector.broadcast %153 : vector<2x128x1xf32> to vector<2x128x128xf32>
      %155 = arith.subf %151, %154 : vector<2x128x128xf32>
      %156 = math.exp %155 : vector<2x128x128xf32>
      %cst_82 = arith.constant dense<0.000000e+00> : vector<2x128xf32>
      %157 = vector.multi_reduction <add>, %156, %cst_82 [2] : vector<2x128x128xf32> to vector<2x128xf32>
      %158 = vector.shape_cast %157 : vector<2x128xf32> to vector<2x128x1xf32>
      %159 = tpu.reciprocal %158 {approx = true} : vector<2x128x1xf32> -> vector<2x128x1xf32>
      %160 = vector.broadcast %159 : vector<2x128x1xf32> to vector<2x128x128xf32>
      %161 = arith.mulf %156, %160 : vector<2x128x128xf32>
      %162 = arith.truncf %161 : vector<2x128x128xf32> to vector<2x128x128xbf16>
      "tpu.trace_start"() <{level = 10 : i32, message = "bqk,bkd->bqd"}> : () -> ()
      %cst_83 = arith.constant dense<0.000000e+00> : vector<2x128x128xf32>
      %163 = tpu.matmul %162, %146, %cst_83 {dimension_numbers = #tpu.dot_dimension_numbers<[2], [1], [1], [2], [0, 0, 0, 1, 1, 2], [0], [0]>} : vector<2x128x128xbf16>, vector<2x128x128xbf16>, vector<2x128x128xf32> -> vector<2x128x128xf32>
      "tpu.trace_stop"() : () -> ()
      %164 = arith.truncf %163 : vector<2x128x128xf32> to vector<2x128x128xbf16>
      %c0_84 = arith.constant 0 : index
      %c0_85 = arith.constant 0 : index
      %165 = arith.index_cast %140 : i32 to index
      %166 = vector.load %arg18[%c0_84, %c0_85, %165] : memref<2x128x256xbf16, #tpu.memory_space<vmem>>, vector<2x128x128xbf16>
      tpu.vector_store %arg18[%c0_84, %c0_85, %165], %164 {strides = array<i32>} : memref<2x128x256xbf16, #tpu.memory_space<vmem>>, vector<2x128x128xbf16>,
    }
    %c2_i32_26 = arith.constant 2 : i32
    %c0_27 = arith.constant 0 : index
    %c0_28 = arith.constant 0 : index
    %c0_29 = arith.constant 0 : index
    %49 = vector.load %arg18[%c0_27, %c0_28, %c0_29] : memref<2x128x256xbf16, #tpu.memory_space<vmem>>, vector<2x128x256xbf16>
    %50 = vector.shape_cast %49 : vector<2x128x256xbf16> to vector<256x256xbf16>
    %c0_30 = arith.constant 0 : index
    %c0_31 = arith.constant 0 : index
    %51 = vector.load %arg6[%c0_30, %c0_31] : memref<256x128xbf16, #tpu.memory_space<vmem>>, vector<256x128xbf16>
    %cst_32 = arith.constant dense<0.000000e+00> : vector<256x128xf32>
    %52 = tpu.matmul %50, %51, %cst_32 {dimension_numbers = #tpu.dot_dimension_numbers<[1], [0], [0], [1], [0, 0, 1, 1], [], []>} : vector<256x256xbf16>, vector<256x128xbf16>, vector<256x128xf32> -> vector<256x128xf32>
    %c0_33 = arith.constant 0 : index
    %c0_34 = arith.constant 0 : index
    %53 = vector.load %arg7[%c0_33, %c0_34] : memref<1x128xf32, #tpu.memory_space<vmem>>, vector<1x128xf32>
    %54 = vector.broadcast %53 : vector<1x128xf32> to vector<256x128xf32>
    %55 = arith.addf %52, %54 : vector<256x128xf32>
    %56 = vector.shape_cast %55 : vector<256x128xf32> to vector<2x128x128xf32>
    %57 = arith.addf %0, %56 : vector<2x128x128xf32>
    %58 = vector.shape_cast %57 : vector<2x128x128xf32> to vector<256x128xf32>
    %c0_35 = arith.constant 0 : index
    %c0_36 = arith.constant 0 : index
    %59 = vector.load %arg8[%c0_35, %c0_36] : memref<1x128xf32, #tpu.memory_space<vmem>>, vector<1x128xf32>
    %c0_37 = arith.constant 0 : index
    %c0_38 = arith.constant 0 : index
    %60 = vector.load %arg9[%c0_37, %c0_38] : memref<1x128xf32, #tpu.memory_space<vmem>>, vector<1x128xf32>
    %cst_39 = arith.constant dense<0.000000e+00> : vector<256xf32>
    %61 = vector.multi_reduction <add>, %58, %cst_39 [1] : vector<256x128xf32> to vector<256xf32>
    %62 = vector.shape_cast %61 : vector<256xf32> to vector<256x1xf32>
    %cst_40 = arith.constant 1.280000e+02 : f32
    %63 = vector.broadcast %cst_40 : f32 to vector<256x1xf32>
    %64 = arith.divf %62, %63 : vector<256x1xf32>
    %65 = vector.broadcast %64 : vector<256x1xf32> to vector<256x128xf32>
    %66 = arith.subf %58, %65 : vector<256x128xf32>
    %67 = arith.mulf %66, %66 : vector<256x128xf32>
    %cst_41 = arith.constant dense<0.000000e+00> : vector<256xf32>
    %68 = vector.multi_reduction <add>, %67, %cst_41 [1] : vector<256x128xf32> to vector<256xf32>
    %69 = vector.shape_cast %68 : vector<256xf32> to vector<256x1xf32>
    %cst_42 = arith.constant 1.280000e+02 : f32
    %70 = vector.broadcast %cst_42 : f32 to vector<256x1xf32>
    %71 = arith.divf %69, %70 : vector<256x1xf32>
    %72 = vector.broadcast %64 : vector<256x1xf32> to vector<256x128xf32>
    %73 = arith.subf %58, %72 : vector<256x128xf32>
    %cst_43 = arith.constant 9.99999997E-7 : f32
    %74 = vector.broadcast %cst_43 : f32 to vector<256x1xf32>
    %75 = arith.addf %71, %74 : vector<256x1xf32>
    %76 = math.rsqrt %75 : vector<256x1xf32>
    %77 = vector.broadcast %76 : vector<256x1xf32> to vector<256x128xf32>
    %78 = arith.mulf %73, %77 : vector<256x128xf32>
    %79 = vector.broadcast %59 : vector<1x128xf32> to vector<256x128xf32>
    %80 = arith.mulf %78, %79 : vector<256x128xf32>
    %81 = vector.broadcast %60 : vector<1x128xf32> to vector<256x128xf32>
    %82 = arith.addf %80, %81 : vector<256x128xf32>
    %83 = arith.truncf %82 : vector<256x128xf32> to vector<256x128xbf16>
    %c0_44 = arith.constant 0 : index
    %c0_45 = arith.constant 0 : index
    %84 = vector.load %arg10[%c0_44, %c0_45] : memref<128x512xbf16, #tpu.memory_space<vmem>>, vector<128x512xbf16>
    %cst_46 = arith.constant dense<0.000000e+00> : vector<256x512xf32>
    %85 = tpu.matmul %83, %84, %cst_46 {dimension_numbers = #tpu.dot_dimension_numbers<[1], [0], [0], [1], [0, 0, 1, 1], [], []>} : vector<256x128xbf16>, vector<128x512xbf16>, vector<256x512xf32> -> vector<256x512xf32>
    %c0_47 = arith.constant 0 : index
    %c0_48 = arith.constant 0 : index
    %86 = vector.load %arg11[%c0_47, %c0_48] : memref<1x512xf32, #tpu.memory_space<vmem>>, vector<1x512xf32>
    %87 = vector.broadcast %86 : vector<1x512xf32> to vector<256x512xf32>
    %88 = arith.addf %85, %87 : vector<256x512xf32>
    %cst_49 = arith.constant 5.000000e-01 : f32
    %89 = vector.broadcast %cst_49 : f32 to vector<256x512xf32>
    %90 = arith.mulf %88, %89 : vector<256x512xf32>
    %cst_50 = arith.constant 0.707106769 : f32
    %91 = vector.broadcast %cst_50 : f32 to vector<256x512xf32>
    %92 = arith.mulf %88, %91 : vector<256x512xf32>
    %cst_51 = arith.constant 0.000000e+00 : f32
    %93 = vector.broadcast %cst_51 : f32 to vector<256x512xf32>
    %94 = arith.cmpf oge, %92, %93 : vector<256x512xf32>
    %cst_52 = arith.constant 1.000000e+00 : f32
    %cst_53 = arith.constant -1.000000e+00 : f32
    %95 = vector.broadcast %cst_52 : f32 to vector<256x512xf32>
    %96 = vector.broadcast %cst_53 : f32 to vector<256x512xf32>
    %97 = arith.select %94, %95, %96 : vector<256x512xi1>, vector<256x512xf32>
    %98 = math.absf %92 : vector<256x512xf32>
    %cst_54 = arith.constant 0.327591091 : f32
    %99 = vector.broadcast %cst_54 : f32 to vector<256x512xf32>
    %100 = arith.mulf %99, %98 : vector<256x512xf32>
    %cst_55 = arith.constant 1.000000e+00 : f32
    %101 = vector.broadcast %cst_55 : f32 to vector<256x512xf32>
    %102 = arith.addf %101, %100 : vector<256x512xf32>
    %cst_56 = arith.constant 1.000000e+00 : f32
    %103 = vector.broadcast %cst_56 : f32 to vector<256x512xf32>
    %104 = arith.divf %103, %102 : vector<256x512xf32>
    %cst_57 = arith.constant 1.06140542 : f32
    %105 = vector.broadcast %cst_57 : f32 to vector<256x512xf32>
    %106 = arith.mulf %105, %104 : vector<256x512xf32>
    %cst_58 = arith.constant -1.45315206 : f32
    %107 = vector.broadcast %cst_58 : f32 to vector<256x512xf32>
    %108 = arith.addf %106, %107 : vector<256x512xf32>
    %109 = arith.mulf %108, %104 : vector<256x512xf32>
    %cst_59 = arith.constant 1.42141378 : f32
    %110 = vector.broadcast %cst_59 : f32 to vector<256x512xf32>
    %111 = arith.addf %109, %110 : vector<256x512xf32>
    %112 = arith.mulf %111, %104 : vector<256x512xf32>
    %cst_60 = arith.constant -0.284496725 : f32
    %113 = vector.broadcast %cst_60 : f32 to vector<256x512xf32>
    %114 = arith.addf %112, %113 : vector<256x512xf32>
    %115 = arith.mulf %114, %104 : vector<256x512xf32>
    %cst_61 = arith.constant 0.254829586 : f32
    %116 = vector.broadcast %cst_61 : f32 to vector<256x512xf32>
    %117 = arith.addf %115, %116 : vector<256x512xf32>
    %118 = arith.mulf %117, %104 : vector<256x512xf32>
    %cst_62 = arith.constant 0.000000e+00 : f32
    %119 = vector.broadcast %cst_62 : f32 to vector<256x512xf32>
    %120 = arith.subf %119, %98 : vector<256x512xf32>
    %121 = arith.mulf %120, %98 : vector<256x512xf32>
    %122 = math.exp %121 : vector<256x512xf32>
    %123 = arith.mulf %118, %122 : vector<256x512xf32>
    %cst_63 = arith.constant 1.000000e+00 : f32
    %124 = vector.broadcast %cst_63 : f32 to vector<256x512xf32>
    %125 = arith.subf %124, %123 : vector<256x512xf32>
    %126 = arith.mulf %97, %125 : vector<256x512xf32>
    %cst_64 = arith.constant 1.000000e+00 : f32
    %127 = vector.broadcast %cst_64 : f32 to vector<256x512xf32>
    %128 = arith.addf %127, %126 : vector<256x512xf32>
    %129 = arith.mulf %90, %128 : vector<256x512xf32>
    %130 = arith.truncf %129 : vector<256x512xf32> to vector<256x512xbf16>
    %c0_65 = arith.constant 0 : index
    %c0_66 = arith.constant 0 : index
    %131 = vector.load %arg12[%c0_65, %c0_66] : memref<512x128xbf16, #tpu.memory_space<vmem>>, vector<512x128xbf16>
    %cst_67 = arith.constant dense<0.000000e+00> : vector<256x128xf32>
    %132 = tpu.matmul %130, %131, %cst_67 {dimension_numbers = #tpu.dot_dimension_numbers<[1], [0], [0], [1], [0, 0, 1, 1], [], []>} : vector<256x512xbf16>, vector<512x128xbf16>, vector<256x128xf32> -> vector<256x128xf32>
    %c0_68 = arith.constant 0 : index
    %c0_69 = arith.constant 0 : index
    %133 = vector.load %arg13[%c0_68, %c0_69] : memref<1x128xf32, #tpu.memory_space<vmem>>, vector<1x128xf32>
    %134 = vector.broadcast %133 : vector<1x128xf32> to vector<256x128xf32>
    %135 = arith.addf %132, %134 : vector<256x128xf32>
    %136 = vector.shape_cast %135 : vector<256x128xf32> to vector<2x128x128xf32>
    %137 = arith.addf %57, %136 : vector<2x128x128xf32>
    %c0_70 = arith.constant 0 : index
    %c0_71 = arith.constant 0 : index
    %c0_72 = arith.constant 0 : index
    %138 = vector.load %arg14[%c0_70, %c0_71, %c0_72] : memref<2x128x128xf32, #tpu.memory_space<vmem>>, vector<2x128x128xf32>
    tpu.vector_store %arg14[%c0_70, %c0_71, %c0_72], %137 {strides = array<i32>} : memref<2x128x128xf32, #tpu.memory_space<vmem>>, vector<2x128x128xf32>,
    return
  }
  func.func @transform_0(%arg0: i32) -> (i32, i32, i32) {
    %c0_i32 = arith.constant 0 : i32
    %c0_i32_0 = arith.constant 0 : i32
    %c0_i32_1 = arith.constant 0 : i32
    return %arg0, %c0_i32, %c0_i32_0 : i32, i32, i32
  }
  func.func @transform_1(%arg0: i32) -> (i32, i32) {
    %c0_i32 = arith.constant 0 : i32
    %c0_i32_0 = arith.constant 0 : i32
    %c0_i32_1 = arith.constant 0 : i32
    return %c0_i32, %c0_i32_0 : i32, i32
  }
  func.func @transform_2(%arg0: i32) -> (i32, i32) {
    %c0_i32 = arith.constant 0 : i32
    %c0_i32_0 = arith.constant 0 : i32
    %c0_i32_1 = arith.constant 0 : i32
    return %c0_i32, %c0_i32_0 : i32, i32
  }
  func.func @transform_3(%arg0: i32) -> (i32, i32) {
    %c0_i32 = arith.constant 0 : i32
    %c0_i32_0 = arith.constant 0 : i32
    %c0_i32_1 = arith.constant 0 : i32
    return %c0_i32, %c0_i32_0 : i32, i32
  }
  func.func @transform_4(%arg0: i32) -> (i32, i32) {
    %c0_i32 = arith.constant 0 : i32
    %c0_i32_0 = arith.constant 0 : i32
    %c0_i32_1 = arith.constant 0 : i32
    return %c0_i32, %c0_i32_0 : i32, i32
  }
  func.func @transform_5(%arg0: i32) -> (i32, i32) {
    %c0_i32 = arith.constant 0 : i32
    %c0_i32_0 = arith.constant 0 : i32
    %c0_i32_1 = arith.constant 0 : i32
    return %c0_i32, %c0_i32_0 : i32, i32
  }
  func.func @transform_6(%arg0: i32) -> (i32, i32) {
    %c0_i32 = arith.constant 0 : i32
    %c0_i32_0 = arith.constant 0 : i32
    %c0_i32_1 = arith.constant 0 : i32
    return %c0_i32, %c0_i32_0 : i32, i32
  }
  func.func @transform_7(%arg0: i32) -> (i32, i32) {
    %c0_i32 = arith.constant 0 : i32
    %c0_i32_0 = arith.constant 0 : i32
    %c0_i32_1 = arith.constant 0 : i32
    return %c0_i32, %c0_i32_0 : i32, i32
  }
  func.func @transform_8(%arg0: i32) -> (i32, i32) {
    %c0_i32 = arith.constant 0 : i32
    %c0_i32_0 = arith.constant 0 : i32
    %c0_i32_1 = arith.constant 0 : i32
    return %c0_i32, %c0_i32_0 : i32, i32
  }
  func.func @transform_9(%arg0: i32) -> (i32, i32) {
    %c0_i32 = arith.constant 0 : i32
    %c0_i32_0 = arith.constant 0 : i32
    %c0_i32_1 = arith.constant 0 : i32
    return %c0_i32, %c0_i32_0 : i32, i32
  }
  func.func @transform_10(%arg0: i32) -> (i32, i32) {
    %c0_i32 = arith.constant 0 : i32
    %c0_i32_0 = arith.constant 0 : i32
    %c0_i32_1 = arith.constant 0 : i32
    return %c0_i32, %c0_i32_0 : i32, i32
  }
  func.func @transform_11(%arg0: i32) -> (i32, i32) {
    %c0_i32 = arith.constant 0 : i32
    %c0_i32_0 = arith.constant 0 : i32
    %c0_i32_1 = arith.constant 0 : i32
    return %c0_i32, %c0_i32_0 : i32, i32
  }
  func.func @transform_12(%arg0: i32) -> (i32, i32) {
    %c0_i32 = arith.constant 0 : i32
    %c0_i32_0 = arith.constant 0 : i32
    %c0_i32_1 = arith.constant 0 : i32
    return %c0_i32, %c0_i32_0 : i32, i32
  }
  func.func @transform_13(%arg0: i32) -> (i32, i32, i32) {
    %c0_i32 = arith.constant 0 : i32
    %c0_i32_0 = arith.constant 0 : i32
    %c0_i32_1 = arith.constant 0 : i32
    return %arg0, %c0_i32, %c0_i32_0 : i32, i32, i32
  }
}

module attributes {stable_mosaic.version = 11 : i64} {
  func.func @_head_kernel(%arg0: memref<8x128xf32, #tpu.memory_space<vmem>>, %arg1: memref<1x128xf32, #tpu.memory_space<vmem>>, %arg2: memref<1x128xf32, #tpu.memory_space<vmem>>, %arg3: memref<128x128xbf16, #tpu.memory_space<vmem>>, %arg4: memref<1x128xf32, #tpu.memory_space<vmem>>, %arg5: memref<128x128xbf16, #tpu.memory_space<vmem>>, %arg6: memref<1x128xf32, #tpu.memory_space<vmem>>, %arg7: memref<128x128xbf16, #tpu.memory_space<vmem>>, %arg8: memref<1x128xf32, #tpu.memory_space<vmem>>, %arg9: memref<8x128xf32, #tpu.memory_space<vmem>>) attributes {dimension_semantics = [], scalar_prefetch = 0 : i64, scratch_operands = 0 : i64, tpu.core_type = #tpu.core_type<tc>} {
    %c0 = arith.constant 0 : index
    %c0_0 = arith.constant 0 : index
    %0 = vector.load %arg0[%c0, %c0_0] : memref<8x128xf32, #tpu.memory_space<vmem>>, vector<8x128xf32>
    %c0_1 = arith.constant 0 : index
    %c0_2 = arith.constant 0 : index
    %1 = vector.load %arg1[%c0_1, %c0_2] : memref<1x128xf32, #tpu.memory_space<vmem>>, vector<1x128xf32>
    %c0_3 = arith.constant 0 : index
    %c0_4 = arith.constant 0 : index
    %2 = vector.load %arg2[%c0_3, %c0_4] : memref<1x128xf32, #tpu.memory_space<vmem>>, vector<1x128xf32>
    %cst = arith.constant dense<0.000000e+00> : vector<8xf32>
    %3 = vector.multi_reduction <add>, %0, %cst [1] : vector<8x128xf32> to vector<8xf32>
    %4 = vector.shape_cast %3 : vector<8xf32> to vector<8x1xf32>
    %cst_5 = arith.constant 1.280000e+02 : f32
    %5 = vector.broadcast %cst_5 : f32 to vector<8x1xf32>
    %6 = arith.divf %4, %5 : vector<8x1xf32>
    %7 = vector.broadcast %6 : vector<8x1xf32> to vector<8x128xf32>
    %8 = arith.subf %0, %7 : vector<8x128xf32>
    %9 = arith.mulf %8, %8 : vector<8x128xf32>
    %cst_6 = arith.constant dense<0.000000e+00> : vector<8xf32>
    %10 = vector.multi_reduction <add>, %9, %cst_6 [1] : vector<8x128xf32> to vector<8xf32>
    %11 = vector.shape_cast %10 : vector<8xf32> to vector<8x1xf32>
    %cst_7 = arith.constant 1.280000e+02 : f32
    %12 = vector.broadcast %cst_7 : f32 to vector<8x1xf32>
    %13 = arith.divf %11, %12 : vector<8x1xf32>
    %14 = vector.broadcast %6 : vector<8x1xf32> to vector<8x128xf32>
    %15 = arith.subf %0, %14 : vector<8x128xf32>
    %cst_8 = arith.constant 9.99999997E-7 : f32
    %16 = vector.broadcast %cst_8 : f32 to vector<8x1xf32>
    %17 = arith.addf %13, %16 : vector<8x1xf32>
    %18 = math.rsqrt %17 : vector<8x1xf32>
    %19 = vector.broadcast %18 : vector<8x1xf32> to vector<8x128xf32>
    %20 = arith.mulf %15, %19 : vector<8x128xf32>
    %21 = vector.broadcast %1 : vector<1x128xf32> to vector<8x128xf32>
    %22 = arith.mulf %20, %21 : vector<8x128xf32>
    %23 = vector.broadcast %2 : vector<1x128xf32> to vector<8x128xf32>
    %24 = arith.addf %22, %23 : vector<8x128xf32>
    %25 = arith.truncf %24 : vector<8x128xf32> to vector<8x128xbf16>
    %c0_9 = arith.constant 0 : index
    %c0_10 = arith.constant 0 : index
    %26 = vector.load %arg3[%c0_9, %c0_10] : memref<128x128xbf16, #tpu.memory_space<vmem>>, vector<128x128xbf16>
    %cst_11 = arith.constant dense<0.000000e+00> : vector<8x128xf32>
    %27 = tpu.matmul %25, %26, %cst_11 {dimension_numbers = #tpu.dot_dimension_numbers<[1], [0], [0], [1], [0, 0, 1, 1], [], []>} : vector<8x128xbf16>, vector<128x128xbf16>, vector<8x128xf32> -> vector<8x128xf32>
    %c0_12 = arith.constant 0 : index
    %c0_13 = arith.constant 0 : index
    %28 = vector.load %arg4[%c0_12, %c0_13] : memref<1x128xf32, #tpu.memory_space<vmem>>, vector<1x128xf32>
    %29 = vector.broadcast %28 : vector<1x128xf32> to vector<8x128xf32>
    %30 = arith.addf %27, %29 : vector<8x128xf32>
    %cst_14 = arith.constant 0.000000e+00 : f32
    %31 = vector.broadcast %cst_14 : f32 to vector<8x128xf32>
    %32 = arith.maximumf %30, %31 : vector<8x128xf32>
    %33 = arith.truncf %32 : vector<8x128xf32> to vector<8x128xbf16>
    %c0_15 = arith.constant 0 : index
    %c0_16 = arith.constant 0 : index
    %34 = vector.load %arg5[%c0_15, %c0_16] : memref<128x128xbf16, #tpu.memory_space<vmem>>, vector<128x128xbf16>
    %cst_17 = arith.constant dense<0.000000e+00> : vector<8x128xf32>
    %35 = tpu.matmul %33, %34, %cst_17 {dimension_numbers = #tpu.dot_dimension_numbers<[1], [0], [0], [1], [0, 0, 1, 1], [], []>} : vector<8x128xbf16>, vector<128x128xbf16>, vector<8x128xf32> -> vector<8x128xf32>
    %c0_18 = arith.constant 0 : index
    %c0_19 = arith.constant 0 : index
    %36 = vector.load %arg6[%c0_18, %c0_19] : memref<1x128xf32, #tpu.memory_space<vmem>>, vector<1x128xf32>
    %37 = vector.broadcast %36 : vector<1x128xf32> to vector<8x128xf32>
    %38 = arith.addf %35, %37 : vector<8x128xf32>
    %cst_20 = arith.constant 0.000000e+00 : f32
    %39 = vector.broadcast %cst_20 : f32 to vector<8x128xf32>
    %40 = arith.maximumf %38, %39 : vector<8x128xf32>
    %41 = arith.truncf %40 : vector<8x128xf32> to vector<8x128xbf16>
    %c0_21 = arith.constant 0 : index
    %c0_22 = arith.constant 0 : index
    %42 = vector.load %arg7[%c0_21, %c0_22] : memref<128x128xbf16, #tpu.memory_space<vmem>>, vector<128x128xbf16>
    %cst_23 = arith.constant dense<0.000000e+00> : vector<8x128xf32>
    %43 = tpu.matmul %41, %42, %cst_23 {dimension_numbers = #tpu.dot_dimension_numbers<[1], [0], [0], [1], [0, 0, 1, 1], [], []>} : vector<8x128xbf16>, vector<128x128xbf16>, vector<8x128xf32> -> vector<8x128xf32>
    %c0_24 = arith.constant 0 : index
    %c0_25 = arith.constant 0 : index
    %44 = vector.load %arg8[%c0_24, %c0_25] : memref<1x128xf32, #tpu.memory_space<vmem>>, vector<1x128xf32>
    %45 = vector.broadcast %44 : vector<1x128xf32> to vector<8x128xf32>
    %46 = arith.addf %43, %45 : vector<8x128xf32>
    %cst_26 = arith.constant 0.000000e+00 : f32
    %47 = vector.broadcast %cst_26 : f32 to vector<8x128xf32>
    %48 = arith.subf %47, %46 : vector<8x128xf32>
    %49 = math.exp %48 : vector<8x128xf32>
    %cst_27 = arith.constant 1.000000e+00 : f32
    %50 = vector.broadcast %cst_27 : f32 to vector<8x128xf32>
    %51 = arith.addf %50, %49 : vector<8x128xf32>
    %cst_28 = arith.constant 1.000000e+00 : f32
    %52 = vector.broadcast %cst_28 : f32 to vector<8x128xf32>
    %53 = arith.divf %52, %51 : vector<8x128xf32>
    %c0_29 = arith.constant 0 : index
    %c0_30 = arith.constant 0 : index
    %54 = vector.load %arg9[%c0_29, %c0_30] : memref<8x128xf32, #tpu.memory_space<vmem>>, vector<8x128xf32>
    tpu.vector_store %arg9[%c0_29, %c0_30], %53 {strides = array<i32>} : memref<8x128xf32, #tpu.memory_space<vmem>>, vector<8x128xf32>,
    return
  }
}

</mosaic_0001>

<llo_original>
// kernel: tpu_custom_call.1
$region0: #{tpu_custom_call.1}
  #allocation0 [shape = 'u32[]', space=smem, size = 0x4, offset = 0x4, fixed_abs, tag = 'smem constant byte address 0x4 - core index']
  #allocation1 [shape = 'u32[144,128]{1,0:T(1,128)}', space=vmem, size = 0x12000, scoped, tag = 'internal scratch']
  %s0 = inlined_call_operand.hbm [shape: f32[16,128], index: 0, kind: input, shape index: {}]
  %s1 = inlined_call_operand.hbm [shape: f32[8,128], index: 1, kind: input, shape index: {}]
  %s2 = inlined_call_operand.hbm [shape: f32[16,128], index: 2, kind: output, shape index: {}]
  %s3 = sld [smem:[#allocation0]]
  $region49: #{tpu_custom_call.1} parent=0
    _
  %s5 = ssub.s32 1, %s3
  %s6 = scalar_select 0, %s5, %s3
  $region1: #{tpu_custom_call.1} parent=0
    #allocation2 [shape = 'u8[8192]{0}', space=vmem, size = 0x2000, scoped, tag = 'input window, operand 0']
    #allocation3 [shape = 's32[2]{0}', space=sflag, size = 0x8, scoped, tag = 'scoped memory for tpu_custom_call.1']
    #allocation4 [shape = 's32[2]{0}', space=sflag, size = 0x8, scoped, tag = 'scoped memory for tpu_custom_call.1']
    #allocation5 [shape = 'u8[4096]{0}', space=vmem, size = 0x1000, scoped, tag = 'input window, operand 1, single buffered']
    #allocation6 [shape = 's32[1]{0}', space=sflag, size = 0x4, scoped, tag = 'scoped memory for tpu_custom_call.1']
    #allocation7 [shape = 'u8[8192]{0}', space=vmem, size = 0x2000, scoped, tag = 'output window, operand 0']
    %7 = vsyncpa [#allocation3], 0
    %s8 = scalar_lea.sflag [#allocation3], 1
    %9 = vsyncpa %s8, 0
    %10 = vsyncpa [#allocation6], 0
    %11 = vsyncpa [#allocation4], 0
    %s12 = scalar_lea.sflag [#allocation4], 1
    %13 = vsyncpa %s12, 0
    loop: start=0, step=1, limit=4
    $region2: #{tpu_custom_call.1} parent=1 // loop_pre_header
      _
    $region3: #{tpu_custom_call.1} parent=1 // loop_header
      %s15 = sphi 0, %s19
      %p16 = scmp.ge.s32.totalorder %s15, 4
      %s25 = sphi 0, %s27
      %s28 = sphi 0, %s25
      %s29 = sphi 0, %s28
      %s45 = sphi 0, %s29
      %s49 = sphi 0, %s49
      %s51 = sphi 0, %s49
      %s52 = sphi 0, %s51
      %s66 = sphi 0, %s52
      %s72 = sphi 0, %s74
      %s75 = sphi 0, %s72
      %s76 = sphi 0, %s75
      %s92 = sphi 0, %s76
    $region4: #{tpu_custom_call.1} parent=1 // loop_header_branch
      %18 = sbr.rel (%p16) target = $region8
    $region5: #{tpu_custom_call.1} parent=1 // loop_body
      %s20 = ssub.s32 %s15, 1
      %s21 = ssub.s32 %s15, 2
      %s22 = sadd.s32 %s15, 1
      %s23 = ssub.s32 %s15, %s22
      %p24 = scmp.eq.s32.totalorder %s23, 0
      %s26 = sadd.s32 %s25, 1
      %s27 = scalar_select %p24, %s25, %s26
      %p30 = pneg %p24
      %p31 = scmp.eq.s32.totalorder %s15, 1
      %p32 = por %p30, %p31
      %p33 = scmp.ne.s32.totalorder %s25, %s28
      %p34 = scmp.eq.s32.totalorder %s15, 0
      %p35 = por %p33, %p34
      %p36 = scmp.ne.s32.totalorder %s25, %s28
      %p37 = scmp.eq.s32.totalorder %s20, 1
      %p38 = por %p36, %p37
      %p39 = scmp.ne.s32.totalorder %s28, %s29
      %p40 = scmp.eq.s32.totalorder %s20, 0
      %p41 = por %p39, %p40
      %p42 = scmp.ne.s32.totalorder %s28, %s29
      %p43 = scmp.eq.s32.totalorder %s21, 1
      %p44 = por %p42, %p43
      %p46 = scmp.ne.s32.totalorder %s29, %s45
      %p47 = scmp.eq.s32.totalorder %s21, 0
      %p48 = por %p46, %p47
      %s50 = sadd.s32 %s49, 1
      %p53 = scmp.eq.s32.totalorder %s15, 1
      %p54 = scmp.ne.s32.totalorder %s49, %s51
      %p55 = scmp.eq.s32.totalorder %s15, 0
      %p56 = por %p54, %p55
      %p57 = scmp.ne.s32.totalorder %s49, %s51
      %p58 = scmp.eq.s32.totalorder %s20, 1
      %p59 = por %p57, %p58
      %p60 = scmp.ne.s32.totalorder %s51, %s52
      %p61 = scmp.eq.s32.totalorder %s20, 0
      %p62 = por %p60, %p61
      %p63 = scmp.ne.s32.totalorder %s51, %s52
      %p64 = scmp.eq.s32.totalorder %s21, 1
      %p65 = por %p63, %p64
      %p67 = scmp.ne.s32.totalorder %s52, %s66
      %p68 = scmp.eq.s32.totalorder %s21, 0
      %p69 = por %p67, %p68
      %s70 = ssub.s32 %s15, %s22
      %p71 = scmp.eq.s32.totalorder %s70, 0
      %s73 = sadd.s32 %s72, 1
      %s74 = scalar_select %p71, %s72, %s73
      %p77 = pneg %p71
      %p78 = scmp.eq.s32.totalorder %s15, 1
      %p79 = por %p77, %p78
      %p80 = scmp.ne.s32.totalorder %s72, %s75
      %p81 = scmp.eq.s32.totalorder %s15, 0
      %p82 = por %p80, %p81
      %p83 = scmp.ne.s32.totalorder %s72, %s75
      %p84 = scmp.eq.s32.totalorder %s20, 1
      %p85 = por %p83, %p84
      %p86 = scmp.ne.s32.totalorder %s75, %s76
      %p87 = scmp.eq.s32.totalorder %s20, 0
      %p88 = por %p86, %p87
      %p89 = scmp.ne.s32.totalorder %s75, %s76
      %p90 = scmp.eq.s32.totalorder %s21, 1
      %p91 = por %p89, %p90
      %p93 = scmp.ne.s32.totalorder %s76, %s92
      %p94 = scmp.eq.s32.totalorder %s21, 0
      %p95 = por %p93, %p94
      %p96 = scmp.le.s32.totalorder 1, %s15
      %p97 = scmp.lt.s32.totalorder %s15, 3
      %p98 = pnand %p96, %p97
      %p99 = pneg %p98
      // Predicated region
      $region9: #{tpu_custom_call.1} parent=5 // pred_check
        _
      $region10: #{tpu_custom_call.1} parent=5 // pred_check_branch
        %101 = sbr.rel (%p98) target = $region12
      $region11: #{tpu_custom_call.1} parent=5 // pred_region
        %s102 = ssub.s32 %s15, 1
        // Predicated region
        $region13: #{tpu_custom_call.1} parent=11 // pred_check
          %p103 = pneg %p62
        $region14: #{tpu_custom_call.1} parent=11 // pred_check_branch
          %105 = sbr.rel (%p103) target = $region16
        $region15: #{tpu_custom_call.1} parent=11 // pred_region
          %s107 = ssub.s32 128, 128
          %108 = vsyncadd [#allocation6], %s107
          %s110 = sshll.u32 [#allocation5], 4
          %s111 = int_to_ptr.vmem [resolvable:$true] %s110
          %113 = dma.hbm_to_vmem [thread:$0]  %s1, 128, %s111, [#allocation6]
        $region16: #{tpu_custom_call.1} parent=11 // pred_fallthru
          _
      $region12: #{tpu_custom_call.1} parent=5 // pred_fallthru
        _
      %p114 = scmp.lt.s32.totalorder %s15, 2
      // Predicated region
      $region17: #{tpu_custom_call.1} parent=5 // pred_check
        %p115 = pneg %p114
      $region18: #{tpu_custom_call.1} parent=5 // pred_check_branch
        %117 = sbr.rel (%p115) target = $region20
      $region19: #{tpu_custom_call.1} parent=5 // pred_region
        // Predicated region
        $region21: #{tpu_custom_call.1} parent=19 // pred_check
          %p118 = pneg %p35
        $region22: #{tpu_custom_call.1} parent=19 // pred_check_branch
          %120 = sbr.rel (%p118) target = $region24
        $region23: #{tpu_custom_call.1} parent=19 // pred_region
          %s121 = sand.u32 %s25, 1
          %s122 = scalar_lea.sflag [#allocation3], %s121
          %s123 = sand.u32 %s25, 1
          %s124 = smul.addr %s123, 8
          %s125 = scalar_lea.vmem [#allocation2], %s124
          %s127 = ssub.s32 128, 128
          %128 = vsyncadd %s122, %s127
          %s129 = smul.addr %s15, 128
          %s130 = scalar_lea.hbm %s0, %s129
          %s132 = sshll.u32 %s125, 4
          %s133 = int_to_ptr.vmem [resolvable:$true] %s132
          %135 = dma.hbm_to_vmem [thread:$0]  %s130, 128, %s133, %s122
        $region24: #{tpu_custom_call.1} parent=19 // pred_fallthru
          _
      $region20: #{tpu_custom_call.1} parent=5 // pred_fallthru
        _
      %p136 = scmp.le.s32.totalorder 1, %s15
      %p137 = scmp.lt.s32.totalorder %s15, 3
      %p138 = pnand %p136, %p137
      %p139 = pneg %p138
      // Predicated region
      $region25: #{tpu_custom_call.1} parent=5 // pred_check
        _
      $region26: #{tpu_custom_call.1} parent=5 // pred_check_branch
        %141 = sbr.rel (%p138) target = $region28
      $region27: #{tpu_custom_call.1} parent=5 // pred_region
        %s142 = ssub.s32 %s15, 1
        %s143 = sand.u32 %s28, 1
        %s144 = scalar_lea.sflag [#allocation3], %s143
        %s145 = sand.u32 %s28, 1
        %s146 = smul.addr %s145, 8
        %s147 = scalar_lea.vmem [#allocation2], %s146
        // Predicated region
        $region29: #{tpu_custom_call.1} parent=27 // pred_check
          %p148 = pneg %p41
        $region30: #{tpu_custom_call.1} parent=27 // pred_check_branch
          %150 = sbr.rel (%p148) target = $region32
        $region31: #{tpu_custom_call.1} parent=27 // pred_region
          %151 = dma.done %s144, 128
        $region32: #{tpu_custom_call.1} parent=27 // pred_fallthru
          _
        // Predicated region
        $region33: #{tpu_custom_call.1} parent=27 // pred_check
          %p152 = pneg %p62
        $region34: #{tpu_custom_call.1} parent=27 // pred_check_branch
          %154 = sbr.rel (%p152) target = $region36
        $region35: #{tpu_custom_call.1} parent=27 // pred_region
          %155 = dma.done [#allocation6], 128
        $region36: #{tpu_custom_call.1} parent=27 // pred_fallthru
          _
        %s156 = sand.u32 %s28, 1
        %s157 = scalar_lea.sflag [#allocation3], %s156
        %s158 = sand.u32 %s28, 1
        %s159 = smul.addr %s158, 8
        %s160 = scalar_lea.vmem [#allocation2], %s159
        %p161 = pneg %p41
        %p162 = pneg %p38
        %p163 = pneg %p62
        %p164 = pneg %p59
        %p165 = pneg %p88
        %p166 = pneg %p85
        %s167 = sand.u32 %s75, 1
        %s168 = scalar_lea.sflag [#allocation4], %s167
        %s169 = sand.u32 %s75, 1
        %s170 = smul.addr %s169, 8
        %s171 = scalar_lea.vmem [#allocation7], %s170
        %v172 = vld [vmem:[%s147] sm:$0xff]
        %v173 = vld [vmem:[#allocation5] sm:$0xff]
        %v174 = vadd.f32 %v172, %v173
        %175 = vst [vmem:[%s171] sm:$0xff] %v174
        %s176 = sand.u32 %s75, 1
        %s177 = scalar_lea.sflag [#allocation4], %s176
        %s178 = sand.u32 %s75, 1
        %s179 = smul.addr %s178, 8
        %s180 = scalar_lea.vmem [#allocation7], %s179
        // Predicated region
        $region37: #{tpu_custom_call.1} parent=27 // pred_check
          %p181 = pneg %p85
        $region38: #{tpu_custom_call.1} parent=27 // pred_check_branch
          %183 = sbr.rel (%p181) target = $region40
        $region39: #{tpu_custom_call.1} parent=27 // pred_region
          %s185 = ssub.s32 128, 128
          %186 = vsyncadd %s177, %s185
          %s187 = smul.addr %s20, 128
          %s188 = scalar_lea.hbm %s2, %s187
          %s190 = sshll.u32 %s180, 4
          %s191 = int_to_ptr.vmem [resolvable:$true] %s190
          %193 = dma.vmem_to_hbm [thread:$0]  %s191, 128, %s188, %s177
        $region40: #{tpu_custom_call.1} parent=27 // pred_fallthru
          _
      $region28: #{tpu_custom_call.1} parent=5 // pred_fallthru
        _
      %p194 = scmp.le.s32.totalorder 2, %s15
      // Predicated region
      $region41: #{tpu_custom_call.1} parent=5 // pred_check
        %p195 = pneg %p194
      $region42: #{tpu_custom_call.1} parent=5 // pred_check_branch
        %197 = sbr.rel (%p195) target = $region44
      $region43: #{tpu_custom_call.1} parent=5 // pred_region
        %s198 = ssub.s32 %s15, 2
        // Predicated region
        $region45: #{tpu_custom_call.1} parent=43 // pred_check
          %p199 = pneg %p91
        $region46: #{tpu_custom_call.1} parent=43 // pred_check_branch
          %201 = sbr.rel (%p199) target = $region48
        $region47: #{tpu_custom_call.1} parent=43 // pred_region
          %s202 = sand.u32 %s76, 1
          %s203 = scalar_lea.sflag [#allocation4], %s202
          %s204 = sand.u32 %s76, 1
          %s205 = smul.addr %s204, 8
          %s206 = scalar_lea.vmem [#allocation7], %s205
          %207 = dma.done %s203, 128
        $region48: #{tpu_custom_call.1} parent=43 // pred_fallthru
          _
      $region44: #{tpu_custom_call.1} parent=5 // pred_fallthru
        _
    $region6: #{tpu_custom_call.1} parent=1 // loop_footer
      %s19 = sadd.s32 1, %s15
    $region7: #{tpu_custom_call.1} parent=1 // loop_footer_branch
      %14 = sbr.rel target = $region3
    $region8: #{tpu_custom_call.1} parent=1 // loop_exit
      _
    %208 = vsyncpa [#allocation3], 1
    %s209 = scalar_lea.sflag [#allocation3], 1
    %210 = vsyncpa %s209, 1
    %211 = vsyncpa [#allocation6], 1
    %212 = vsyncpa [#allocation4], 1
    %s213 = scalar_lea.sflag [#allocation4], 1
    %214 = vsyncpa %s213, 1

// kernel: vision_transformer_forward.4
$region0: #{vision_transformer_forward.4}
  #allocation0 [shape = 'u32[]', space=smem, size = 0x4, offset = 0x4, fixed_abs, tag = 'smem constant byte address 0x4 - core index']
  #allocation1 [shape = 'u32[144,128]{1,0:T(1,128)}', space=vmem, size = 0x12000, scoped, tag = 'internal scratch']
  %s0 = inlined_call_operand.vmem [shape: bf16[64,128], index: 0, kind: input, shape index: {}]
  %s1 = inlined_call_operand.vmem [shape: bf16[128,128], index: 1, kind: input, shape index: {}]
  %s2 = inlined_call_operand.vmem [shape: f32[1,128], index: 2, kind: input, shape index: {}]
  %s3 = inlined_call_operand.vmem [shape: bf16[64,128], index: 3, kind: output, shape index: {}]
  %s4 = sld [smem:[#allocation0]]
  $region22: #{vision_transformer_forward.4} parent=0
    _
  %s6 = ssub.s32 1, %s4
  %s7 = scalar_select 0, %s6, %s4
  // Predicated region
  $region2: #{vision_transformer_forward.4} parent=0 // pred_check
    _
  $region3: #{vision_transformer_forward.4} parent=0 // pred_check_branch
    %9 = sbr.rel (0) target = $region5
  $region4: #{vision_transformer_forward.4} parent=0 // pred_region
    _
  $region5: #{vision_transformer_forward.4} parent=0 // pred_fallthru
    _
  // Predicated region
  $region6: #{vision_transformer_forward.4} parent=0 // pred_check
    _
  $region7: #{vision_transformer_forward.4} parent=0 // pred_check_branch
    %11 = sbr.rel (0) target = $region9
  $region8: #{vision_transformer_forward.4} parent=0 // pred_region
    _
  $region9: #{vision_transformer_forward.4} parent=0 // pred_fallthru
    _
  // Predicated region
  $region10: #{vision_transformer_forward.4} parent=0 // pred_check
    _
  $region11: #{vision_transformer_forward.4} parent=0 // pred_check_branch
    %13 = sbr.rel (0) target = $region13
  $region12: #{vision_transformer_forward.4} parent=0 // pred_region
    _
  $region13: #{vision_transformer_forward.4} parent=0 // pred_fallthru
    _
  %v15 = vld [vmem:[%s0] sm:$0xf]
  %v16 = vld [vmem:[%s0 + $0x4] sm:$0xf]
  %v17 = vld [vmem:[%s0 + $0x8] sm:$0xf]
  %v18 = vld [vmem:[%s0 + $0xc] sm:$0xf]
  %v19 = vld [vmem:[%s0 + $0x10] sm:$0xf]
  %v20 = vld [vmem:[%s0 + $0x14] sm:$0xf]
  %v21 = vld [vmem:[%s0 + $0x18] sm:$0xf]
  %v22 = vld [vmem:[%s0 + $0x1c] sm:$0xf]
  %v23 = vld [vmem:[%s1] sm:$0xf]
  %v24 = vld [vmem:[%s1 + $0x4] sm:$0xf]
  %v25 = vld [vmem:[%s1 + $0x8] sm:$0xf]
  %v26 = vld [vmem:[%s1 + $0xc] sm:$0xf]
  %v27 = vld [vmem:[%s1 + $0x10] sm:$0xf]
  %v28 = vld [vmem:[%s1 + $0x14] sm:$0xf]
  %v29 = vld [vmem:[%s1 + $0x18] sm:$0xf]
  %v30 = vld [vmem:[%s1 + $0x1c] sm:$0xf]
  %v31 = vld [vmem:[%s1 + $0x20] sm:$0xf]
  %v32 = vld [vmem:[%s1 + $0x24] sm:$0xf]
  %v33 = vld [vmem:[%s1 + $0x28] sm:$0xf]
  %v34 = vld [vmem:[%s1 + $0x2c] sm:$0xf]
  %v35 = vld [vmem:[%s1 + $0x30] sm:$0xf]
  %v36 = vld [vmem:[%s1 + $0x34] sm:$0xf]
  %v37 = vld [vmem:[%s1 + $0x38] sm:$0xf]
  %v38 = vld [vmem:[%s1 + $0x3c] sm:$0xf]
  %v39 = vld [vmem:[%s2] sm:$0x1]
  %v41 = vlaneseq
  %v42 = vshrl.u32 %v41, 7
  %v43 = vsub.s32 0, %v42
  %v44 = vrot.slane %v39, %v43
  %v54 = vunpack.c.l.b16 %v15
  %v55 = vunpack.c.l.b16 %v16
  %v56 = vunpack.c.l.b16 %v17
  %v57 = vunpack.c.l.b16 %v18
  %v58 = vunpack.c.l.b16 %v19
  %v59 = vunpack.c.l.b16 %v20
  %v60 = vunpack.c.l.b16 %v21
  %v61 = vunpack.c.l.b16 %v22
  %v62 = vpack.c.b16 %v55, %v54
  %v63 = vpack.c.b16 %v57, %v56
  %v64 = vpack.c.b16 %v59, %v58
  %v65 = vpack.c.b16 %v61, %v60
  %v86 = vunpack.c.l.b16 %v23
  %v87 = vunpack.c.l.b16 %v24
  %v88 = vunpack.c.l.b16 %v25
  %v89 = vunpack.c.l.b16 %v26
  %v90 = vunpack.c.l.b16 %v27
  %v91 = vunpack.c.l.b16 %v28
  %v92 = vunpack.c.l.b16 %v29
  %v93 = vunpack.c.l.b16 %v30
  %v94 = vunpack.c.l.b16 %v31
  %v95 = vunpack.c.l.b16 %v32
  %v96 = vunpack.c.l.b16 %v33
  %v97 = vunpack.c.l.b16 %v34
  %v98 = vunpack.c.l.b16 %v35
  %v99 = vunpack.c.l.b16 %v36
  %v100 = vunpack.c.l.b16 %v37
  %v101 = vunpack.c.l.b16 %v38
  %v102 = vpack.c.b16 %v87, %v86
  %v103 = vpack.c.b16 %v89, %v88
  %v104 = vpack.c.b16 %v91, %v90
  %v105 = vpack.c.b16 %v93, %v92
  %v106 = vpack.c.b16 %v95, %v94
  %v107 = vpack.c.b16 %v97, %v96
  %v108 = vpack.c.b16 %v99, %v98
  %v109 = vpack.c.b16 %v101, %v100
  %118 = vmatprep.subr.bf16.mxu0 0
  %119 = vmatpush1.bf16.msra.mxu0 %v102
  %120 = vmatprep.subr.bf16.mxu0 0
  %121 = vmatpush1.bf16.msra.mxu0 %v103
  %122 = vmatprep.subr.bf16.mxu0 0
  %123 = vmatpush1.bf16.msra.mxu0 %v104
  %124 = vmatprep.subr.bf16.mxu0 0
  %125 = vmatpush1.bf16.msra.mxu0 %v105
  %126 = vmatprep.subr.bf16.mxu0 0
  %127 = vmatpush1.bf16.msra.mxu0 %v106
  %128 = vmatprep.subr.bf16.mxu0 0
  %129 = vmatpush1.bf16.msra.mxu0 %v107
  %130 = vmatprep.subr.bf16.mxu0 0
  %131 = vmatpush1.bf16.msra.mxu0 %v108
  %132 = vmatprep.subr.bf16.mxu0 0
  %133 = vmatpush1.bf16.msra.mxu0 %v109
  %134 = vmatprep.subr.bf16.mxu0 0
  %135 = vmatpush1.bf16.msra.mxu0 0
  %136 = vmatprep.subr.bf16.mxu0 0
  %137 = vmatpush1.bf16.msra.mxu0 0
  %138 = vmatprep.subr.bf16.mxu0 0
  %139 = vmatpush1.bf16.msra.mxu0 0
  %140 = vmatprep.subr.bf16.mxu0 0
  %141 = vmatpush1.bf16.msra.mxu0 0
  %142 = vmatprep.subr.bf16.mxu0 0
  %143 = vmatpush1.bf16.msra.mxu0 0
  %144 = vmatprep.subr.bf16.mxu0 0
  %145 = vmatpush1.bf16.msra.mxu0 0
  %146 = vmatprep.subr.bf16.mxu0 0
  %147 = vmatpush1.bf16.msra.mxu0 0
  %148 = vmatprep.subr.bf16.mxu0 0
  %149 = vmatpush1.bf16.msra.mxu0 0
  %150 = vmatprep.mubr.bf16.mxu0 0
  %151 = vmatmul.mubr.bf16.gmra.mrb[0].mxu0 %v62
  %v152 = vpop.f32.mrb[0].mxu0
  %v153 = vadd.f32 %v44, %v152
  %v154 = vpop.f32.mrb[0].mxu0
  %v155 = vpop.f32.mrb[0].mxu0
  %v156 = vadd.f32 %v44, %v155
  %v157 = vpop.f32.mrb[0].mxu0
  %158 = vmatprep.mubr.bf16.mxu0 0
  %159 = vmatmul.mubr.bf16.gmra.mrb[0].mxu0 %v63
  %v160 = vpop.f32.mrb[0].mxu0
  %v161 = vadd.f32 %v44, %v160
  %v162 = vpop.f32.mrb[0].mxu0
  %v163 = vpop.f32.mrb[0].mxu0
  %v164 = vadd.f32 %v44, %v163
  %v165 = vpop.f32.mrb[0].mxu0
  %166 = vmatprep.mubr.bf16.mxu0 0
  %167 = vmatmul.mubr.bf16.gmra.mrb[0].mxu0 %v64
  %v168 = vpop.f32.mrb[0].mxu0
  %v169 = vadd.f32 %v44, %v168
  %v170 = vpop.f32.mrb[0].mxu0
  %v171 = vpop.f32.mrb[0].mxu0
  %v172 = vadd.f32 %v44, %v171
  %v173 = vpop.f32.mrb[0].mxu0
  %174 = vmatprep.mubr.bf16.mxu0 0
  %175 = vmatmul.mubr.bf16.gmra.mrb[0].mxu0 %v65
  %v176 = vpop.f32.mrb[0].mxu0
  %v177 = vadd.f32 %v44, %v176
  %v178 = vpop.f32.mrb[0].mxu0
  %v179 = vpop.f32.mrb[0].mxu0
  %v180 = vadd.f32 %v44, %v179
  %v181 = vpop.f32.mrb[0].mxu0
  %182 = vdwg.mxu0
  %v183 = vpack.c.bf16 %v156, %v153
  %v184 = vpack.c.bf16 %v164, %v161
  %v185 = vpack.c.bf16 %v172, %v169
  %v186 = vpack.c.bf16 %v180, %v177
  %v191 = vunpack.c.l.b16 %v183
  %v192 = vunpack.c.h.b16 %v183
  %v193 = vunpack.c.l.b16 %v184
  %v194 = vunpack.c.h.b16 %v184
  %v195 = vunpack.c.l.b16 %v185
  %v196 = vunpack.c.h.b16 %v185
  %v197 = vunpack.c.l.b16 %v186
  %v198 = vunpack.c.h.b16 %v186
  %v199 = vpack.c.b16 %v191, %v191
  %v200 = vpack.c.b16 %v192, %v192
  %v201 = vpack.c.b16 %v193, %v193
  %v202 = vpack.c.b16 %v194, %v194
  %v203 = vpack.c.b16 %v195, %v195
  %v204 = vpack.c.b16 %v196, %v196
  %v205 = vpack.c.b16 %v197, %v197
  %v206 = vpack.c.b16 %v198, %v198
  %215 = vst [vmem:[%s3] sm:$0xf] %v199
  %216 = vst [vmem:[%s3 + $0x4] sm:$0xf] %v200
  %217 = vst [vmem:[%s3 + $0x8] sm:$0xf] %v201
  %218 = vst [vmem:[%s3 + $0xc] sm:$0xf] %v202
  %219 = vst [vmem:[%s3 + $0x10] sm:$0xf] %v203
  %220 = vst [vmem:[%s3 + $0x14] sm:$0xf] %v204
  %221 = vst [vmem:[%s3 + $0x18] sm:$0xf] %v205
  %222 = vst [vmem:[%s3 + $0x1c] sm:$0xf] %v206
  // Predicated region
  $region14: #{vision_transformer_forward.4} parent=0 // pred_check
    _
  $region15: #{vision_transformer_forward.4} parent=0 // pred_check_branch
    %224 = sbr.rel (0) target = $region17
  $region16: #{vision_transformer_forward.4} parent=0 // pred_region
    _
  $region17: #{vision_transformer_forward.4} parent=0 // pred_fallthru
    _
  // Predicated region
  $region18: #{vision_transformer_forward.4} parent=0 // pred_check
    _
  $region19: #{vision_transformer_forward.4} parent=0 // pred_check_branch
    %226 = sbr.rel (0) target = $region21
  $region20: #{vision_transformer_forward.4} parent=0 // pred_region
    _
  $region21: #{vision_transformer_forward.4} parent=0 // pred_fallthru
    _

// kernel: vision_transformer_forward.7
$region0: #{vision_transformer_forward.7}
  #allocation0 [shape = 'u32[]', space=smem, size = 0x4, offset = 0x4, fixed_abs, tag = 'smem constant byte address 0x4 - core index']
  #allocation1 [shape = 'u32[144,128]{1,0:T(1,128)}', space=vmem, size = 0x12000, scoped, tag = 'internal scratch']
  %s0 = inlined_call_operand.vmem [shape: f32[8,128], index: 0, kind: input, shape index: {}]
  %s1 = inlined_call_operand.vmem [shape: f32[1,128], index: 1, kind: input, shape index: {}]
  %s2 = inlined_call_operand.vmem [shape: f32[1,128], index: 2, kind: input, shape index: {}]
  %s3 = inlined_call_operand.vmem [shape: bf16[128,128], index: 3, kind: input, shape index: {}]
  %s4 = inlined_call_operand.vmem [shape: f32[1,128], index: 4, kind: input, shape index: {}]
  %s5 = inlined_call_operand.vmem [shape: bf16[128,128], index: 5, kind: input, shape index: {}]
  %s6 = inlined_call_operand.vmem [shape: f32[1,128], index: 6, kind: input, shape index: {}]
  %s7 = inlined_call_operand.vmem [shape: bf16[128,128], index: 7, kind: input, shape index: {}]
  %s8 = inlined_call_operand.vmem [shape: f32[1,128], index: 8, kind: input, shape index: {}]
  %s9 = inlined_call_operand.vmem [shape: f32[8,128], index: 9, kind: output, shape index: {}]
  %s10 = sld [smem:[#allocation0]]
  $region46: #{vision_transformer_forward.7} parent=0
    _
  %s12 = ssub.s32 1, %s10
  %s13 = scalar_select 0, %s12, %s10
  // Predicated region
  $region2: #{vision_transformer_forward.7} parent=0 // pred_check
    _
  $region3: #{vision_transformer_forward.7} parent=0 // pred_check_branch
    %15 = sbr.rel (0) target = $region5
  $region4: #{vision_transformer_forward.7} parent=0 // pred_region
    _
  $region5: #{vision_transformer_forward.7} parent=0 // pred_fallthru
    _
  // Predicated region
  $region6: #{vision_transformer_forward.7} parent=0 // pred_check
    _
  $region7: #{vision_transformer_forward.7} parent=0 // pred_check_branch
    %17 = sbr.rel (0) target = $region9
  $region8: #{vision_transformer_forward.7} parent=0 // pred_region
    _
  $region9: #{vision_transformer_forward.7} parent=0 // pred_fallthru
    _
  // Predicated region
  $region10: #{vision_transformer_forward.7} parent=0 // pred_check
    _
  $region11: #{vision_transformer_forward.7} parent=0 // pred_check_branch
    %19 = sbr.rel (0) target = $region13
  $region12: #{vision_transformer_forward.7} parent=0 // pred_region
    _
  $region13: #{vision_transformer_forward.7} parent=0 // pred_fallthru
    _
  // Predicated region
  $region14: #{vision_transformer_forward.7} parent=0 // pred_check
    _
  $region15: #{vision_transformer_forward.7} parent=0 // pred_check_branch
    %21 = sbr.rel (0) target = $region17
  $region16: #{vision_transformer_forward.7} parent=0 // pred_region
    _
  $region17: #{vision_transformer_forward.7} parent=0 // pred_fallthru
    _
  // Predicated region
  $region18: #{vision_transformer_forward.7} parent=0 // pred_check
    _
  $region19: #{vision_transformer_forward.7} parent=0 // pred_check_branch
    %23 = sbr.rel (0) target = $region21
  $region20: #{vision_transformer_forward.7} parent=0 // pred_region
    _
  $region21: #{vision_transformer_forward.7} parent=0 // pred_fallthru
    _
  // Predicated region
  $region22: #{vision_transformer_forward.7} parent=0 // pred_check
    _
  $region23: #{vision_transformer_forward.7} parent=0 // pred_check_branch
    %25 = sbr.rel (0) target = $region25
  $region24: #{vision_transformer_forward.7} parent=0 // pred_region
    _
  $region25: #{vision_transformer_forward.7} parent=0 // pred_fallthru
    _
  // Predicated region
  $region26: #{vision_transformer_forward.7} parent=0 // pred_check
    _
  $region27: #{vision_transformer_forward.7} parent=0 // pred_check_branch
    %27 = sbr.rel (0) target = $region29
  $region28: #{vision_transformer_forward.7} parent=0 // pred_region
    _
  $region29: #{vision_transformer_forward.7} parent=0 // pred_fallthru
    _
  // Predicated region
  $region30: #{vision_transformer_forward.7} parent=0 // pred_check
    _
  $region31: #{vision_transformer_forward.7} parent=0 // pred_check_branch
    %29 = sbr.rel (0) target = $region33
  $region32: #{vision_transformer_forward.7} parent=0 // pred_region
    _
  $region33: #{vision_transformer_forward.7} parent=0 // pred_fallthru
    _
  // Predicated region
  $region34: #{vision_transformer_forward.7} parent=0 // pred_check
    _
  $region35: #{vision_transformer_forward.7} parent=0 // pred_check_branch
    %31 = sbr.rel (0) target = $region37
  $region36: #{vision_transformer_forward.7} parent=0 // pred_region
    _
  $region37: #{vision_transformer_forward.7} parent=0 // pred_fallthru
    _
  %v33 = vld [vmem:[%s0] sm:$0xff]
  %v34 = vld [vmem:[%s1] sm:$0x1]
  %v35 = vld [vmem:[%s2] sm:$0x1]
  %36 = vadd.xlane.f32.xlu0 %v33
  %v37 = vpop.xlane.xlu0 %36
  %v38 = vrcp.pop 128.0
  %v39 = vmul.f32 %v37, %v38
  %v40 = vsub.f32 %v33, %v39
  %v41 = vmul.f32 %v40, %v40
  %42 = vadd.xlane.f32.xlu0 %v41
  %v43 = vpop.xlane.xlu0 %42
  %v44 = vmul.f32 %v43, %v38
  %v45 = vadd.f32 %v44, 1e-06
  %v46 = vrsqrt.pop %v45
  %v47 = vmul.f32 %v40, %v46
  %v49 = vlaneseq
  %v50 = vshrl.u32 %v49, 7
  %v51 = vsub.s32 0, %v50
  %v52 = vrot.slane %v34, %v51
  %v54 = vmul.f32 %v47, %v52
  %v56 = vlaneseq
  %v57 = vshrl.u32 %v56, 7
  %v58 = vsub.s32 0, %v57
  %v59 = vrot.slane %v35, %v58
  %v61 = vadd.f32 %v54, %v59
  %v62 = vpack.c.bf16 %v61, %v61
  %v63 = vld [vmem:[%s3] sm:$0xf]
  %v64 = vld [vmem:[%s3 + $0x4] sm:$0xf]
  %v65 = vld [vmem:[%s3 + $0x8] sm:$0xf]
  %v66 = vld [vmem:[%s3 + $0xc] sm:$0xf]
  %v67 = vld [vmem:[%s3 + $0x10] sm:$0xf]
  %v68 = vld [vmem:[%s3 + $0x14] sm:$0xf]
  %v69 = vld [vmem:[%s3 + $0x18] sm:$0xf]
  %v70 = vld [vmem:[%s3 + $0x1c] sm:$0xf]
  %v71 = vld [vmem:[%s3 + $0x20] sm:$0xf]
  %v72 = vld [vmem:[%s3 + $0x24] sm:$0xf]
  %v73 = vld [vmem:[%s3 + $0x28] sm:$0xf]
  %v74 = vld [vmem:[%s3 + $0x2c] sm:$0xf]
  %v75 = vld [vmem:[%s3 + $0x30] sm:$0xf]
  %v76 = vld [vmem:[%s3 + $0x34] sm:$0xf]
  %v77 = vld [vmem:[%s3 + $0x38] sm:$0xf]
  %v78 = vld [vmem:[%s3 + $0x3c] sm:$0xf]
  %v79 = vld [vmem:[%s4] sm:$0x1]
  %v81 = vlaneseq
  %v82 = vshrl.u32 %v81, 7
  %v83 = vsub.s32 0, %v82
  %v84 = vrot.slane %v79, %v83
  %v102 = vunpack.c.l.b16 %v63
  %v103 = vunpack.c.l.b16 %v64
  %v104 = vunpack.c.l.b16 %v65
  %v105 = vunpack.c.l.b16 %v66
  %v106 = vunpack.c.l.b16 %v67
  %v107 = vunpack.c.l.b16 %v68
  %v108 = vunpack.c.l.b16 %v69
  %v109 = vunpack.c.l.b16 %v70
  %v110 = vunpack.c.l.b16 %v71
  %v111 = vunpack.c.l.b16 %v72
  %v112 = vunpack.c.l.b16 %v73
  %v113 = vunpack.c.l.b16 %v74
  %v114 = vunpack.c.l.b16 %v75
  %v115 = vunpack.c.l.b16 %v76
  %v116 = vunpack.c.l.b16 %v77
  %v117 = vunpack.c.l.b16 %v78
  %v118 = vpack.c.b16 %v103, %v102
  %v119 = vpack.c.b16 %v105, %v104
  %v120 = vpack.c.b16 %v107, %v106
  %v121 = vpack.c.b16 %v109, %v108
  %v122 = vpack.c.b16 %v111, %v110
  %v123 = vpack.c.b16 %v113, %v112
  %v124 = vpack.c.b16 %v115, %v114
  %v125 = vpack.c.b16 %v117, %v116
  %134 = vmatprep.subr.bf16.mxu0 0
  %135 = vmatpush1.bf16.msra.mxu0 %v118
  %136 = vmatprep.subr.bf16.mxu0 0
  %137 = vmatpush1.bf16.msra.mxu0 %v119
  %138 = vmatprep.subr.bf16.mxu0 0
  %139 = vmatpush1.bf16.msra.mxu0 %v120
  %140 = vmatprep.subr.bf16.mxu0 0
  %141 = vmatpush1.bf16.msra.mxu0 %v121
  %142 = vmatprep.subr.bf16.mxu0 0
  %143 = vmatpush1.bf16.msra.mxu0 %v122
  %144 = vmatprep.subr.bf16.mxu0 0
  %145 = vmatpush1.bf16.msra.mxu0 %v123
  %146 = vmatprep.subr.bf16.mxu0 0
  %147 = vmatpush1.bf16.msra.mxu0 %v124
  %148 = vmatprep.subr.bf16.mxu0 0
  %149 = vmatpush1.bf16.msra.mxu0 %v125
  %150 = vmatprep.subr.bf16.mxu0 0
  %151 = vmatpush1.bf16.msra.mxu0 0
  %152 = vmatprep.subr.bf16.mxu0 0
  %153 = vmatpush1.bf16.msra.mxu0 0
  %154 = vmatprep.subr.bf16.mxu0 0
  %155 = vmatpush1.bf16.msra.mxu0 0
  %156 = vmatprep.subr.bf16.mxu0 0
  %157 = vmatpush1.bf16.msra.mxu0 0
  %158 = vmatprep.subr.bf16.mxu0 0
  %159 = vmatpush1.bf16.msra.mxu0 0
  %160 = vmatprep.subr.bf16.mxu0 0
  %161 = vmatpush1.bf16.msra.mxu0 0
  %162 = vmatprep.subr.bf16.mxu0 0
  %163 = vmatpush1.bf16.msra.mxu0 0
  %164 = vmatprep.subr.bf16.mxu0 0
  %165 = vmatpush1.bf16.msra.mxu0 0
  %166 = vmatprep.mubr.bf16.mxu0 0
  %167 = vmatmul.mubr.bf16.gmra.mrb[0].mxu0 %v62
  %v168 = vpop.f32.mrb[0].mxu0
  %v169 = vadd.f32 %v84, %v168
  %v170 = vpop.f32.mrb[0].mxu0
  %v171 = vpop.f32.mrb[0].mxu0
  %v172 = vpop.f32.mrb[0].mxu0
  %173 = vdwg.mxu0
  %v174 = vmax.f32 %v169, 0.0
  %v175 = vpack.c.bf16 %v174, %v174
  %v176 = vld [vmem:[%s5] sm:$0xf]
  %v177 = vld [vmem:[%s5 + $0x4] sm:$0xf]
  %v178 = vld [vmem:[%s5 + $0x8] sm:$0xf]
  %v179 = vld [vmem:[%s5 + $0xc] sm:$0xf]
  %v180 = vld [vmem:[%s5 + $0x10] sm:$0xf]
  %v181 = vld [vmem:[%s5 + $0x14] sm:$0xf]
  %v182 = vld [vmem:[%s5 + $0x18] sm:$0xf]
  %v183 = vld [vmem:[%s5 + $0x1c] sm:$0xf]
  %v184 = vld [vmem:[%s5 + $0x20] sm:$0xf]
  %v185 = vld [vmem:[%s5 + $0x24] sm:$0xf]
  %v186 = vld [vmem:[%s5 + $0x28] sm:$0xf]
  %v187 = vld [vmem:[%s5 + $0x2c] sm:$0xf]
  %v188 = vld [vmem:[%s5 + $0x30] sm:$0xf]
  %v189 = vld [vmem:[%s5 + $0x34] sm:$0xf]
  %v190 = vld [vmem:[%s5 + $0x38] sm:$0xf]
  %v191 = vld [vmem:[%s5 + $0x3c] sm:$0xf]
  %v192 = vld [vmem:[%s6] sm:$0x1]
  %v194 = vlaneseq
  %v195 = vshrl.u32 %v194, 7
  %v196 = vsub.s32 0, %v195
  %v197 = vrot.slane %v192, %v196
  %v215 = vunpack.c.l.b16 %v176
  %v216 = vunpack.c.l.b16 %v177
  %v217 = vunpack.c.l.b16 %v178
  %v218 = vunpack.c.l.b16 %v179
  %v219 = vunpack.c.l.b16 %v180
  %v220 = vunpack.c.l.b16 %v181
  %v221 = vunpack.c.l.b16 %v182
  %v222 = vunpack.c.l.b16 %v183
  %v223 = vunpack.c.l.b16 %v184
  %v224 = vunpack.c.l.b16 %v185
  %v225 = vunpack.c.l.b16 %v186
  %v226 = vunpack.c.l.b16 %v187
  %v227 = vunpack.c.l.b16 %v188
  %v228 = vunpack.c.l.b16 %v189
  %v229 = vunpack.c.l.b16 %v190
  %v230 = vunpack.c.l.b16 %v191
  %v231 = vpack.c.b16 %v216, %v215
  %v232 = vpack.c.b16 %v218, %v217
  %v233 = vpack.c.b16 %v220, %v219
  %v234 = vpack.c.b16 %v222, %v221
  %v235 = vpack.c.b16 %v224, %v223
  %v236 = vpack.c.b16 %v226, %v225
  %v237 = vpack.c.b16 %v228, %v227
  %v238 = vpack.c.b16 %v230, %v229
  %247 = vmatprep.subr.bf16.mxu0 0
  %248 = vmatpush1.bf16.msra.mxu0 %v231
  %249 = vmatprep.subr.bf16.mxu0 0
  %250 = vmatpush1.bf16.msra.mxu0 %v232
  %251 = vmatprep.subr.bf16.mxu0 0
  %252 = vmatpush1.bf16.msra.mxu0 %v233
  %253 = vmatprep.subr.bf16.mxu0 0
  %254 = vmatpush1.bf16.msra.mxu0 %v234
  %255 = vmatprep.subr.bf16.mxu0 0
  %256 = vmatpush1.bf16.msra.mxu0 %v235
  %257 = vmatprep.subr.bf16.mxu0 0
  %258 = vmatpush1.bf16.msra.mxu0 %v236
  %259 = vmatprep.subr.bf16.mxu0 0
  %260 = vmatpush1.bf16.msra.mxu0 %v237
  %261 = vmatprep.subr.bf16.mxu0 0
  %262 = vmatpush1.bf16.msra.mxu0 %v238
  %263 = vmatprep.subr.bf16.mxu0 0
  %264 = vmatpush1.bf16.msra.mxu0 0
  %265 = vmatprep.subr.bf16.mxu0 0
  %266 = vmatpush1.bf16.msra.mxu0 0
  %267 = vmatprep.subr.bf16.mxu0 0
  %268 = vmatpush1.bf16.msra.mxu0 0
  %269 = vmatprep.subr.bf16.mxu0 0
  %270 = vmatpush1.bf16.msra.mxu0 0
  %271 = vmatprep.subr.bf16.mxu0 0
  %272 = vmatpush1.bf16.msra.mxu0 0
  %273 = vmatprep.subr.bf16.mxu0 0
  %274 = vmatpush1.bf16.msra.mxu0 0
  %275 = vmatprep.subr.bf16.mxu0 0
  %276 = vmatpush1.bf16.msra.mxu0 0
  %277 = vmatprep.subr.bf16.mxu0 0
  %278 = vmatpush1.bf16.msra.mxu0 0
  %279 = vmatprep.mubr.bf16.mxu0 0
  %280 = vmatmul.mubr.bf16.gmra.mrb[0].mxu0 %v175
  %v281 = vpop.f32.mrb[0].mxu0
  %v282 = vadd.f32 %v197, %v281
  %v283 = vpop.f32.mrb[0].mxu0
  %v284 = vpop.f32.mrb[0].mxu0
  %v285 = vpop.f32.mrb[0].mxu0
  %286 = vdwg.mxu0
  %v287 = vmax.f32 %v282, 0.0
  %v288 = vpack.c.bf16 %v287, %v287
  %v289 = vld [vmem:[%s7] sm:$0xf]
  %v290 = vld [vmem:[%s7 + $0x4] sm:$0xf]
  %v291 = vld [vmem:[%s7 + $0x8] sm:$0xf]
  %v292 = vld [vmem:[%s7 + $0xc] sm:$0xf]
  %v293 = vld [vmem:[%s7 + $0x10] sm:$0xf]
  %v294 = vld [vmem:[%s7 + $0x14] sm:$0xf]
  %v295 = vld [vmem:[%s7 + $0x18] sm:$0xf]
  %v296 = vld [vmem:[%s7 + $0x1c] sm:$0xf]
  %v297 = vld [vmem:[%s7 + $0x20] sm:$0xf]
  %v298 = vld [vmem:[%s7 + $0x24] sm:$0xf]
  %v299 = vld [vmem:[%s7 + $0x28] sm:$0xf]
  %v300 = vld [vmem:[%s7 + $0x2c] sm:$0xf]
  %v301 = vld [vmem:[%s7 + $0x30] sm:$0xf]
  %v302 = vld [vmem:[%s7 + $0x34] sm:$0xf]
  %v303 = vld [vmem:[%s7 + $0x38] sm:$0xf]
  %v304 = vld [vmem:[%s7 + $0x3c] sm:$0xf]
  %v305 = vld [vmem:[%s8] sm:$0x1]
  %v307 = vlaneseq
  %v308 = vshrl.u32 %v307, 7
  %v309 = vsub.s32 0, %v308
  %v310 = vrot.slane %v305, %v309
  %v328 = vunpack.c.l.b16 %v289
  %v329 = vunpack.c.l.b16 %v290
  %v330 = vunpack.c.l.b16 %v291
  %v331 = vunpack.c.l.b16 %v292
  %v332 = vunpack.c.l.b16 %v293
  %v333 = vunpack.c.l.b16 %v294
  %v334 = vunpack.c.l.b16 %v295
  %v335 = vunpack.c.l.b16 %v296
  %v336 = vunpack.c.l.b16 %v297
  %v337 = vunpack.c.l.b16 %v298
  %v338 = vunpack.c.l.b16 %v299
  %v339 = vunpack.c.l.b16 %v300
  %v340 = vunpack.c.l.b16 %v301
  %v341 = vunpack.c.l.b16 %v302
  %v342 = vunpack.c.l.b16 %v303
  %v343 = vunpack.c.l.b16 %v304
  %v344 = vpack.c.b16 %v329, %v328
  %v345 = vpack.c.b16 %v331, %v330
  %v346 = vpack.c.b16 %v333, %v332
  %v347 = vpack.c.b16 %v335, %v334
  %v348 = vpack.c.b16 %v337, %v336
  %v349 = vpack.c.b16 %v339, %v338
  %v350 = vpack.c.b16 %v341, %v340
  %v351 = vpack.c.b16 %v343, %v342
  %360 = vmatprep.subr.bf16.mxu0 0
  %361 = vmatpush1.bf16.msra.mxu0 %v344
  %362 = vmatprep.subr.bf16.mxu0 0
  %363 = vmatpush1.bf16.msra.mxu0 %v345
  %364 = vmatprep.subr.bf16.mxu0 0
  %365 = vmatpush1.bf16.msra.mxu0 %v346
  %366 = vmatprep.subr.bf16.mxu0 0
  %367 = vmatpush1.bf16.msra.mxu0 %v347
  %368 = vmatprep.subr.bf16.mxu0 0
  %369 = vmatpush1.bf16.msra.mxu0 %v348
  %370 = vmatprep.subr.bf16.mxu0 0
  %371 = vmatpush1.bf16.msra.mxu0 %v349
  %372 = vmatprep.subr.bf16.mxu0 0
  %373 = vmatpush1.bf16.msra.mxu0 %v350
  %374 = vmatprep.subr.bf16.mxu0 0
  %375 = vmatpush1.bf16.msra.mxu0 %v351
  %376 = vmatprep.subr.bf16.mxu0 0
  %377 = vmatpush1.bf16.msra.mxu0 0
  %378 = vmatprep.subr.bf16.mxu0 0
  %379 = vmatpush1.bf16.msra.mxu0 0
  %380 = vmatprep.subr.bf16.mxu0 0
  %381 = vmatpush1.bf16.msra.mxu0 0
  %382 = vmatprep.subr.bf16.mxu0 0
  %383 = vmatpush1.bf16.msra.mxu0 0
  %384 = vmatprep.subr.bf16.mxu0 0
  %385 = vmatpush1.bf16.msra.mxu0 0
  %386 = vmatprep.subr.bf16.mxu0 0
  %387 = vmatpush1.bf16.msra.mxu0 0
  %388 = vmatprep.subr.bf16.mxu0 0
  %389 = vmatpush1.bf16.msra.mxu0 0
  %390 = vmatprep.subr.bf16.mxu0 0
  %391 = vmatpush1.bf16.msra.mxu0 0
  %392 = vmatprep.mubr.bf16.mxu0 0
  %393 = vmatmul.mubr.bf16.gmra.mrb[0].mxu0 %v288
  %v394 = vpop.f32.mrb[0].mxu0
  %v395 = vadd.f32 %v310, %v394
  %v396 = vpop.f32.mrb[0].mxu0
  %v397 = vpop.f32.mrb[0].mxu0
  %v398 = vpop.f32.mrb[0].mxu0
  %399 = vdwg.mxu0
  %v400 = vsub.f32 0.0, %v395
  %v401 = vmul.f32 %v400, 1.442695
  %v402 = vpow.pop %v401
  %v403 = vadd.f32 %v402, 1.0
  %v404 = vrcp.pop %v403
  %v405 = vmul.f32 1.0, %v404
  %406 = vst [vmem:[%s9] sm:$0xff] %v405
  // Predicated region
  $region38: #{vision_transformer_forward.7} parent=0 // pred_check
    _
  $region39: #{vision_transformer_forward.7} parent=0 // pred_check_branch
    %408 = sbr.rel (0) target = $region41
  $region40: #{vision_transformer_forward.7} parent=0 // pred_region
    _
  $region41: #{vision_transformer_forward.7} parent=0 // pred_fallthru
    _
  // Predicated region
  $region42: #{vision_transformer_forward.7} parent=0 // pred_check
    _
  $region43: #{vision_transformer_forward.7} parent=0 // pred_check_branch
    %410 = sbr.rel (0) target = $region45
  $region44: #{vision_transformer_forward.7} parent=0 // pred_region
    _
  $region45: #{vision_transformer_forward.7} parent=0 // pred_fallthru
    _

// kernel: vision_transformer_forward.5
$region0: #{vision_transformer_forward.5}
  #allocation0 [shape = 'u32[]', space=smem, size = 0x4, offset = 0x4, fixed_abs, tag = 'smem constant byte address 0x4 - core index']
  #allocation1 [shape = 'u32[144,128]{1,0:T(1,128)}', space=vmem, size = 0x12000, scoped, tag = 'internal scratch']
  #allocation2 [shape = 'bf16[2,128,256]{2,1,0:T(16,128)(2,1)}', space=vmem, size = 0x20000, scoped, tag = 'scratch operand']
  #allocation3 [shape = 'bf16[2,128,256]{2,1,0:T(16,128)(2,1)}', space=vmem, size = 0x20000, scoped, tag = 'scratch operand']
  #allocation4 [shape = 'bf16[2,128,256]{2,1,0:T(16,128)(2,1)}', space=vmem, size = 0x20000, scoped, tag = 'scratch operand']
  #allocation5 [shape = 'bf16[2,128,256]{2,1,0:T(16,128)(2,1)}', space=vmem, size = 0x20000, scoped, tag = 'scratch operand']
  %s0 = inlined_call_operand.vmem [shape: f32[4,128,128], index: 0, kind: input, shape index: {}, may-alias: {0,13}]
  %s1 = inlined_call_operand.vmem [shape: f32[1,128], index: 1, kind: input, shape index: {}]
  %s2 = inlined_call_operand.vmem [shape: f32[1,128], index: 2, kind: input, shape index: {}]
  %s3 = inlined_call_operand.vmem [shape: bf16[128,768], index: 3, kind: input, shape index: {}]
  %s4 = inlined_call_operand.vmem [shape: f32[1,768], index: 4, kind: input, shape index: {}]
  %s5 = inlined_call_operand.vmem [shape: bf16[256,128], index: 5, kind: input, shape index: {}]
  %s6 = inlined_call_operand.vmem [shape: f32[1,128], index: 6, kind: input, shape index: {}]
  %s7 = inlined_call_operand.vmem [shape: f32[1,128], index: 7, kind: input, shape index: {}]
  %s8 = inlined_call_operand.vmem [shape: f32[1,128], index: 8, kind: input, shape index: {}]
  %s9 = inlined_call_operand.vmem [shape: bf16[128,512], index: 9, kind: input, shape index: {}]
  %s10 = inlined_call_operand.vmem [shape: f32[1,512], index: 10, kind: input, shape index: {}]
  %s11 = inlined_call_operand.vmem [shape: bf16[512,128], index: 11, kind: input, shape index: {}]
  %s12 = inlined_call_operand.vmem [shape: f32[1,128], index: 12, kind: input, shape index: {}]
  %s13 = inlined_call_operand.vmem [shape: f32[4,128,128], index: 13, kind: output, shape index: {}, may-alias: {0,13}]
  %s14 = sld [smem:[#allocation0]]
  $region92: #{vision_transformer_forward.5} parent=0
    _
  %s16 = ssub.s32 1, %s14
  %s17 = scalar_select 0, %s16, %s14
  loop: start=0, step=1, limit=4
  $region2: #{vision_transformer_forward.5} parent=0 // loop_pre_header
    _
  $region3: #{vision_transformer_forward.5} parent=0 // loop_header
    %s19 = sphi 0, %s23
    %p20 = scmp.ge.s32.totalorder %s19, 4
    %s29 = sphi 0, %s31
    %s32 = sphi 0, %s29
    %s33 = sphi 0, %s32
    %s49 = sphi 0, %s33
    %s53 = sphi 0, %s53
    %s55 = sphi 0, %s53
    %s56 = sphi 0, %s55
    %s70 = sphi 0, %s56
    %s74 = sphi 0, %s74
    %s76 = sphi 0, %s74
    %s77 = sphi 0, %s76
    %s91 = sphi 0, %s77
    %s95 = sphi 0, %s95
    %s97 = sphi 0, %s95
    %s98 = sphi 0, %s97
    %s112 = sphi 0, %s98
    %s116 = sphi 0, %s116
    %s118 = sphi 0, %s116
    %s119 = sphi 0, %s118
    %s133 = sphi 0, %s119
    %s137 = sphi 0, %s137
    %s139 = sphi 0, %s137
    %s140 = sphi 0, %s139
    %s154 = sphi 0, %s140
    %s158 = sphi 0, %s158
    %s160 = sphi 0, %s158
    %s161 = sphi 0, %s160
    %s175 = sphi 0, %s161
    %s179 = sphi 0, %s179
    %s181 = sphi 0, %s179
    %s182 = sphi 0, %s181
    %s196 = sphi 0, %s182
    %s200 = sphi 0, %s200
    %s202 = sphi 0, %s200
    %s203 = sphi 0, %s202
    %s217 = sphi 0, %s203
    %s221 = sphi 0, %s221
    %s223 = sphi 0, %s221
    %s224 = sphi 0, %s223
    %s238 = sphi 0, %s224
    %s242 = sphi 0, %s242
    %s244 = sphi 0, %s242
    %s245 = sphi 0, %s244
    %s259 = sphi 0, %s245
    %s263 = sphi 0, %s263
    %s265 = sphi 0, %s263
    %s266 = sphi 0, %s265
    %s280 = sphi 0, %s266
    %s284 = sphi 0, %s284
    %s286 = sphi 0, %s284
    %s287 = sphi 0, %s286
    %s301 = sphi 0, %s287
    %s307 = sphi 0, %s309
    %s310 = sphi 0, %s307
    %s311 = sphi 0, %s310
    %s327 = sphi 0, %s311
  $region4: #{vision_transformer_forward.5} parent=0 // loop_header_branch
    %22 = sbr.rel (%p20) target = $region8
  $region5: #{vision_transformer_forward.5} parent=0 // loop_body
    %s24 = ssub.s32 %s19, 1
    %s25 = ssub.s32 %s19, 2
    %s26 = sadd.s32 %s19, 1
    %s27 = ssub.s32 %s19, %s26
    %p28 = scmp.eq.s32.totalorder %s27, 0
    %s30 = sadd.s32 %s29, 1
    %s31 = scalar_select %p28, %s29, %s30
    %p34 = pneg %p28
    %p35 = scmp.eq.s32.totalorder %s19, 1
    %p36 = por %p34, %p35
    %p37 = scmp.ne.s32.totalorder %s29, %s32
    %p38 = scmp.eq.s32.totalorder %s19, 0
    %p39 = por %p37, %p38
    %p40 = scmp.ne.s32.totalorder %s29, %s32
    %p41 = scmp.eq.s32.totalorder %s24, 1
    %p42 = por %p40, %p41
    %p43 = scmp.ne.s32.totalorder %s32, %s33
    %p44 = scmp.eq.s32.totalorder %s24, 0
    %p45 = por %p43, %p44
    %p46 = scmp.ne.s32.totalorder %s32, %s33
    %p47 = scmp.eq.s32.totalorder %s25, 1
    %p48 = por %p46, %p47
    %p50 = scmp.ne.s32.totalorder %s33, %s49
    %p51 = scmp.eq.s32.totalorder %s25, 0
    %p52 = por %p50, %p51
    %s54 = sadd.s32 %s53, 1
    %p57 = scmp.eq.s32.totalorder %s19, 1
    %p58 = scmp.ne.s32.totalorder %s53, %s55
    %p59 = scmp.eq.s32.totalorder %s19, 0
    %p60 = por %p58, %p59
    %p61 = scmp.ne.s32.totalorder %s53, %s55
    %p62 = scmp.eq.s32.totalorder %s24, 1
    %p63 = por %p61, %p62
    %p64 = scmp.ne.s32.totalorder %s55, %s56
    %p65 = scmp.eq.s32.totalorder %s24, 0
    %p66 = por %p64, %p65
    %p67 = scmp.ne.s32.totalorder %s55, %s56
    %p68 = scmp.eq.s32.totalorder %s25, 1
    %p69 = por %p67, %p68
    %p71 = scmp.ne.s32.totalorder %s56, %s70
    %p72 = scmp.eq.s32.totalorder %s25, 0
    %p73 = por %p71, %p72
    %s75 = sadd.s32 %s74, 1
    %p78 = scmp.eq.s32.totalorder %s19, 1
    %p79 = scmp.ne.s32.totalorder %s74, %s76
    %p80 = scmp.eq.s32.totalorder %s19, 0
    %p81 = por %p79, %p80
    %p82 = scmp.ne.s32.totalorder %s74, %s76
    %p83 = scmp.eq.s32.totalorder %s24, 1
    %p84 = por %p82, %p83
    %p85 = scmp.ne.s32.totalorder %s76, %s77
    %p86 = scmp.eq.s32.totalorder %s24, 0
    %p87 = por %p85, %p86
    %p88 = scmp.ne.s32.totalorder %s76, %s77
    %p89 = scmp.eq.s32.totalorder %s25, 1
    %p90 = por %p88, %p89
    %p92 = scmp.ne.s32.totalorder %s77, %s91
    %p93 = scmp.eq.s32.totalorder %s25, 0
    %p94 = por %p92, %p93
    %s96 = sadd.s32 %s95, 1
    %p99 = scmp.eq.s32.totalorder %s19, 1
    %p100 = scmp.ne.s32.totalorder %s95, %s97
    %p101 = scmp.eq.s32.totalorder %s19, 0
    %p102 = por %p100, %p101
    %p103 = scmp.ne.s32.totalorder %s95, %s97
    %p104 = scmp.eq.s32.totalorder %s24, 1
    %p105 = por %p103, %p104
    %p106 = scmp.ne.s32.totalorder %s97, %s98
    %p107 = scmp.eq.s32.totalorder %s24, 0
    %p108 = por %p106, %p107
    %p109 = scmp.ne.s32.totalorder %s97, %s98
    %p110 = scmp.eq.s32.totalorder %s25, 1
    %p111 = por %p109, %p110
    %p113 = scmp.ne.s32.totalorder %s98, %s112
    %p114 = scmp.eq.s32.totalorder %s25, 0
    %p115 = por %p113, %p114
    %s117 = sadd.s32 %s116, 1
    %p120 = scmp.eq.s32.totalorder %s19, 1
    %p121 = scmp.ne.s32.totalorder %s116, %s118
    %p122 = scmp.eq.s32.totalorder %s19, 0
    %p123 = por %p121, %p122
    %p124 = scmp.ne.s32.totalorder %s116, %s118
    %p125 = scmp.eq.s32.totalorder %s24, 1
    %p126 = por %p124, %p125
    %p127 = scmp.ne.s32.totalorder %s118, %s119
    %p128 = scmp.eq.s32.totalorder %s24, 0
    %p129 = por %p127, %p128
    %p130 = scmp.ne.s32.totalorder %s118, %s119
    %p131 = scmp.eq.s32.totalorder %s25, 1
    %p132 = por %p130, %p131
    %p134 = scmp.ne.s32.totalorder %s119, %s133
    %p135 = scmp.eq.s32.totalorder %s25, 0
    %p136 = por %p134, %p135
    %s138 = sadd.s32 %s137, 1
    %p141 = scmp.eq.s32.totalorder %s19, 1
    %p142 = scmp.ne.s32.totalorder %s137, %s139
    %p143 = scmp.eq.s32.totalorder %s19, 0
    %p144 = por %p142, %p143
    %p145 = scmp.ne.s32.totalorder %s137, %s139
    %p146 = scmp.eq.s32.totalorder %s24, 1
    %p147 = por %p145, %p146
    %p148 = scmp.ne.s32.totalorder %s139, %s140
    %p149 = scmp.eq.s32.totalorder %s24, 0
    %p150 = por %p148, %p149
    %p151 = scmp.ne.s32.totalorder %s139, %s140
    %p152 = scmp.eq.s32.totalorder %s25, 1
    %p153 = por %p151, %p152
    %p155 = scmp.ne.s32.totalorder %s140, %s154
    %p156 = scmp.eq.s32.totalorder %s25, 0
    %p157 = por %p155, %p156
    %s159 = sadd.s32 %s158, 1
    %p162 = scmp.eq.s32.totalorder %s19, 1
    %p163 = scmp.ne.s32.totalorder %s158, %s160
    %p164 = scmp.eq.s32.totalorder %s19, 0
    %p165 = por %p163, %p164
    %p166 = scmp.ne.s32.totalorder %s158, %s160
    %p167 = scmp.eq.s32.totalorder %s24, 1
    %p168 = por %p166, %p167
    %p169 = scmp.ne.s32.totalorder %s160, %s161
    %p170 = scmp.eq.s32.totalorder %s24, 0
    %p171 = por %p169, %p170
    %p172 = scmp.ne.s32.totalorder %s160, %s161
    %p173 = scmp.eq.s32.totalorder %s25, 1
    %p174 = por %p172, %p173
    %p176 = scmp.ne.s32.totalorder %s161, %s175
    %p177 = scmp.eq.s32.totalorder %s25, 0
    %p178 = por %p176, %p177
    %s180 = sadd.s32 %s179, 1
    %p183 = scmp.eq.s32.totalorder %s19, 1
    %p184 = scmp.ne.s32.totalorder %s179, %s181
    %p185 = scmp.eq.s32.totalorder %s19, 0
    %p186 = por %p184, %p185
    %p187 = scmp.ne.s32.totalorder %s179, %s181
    %p188 = scmp.eq.s32.totalorder %s24, 1
    %p189 = por %p187, %p188
    %p190 = scmp.ne.s32.totalorder %s181, %s182
    %p191 = scmp.eq.s32.totalorder %s24, 0
    %p192 = por %p190, %p191
    %p193 = scmp.ne.s32.totalorder %s181, %s182
    %p194 = scmp.eq.s32.totalorder %s25, 1
    %p195 = por %p193, %p194
    %p197 = scmp.ne.s32.totalorder %s182, %s196
    %p198 = scmp.eq.s32.totalorder %s25, 0
    %p199 = por %p197, %p198
    %s201 = sadd.s32 %s200, 1
    %p204 = scmp.eq.s32.totalorder %s19, 1
    %p205 = scmp.ne.s32.totalorder %s200, %s202
    %p206 = scmp.eq.s32.totalorder %s19, 0
    %p207 = por %p205, %p206
    %p208 = scmp.ne.s32.totalorder %s200, %s202
    %p209 = scmp.eq.s32.totalorder %s24, 1
    %p210 = por %p208, %p209
    %p211 = scmp.ne.s32.totalorder %s202, %s203
    %p212 = scmp.eq.s32.totalorder %s24, 0
    %p213 = por %p211, %p212
    %p214 = scmp.ne.s32.totalorder %s202, %s203
    %p215 = scmp.eq.s32.totalorder %s25, 1
    %p216 = por %p214, %p215
    %p218 = scmp.ne.s32.totalorder %s203, %s217
    %p219 = scmp.eq.s32.totalorder %s25, 0
    %p220 = por %p218, %p219
    %s222 = sadd.s32 %s221, 1
    %p225 = scmp.eq.s32.totalorder %s19, 1
    %p226 = scmp.ne.s32.totalorder %s221, %s223
    %p227 = scmp.eq.s32.totalorder %s19, 0
    %p228 = por %p226, %p227
    %p229 = scmp.ne.s32.totalorder %s221, %s223
    %p230 = scmp.eq.s32.totalorder %s24, 1
    %p231 = por %p229, %p230
    %p232 = scmp.ne.s32.totalorder %s223, %s224
    %p233 = scmp.eq.s32.totalorder %s24, 0
    %p234 = por %p232, %p233
    %p235 = scmp.ne.s32.totalorder %s223, %s224
    %p236 = scmp.eq.s32.totalorder %s25, 1
    %p237 = por %p235, %p236
    %p239 = scmp.ne.s32.totalorder %s224, %s238
    %p240 = scmp.eq.s32.totalorder %s25, 0
    %p241 = por %p239, %p240
    %s243 = sadd.s32 %s242, 1
    %p246 = scmp.eq.s32.totalorder %s19, 1
    %p247 = scmp.ne.s32.totalorder %s242, %s244
    %p248 = scmp.eq.s32.totalorder %s19, 0
    %p249 = por %p247, %p248
    %p250 = scmp.ne.s32.totalorder %s242, %s244
    %p251 = scmp.eq.s32.totalorder %s24, 1
    %p252 = por %p250, %p251
    %p253 = scmp.ne.s32.totalorder %s244, %s245
    %p254 = scmp.eq.s32.totalorder %s24, 0
    %p255 = por %p253, %p254
    %p256 = scmp.ne.s32.totalorder %s244, %s245
    %p257 = scmp.eq.s32.totalorder %s25, 1
    %p258 = por %p256, %p257
    %p260 = scmp.ne.s32.totalorder %s245, %s259
    %p261 = scmp.eq.s32.totalorder %s25, 0
    %p262 = por %p260, %p261
    %s264 = sadd.s32 %s263, 1
    %p267 = scmp.eq.s32.totalorder %s19, 1
    %p268 = scmp.ne.s32.totalorder %s263, %s265
    %p269 = scmp.eq.s32.totalorder %s19, 0
    %p270 = por %p268, %p269
    %p271 = scmp.ne.s32.totalorder %s263, %s265
    %p272 = scmp.eq.s32.totalorder %s24, 1
    %p273 = por %p271, %p272
    %p274 = scmp.ne.s32.totalorder %s265, %s266
    %p275 = scmp.eq.s32.totalorder %s24, 0
    %p276 = por %p274, %p275
    %p277 = scmp.ne.s32.totalorder %s265, %s266
    %p278 = scmp.eq.s32.totalorder %s25, 1
    %p279 = por %p277, %p278
    %p281 = scmp.ne.s32.totalorder %s266, %s280
    %p282 = scmp.eq.s32.totalorder %s25, 0
    %p283 = por %p281, %p282
    %s285 = sadd.s32 %s284, 1
    %p288 = scmp.eq.s32.totalorder %s19, 1
    %p289 = scmp.ne.s32.totalorder %s284, %s286
    %p290 = scmp.eq.s32.totalorder %s19, 0
    %p291 = por %p289, %p290
    %p292 = scmp.ne.s32.totalorder %s284, %s286
    %p293 = scmp.eq.s32.totalorder %s24, 1
    %p294 = por %p292, %p293
    %p295 = scmp.ne.s32.totalorder %s286, %s287
    %p296 = scmp.eq.s32.totalorder %s24, 0
    %p297 = por %p295, %p296
    %p298 = scmp.ne.s32.totalorder %s286, %s287
    %p299 = scmp.eq.s32.totalorder %s25, 1
    %p300 = por %p298, %p299
    %p302 = scmp.ne.s32.totalorder %s287, %s301
    %p303 = scmp.eq.s32.totalorder %s25, 0
    %p304 = por %p302, %p303
    %s305 = ssub.s32 %s19, %s26
    %p306 = scmp.eq.s32.totalorder %s305, 0
    %s308 = sadd.s32 %s307, 1
    %s309 = scalar_select %p306, %s307, %s308
    %p312 = pneg %p306
    %p313 = scmp.eq.s32.totalorder %s19, 1
    %p314 = por %p312, %p313
    %p315 = scmp.ne.s32.totalorder %s307, %s310
    %p316 = scmp.eq.s32.totalorder %s19, 0
    %p317 = por %p315, %p316
    %p318 = scmp.ne.s32.totalorder %s307, %s310
    %p319 = scmp.eq.s32.totalorder %s24, 1
    %p320 = por %p318, %p319
    %p321 = scmp.ne.s32.totalorder %s310, %s311
    %p322 = scmp.eq.s32.totalorder %s24, 0
    %p323 = por %p321, %p322
    %p324 = scmp.ne.s32.totalorder %s310, %s311
    %p325 = scmp.eq.s32.totalorder %s25, 1
    %p326 = por %p324, %p325
    %p328 = scmp.ne.s32.totalorder %s311, %s327
    %p329 = scmp.eq.s32.totalorder %s25, 0
    %p330 = por %p328, %p329
    %p331 = scmp.le.s32.totalorder 1, %s19
    %p332 = scmp.lt.s32.totalorder %s19, 3
    %p333 = pnand %p331, %p332
    %p334 = pneg %p333
    // Predicated region
    $region9: #{vision_transformer_forward.5} parent=5 // pred_check
      _
    $region10: #{vision_transformer_forward.5} parent=5 // pred_check_branch
      %336 = sbr.rel (%p333) target = $region12
    $region11: #{vision_transformer_forward.5} parent=5 // pred_region
      %s337 = ssub.s32 %s19, 1
      // Predicated region
      $region13: #{vision_transformer_forward.5} parent=11 // pred_check
        %p338 = pneg %p66
      $region14: #{vision_transformer_forward.5} parent=11 // pred_check_branch
        %340 = sbr.rel (%p338) target = $region16
      $region15: #{vision_transformer_forward.5} parent=11 // pred_region
        _
      $region16: #{vision_transformer_forward.5} parent=11 // pred_fallthru
        _
      // Predicated region
      $region17: #{vision_transformer_forward.5} parent=11 // pred_check
        %p341 = pneg %p87
      $region18: #{vision_transformer_forward.5} parent=11 // pred_check_branch
        %343 = sbr.rel (%p341) target = $region20
      $region19: #{vision_transformer_forward.5} parent=11 // pred_region
        _
      $region20: #{vision_transformer_forward.5} parent=11 // pred_fallthru
        _
      // Predicated region
      $region21: #{vision_transformer_forward.5} parent=11 // pred_check
        %p344 = pneg %p108
      $region22: #{vision_transformer_forward.5} parent=11 // pred_check_branch
        %346 = sbr.rel (%p344) target = $region24
      $region23: #{vision_transformer_forward.5} parent=11 // pred_region
        _
      $region24: #{vision_transformer_forward.5} parent=11 // pred_fallthru
        _
      // Predicated region
      $region25: #{vision_transformer_forward.5} parent=11 // pred_check
        %p347 = pneg %p129
      $region26: #{vision_transformer_forward.5} parent=11 // pred_check_branch
        %349 = sbr.rel (%p347) target = $region28
      $region27: #{vision_transformer_forward.5} parent=11 // pred_region
        _
      $region28: #{vision_transformer_forward.5} parent=11 // pred_fallthru
        _
      // Predicated region
      $region29: #{vision_transformer_forward.5} parent=11 // pred_check
        %p350 = pneg %p150
      $region30: #{vision_transformer_forward.5} parent=11 // pred_check_branch
        %352 = sbr.rel (%p350) target = $region32
      $region31: #{vision_transformer_forward.5} parent=11 // pred_region
        _
      $region32: #{vision_transformer_forward.5} parent=11 // pred_fallthru
        _
      // Predicated region
      $region33: #{vision_transformer_forward.5} parent=11 // pred_check
        %p353 = pneg %p171
      $region34: #{vision_transformer_forward.5} parent=11 // pred_check_branch
        %355 = sbr.rel (%p353) target = $region36
      $region35: #{vision_transformer_forward.5} parent=11 // pred_region
        _
      $region36: #{vision_transformer_forward.5} parent=11 // pred_fallthru
        _
      // Predicated region
      $region37: #{vision_transformer_forward.5} parent=11 // pred_check
        %p356 = pneg %p192
      $region38: #{vision_transformer_forward.5} parent=11 // pred_check_branch
        %358 = sbr.rel (%p356) target = $region40
      $region39: #{vision_transformer_forward.5} parent=11 // pred_region
        _
      $region40: #{vision_transformer_forward.5} parent=11 // pred_fallthru
        _
      // Predicated region
      $region41: #{vision_transformer_forward.5} parent=11 // pred_check
        %p359 = pneg %p213
      $region42: #{vision_transformer_forward.5} parent=11 // pred_check_branch
        %361 = sbr.rel (%p359) target = $region44
      $region43: #{vision_transformer_forward.5} parent=11 // pred_region
        _
      $region44: #{vision_transformer_forward.5} parent=11 // pred_fallthru
        _
      // Predicated region
      $region45: #{vision_transformer_forward.5} parent=11 // pred_check
        %p362 = pneg %p234
      $region46: #{vision_transformer_forward.5} parent=11 // pred_check_branch
        %364 = sbr.rel (%p362) target = $region48
      $region47: #{vision_transformer_forward.5} parent=11 // pred_region
        _
      $region48: #{vision_transformer_forward.5} parent=11 // pred_fallthru
        _
      // Predicated region
      $region49: #{vision_transformer_forward.5} parent=11 // pred_check
        %p365 = pneg %p255
      $region50: #{vision_transformer_forward.5} parent=11 // pred_check_branch
        %367 = sbr.rel (%p365) target = $region52
      $region51: #{vision_transformer_forward.5} parent=11 // pred_region
        _
      $region52: #{vision_transformer_forward.5} parent=11 // pred_fallthru
        _
      // Predicated region
      $region53: #{vision_transformer_forward.5} parent=11 // pred_check
        %p368 = pneg %p276
      $region54: #{vision_transformer_forward.5} parent=11 // pred_check_branch
        %370 = sbr.rel (%p368) target = $region56
      $region55: #{vision_transformer_forward.5} parent=11 // pred_region
        _
      $region56: #{vision_transformer_forward.5} parent=11 // pred_fallthru
        _
      // Predicated region
      $region57: #{vision_transformer_forward.5} parent=11 // pred_check
        %p371 = pneg %p297
      $region58: #{vision_transformer_forward.5} parent=11 // pred_check_branch
        %373 = sbr.rel (%p371) target = $region60
      $region59: #{vision_transformer_forward.5} parent=11 // pred_region
        _
      $region60: #{vision_transformer_forward.5} parent=11 // pred_fallthru
        _
    $region12: #{vision_transformer_forward.5} parent=5 // pred_fallthru
      _
    %p374 = scmp.lt.s32.totalorder %s19, 2
    // Predicated region
    $region61: #{vision_transformer_forward.5} parent=5 // pred_check
      %p375 = pneg %p374
    $region62: #{vision_transformer_forward.5} parent=5 // pred_check_branch
      %377 = sbr.rel (%p375) target = $region64
    $region63: #{vision_transformer_forward.5} parent=5 // pred_region
      // Predicated region
      $region65: #{vision_transformer_forward.5} parent=63 // pred_check
        %p378 = pneg %p39
      $region66: #{vision_transformer_forward.5} parent=63 // pred_check_branch
        %380 = sbr.rel (%p378) target = $region68
      $region67: #{vision_transformer_forward.5} parent=63 // pred_region
        %s381 = smul.u32 2, %s19
        %p382 = scmp.lt.s32.totalorder %s381, 3
        %s383 = scalar_select %p382, %s381, 3
        %s384 = smul.addr %s383, 16
        %s385 = smul.addr %s384, 8
        %s386 = scalar_lea.vmem %s0, %s385
        %s387 = smul.u32 2, %s19
      $region68: #{vision_transformer_forward.5} parent=63 // pred_fallthru
        _
    $region64: #{vision_transformer_forward.5} parent=5 // pred_fallthru
      _
    %p388 = scmp.le.s32.totalorder 1, %s19
    %p389 = scmp.lt.s32.totalorder %s19, 3
    %p390 = pnand %p388, %p389
    %p391 = pneg %p390
    // Predicated region
    $region69: #{vision_transformer_forward.5} parent=5 // pred_check
      _
    $region70: #{vision_transformer_forward.5} parent=5 // pred_check_branch
      %393 = sbr.rel (%p390) target = $region72
    $region71: #{vision_transformer_forward.5} parent=5 // pred_region
      %s394 = ssub.s32 %s19, 1
      %s395 = smul.u32 2, %s24
      %p396 = scmp.lt.s32.totalorder %s395, 3
      %s397 = scalar_select %p396, %s395, 3
      %s398 = smul.addr %s397, 16
      %s399 = smul.addr %s398, 8
      %s400 = scalar_lea.vmem %s0, %s399
      %p401 = pneg %p45
      %p402 = pneg %p42
      %p403 = pneg %p66
      %p404 = pneg %p63
      %p405 = pneg %p87
      %p406 = pneg %p84
      %p407 = pneg %p108
      %p408 = pneg %p105
      %p409 = pneg %p129
      %p410 = pneg %p126
      %p411 = pneg %p150
      %p412 = pneg %p147
      %p413 = pneg %p171
      %p414 = pneg %p168
      %p415 = pneg %p192
      %p416 = pneg %p189
      %p417 = pneg %p213
      %p418 = pneg %p210
      %p419 = pneg %p234
      %p420 = pneg %p231
      %p421 = pneg %p255
      %p422 = pneg %p252
      %p423 = pneg %p276
      %p424 = pneg %p273
      %p425 = pneg %p297
      %p426 = pneg %p294
      %p427 = pneg %p323
      %p428 = pneg %p320
      %s429 = smul.u32 2, %s24
      %p430 = scmp.lt.s32.totalorder %s429, 3
      %s431 = scalar_select %p430, %s429, 3
      %s432 = smul.addr %s431, 16
      %s433 = smul.addr %s432, 8
      %s434 = scalar_lea.vmem %s13, %s433
      %s435 = smul.u32 2, %s24
      %p436 = scmp.lt.s32.totalorder %s435, 3
      %s437 = scalar_select %p436, %s435, 3
      %s438 = smul.addr %s437, 16
      %s439 = smul.addr %s438, 8
      %s440 = scalar_lea.vmem %s0, %s439
      %s441 = smul.u32 2, %s24
      %s442 = smul.u32 2, %s24
      %p443 = scmp.lt.s32.totalorder %s442, 3
      %s444 = scalar_select %p443, %s442, 3
      %s445 = smul.addr %s444, 16
      %s446 = smul.addr %s445, 8
      %s447 = scalar_lea.vmem %s13, %s446
      %s448 = smul.u32 2, %s24
      %v450 = vld [vmem:[%s440] sm:$0xff]
      %v451 = vld [vmem:[%s440 + $0x8] sm:$0xff]
      %v452 = vld [vmem:[%s440 + $0x10] sm:$0xff]
      %v453 = vld [vmem:[%s440 + $0x18] sm:$0xff]
      %v454 = vld [vmem:[%s440 + $0x20] sm:$0xff]
      %v455 = vld [vmem:[%s440 + $0x28] sm:$0xff]
      %v456 = vld [vmem:[%s440 + $0x30] sm:$0xff]
      %v457 = vld [vmem:[%s440 + $0x38] sm:$0xff]
      %v458 = vld [vmem:[%s440 + $0x40] sm:$0xff]
      %v459 = vld [vmem:[%s440 + $0x48] sm:$0xff]
      %v460 = vld [vmem:[%s440 + $0x50] sm:$0xff]
      %v461 = vld [vmem:[%s440 + $0x58] sm:$0xff]
      %v462 = vld [vmem:[%s440 + $0x60] sm:$0xff]
      %v463 = vld [vmem:[%s440 + $0x68] sm:$0xff]
      %v464 = vld [vmem:[%s440 + $0x70] sm:$0xff]
      %v465 = vld [vmem:[%s440 + $0x78] sm:$0xff]
      %v466 = vld [vmem:[%s440 + $0x80] sm:$0xff]
      %v467 = vld [vmem:[%s440 + $0x88] sm:$0xff]
      %v468 = vld [vmem:[%s440 + $0x90] sm:$0xff]
      %v469 = vld [vmem:[%s440 + $0x98] sm:$0xff]
      %v470 = vld [vmem:[%s440 + $0xa0] sm:$0xff]
      %v471 = vld [vmem:[%s440 + $0xa8] sm:$0xff]
      %v472 = vld [vmem:[%s440 + $0xb0] sm:$0xff]
      %v473 = vld [vmem:[%s440 + $0xb8] sm:$0xff]
      %v474 = vld [vmem:[%s440 + $0xc0] sm:$0xff]
      %v475 = vld [vmem:[%s440 + $0xc8] sm:$0xff]
      %v476 = vld [vmem:[%s440 + $0xd0] sm:$0xff]
      %v477 = vld [vmem:[%s440 + $0xd8] sm:$0xff]
      %v478 = vld [vmem:[%s440 + $0xe0] sm:$0xff]
      %v479 = vld [vmem:[%s440 + $0xe8] sm:$0xff]
      %v480 = vld [vmem:[%s440 + $0xf0] sm:$0xff]
      %v481 = vld [vmem:[%s440 + $0xf8] sm:$0xff]
      %v482 = vld [vmem:[%s1] sm:$0x1]
      %v483 = vld [vmem:[%s2] sm:$0x1]
      %484 = vadd.xlane.f32.xlu0 %v450
      %v485 = vpop.xlane.xlu0 %484
      %486 = vadd.xlane.f32.xlu0 %v451
      %v487 = vpop.xlane.xlu0 %486
      %488 = vadd.xlane.f32.xlu0 %v452
      %v489 = vpop.xlane.xlu0 %488
      %490 = vadd.xlane.f32.xlu0 %v453
      %v491 = vpop.xlane.xlu0 %490
      %492 = vadd.xlane.f32.xlu0 %v454
      %v493 = vpop.xlane.xlu0 %492
      %494 = vadd.xlane.f32.xlu0 %v455
      %v495 = vpop.xlane.xlu0 %494
      %496 = vadd.xlane.f32.xlu0 %v456
      %v497 = vpop.xlane.xlu0 %496
      %498 = vadd.xlane.f32.xlu0 %v457
      %v499 = vpop.xlane.xlu0 %498
      %500 = vadd.xlane.f32.xlu0 %v458
      %v501 = vpop.xlane.xlu0 %500
      %502 = vadd.xlane.f32.xlu0 %v459
      %v503 = vpop.xlane.xlu0 %502
      %504 = vadd.xlane.f32.xlu0 %v460
      %v505 = vpop.xlane.xlu0 %504
      %506 = vadd.xlane.f32.xlu0 %v461
      %v507 = vpop.xlane.xlu0 %506
      %508 = vadd.xlane.f32.xlu0 %v462
      %v509 = vpop.xlane.xlu0 %508
      %510 = vadd.xlane.f32.xlu0 %v463
      %v511 = vpop.xlane.xlu0 %510
      %512 = vadd.xlane.f32.xlu0 %v464
      %v513 = vpop.xlane.xlu0 %512
      %514 = vadd.xlane.f32.xlu0 %v465
      %v515 = vpop.xlane.xlu0 %514
      %516 = vadd.xlane.f32.xlu0 %v466
      %v517 = vpop.xlane.xlu0 %516
      %518 = vadd.xlane.f32.xlu0 %v467
      %v519 = vpop.xlane.xlu0 %518
      %520 = vadd.xlane.f32.xlu0 %v468
      %v521 = vpop.xlane.xlu0 %520
      %522 = vadd.xlane.f32.xlu0 %v469
      %v523 = vpop.xlane.xlu0 %522
      %524 = vadd.xlane.f32.xlu0 %v470
      %v525 = vpop.xlane.xlu0 %524
      %526 = vadd.xlane.f32.xlu0 %v471
      %v527 = vpop.xlane.xlu0 %526
      %528 = vadd.xlane.f32.xlu0 %v472
      %v529 = vpop.xlane.xlu0 %528
      %530 = vadd.xlane.f32.xlu0 %v473
      %v531 = vpop.xlane.xlu0 %530
      %532 = vadd.xlane.f32.xlu0 %v474
      %v533 = vpop.xlane.xlu0 %532
      %534 = vadd.xlane.f32.xlu0 %v475
      %v535 = vpop.xlane.xlu0 %534
      %536 = vadd.xlane.f32.xlu0 %v476
      %v537 = vpop.xlane.xlu0 %536
      %538 = vadd.xlane.f32.xlu0 %v477
      %v539 = vpop.xlane.xlu0 %538
      %540 = vadd.xlane.f32.xlu0 %v478
      %v541 = vpop.xlane.xlu0 %540
      %542 = vadd.xlane.f32.xlu0 %v479
      %v543 = vpop.xlane.xlu0 %542
      %544 = vadd.xlane.f32.xlu0 %v480
      %v545 = vpop.xlane.xlu0 %544
      %546 = vadd.xlane.f32.xlu0 %v481
      %v547 = vpop.xlane.xlu0 %546
      %v548 = vrcp.pop 128.0
      %v549 = vmul.f32 %v485, %v548
      %v550 = vmul.f32 %v487, %v548
      %v551 = vmul.f32 %v489, %v548
      %v552 = vmul.f32 %v491, %v548
      %v553 = vmul.f32 %v493, %v548
      %v554 = vmul.f32 %v495, %v548
      %v555 = vmul.f32 %v497, %v548
      %v556 = vmul.f32 %v499, %v548
      %v557 = vmul.f32 %v501, %v548
      %v558 = vmul.f32 %v503, %v548
      %v559 = vmul.f32 %v505, %v548
      %v560 = vmul.f32 %v507, %v548
      %v561 = vmul.f32 %v509, %v548
      %v562 = vmul.f32 %v511, %v548
      %v563 = vmul.f32 %v513, %v548
      %v564 = vmul.f32 %v515, %v548
      %v565 = vmul.f32 %v517, %v548
      %v566 = vmul.f32 %v519, %v548
      %v567 = vmul.f32 %v521, %v548
      %v568 = vmul.f32 %v523, %v548
      %v569 = vmul.f32 %v525, %v548
      %v570 = vmul.f32 %v527, %v548
      %v571 = vmul.f32 %v529, %v548
      %v572 = vmul.f32 %v531, %v548
      %v573 = vmul.f32 %v533, %v548
      %v574 = vmul.f32 %v535, %v548
      %v575 = vmul.f32 %v537, %v548
      %v576 = vmul.f32 %v539, %v548
      %v577 = vmul.f32 %v541, %v548
      %v578 = vmul.f32 %v543, %v548
      %v579 = vmul.f32 %v545, %v548
      %v580 = vmul.f32 %v547, %v548
      %v581 = vsub.f32 %v450, %v549
      %v582 = vsub.f32 %v451, %v550
      %v583 = vsub.f32 %v452, %v551
      %v584 = vsub.f32 %v453, %v552
      %v585 = vsub.f32 %v454, %v553
      %v586 = vsub.f32 %v455, %v554
      %v587 = vsub.f32 %v456, %v555
      %v588 = vsub.f32 %v457, %v556
      %v589 = vsub.f32 %v458, %v557
      %v590 = vsub.f32 %v459, %v558
      %v591 = vsub.f32 %v460, %v559
      %v592 = vsub.f32 %v461, %v560
      %v593 = vsub.f32 %v462, %v561
      %v594 = vsub.f32 %v463, %v562
      %v595 = vsub.f32 %v464, %v563
      %v596 = vsub.f32 %v465, %v564
      %v597 = vsub.f32 %v466, %v565
      %v598 = vsub.f32 %v467, %v566
      %v599 = vsub.f32 %v468, %v567
      %v600 = vsub.f32 %v469, %v568
      %v601 = vsub.f32 %v470, %v569
      %v602 = vsub.f32 %v471, %v570
      %v603 = vsub.f32 %v472, %v571
      %v604 = vsub.f32 %v473, %v572
      %v605 = vsub.f32 %v474, %v573
      %v606 = vsub.f32 %v475, %v574
      %v607 = vsub.f32 %v476, %v575
      %v608 = vsub.f32 %v477, %v576
      %v609 = vsub.f32 %v478, %v577
      %v610 = vsub.f32 %v479, %v578
      %v611 = vsub.f32 %v480, %v579
      %v612 = vsub.f32 %v481, %v580
      %v613 = vmul.f32 %v581, %v581
      %v614 = vmul.f32 %v582, %v582
      %v615 = vmul.f32 %v583, %v583
      %v616 = vmul.f32 %v584, %v584
      %v617 = vmul.f32 %v585, %v585
      %v618 = vmul.f32 %v586, %v586
      %v619 = vmul.f32 %v587, %v587
      %v620 = vmul.f32 %v588, %v588
      %v621 = vmul.f32 %v589, %v589
      %v622 = vmul.f32 %v590, %v590
      %v623 = vmul.f32 %v591, %v591
      %v624 = vmul.f32 %v592, %v592
      %v625 = vmul.f32 %v593, %v593
      %v626 = vmul.f32 %v594, %v594
      %v627 = vmul.f32 %v595, %v595
      %v628 = vmul.f32 %v596, %v596
      %v629 = vmul.f32 %v597, %v597
      %v630 = vmul.f32 %v598, %v598
      %v631 = vmul.f32 %v599, %v599
      %v632 = vmul.f32 %v600, %v600
      %v633 = vmul.f32 %v601, %v601
      %v634 = vmul.f32 %v602, %v602
      %v635 = vmul.f32 %v603, %v603
      %v636 = vmul.f32 %v604, %v604
      %v637 = vmul.f32 %v605, %v605
      %v638 = vmul.f32 %v606, %v606
      %v639 = vmul.f32 %v607, %v607
      %v640 = vmul.f32 %v608, %v608
      %v641 = vmul.f32 %v609, %v609
      %v642 = vmul.f32 %v610, %v610
      %v643 = vmul.f32 %v611, %v611
      %v644 = vmul.f32 %v612, %v612
      %645 = vadd.xlane.f32.xlu0 %v613
      %v646 = vpop.xlane.xlu0 %645
      %647 = vadd.xlane.f32.xlu0 %v614
      %v648 = vpop.xlane.xlu0 %647
      %649 = vadd.xlane.f32.xlu0 %v615
      %v650 = vpop.xlane.xlu0 %649
      %651 = vadd.xlane.f32.xlu0 %v616
      %v652 = vpop.xlane.xlu0 %651
      %653 = vadd.xlane.f32.xlu0 %v617
      %v654 = vpop.xlane.xlu0 %653
      %655 = vadd.xlane.f32.xlu0 %v618
      %v656 = vpop.xlane.xlu0 %655
      %657 = vadd.xlane.f32.xlu0 %v619
      %v658 = vpop.xlane.xlu0 %657
      %659 = vadd.xlane.f32.xlu0 %v620
      %v660 = vpop.xlane.xlu0 %659
      %661 = vadd.xlane.f32.xlu0 %v621
      %v662 = vpop.xlane.xlu0 %661
      %663 = vadd.xlane.f32.xlu0 %v622
      %v664 = vpop.xlane.xlu0 %663
      %665 = vadd.xlane.f32.xlu0 %v623
      %v666 = vpop.xlane.xlu0 %665
      %667 = vadd.xlane.f32.xlu0 %v624
      %v668 = vpop.xlane.xlu0 %667
      %669 = vadd.xlane.f32.xlu0 %v625
      %v670 = vpop.xlane.xlu0 %669
      %671 = vadd.xlane.f32.xlu0 %v626
      %v672 = vpop.xlane.xlu0 %671
      %673 = vadd.xlane.f32.xlu0 %v627
      %v674 = vpop.xlane.xlu0 %673
      %675 = vadd.xlane.f32.xlu0 %v628
      %v676 = vpop.xlane.xlu0 %675
      %677 = vadd.xlane.f32.xlu0 %v629
      %v678 = vpop.xlane.xlu0 %677
      %679 = vadd.xlane.f32.xlu0 %v630
      %v680 = vpop.xlane.xlu0 %679
      %681 = vadd.xlane.f32.xlu0 %v631
      %v682 = vpop.xlane.xlu0 %681
      %683 = vadd.xlane.f32.xlu0 %v632
      %v684 = vpop.xlane.xlu0 %683
      %685 = vadd.xlane.f32.xlu0 %v633
      %v686 = vpop.xlane.xlu0 %685
      %687 = vadd.xlane.f32.xlu0 %v634
      %v688 = vpop.xlane.xlu0 %687
      %689 = vadd.xlane.f32.xlu0 %v635
      %v690 = vpop.xlane.xlu0 %689
      %691 = vadd.xlane.f32.xlu0 %v636
      %v692 = vpop.xlane.xlu0 %691
      %693 = vadd.xlane.f32.xlu0 %v637
      %v694 = vpop.xlane.xlu0 %693
      %695 = vadd.xlane.f32.xlu0 %v638
      %v696 = vpop.xlane.xlu0 %695
      %697 = vadd.xlane.f32.xlu0 %v639
      %v698 = vpop.xlane.xlu0 %697
      %699 = vadd.xlane.f32.xlu0 %v640
      %v700 = vpop.xlane.xlu0 %699
      %701 = vadd.xlane.f32.xlu0 %v641
      %v702 = vpop.xlane.xlu0 %701
      %703 = vadd.xlane.f32.xlu0 %v642
      %v704 = vpop.xlane.xlu0 %703
      %705 = vadd.xlane.f32.xlu0 %v643
      %v706 = vpop.xlane.xlu0 %705
      %707 = vadd.xlane.f32.xlu0 %v644
      %v708 = vpop.xlane.xlu0 %707
      %v709 = vmul.f32 %v646, %v548
      %v710 = vmul.f32 %v648, %v548
      %v711 = vmul.f32 %v650, %v548
      %v712 = vmul.f32 %v652, %v548
      %v713 = vmul.f32 %v654, %v548
      %v714 = vmul.f32 %v656, %v548
      %v715 = vmul.f32 %v658, %v548
      %v716 = vmul.f32 %v660, %v548
      %v717 = vmul.f32 %v662, %v548
      %v718 = vmul.f32 %v664, %v548
      %v719 = vmul.f32 %v666, %v548
      %v720 = vmul.f32 %v668, %v548
      %v721 = vmul.f32 %v670, %v548
      %v722 = vmul.f32 %v672, %v548
      %v723 = vmul.f32 %v674, %v548
      %v724 = vmul.f32 %v676, %v548
      %v725 = vmul.f32 %v678, %v548
      %v726 = vmul.f32 %v680, %v548
      %v727 = vmul.f32 %v682, %v548
      %v728 = vmul.f32 %v684, %v548
      %v729 = vmul.f32 %v686, %v548
      %v730 = vmul.f32 %v688, %v548
      %v731 = vmul.f32 %v690, %v548
      %v732 = vmul.f32 %v692, %v548
      %v733 = vmul.f32 %v694, %v548
      %v734 = vmul.f32 %v696, %v548
      %v735 = vmul.f32 %v698, %v548
      %v736 = vmul.f32 %v700, %v548
      %v737 = vmul.f32 %v702, %v548
      %v738 = vmul.f32 %v704, %v548
      %v739 = vmul.f32 %v706, %v548
      %v740 = vmul.f32 %v708, %v548
      %v741 = vadd.f32 %v709, 1e-06
      %v742 = vadd.f32 %v710, 1e-06
      %v743 = vadd.f32 %v711, 1e-06
      %v744 = vadd.f32 %v712, 1e-06
      %v745 = vadd.f32 %v713, 1e-06
      %v746 = vadd.f32 %v714, 1e-06
      %v747 = vadd.f32 %v715, 1e-06
      %v748 = vadd.f32 %v716, 1e-06
      %v749 = vadd.f32 %v717, 1e-06
      %v750 = vadd.f32 %v718, 1e-06
      %v751 = vadd.f32 %v719, 1e-06
      %v752 = vadd.f32 %v720, 1e-06
      %v753 = vadd.f32 %v721, 1e-06
      %v754 = vadd.f32 %v722, 1e-06
      %v755 = vadd.f32 %v723, 1e-06
      %v756 = vadd.f32 %v724, 1e-06
      %v757 = vadd.f32 %v725, 1e-06
      %v758 = vadd.f32 %v726, 1e-06
      %v759 = vadd.f32 %v727, 1e-06
      %v760 = vadd.f32 %v728, 1e-06
      %v761 = vadd.f32 %v729, 1e-06
      %v762 = vadd.f32 %v730, 1e-06
      %v763 = vadd.f32 %v731, 1e-06
      %v764 = vadd.f32 %v732, 1e-06
      %v765 = vadd.f32 %v733, 1e-06
      %v766 = vadd.f32 %v734, 1e-06
      %v767 = vadd.f32 %v735, 1e-06
      %v768 = vadd.f32 %v736, 1e-06
      %v769 = vadd.f32 %v737, 1e-06
      %v770 = vadd.f32 %v738, 1e-06
      %v771 = vadd.f32 %v739, 1e-06
      %v772 = vadd.f32 %v740, 1e-06
      %v773 = vrsqrt.pop %v741
      %v774 = vrsqrt.pop %v742
      %v775 = vrsqrt.pop %v743
      %v776 = vrsqrt.pop %v744
      %v777 = vrsqrt.pop %v745
      %v778 = vrsqrt.pop %v746
      %v779 = vrsqrt.pop %v747
      %v780 = vrsqrt.pop %v748
      %v781 = vrsqrt.pop %v749
      %v782 = vrsqrt.pop %v750
      %v783 = vrsqrt.pop %v751
      %v784 = vrsqrt.pop %v752
      %v785 = vrsqrt.pop %v753
      %v786 = vrsqrt.pop %v754
      %v787 = vrsqrt.pop %v755
      %v788 = vrsqrt.pop %v756
      %v789 = vrsqrt.pop %v757
      %v790 = vrsqrt.pop %v758
      %v791 = vrsqrt.pop %v759
      %v792 = vrsqrt.pop %v760
      %v793 = vrsqrt.pop %v761
      %v794 = vrsqrt.pop %v762
      %v795 = vrsqrt.pop %v763
      %v796 = vrsqrt.pop %v764
      %v797 = vrsqrt.pop %v765
      %v798 = vrsqrt.pop %v766
      %v799 = vrsqrt.pop %v767
      %v800 = vrsqrt.pop %v768
      %v801 = vrsqrt.pop %v769
      %v802 = vrsqrt.pop %v770
      %v803 = vrsqrt.pop %v771
      %v804 = vrsqrt.pop %v772
      %v805 = vmul.f32 %v581, %v773
      %v806 = vmul.f32 %v582, %v774
      %v807 = vmul.f32 %v583, %v775
      %v808 = vmul.f32 %v584, %v776
      %v809 = vmul.f32 %v585, %v777
      %v810 = vmul.f32 %v586, %v778
      %v811 = vmul.f32 %v587, %v779
      %v812 = vmul.f32 %v588, %v780
      %v813 = vmul.f32 %v589, %v781
      %v814 = vmul.f32 %v590, %v782
      %v815 = vmul.f32 %v591, %v783
      %v816 = vmul.f32 %v592, %v784
      %v817 = vmul.f32 %v593, %v785
      %v818 = vmul.f32 %v594, %v786
      %v819 = vmul.f32 %v595, %v787
      %v820 = vmul.f32 %v596, %v788
      %v821 = vmul.f32 %v597, %v789
      %v822 = vmul.f32 %v598, %v790
      %v823 = vmul.f32 %v599, %v791
      %v824 = vmul.f32 %v600, %v792
      %v825 = vmul.f32 %v601, %v793
      %v826 = vmul.f32 %v602, %v794
      %v827 = vmul.f32 %v603, %v795
      %v828 = vmul.f32 %v604, %v796
      %v829 = vmul.f32 %v605, %v797
      %v830 = vmul.f32 %v606, %v798
      %v831 = vmul.f32 %v607, %v799
      %v832 = vmul.f32 %v608, %v800
      %v833 = vmul.f32 %v609, %v801
      %v834 = vmul.f32 %v610, %v802
      %v835 = vmul.f32 %v611, %v803
      %v836 = vmul.f32 %v612, %v804
      %v838 = vlaneseq
      %v839 = vshrl.u32 %v838, 7
      %v840 = vsub.s32 0, %v839
      %v841 = vrot.slane %v482, %v840
      %v843 = vmul.f32 %v805, %v841
      %v844 = vmul.f32 %v806, %v841
      %v845 = vmul.f32 %v807, %v841
      %v846 = vmul.f32 %v808, %v841
      %v847 = vmul.f32 %v809, %v841
      %v848 = vmul.f32 %v810, %v841
      %v849 = vmul.f32 %v811, %v841
      %v850 = vmul.f32 %v812, %v841
      %v851 = vmul.f32 %v813, %v841
      %v852 = vmul.f32 %v814, %v841
      %v853 = vmul.f32 %v815, %v841
      %v854 = vmul.f32 %v816, %v841
      %v855 = vmul.f32 %v817, %v841
      %v856 = vmul.f32 %v818, %v841
      %v857 = vmul.f32 %v819, %v841
      %v858 = vmul.f32 %v820, %v841
      %v859 = vmul.f32 %v821, %v841
      %v860 = vmul.f32 %v822, %v841
      %v861 = vmul.f32 %v823, %v841
      %v862 = vmul.f32 %v824, %v841
      %v863 = vmul.f32 %v825, %v841
      %v864 = vmul.f32 %v826, %v841
      %v865 = vmul.f32 %v827, %v841
      %v866 = vmul.f32 %v828, %v841
      %v867 = vmul.f32 %v829, %v841
      %v868 = vmul.f32 %v830, %v841
      %v869 = vmul.f32 %v831, %v841
      %v870 = vmul.f32 %v832, %v841
      %v871 = vmul.f32 %v833, %v841
      %v872 = vmul.f32 %v834, %v841
      %v873 = vmul.f32 %v835, %v841
      %v874 = vmul.f32 %v836, %v841
      %v876 = vlaneseq
      %v877 = vshrl.u32 %v876, 7
      %v878 = vsub.s32 0, %v877
      %v879 = vrot.slane %v483, %v878
      %v881 = vadd.f32 %v843, %v879
      %v882 = vadd.f32 %v844, %v879
      %v883 = vadd.f32 %v845, %v879
      %v884 = vadd.f32 %v846, %v879
      %v885 = vadd.f32 %v847, %v879
      %v886 = vadd.f32 %v848, %v879
      %v887 = vadd.f32 %v849, %v879
      %v888 = vadd.f32 %v850, %v879
      %v889 = vadd.f32 %v851, %v879
      %v890 = vadd.f32 %v852, %v879
      %v891 = vadd.f32 %v853, %v879
      %v892 = vadd.f32 %v854, %v879
      %v893 = vadd.f32 %v855, %v879
      %v894 = vadd.f32 %v856, %v879
      %v895 = vadd.f32 %v857, %v879
      %v896 = vadd.f32 %v858, %v879
      %v897 = vadd.f32 %v859, %v879
      %v898 = vadd.f32 %v860, %v879
      %v899 = vadd.f32 %v861, %v879
      %v900 = vadd.f32 %v862, %v879
      %v901 = vadd.f32 %v863, %v879
      %v902 = vadd.f32 %v864, %v879
      %v903 = vadd.f32 %v865, %v879
      %v904 = vadd.f32 %v866, %v879
      %v905 = vadd.f32 %v867, %v879
      %v906 = vadd.f32 %v868, %v879
      %v907 = vadd.f32 %v869, %v879
      %v908 = vadd.f32 %v870, %v879
      %v909 = vadd.f32 %v871, %v879
      %v910 = vadd.f32 %v872, %v879
      %v911 = vadd.f32 %v873, %v879
      %v912 = vadd.f32 %v874, %v879
      %v913 = vpack.c.bf16 %v882, %v881
      %v914 = vpack.c.bf16 %v884, %v883
      %v915 = vpack.c.bf16 %v886, %v885
      %v916 = vpack.c.bf16 %v888, %v887
      %v917 = vpack.c.bf16 %v890, %v889
      %v918 = vpack.c.bf16 %v892, %v891
      %v919 = vpack.c.bf16 %v894, %v893
      %v920 = vpack.c.bf16 %v896, %v895
      %v921 = vpack.c.bf16 %v898, %v897
      %v922 = vpack.c.bf16 %v900, %v899
      %v923 = vpack.c.bf16 %v902, %v901
      %v924 = vpack.c.bf16 %v904, %v903
      %v925 = vpack.c.bf16 %v906, %v905
      %v926 = vpack.c.bf16 %v908, %v907
      %v927 = vpack.c.bf16 %v910, %v909
      %v928 = vpack.c.bf16 %v912, %v911
      %v929 = vld [vmem:[%s3] sm:$0xff]
      %v930 = vld [vmem:[%s3 + $0x8] sm:$0xff]
      %v931 = vld [vmem:[%s3 + $0x10] sm:$0xff]
      %v932 = vld [vmem:[%s3 + $0x18] sm:$0xff]
      %v933 = vld [vmem:[%s3 + $0x20] sm:$0xff]
      %v934 = vld [vmem:[%s3 + $0x28] sm:$0xff]
      %v935 = vld [vmem:[%s3 + $0x30] sm:$0xff]
      %v936 = vld [vmem:[%s3 + $0x38] sm:$0xff]
      %v937 = vld [vmem:[%s3 + $0x40] sm:$0xff]
      %v938 = vld [vmem:[%s3 + $0x48] sm:$0xff]
      %v939 = vld [vmem:[%s3 + $0x50] sm:$0xff]
      %v940 = vld [vmem:[%s3 + $0x58] sm:$0xff]
      %v941 = vld [vmem:[%s3 + $0x60] sm:$0xff]
      %v942 = vld [vmem:[%s3 + $0x68] sm:$0xff]
      %v943 = vld [vmem:[%s3 + $0x70] sm:$0xff]
      %v944 = vld [vmem:[%s3 + $0x78] sm:$0xff]
      %v945 = vld [vmem:[%s3 + $0x80] sm:$0xff]
      %v946 = vld [vmem:[%s3 + $0x88] sm:$0xff]
      %v947 = vld [vmem:[%s3 + $0x90] sm:$0xff]
      %v948 = vld [vmem:[%s3 + $0x98] sm:$0xff]
      %v949 = vld [vmem:[%s3 + $0xa0] sm:$0xff]
      %v950 = vld [vmem:[%s3 + $0xa8] sm:$0xff]
      %v951 = vld [vmem:[%s3 + $0xb0] sm:$0xff]
      %v952 = vld [vmem:[%s3 + $0xb8] sm:$0xff]
      %v953 = vld [vmem:[%s3 + $0xc0] sm:$0xff]
      %v954 = vld [vmem:[%s3 + $0xc8] sm:$0xff]
      %v955 = vld [vmem:[%s3 + $0xd0] sm:$0xff]
      %v956 = vld [vmem:[%s3 + $0xd8] sm:$0xff]
      %v957 = vld [vmem:[%s3 + $0xe0] sm:$0xff]
      %v958 = vld [vmem:[%s3 + $0xe8] sm:$0xff]
      %v959 = vld [vmem:[%s3 + $0xf0] sm:$0xff]
      %v960 = vld [vmem:[%s3 + $0xf8] sm:$0xff]
      %v961 = vld [vmem:[%s3 + $0x100] sm:$0xff]
      %v962 = vld [vmem:[%s3 + $0x108] sm:$0xff]
      %v963 = vld [vmem:[%s3 + $0x110] sm:$0xff]
      %v964 = vld [vmem:[%s3 + $0x118] sm:$0xff]
      %v965 = vld [vmem:[%s3 + $0x120] sm:$0xff]
      %v966 = vld [vmem:[%s3 + $0x128] sm:$0xff]
      %v967 = vld [vmem:[%s3 + $0x130] sm:$0xff]
      %v968 = vld [vmem:[%s3 + $0x138] sm:$0xff]
      %v969 = vld [vmem:[%s3 + $0x140] sm:$0xff]
      %v970 = vld [vmem:[%s3 + $0x148] sm:$0xff]
      %v971 = vld [vmem:[%s3 + $0x150] sm:$0xff]
      %v972 = vld [vmem:[%s3 + $0x158] sm:$0xff]
      %v973 = vld [vmem:[%s3 + $0x160] sm:$0xff]
      %v974 = vld [vmem:[%s3 + $0x168] sm:$0xff]
      %v975 = vld [vmem:[%s3 + $0x170] sm:$0xff]
      %v976 = vld [vmem:[%s3 + $0x178] sm:$0xff]
      %v977 = vld [vmem:[%s4] sm:$0x3f]
      %v979 = vlaneseq
      %v980 = vshrl.u32 %v979, 7
      %v981 = vsub.s32 0, %v980
      %v982 = vrot.slane %v977, %v981
      %v983 = vlaneseq
      %v984 = vshrl.u32 %v983, 7
      %v985 = vsub.s32 1, %v984
      %v986 = vrot.slane %v977, %v985
      %v987 = vlaneseq
      %v988 = vshrl.u32 %v987, 7
      %v989 = vsub.s32 2, %v988
      %v990 = vrot.slane %v977, %v989
      %v991 = vlaneseq
      %v992 = vshrl.u32 %v991, 7
      %v993 = vsub.s32 3, %v992
      %v994 = vrot.slane %v977, %v993
      %v995 = vlaneseq
      %v996 = vshrl.u32 %v995, 7
      %v997 = vsub.s32 4, %v996
      %v998 = vrot.slane %v977, %v997
      %v999 = vlaneseq
      %v1000 = vshrl.u32 %v999, 7
      %v1001 = vsub.s32 5, %v1000
      %v1002 = vrot.slane %v977, %v1001
      %v1057 = vunpack.c.l.b16 %v929
      %v1058 = vunpack.c.h.b16 %v929
      %v1059 = vunpack.c.l.b16 %v930
      %v1060 = vunpack.c.h.b16 %v930
      %v1061 = vunpack.c.l.b16 %v931
      %v1062 = vunpack.c.h.b16 %v931
      %v1063 = vunpack.c.l.b16 %v932
      %v1064 = vunpack.c.h.b16 %v932
      %v1065 = vunpack.c.l.b16 %v933
      %v1066 = vunpack.c.h.b16 %v933
      %v1067 = vunpack.c.l.b16 %v934
      %v1068 = vunpack.c.h.b16 %v934
      %v1069 = vunpack.c.l.b16 %v935
      %v1070 = vunpack.c.h.b16 %v935
      %v1071 = vunpack.c.l.b16 %v936
      %v1072 = vunpack.c.h.b16 %v936
      %v1073 = vunpack.c.l.b16 %v937
      %v1074 = vunpack.c.h.b16 %v937
      %v1075 = vunpack.c.l.b16 %v938
      %v1076 = vunpack.c.h.b16 %v938
      %v1077 = vunpack.c.l.b16 %v939
      %v1078 = vunpack.c.h.b16 %v939
      %v1079 = vunpack.c.l.b16 %v940
      %v1080 = vunpack.c.h.b16 %v940
      %v1081 = vunpack.c.l.b16 %v941
      %v1082 = vunpack.c.h.b16 %v941
      %v1083 = vunpack.c.l.b16 %v942
      %v1084 = vunpack.c.h.b16 %v942
      %v1085 = vunpack.c.l.b16 %v943
      %v1086 = vunpack.c.h.b16 %v943
      %v1087 = vunpack.c.l.b16 %v944
      %v1088 = vunpack.c.h.b16 %v944
      %v1089 = vunpack.c.l.b16 %v945
      %v1090 = vunpack.c.h.b16 %v945
      %v1091 = vunpack.c.l.b16 %v946
      %v1092 = vunpack.c.h.b16 %v946
      %v1093 = vunpack.c.l.b16 %v947
      %v1094 = vunpack.c.h.b16 %v947
      %v1095 = vunpack.c.l.b16 %v948
      %v1096 = vunpack.c.h.b16 %v948
      %v1097 = vunpack.c.l.b16 %v949
      %v1098 = vunpack.c.h.b16 %v949
      %v1099 = vunpack.c.l.b16 %v950
      %v1100 = vunpack.c.h.b16 %v950
      %v1101 = vunpack.c.l.b16 %v951
      %v1102 = vunpack.c.h.b16 %v951
      %v1103 = vunpack.c.l.b16 %v952
      %v1104 = vunpack.c.h.b16 %v952
      %v1105 = vunpack.c.l.b16 %v953
      %v1106 = vunpack.c.h.b16 %v953
      %v1107 = vunpack.c.l.b16 %v954
      %v1108 = vunpack.c.h.b16 %v954
      %v1109 = vunpack.c.l.b16 %v955
      %v1110 = vunpack.c.h.b16 %v955
      %v1111 = vunpack.c.l.b16 %v956
      %v1112 = vunpack.c.h.b16 %v956
      %v1113 = vunpack.c.l.b16 %v957
      %v1114 = vunpack.c.h.b16 %v957
      %v1115 = vunpack.c.l.b16 %v958
      %v1116 = vunpack.c.h.b16 %v958
      %v1117 = vunpack.c.l.b16 %v959
      %v1118 = vunpack.c.h.b16 %v959
      %v1119 = vunpack.c.l.b16 %v960
      %v1120 = vunpack.c.h.b16 %v960
      %v1121 = vunpack.c.l.b16 %v961
      %v1122 = vunpack.c.h.b16 %v961
      %v1123 = vunpack.c.l.b16 %v962
      %v1124 = vunpack.c.h.b16 %v962
      %v1125 = vunpack.c.l.b16 %v963
      %v1126 = vunpack.c.h.b16 %v963
      %v1127 = vunpack.c.l.b16 %v964
      %v1128 = vunpack.c.h.b16 %v964
      %v1129 = vunpack.c.l.b16 %v965
      %v1130 = vunpack.c.h.b16 %v965
      %v1131 = vunpack.c.l.b16 %v966
      %v1132 = vunpack.c.h.b16 %v966
      %v1133 = vunpack.c.l.b16 %v967
      %v1134 = vunpack.c.h.b16 %v967
      %v1135 = vunpack.c.l.b16 %v968
      %v1136 = vunpack.c.h.b16 %v968
      %v1137 = vunpack.c.l.b16 %v969
      %v1138 = vunpack.c.h.b16 %v969
      %v1139 = vunpack.c.l.b16 %v970
      %v1140 = vunpack.c.h.b16 %v970
      %v1141 = vunpack.c.l.b16 %v971
      %v1142 = vunpack.c.h.b16 %v971
      %v1143 = vunpack.c.l.b16 %v972
      %v1144 = vunpack.c.h.b16 %v972
      %v1145 = vunpack.c.l.b16 %v973
      %v1146 = vunpack.c.h.b16 %v973
      %v1147 = vunpack.c.l.b16 %v974
      %v1148 = vunpack.c.h.b16 %v974
      %v1149 = vunpack.c.l.b16 %v975
      %v1150 = vunpack.c.h.b16 %v975
      %v1151 = vunpack.c.l.b16 %v976
      %v1152 = vunpack.c.h.b16 %v976
      %v1153 = vpack.c.b16 %v1063, %v1057
      %v1154 = vpack.c.b16 %v1064, %v1058
      %v1155 = vpack.c.b16 %v1065, %v1059
      %v1156 = vpack.c.b16 %v1066, %v1060
      %v1157 = vpack.c.b16 %v1067, %v1061
      %v1158 = vpack.c.b16 %v1068, %v1062
      %v1159 = vpack.c.b16 %v1075, %v1069
      %v1160 = vpack.c.b16 %v1076, %v1070
      %v1161 = vpack.c.b16 %v1077, %v1071
      %v1162 = vpack.c.b16 %v1078, %v1072
      %v1163 = vpack.c.b16 %v1079, %v1073
      %v1164 = vpack.c.b16 %v1080, %v1074
      %v1165 = vpack.c.b16 %v1087, %v1081
      %v1166 = vpack.c.b16 %v1088, %v1082
      %v1167 = vpack.c.b16 %v1089, %v1083
      %v1168 = vpack.c.b16 %v1090, %v1084
      %v1169 = vpack.c.b16 %v1091, %v1085
      %v1170 = vpack.c.b16 %v1092, %v1086
      %v1171 = vpack.c.b16 %v1099, %v1093
      %v1172 = vpack.c.b16 %v1100, %v1094
      %v1173 = vpack.c.b16 %v1101, %v1095
      %v1174 = vpack.c.b16 %v1102, %v1096
      %v1175 = vpack.c.b16 %v1103, %v1097
      %v1176 = vpack.c.b16 %v1104, %v1098
      %v1177 = vpack.c.b16 %v1111, %v1105
      %v1178 = vpack.c.b16 %v1112, %v1106
      %v1179 = vpack.c.b16 %v1113, %v1107
      %v1180 = vpack.c.b16 %v1114, %v1108
      %v1181 = vpack.c.b16 %v1115, %v1109
      %v1182 = vpack.c.b16 %v1116, %v1110
      %v1183 = vpack.c.b16 %v1123, %v1117
      %v1184 = vpack.c.b16 %v1124, %v1118
      %v1185 = vpack.c.b16 %v1125, %v1119
      %v1186 = vpack.c.b16 %v1126, %v1120
      %v1187 = vpack.c.b16 %v1127, %v1121
      %v1188 = vpack.c.b16 %v1128, %v1122
      %v1189 = vpack.c.b16 %v1135, %v1129
      %v1190 = vpack.c.b16 %v1136, %v1130
      %v1191 = vpack.c.b16 %v1137, %v1131
      %v1192 = vpack.c.b16 %v1138, %v1132
      %v1193 = vpack.c.b16 %v1139, %v1133
      %v1194 = vpack.c.b16 %v1140, %v1134
      %v1195 = vpack.c.b16 %v1147, %v1141
      %v1196 = vpack.c.b16 %v1148, %v1142
      %v1197 = vpack.c.b16 %v1149, %v1143
      %v1198 = vpack.c.b16 %v1150, %v1144
      %v1199 = vpack.c.b16 %v1151, %v1145
      %v1200 = vpack.c.b16 %v1152, %v1146
      %1249 = vmatprep.subr.bf16.mxu0 %v1154
      %1250 = vmatpush1.bf16.msra.mxu0 %v1153
      %1251 = vmatprep.subr.bf16.mxu0 %v1160
      %1252 = vmatpush1.bf16.msra.mxu0 %v1159
      %1253 = vmatprep.subr.bf16.mxu0 %v1166
      %1254 = vmatpush1.bf16.msra.mxu0 %v1165
      %1255 = vmatprep.subr.bf16.mxu0 %v1172
      %1256 = vmatpush1.bf16.msra.mxu0 %v1171
      %1257 = vmatprep.subr.bf16.mxu0 %v1178
      %1258 = vmatpush1.bf16.msra.mxu0 %v1177
      %1259 = vmatprep.subr.bf16.mxu0 %v1184
      %1260 = vmatpush1.bf16.msra.mxu0 %v1183
      %1261 = vmatprep.subr.bf16.mxu0 %v1190
      %1262 = vmatpush1.bf16.msra.mxu0 %v1189
      %1263 = vmatprep.subr.bf16.mxu0 %v1196
      %1264 = vmatpush1.bf16.msra.mxu0 %v1195
      %1265 = vmatprep.subr.bf16.mxu0 0
      %1266 = vmatpush1.bf16.msra.mxu0 0
      %1267 = vmatprep.subr.bf16.mxu0 0
      %1268 = vmatpush1.bf16.msra.mxu0 0
      %1269 = vmatprep.subr.bf16.mxu0 0
      %1270 = vmatpush1.bf16.msra.mxu0 0
      %1271 = vmatprep.subr.bf16.mxu0 0
      %1272 = vmatpush1.bf16.msra.mxu0 0
      %1273 = vmatprep.subr.bf16.mxu0 0
      %1274 = vmatpush1.bf16.msra.mxu0 0
      %1275 = vmatprep.subr.bf16.mxu0 0
      %1276 = vmatpush1.bf16.msra.mxu0 0
      %1277 = vmatprep.subr.bf16.mxu0 0
      %1278 = vmatpush1.bf16.msra.mxu0 0
      %1279 = vmatprep.subr.bf16.mxu0 0
      %1280 = vmatpush1.bf16.msra.mxu0 0
      %1281 = vmatprep.mubr.bf16.mxu0 0
      %1282 = vmatmul.mubr.bf16.gmra.mrb[0].mxu0 %v913
      %v1283 = vpop.f32.mrb[0].mxu0
      %v1284 = vadd.f32 %v982, %v1283
      %v1285 = vpop.f32.mrb[0].mxu0
      %v1286 = vadd.f32 %v986, %v1285
      %v1287 = vpop.f32.mrb[0].mxu0
      %v1288 = vadd.f32 %v982, %v1287
      %v1289 = vpop.f32.mrb[0].mxu0
      %v1290 = vadd.f32 %v986, %v1289
      %1291 = vmatprep.mubr.bf16.mxu0 0
      %1292 = vmatmul.mubr.bf16.gmra.mrb[0].mxu0 %v914
      %v1293 = vpop.f32.mrb[0].mxu0
      %v1294 = vadd.f32 %v982, %v1293
      %v1295 = vpop.f32.mrb[0].mxu0
      %v1296 = vadd.f32 %v986, %v1295
      %v1297 = vpop.f32.mrb[0].mxu0
      %v1298 = vadd.f32 %v982, %v1297
      %v1299 = vpop.f32.mrb[0].mxu0
      %v1300 = vadd.f32 %v986, %v1299
      %1301 = vmatprep.mubr.bf16.mxu0 0
      %1302 = vmatmul.mubr.bf16.gmra.mrb[0].mxu0 %v915
      %v1303 = vpop.f32.mrb[0].mxu0
      %v1304 = vadd.f32 %v982, %v1303
      %v1305 = vpop.f32.mrb[0].mxu0
      %v1306 = vadd.f32 %v986, %v1305
      %v1307 = vpop.f32.mrb[0].mxu0
      %v1308 = vadd.f32 %v982, %v1307
      %v1309 = vpop.f32.mrb[0].mxu0
      %v1310 = vadd.f32 %v986, %v1309
      %1311 = vmatprep.mubr.bf16.mxu0 0
      %1312 = vmatmul.mubr.bf16.gmra.mrb[0].mxu0 %v916
      %v1313 = vpop.f32.mrb[0].mxu0
      %v1314 = vadd.f32 %v982, %v1313
      %v1315 = vpop.f32.mrb[0].mxu0
      %v1316 = vadd.f32 %v986, %v1315
      %v1317 = vpop.f32.mrb[0].mxu0
      %v1318 = vadd.f32 %v982, %v1317
      %v1319 = vpop.f32.mrb[0].mxu0
      %v1320 = vadd.f32 %v986, %v1319
      %1321 = vmatprep.mubr.bf16.mxu0 0
      %1322 = vmatmul.mubr.bf16.gmra.mrb[0].mxu0 %v917
      %v1323 = vpop.f32.mrb[0].mxu0
      %v1324 = vadd.f32 %v982, %v1323
      %v1325 = vpop.f32.mrb[0].mxu0
      %v1326 = vadd.f32 %v986, %v1325
      %v1327 = vpop.f32.mrb[0].mxu0
      %v1328 = vadd.f32 %v982, %v1327
      %v1329 = vpop.f32.mrb[0].mxu0
      %v1330 = vadd.f32 %v986, %v1329
      %1331 = vmatprep.mubr.bf16.mxu0 0
      %1332 = vmatmul.mubr.bf16.gmra.mrb[0].mxu0 %v918
      %v1333 = vpop.f32.mrb[0].mxu0
      %v1334 = vadd.f32 %v982, %v1333
      %v1335 = vpop.f32.mrb[0].mxu0
      %v1336 = vadd.f32 %v986, %v1335
      %v1337 = vpop.f32.mrb[0].mxu0
      %v1338 = vadd.f32 %v982, %v1337
      %v1339 = vpop.f32.mrb[0].mxu0
      %v1340 = vadd.f32 %v986, %v1339
      %1341 = vmatprep.mubr.bf16.mxu0 0
      %1342 = vmatmul.mubr.bf16.gmra.mrb[0].mxu0 %v919
      %v1343 = vpop.f32.mrb[0].mxu0
      %v1344 = vadd.f32 %v982, %v1343
      %v1345 = vpop.f32.mrb[0].mxu0
      %v1346 = vadd.f32 %v986, %v1345
      %v1347 = vpop.f32.mrb[0].mxu0
      %v1348 = vadd.f32 %v982, %v1347
      %v1349 = vpop.f32.mrb[0].mxu0
      %v1350 = vadd.f32 %v986, %v1349
      %1351 = vmatprep.mubr.bf16.mxu0 0
      %1352 = vmatmul.mubr.bf16.gmra.mrb[0].mxu0 %v920
      %v1353 = vpop.f32.mrb[0].mxu0
      %v1354 = vadd.f32 %v982, %v1353
      %v1355 = vpop.f32.mrb[0].mxu0
      %v1356 = vadd.f32 %v986, %v1355
      %v1357 = vpop.f32.mrb[0].mxu0
      %v1358 = vadd.f32 %v982, %v1357
      %v1359 = vpop.f32.mrb[0].mxu0
      %v1360 = vadd.f32 %v986, %v1359
      %1361 = vmatprep.mubr.bf16.mxu0 0
      %1362 = vmatmul.mubr.bf16.gmra.mrb[0].mxu0 %v921
      %v1363 = vpop.f32.mrb[0].mxu0
      %v1364 = vadd.f32 %v982, %v1363
      %v1365 = vpop.f32.mrb[0].mxu0
      %v1366 = vadd.f32 %v986, %v1365
      %v1367 = vpop.f32.mrb[0].mxu0
      %v1368 = vadd.f32 %v982, %v1367
      %v1369 = vpop.f32.mrb[0].mxu0
      %v1370 = vadd.f32 %v986, %v1369
      %1371 = vmatprep.mubr.bf16.mxu0 0
      %1372 = vmatmul.mubr.bf16.gmra.mrb[0].mxu0 %v922
      %v1373 = vpop.f32.mrb[0].mxu0
      %v1374 = vadd.f32 %v982, %v1373
      %v1375 = vpop.f32.mrb[0].mxu0
      %v1376 = vadd.f32 %v986, %v1375
      %v1377 = vpop.f32.mrb[0].mxu0
      %v1378 = vadd.f32 %v982, %v1377
      %v1379 = vpop.f32.mrb[0].mxu0
      %v1380 = vadd.f32 %v986, %v1379
      %1381 = vmatprep.mubr.bf16.mxu0 0
      %1382 = vmatmul.mubr.bf16.gmra.mrb[0].mxu0 %v923
      %v1383 = vpop.f32.mrb[0].mxu0
      %v1384 = vadd.f32 %v982, %v1383
      %v1385 = vpop.f32.mrb[0].mxu0
      %v1386 = vadd.f32 %v986, %v1385
      %v1387 = vpop.f32.mrb[0].mxu0
      %v1388 = vadd.f32 %v982, %v1387
      %v1389 = vpop.f32.mrb[0].mxu0
      %v1390 = vadd.f32 %v986, %v1389
      %1391 = vmatprep.mubr.bf16.mxu0 0
      %1392 = vmatmul.mubr.bf16.gmra.mrb[0].mxu0 %v924
      %v1393 = vpop.f32.mrb[0].mxu0
      %v1394 = vadd.f32 %v982, %v1393
      %v1395 = vpop.f32.mrb[0].mxu0
      %v1396 = vadd.f32 %v986, %v1395
      %v1397 = vpop.f32.mrb[0].mxu0
      %v1398 = vadd.f32 %v982, %v1397
      %v1399 = vpop.f32.mrb[0].mxu0
      %v1400 = vadd.f32 %v986, %v1399
      %1401 = vmatprep.mubr.bf16.mxu0 0
      %1402 = vmatmul.mubr.bf16.gmra.mrb[0].mxu0 %v925
      %v1403 = vpop.f32.mrb[0].mxu0
      %v1404 = vadd.f32 %v982, %v1403
      %v1405 = vpop.f32.mrb[0].mxu0
      %v1406 = vadd.f32 %v986, %v1405
      %v1407 = vpop.f32.mrb[0].mxu0
      %v1408 = vadd.f32 %v982, %v1407
      %v1409 = vpop.f32.mrb[0].mxu0
      %v1410 = vadd.f32 %v986, %v1409
      %1411 = vmatprep.mubr.bf16.mxu0 0
      %1412 = vmatmul.mubr.bf16.gmra.mrb[0].mxu0 %v926
      %v1413 = vpop.f32.mrb[0].mxu0
      %v1414 = vadd.f32 %v982, %v1413
      %v1415 = vpop.f32.mrb[0].mxu0
      %v1416 = vadd.f32 %v986, %v1415
      %v1417 = vpop.f32.mrb[0].mxu0
      %v1418 = vadd.f32 %v982, %v1417
      %v1419 = vpop.f32.mrb[0].mxu0
      %v1420 = vadd.f32 %v986, %v1419
      %1421 = vmatprep.mubr.bf16.mxu0 0
      %1422 = vmatmul.mubr.bf16.gmra.mrb[0].mxu0 %v927
      %v1423 = vpop.f32.mrb[0].mxu0
      %v1424 = vadd.f32 %v982, %v1423
      %v1425 = vpop.f32.mrb[0].mxu0
      %v1426 = vadd.f32 %v986, %v1425
      %v1427 = vpop.f32.mrb[0].mxu0
      %v1428 = vadd.f32 %v982, %v1427
      %v1429 = vpop.f32.mrb[0].mxu0
      %v1430 = vadd.f32 %v986, %v1429
      %1431 = vmatprep.mubr.bf16.mxu0 0
      %1432 = vmatmul.mubr.bf16.gmra.mrb[0].mxu0 %v928
      %v1433 = vpop.f32.mrb[0].mxu0
      %v1434 = vadd.f32 %v982, %v1433
      %v1435 = vpop.f32.mrb[0].mxu0
      %v1436 = vadd.f32 %v986, %v1435
      %v1437 = vpop.f32.mrb[0].mxu0
      %v1438 = vadd.f32 %v982, %v1437
      %v1439 = vpop.f32.mrb[0].mxu0
      %v1440 = vadd.f32 %v986, %v1439
      %1441 = vdwg.mxu0
      %1442 = vmatprep.subr.bf16.mxu0 %v1156
      %1443 = vmatpush1.bf16.msra.mxu0 %v1155
      %1444 = vmatprep.subr.bf16.mxu0 %v1162
      %1445 = vmatpush1.bf16.msra.mxu0 %v1161
      %1446 = vmatprep.subr.bf16.mxu0 %v1168
      %1447 = vmatpush1.bf16.msra.mxu0 %v1167
      %1448 = vmatprep.subr.bf16.mxu0 %v1174
      %1449 = vmatpush1.bf16.msra.mxu0 %v1173
      %1450 = vmatprep.subr.bf16.mxu0 %v1180
      %1451 = vmatpush1.bf16.msra.mxu0 %v1179
      %1452 = vmatprep.subr.bf16.mxu0 %v1186
      %1453 = vmatpush1.bf16.msra.mxu0 %v1185
      %1454 = vmatprep.subr.bf16.mxu0 %v1192
      %1455 = vmatpush1.bf16.msra.mxu0 %v1191
      %1456 = vmatprep.subr.bf16.mxu0 %v1198
      %1457 = vmatpush1.bf16.msra.mxu0 %v1197
      %1458 = vmatprep.subr.bf16.mxu0 0
      %1459 = vmatpush1.bf16.msra.mxu0 0
      %1460 = vmatprep.subr.bf16.mxu0 0
      %1461 = vmatpush1.bf16.msra.mxu0 0
      %1462 = vmatprep.subr.bf16.mxu0 0
      %1463 = vmatpush1.bf16.msra.mxu0 0
      %1464 = vmatprep.subr.bf16.mxu0 0
      %1465 = vmatpush1.bf16.msra.mxu0 0
      %1466 = vmatprep.subr.bf16.mxu0 0
      %1467 = vmatpush1.bf16.msra.mxu0 0
      %1468 = vmatprep.subr.bf16.mxu0 0
      %1469 = vmatpush1.bf16.msra.mxu0 0
      %1470 = vmatprep.subr.bf16.mxu0 0
      %1471 = vmatpush1.bf16.msra.mxu0 0
      %1472 = vmatprep.subr.bf16.mxu0 0
      %1473 = vmatpush1.bf16.msra.mxu0 0
      %1474 = vmatprep.mubr.bf16.mxu0 0
      %1475 = vmatmul.mubr.bf16.gmra.mrb[0].mxu0 %v913
      %v1476 = vpop.f32.mrb[0].mxu0
      %v1477 = vadd.f32 %v990, %v1476
      %v1478 = vpop.f32.mrb[0].mxu0
      %v1479 = vadd.f32 %v994, %v1478
      %v1480 = vpop.f32.mrb[0].mxu0
      %v1481 = vadd.f32 %v990, %v1480
      %v1482 = vpop.f32.mrb[0].mxu0
      %v1483 = vadd.f32 %v994, %v1482
      %1484 = vmatprep.mubr.bf16.mxu0 0
      %1485 = vmatmul.mubr.bf16.gmra.mrb[0].mxu0 %v914
      %v1486 = vpop.f32.mrb[0].mxu0
      %v1487 = vadd.f32 %v990, %v1486
      %v1488 = vpop.f32.mrb[0].mxu0
      %v1489 = vadd.f32 %v994, %v1488
      %v1490 = vpop.f32.mrb[0].mxu0
      %v1491 = vadd.f32 %v990, %v1490
      %v1492 = vpop.f32.mrb[0].mxu0
      %v1493 = vadd.f32 %v994, %v1492
      %1494 = vmatprep.mubr.bf16.mxu0 0
      %1495 = vmatmul.mubr.bf16.gmra.mrb[0].mxu0 %v915
      %v1496 = vpop.f32.mrb[0].mxu0
      %v1497 = vadd.f32 %v990, %v1496
      %v1498 = vpop.f32.mrb[0].mxu0
      %v1499 = vadd.f32 %v994, %v1498
      %v1500 = vpop.f32.mrb[0].mxu0
      %v1501 = vadd.f32 %v990, %v1500
      %v1502 = vpop.f32.mrb[0].mxu0
      %v1503 = vadd.f32 %v994, %v1502
      %1504 = vmatprep.mubr.bf16.mxu0 0
      %1505 = vmatmul.mubr.bf16.gmra.mrb[0].mxu0 %v916
      %v1506 = vpop.f32.mrb[0].mxu0
      %v1507 = vadd.f32 %v990, %v1506
      %v1508 = vpop.f32.mrb[0].mxu0
      %v1509 = vadd.f32 %v994, %v1508
      %v1510 = vpop.f32.mrb[0].mxu0
      %v1511 = vadd.f32 %v990, %v1510
      %v1512 = vpop.f32.mrb[0].mxu0
      %v1513 = vadd.f32 %v994, %v1512
      %1514 = vmatprep.mubr.bf16.mxu0 0
      %1515 = vmatmul.mubr.bf16.gmra.mrb[0].mxu0 %v917
      %v1516 = vpop.f32.mrb[0].mxu0
      %v1517 = vadd.f32 %v990, %v1516
      %v1518 = vpop.f32.mrb[0].mxu0
      %v1519 = vadd.f32 %v994, %v1518
      %v1520 = vpop.f32.mrb[0].mxu0
      %v1521 = vadd.f32 %v990, %v1520
      %v1522 = vpop.f32.mrb[0].mxu0
      %v1523 = vadd.f32 %v994, %v1522
      %1524 = vmatprep.mubr.bf16.mxu0 0
      %1525 = vmatmul.mubr.bf16.gmra.mrb[0].mxu0 %v918
      %v1526 = vpop.f32.mrb[0].mxu0
      %v1527 = vadd.f32 %v990, %v1526
      %v1528 = vpop.f32.mrb[0].mxu0
      %v1529 = vadd.f32 %v994, %v1528
      %v1530 = vpop.f32.mrb[0].mxu0
      %v1531 = vadd.f32 %v990, %v1530
      %v1532 = vpop.f32.mrb[0].mxu0
      %v1533 = vadd.f32 %v994, %v1532
      %1534 = vmatprep.mubr.bf16.mxu0 0
      %1535 = vmatmul.mubr.bf16.gmra.mrb[0].mxu0 %v919
      %v1536 = vpop.f32.mrb[0].mxu0
      %v1537 = vadd.f32 %v990, %v1536
      %v1538 = vpop.f32.mrb[0].mxu0
      %v1539 = vadd.f32 %v994, %v1538
      %v1540 = vpop.f32.mrb[0].mxu0
      %v1541 = vadd.f32 %v990, %v1540
      %v1542 = vpop.f32.mrb[0].mxu0
      %v1543 = vadd.f32 %v994, %v1542
      %1544 = vmatprep.mubr.bf16.mxu0 0
      %1545 = vmatmul.mubr.bf16.gmra.mrb[0].mxu0 %v920
      %v1546 = vpop.f32.mrb[0].mxu0
      %v1547 = vadd.f32 %v990, %v1546
      %v1548 = vpop.f32.mrb[0].mxu0
      %v1549 = vadd.f32 %v994, %v1548
      %v1550 = vpop.f32.mrb[0].mxu0
      %v1551 = vadd.f32 %v990, %v1550
      %v1552 = vpop.f32.mrb[0].mxu0
      %v1553 = vadd.f32 %v994, %v1552
      %1554 = vmatprep.mubr.bf16.mxu0 0
      %1555 = vmatmul.mubr.bf16.gmra.mrb[0].mxu0 %v921
      %v1556 = vpop.f32.mrb[0].mxu0
      %v1557 = vadd.f32 %v990, %v1556
      %v1558 = vpop.f32.mrb[0].mxu0
      %v1559 = vadd.f32 %v994, %v1558
      %v1560 = vpop.f32.mrb[0].mxu0
      %v1561 = vadd.f32 %v990, %v1560
      %v1562 = vpop.f32.mrb[0].mxu0
      %v1563 = vadd.f32 %v994, %v1562
      %1564 = vmatprep.mubr.bf16.mxu0 0
      %1565 = vmatmul.mubr.bf16.gmra.mrb[0].mxu0 %v922
      %v1566 = vpop.f32.mrb[0].mxu0
      %v1567 = vadd.f32 %v990, %v1566
      %v1568 = vpop.f32.mrb[0].mxu0
      %v1569 = vadd.f32 %v994, %v1568
      %v1570 = vpop.f32.mrb[0].mxu0
      %v1571 = vadd.f32 %v990, %v1570
      %v1572 = vpop.f32.mrb[0].mxu0
      %v1573 = vadd.f32 %v994, %v1572
      %1574 = vmatprep.mubr.bf16.mxu0 0
      %1575 = vmatmul.mubr.bf16.gmra.mrb[0].mxu0 %v923
      %v1576 = vpop.f32.mrb[0].mxu0
      %v1577 = vadd.f32 %v990, %v1576
      %v1578 = vpop.f32.mrb[0].mxu0
      %v1579 = vadd.f32 %v994, %v1578
      %v1580 = vpop.f32.mrb[0].mxu0
      %v1581 = vadd.f32 %v990, %v1580
      %v1582 = vpop.f32.mrb[0].mxu0
      %v1583 = vadd.f32 %v994, %v1582
      %1584 = vmatprep.mubr.bf16.mxu0 0
      %1585 = vmatmul.mubr.bf16.gmra.mrb[0].mxu0 %v924
      %v1586 = vpop.f32.mrb[0].mxu0
      %v1587 = vadd.f32 %v990, %v1586
      %v1588 = vpop.f32.mrb[0].mxu0
      %v1589 = vadd.f32 %v994, %v1588
      %v1590 = vpop.f32.mrb[0].mxu0
      %v1591 = vadd.f32 %v990, %v1590
      %v1592 = vpop.f32.mrb[0].mxu0
      %v1593 = vadd.f32 %v994, %v1592
      %1594 = vmatprep.mubr.bf16.mxu0 0
      %1595 = vmatmul.mubr.bf16.gmra.mrb[0].mxu0 %v925
      %v1596 = vpop.f32.mrb[0].mxu0
      %v1597 = vadd.f32 %v990, %v1596
      %v1598 = vpop.f32.mrb[0].mxu0
      %v1599 = vadd.f32 %v994, %v1598
      %v1600 = vpop.f32.mrb[0].mxu0
      %v1601 = vadd.f32 %v990, %v1600
      %v1602 = vpop.f32.mrb[0].mxu0
      %v1603 = vadd.f32 %v994, %v1602
      %1604 = vmatprep.mubr.bf16.mxu0 0
      %1605 = vmatmul.mubr.bf16.gmra.mrb[0].mxu0 %v926
      %v1606 = vpop.f32.mrb[0].mxu0
      %v1607 = vadd.f32 %v990, %v1606
      %v1608 = vpop.f32.mrb[0].mxu0
      %v1609 = vadd.f32 %v994, %v1608
      %v1610 = vpop.f32.mrb[0].mxu0
      %v1611 = vadd.f32 %v990, %v1610
      %v1612 = vpop.f32.mrb[0].mxu0
      %v1613 = vadd.f32 %v994, %v1612
      %1614 = vmatprep.mubr.bf16.mxu0 0
      %1615 = vmatmul.mubr.bf16.gmra.mrb[0].mxu0 %v927
      %v1616 = vpop.f32.mrb[0].mxu0
      %v1617 = vadd.f32 %v990, %v1616
      %v1618 = vpop.f32.mrb[0].mxu0
      %v1619 = vadd.f32 %v994, %v1618
      %v1620 = vpop.f32.mrb[0].mxu0
      %v1621 = vadd.f32 %v990, %v1620
      %v1622 = vpop.f32.mrb[0].mxu0
      %v1623 = vadd.f32 %v994, %v1622
      %1624 = vmatprep.mubr.bf16.mxu0 0
      %1625 = vmatmul.mubr.bf16.gmra.mrb[0].mxu0 %v928
      %v1626 = vpop.f32.mrb[0].mxu0
      %v1627 = vadd.f32 %v990, %v1626
      %v1628 = vpop.f32.mrb[0].mxu0
      %v1629 = vadd.f32 %v994, %v1628
      %v1630 = vpop.f32.mrb[0].mxu0
      %v1631 = vadd.f32 %v990, %v1630
      %v1632 = vpop.f32.mrb[0].mxu0
      %v1633 = vadd.f32 %v994, %v1632
      %1634 = vdwg.mxu0
      %1635 = vmatprep.subr.bf16.mxu0 %v1158
      %1636 = vmatpush1.bf16.msra.mxu0 %v1157
      %1637 = vmatprep.subr.bf16.mxu0 %v1164
      %1638 = vmatpush1.bf16.msra.mxu0 %v1163
      %1639 = vmatprep.subr.bf16.mxu0 %v1170
      %1640 = vmatpush1.bf16.msra.mxu0 %v1169
      %1641 = vmatprep.subr.bf16.mxu0 %v1176
      %1642 = vmatpush1.bf16.msra.mxu0 %v1175
      %1643 = vmatprep.subr.bf16.mxu0 %v1182
      %1644 = vmatpush1.bf16.msra.mxu0 %v1181
      %1645 = vmatprep.subr.bf16.mxu0 %v1188
      %1646 = vmatpush1.bf16.msra.mxu0 %v1187
      %1647 = vmatprep.subr.bf16.mxu0 %v1194
      %1648 = vmatpush1.bf16.msra.mxu0 %v1193
      %1649 = vmatprep.subr.bf16.mxu0 %v1200
      %1650 = vmatpush1.bf16.msra.mxu0 %v1199
      %1651 = vmatprep.subr.bf16.mxu0 0
      %1652 = vmatpush1.bf16.msra.mxu0 0
      %1653 = vmatprep.subr.bf16.mxu0 0
      %1654 = vmatpush1.bf16.msra.mxu0 0
      %1655 = vmatprep.subr.bf16.mxu0 0
      %1656 = vmatpush1.bf16.msra.mxu0 0
      %1657 = vmatprep.subr.bf16.mxu0 0
      %1658 = vmatpush1.bf16.msra.mxu0 0
      %1659 = vmatprep.subr.bf16.mxu0 0
      %1660 = vmatpush1.bf16.msra.mxu0 0
      %1661 = vmatprep.subr.bf16.mxu0 0
      %1662 = vmatpush1.bf16.msra.mxu0 0
      %1663 = vmatprep.subr.bf16.mxu0 0
      %1664 = vmatpush1.bf16.msra.mxu0 0
      %1665 = vmatprep.subr.bf16.mxu0 0
      %1666 = vmatpush1.bf16.msra.mxu0 0
      %1667 = vmatprep.mubr.bf16.mxu0 0
      %1668 = vmatmul.mubr.bf16.gmra.mrb[0].mxu0 %v913
      %v1669 = vpop.f32.mrb[0].mxu0
      %v1670 = vadd.f32 %v998, %v1669
      %v1671 = vpop.f32.mrb[0].mxu0
      %v1672 = vadd.f32 %v1002, %v1671
      %v1673 = vpop.f32.mrb[0].mxu0
      %v1674 = vadd.f32 %v998, %v1673
      %v1675 = vpop.f32.mrb[0].mxu0
      %v1676 = vadd.f32 %v1002, %v1675
      %1677 = vmatprep.mubr.bf16.mxu0 0
      %1678 = vmatmul.mubr.bf16.gmra.mrb[0].mxu0 %v914
      %v1679 = vpop.f32.mrb[0].mxu0
      %v1680 = vadd.f32 %v998, %v1679
      %v1681 = vpop.f32.mrb[0].mxu0
      %v1682 = vadd.f32 %v1002, %v1681
      %v1683 = vpop.f32.mrb[0].mxu0
      %v1684 = vadd.f32 %v998, %v1683
      %v1685 = vpop.f32.mrb[0].mxu0
      %v1686 = vadd.f32 %v1002, %v1685
      %1687 = vmatprep.mubr.bf16.mxu0 0
      %1688 = vmatmul.mubr.bf16.gmra.mrb[0].mxu0 %v915
      %v1689 = vpop.f32.mrb[0].mxu0
      %v1690 = vadd.f32 %v998, %v1689
      %v1691 = vpop.f32.mrb[0].mxu0
      %v1692 = vadd.f32 %v1002, %v1691
      %v1693 = vpop.f32.mrb[0].mxu0
      %v1694 = vadd.f32 %v998, %v1693
      %v1695 = vpop.f32.mrb[0].mxu0
      %v1696 = vadd.f32 %v1002, %v1695
      %1697 = vmatprep.mubr.bf16.mxu0 0
      %1698 = vmatmul.mubr.bf16.gmra.mrb[0].mxu0 %v916
      %v1699 = vpop.f32.mrb[0].mxu0
      %v1700 = vadd.f32 %v998, %v1699
      %v1701 = vpop.f32.mrb[0].mxu0
      %v1702 = vadd.f32 %v1002, %v1701
      %v1703 = vpop.f32.mrb[0].mxu0
      %v1704 = vadd.f32 %v998, %v1703
      %v1705 = vpop.f32.mrb[0].mxu0
      %v1706 = vadd.f32 %v1002, %v1705
      %1707 = vmatprep.mubr.bf16.mxu0 0
      %1708 = vmatmul.mubr.bf16.gmra.mrb[0].mxu0 %v917
      %v1709 = vpop.f32.mrb[0].mxu0
      %v1710 = vadd.f32 %v998, %v1709
      %v1711 = vpop.f32.mrb[0].mxu0
      %v1712 = vadd.f32 %v1002, %v1711
      %v1713 = vpop.f32.mrb[0].mxu0
      %v1714 = vadd.f32 %v998, %v1713
      %v1715 = vpop.f32.mrb[0].mxu0
      %v1716 = vadd.f32 %v1002, %v1715
      %1717 = vmatprep.mubr.bf16.mxu0 0
      %1718 = vmatmul.mubr.bf16.gmra.mrb[0].mxu0 %v918
      %v1719 = vpop.f32.mrb[0].mxu0
      %v1720 = vadd.f32 %v998, %v1719
      %v1721 = vpop.f32.mrb[0].mxu0
      %v1722 = vadd.f32 %v1002, %v1721
      %v1723 = vpop.f32.mrb[0].mxu0
      %v1724 = vadd.f32 %v998, %v1723
      %v1725 = vpop.f32.mrb[0].mxu0
      %v1726 = vadd.f32 %v1002, %v1725
      %1727 = vmatprep.mubr.bf16.mxu0 0
      %1728 = vmatmul.mubr.bf16.gmra.mrb[0].mxu0 %v919
      %v1729 = vpop.f32.mrb[0].mxu0
      %v1730 = vadd.f32 %v998, %v1729
      %v1731 = vpop.f32.mrb[0].mxu0
      %v1732 = vadd.f32 %v1002, %v1731
      %v1733 = vpop.f32.mrb[0].mxu0
      %v1734 = vadd.f32 %v998, %v1733
      %v1735 = vpop.f32.mrb[0].mxu0
      %v1736 = vadd.f32 %v1002, %v1735
      %1737 = vmatprep.mubr.bf16.mxu0 0
      %1738 = vmatmul.mubr.bf16.gmra.mrb[0].mxu0 %v920
      %v1739 = vpop.f32.mrb[0].mxu0
      %v1740 = vadd.f32 %v998, %v1739
      %v1741 = vpop.f32.mrb[0].mxu0
      %v1742 = vadd.f32 %v1002, %v1741
      %v1743 = vpop.f32.mrb[0].mxu0
      %v1744 = vadd.f32 %v998, %v1743
      %v1745 = vpop.f32.mrb[0].mxu0
      %v1746 = vadd.f32 %v1002, %v1745
      %1747 = vmatprep.mubr.bf16.mxu0 0
      %1748 = vmatmul.mubr.bf16.gmra.mrb[0].mxu0 %v921
      %v1749 = vpop.f32.mrb[0].mxu0
      %v1750 = vadd.f32 %v998, %v1749
      %v1751 = vpop.f32.mrb[0].mxu0
      %v1752 = vadd.f32 %v1002, %v1751
      %v1753 = vpop.f32.mrb[0].mxu0
      %v1754 = vadd.f32 %v998, %v1753
      %v1755 = vpop.f32.mrb[0].mxu0
      %v1756 = vadd.f32 %v1002, %v1755
      %1757 = vmatprep.mubr.bf16.mxu0 0
      %1758 = vmatmul.mubr.bf16.gmra.mrb[0].mxu0 %v922
      %v1759 = vpop.f32.mrb[0].mxu0
      %v1760 = vadd.f32 %v998, %v1759
      %v1761 = vpop.f32.mrb[0].mxu0
      %v1762 = vadd.f32 %v1002, %v1761
      %v1763 = vpop.f32.mrb[0].mxu0
      %v1764 = vadd.f32 %v998, %v1763
      %v1765 = vpop.f32.mrb[0].mxu0
      %v1766 = vadd.f32 %v1002, %v1765
      %1767 = vmatprep.mubr.bf16.mxu0 0
      %1768 = vmatmul.mubr.bf16.gmra.mrb[0].mxu0 %v923
      %v1769 = vpop.f32.mrb[0].mxu0
      %v1770 = vadd.f32 %v998, %v1769
      %v1771 = vpop.f32.mrb[0].mxu0
      %v1772 = vadd.f32 %v1002, %v1771
      %v1773 = vpop.f32.mrb[0].mxu0
      %v1774 = vadd.f32 %v998, %v1773
      %v1775 = vpop.f32.mrb[0].mxu0
      %v1776 = vadd.f32 %v1002, %v1775
      %1777 = vmatprep.mubr.bf16.mxu0 0
      %1778 = vmatmul.mubr.bf16.gmra.mrb[0].mxu0 %v924
      %v1779 = vpop.f32.mrb[0].mxu0
      %v1780 = vadd.f32 %v998, %v1779
      %v1781 = vpop.f32.mrb[0].mxu0
      %v1782 = vadd.f32 %v1002, %v1781
      %v1783 = vpop.f32.mrb[0].mxu0
      %v1784 = vadd.f32 %v998, %v1783
      %v1785 = vpop.f32.mrb[0].mxu0
      %v1786 = vadd.f32 %v1002, %v1785
      %1787 = vmatprep.mubr.bf16.mxu0 0
      %1788 = vmatmul.mubr.bf16.gmra.mrb[0].mxu0 %v925
      %v1789 = vpop.f32.mrb[0].mxu0
      %v1790 = vadd.f32 %v998, %v1789
      %v1791 = vpop.f32.mrb[0].mxu0
      %v1792 = vadd.f32 %v1002, %v1791
      %v1793 = vpop.f32.mrb[0].mxu0
      %v1794 = vadd.f32 %v998, %v1793
      %v1795 = vpop.f32.mrb[0].mxu0
      %v1796 = vadd.f32 %v1002, %v1795
      %1797 = vmatprep.mubr.bf16.mxu0 0
      %1798 = vmatmul.mubr.bf16.gmra.mrb[0].mxu0 %v926
      %v1799 = vpop.f32.mrb[0].mxu0
      %v1800 = vadd.f32 %v998, %v1799
      %v1801 = vpop.f32.mrb[0].mxu0
      %v1802 = vadd.f32 %v1002, %v1801
      %v1803 = vpop.f32.mrb[0].mxu0
      %v1804 = vadd.f32 %v998, %v1803
      %v1805 = vpop.f32.mrb[0].mxu0
      %v1806 = vadd.f32 %v1002, %v1805
      %1807 = vmatprep.mubr.bf16.mxu0 0
      %1808 = vmatmul.mubr.bf16.gmra.mrb[0].mxu0 %v927
      %v1809 = vpop.f32.mrb[0].mxu0
      %v1810 = vadd.f32 %v998, %v1809
      %v1811 = vpop.f32.mrb[0].mxu0
      %v1812 = vadd.f32 %v1002, %v1811
      %v1813 = vpop.f32.mrb[0].mxu0
      %v1814 = vadd.f32 %v998, %v1813
      %v1815 = vpop.f32.mrb[0].mxu0
      %v1816 = vadd.f32 %v1002, %v1815
      %1817 = vmatprep.mubr.bf16.mxu0 0
      %1818 = vmatmul.mubr.bf16.gmra.mrb[0].mxu0 %v928
      %v1819 = vpop.f32.mrb[0].mxu0
      %v1820 = vadd.f32 %v998, %v1819
      %v1821 = vpop.f32.mrb[0].mxu0
      %v1822 = vadd.f32 %v1002, %v1821
      %v1823 = vpop.f32.mrb[0].mxu0
      %v1824 = vadd.f32 %v998, %v1823
      %v1825 = vpop.f32.mrb[0].mxu0
      %v1826 = vadd.f32 %v1002, %v1825
      %1827 = vdwg.mxu0
      %v1828 = vpack.c.bf16 %v1288, %v1284
      %v1829 = vpack.c.bf16 %v1290, %v1286
      %v1830 = vpack.c.bf16 %v1481, %v1477
      %v1831 = vpack.c.bf16 %v1483, %v1479
      %v1832 = vpack.c.bf16 %v1674, %v1670
      %v1833 = vpack.c.bf16 %v1676, %v1672
      %v1834 = vpack.c.bf16 %v1298, %v1294
      %v1835 = vpack.c.bf16 %v1300, %v1296
      %v1836 = vpack.c.bf16 %v1491, %v1487
      %v1837 = vpack.c.bf16 %v1493, %v1489
      %v1838 = vpack.c.bf16 %v1684, %v1680
      %v1839 = vpack.c.bf16 %v1686, %v1682
      %v1840 = vpack.c.bf16 %v1308, %v1304
      %v1841 = vpack.c.bf16 %v1310, %v1306
      %v1842 = vpack.c.bf16 %v1501, %v1497
      %v1843 = vpack.c.bf16 %v1503, %v1499
      %v1844 = vpack.c.bf16 %v1694, %v1690
      %v1845 = vpack.c.bf16 %v1696, %v1692
      %v1846 = vpack.c.bf16 %v1318, %v1314
      %v1847 = vpack.c.bf16 %v1320, %v1316
      %v1848 = vpack.c.bf16 %v1511, %v1507
      %v1849 = vpack.c.bf16 %v1513, %v1509
      %v1850 = vpack.c.bf16 %v1704, %v1700
      %v1851 = vpack.c.bf16 %v1706, %v1702
      %v1852 = vpack.c.bf16 %v1328, %v1324
      %v1853 = vpack.c.bf16 %v1330, %v1326
      %v1854 = vpack.c.bf16 %v1521, %v1517
      %v1855 = vpack.c.bf16 %v1523, %v1519
      %v1856 = vpack.c.bf16 %v1714, %v1710
      %v1857 = vpack.c.bf16 %v1716, %v1712
      %v1858 = vpack.c.bf16 %v1338, %v1334
      %v1859 = vpack.c.bf16 %v1340, %v1336
      %v1860 = vpack.c.bf16 %v1531, %v1527
      %v1861 = vpack.c.bf16 %v1533, %v1529
      %v1862 = vpack.c.bf16 %v1724, %v1720
      %v1863 = vpack.c.bf16 %v1726, %v1722
      %v1864 = vpack.c.bf16 %v1348, %v1344
      %v1865 = vpack.c.bf16 %v1350, %v1346
      %v1866 = vpack.c.bf16 %v1541, %v1537
      %v1867 = vpack.c.bf16 %v1543, %v1539
      %v1868 = vpack.c.bf16 %v1734, %v1730
      %v1869 = vpack.c.bf16 %v1736, %v1732
      %v1870 = vpack.c.bf16 %v1358, %v1354
      %v1871 = vpack.c.bf16 %v1360, %v1356
      %v1872 = vpack.c.bf16 %v1551, %v1547
      %v1873 = vpack.c.bf16 %v1553, %v1549
      %v1874 = vpack.c.bf16 %v1744, %v1740
      %v1875 = vpack.c.bf16 %v1746, %v1742
      %v1876 = vpack.c.bf16 %v1368, %v1364
      %v1877 = vpack.c.bf16 %v1370, %v1366
      %v1878 = vpack.c.bf16 %v1561, %v1557
      %v1879 = vpack.c.bf16 %v1563, %v1559
      %v1880 = vpack.c.bf16 %v1754, %v1750
      %v1881 = vpack.c.bf16 %v1756, %v1752
      %v1882 = vpack.c.bf16 %v1378, %v1374
      %v1883 = vpack.c.bf16 %v1380, %v1376
      %v1884 = vpack.c.bf16 %v1571, %v1567
      %v1885 = vpack.c.bf16 %v1573, %v1569
      %v1886 = vpack.c.bf16 %v1764, %v1760
      %v1887 = vpack.c.bf16 %v1766, %v1762
      %v1888 = vpack.c.bf16 %v1388, %v1384
      %v1889 = vpack.c.bf16 %v1390, %v1386
      %v1890 = vpack.c.bf16 %v1581, %v1577
      %v1891 = vpack.c.bf16 %v1583, %v1579
      %v1892 = vpack.c.bf16 %v1774, %v1770
      %v1893 = vpack.c.bf16 %v1776, %v1772
      %v1894 = vpack.c.bf16 %v1398, %v1394
      %v1895 = vpack.c.bf16 %v1400, %v1396
      %v1896 = vpack.c.bf16 %v1591, %v1587
      %v1897 = vpack.c.bf16 %v1593, %v1589
      %v1898 = vpack.c.bf16 %v1784, %v1780
      %v1899 = vpack.c.bf16 %v1786, %v1782
      %v1900 = vpack.c.bf16 %v1408, %v1404
      %v1901 = vpack.c.bf16 %v1410, %v1406
      %v1902 = vpack.c.bf16 %v1601, %v1597
      %v1903 = vpack.c.bf16 %v1603, %v1599
      %v1904 = vpack.c.bf16 %v1794, %v1790
      %v1905 = vpack.c.bf16 %v1796, %v1792
      %v1906 = vpack.c.bf16 %v1418, %v1414
      %v1907 = vpack.c.bf16 %v1420, %v1416
      %v1908 = vpack.c.bf16 %v1611, %v1607
      %v1909 = vpack.c.bf16 %v1613, %v1609
      %v1910 = vpack.c.bf16 %v1804, %v1800
      %v1911 = vpack.c.bf16 %v1806, %v1802
      %v1912 = vpack.c.bf16 %v1428, %v1424
      %v1913 = vpack.c.bf16 %v1430, %v1426
      %v1914 = vpack.c.bf16 %v1621, %v1617
      %v1915 = vpack.c.bf16 %v1623, %v1619
      %v1916 = vpack.c.bf16 %v1814, %v1810
      %v1917 = vpack.c.bf16 %v1816, %v1812
      %v1918 = vpack.c.bf16 %v1438, %v1434
      %v1919 = vpack.c.bf16 %v1440, %v1436
      %v1920 = vpack.c.bf16 %v1631, %v1627
      %v1921 = vpack.c.bf16 %v1633, %v1629
      %v1922 = vpack.c.bf16 %v1824, %v1820
      %v1923 = vpack.c.bf16 %v1826, %v1822
      %1924 = vst [vmem:[#allocation2] sm:$0xff] %v1828
      %1925 = vst [vmem:[#allocation2 + $0x8] sm:$0xff] %v1829
      %1926 = vst [vmem:[#allocation2 + $0x10] sm:$0xff] %v1834
      %1927 = vst [vmem:[#allocation2 + $0x18] sm:$0xff] %v1835
      %1928 = vst [vmem:[#allocation2 + $0x20] sm:$0xff] %v1840
      %1929 = vst [vmem:[#allocation2 + $0x28] sm:$0xff] %v1841
      %1930 = vst [vmem:[#allocation2 + $0x30] sm:$0xff] %v1846
      %1931 = vst [vmem:[#allocation2 + $0x38] sm:$0xff] %v1847
      %1932 = vst [vmem:[#allocation2 + $0x40] sm:$0xff] %v1852
      %1933 = vst [vmem:[#allocation2 + $0x48] sm:$0xff] %v1853
      %1934 = vst [vmem:[#allocation2 + $0x50] sm:$0xff] %v1858
      %1935 = vst [vmem:[#allocation2 + $0x58] sm:$0xff] %v1859
      %1936 = vst [vmem:[#allocation2 + $0x60] sm:$0xff] %v1864
      %1937 = vst [vmem:[#allocation2 + $0x68] sm:$0xff] %v1865
      %1938 = vst [vmem:[#allocation2 + $0x70] sm:$0xff] %v1870
      %1939 = vst [vmem:[#allocation2 + $0x78] sm:$0xff] %v1871
      %1940 = vst [vmem:[#allocation2 + $0x80] sm:$0xff] %v1876
      %1941 = vst [vmem:[#allocation2 + $0x88] sm:$0xff] %v1877
      %1942 = vst [vmem:[#allocation2 + $0x90] sm:$0xff] %v1882
      %1943 = vst [vmem:[#allocation2 + $0x98] sm:$0xff] %v1883
      %1944 = vst [vmem:[#allocation2 + $0xa0] sm:$0xff] %v1888
      %1945 = vst [vmem:[#allocation2 + $0xa8] sm:$0xff] %v1889
      %1946 = vst [vmem:[#allocation2 + $0xb0] sm:$0xff] %v1894
      %1947 = vst [vmem:[#allocation2 + $0xb8] sm:$0xff] %v1895
      %1948 = vst [vmem:[#allocation2 + $0xc0] sm:$0xff] %v1900
      %1949 = vst [vmem:[#allocation2 + $0xc8] sm:$0xff] %v1901
      %1950 = vst [vmem:[#allocation2 + $0xd0] sm:$0xff] %v1906
      %1951 = vst [vmem:[#allocation2 + $0xd8] sm:$0xff] %v1907
      %1952 = vst [vmem:[#allocation2 + $0xe0] sm:$0xff] %v1912
      %1953 = vst [vmem:[#allocation2 + $0xe8] sm:$0xff] %v1913
      %1954 = vst [vmem:[#allocation2 + $0xf0] sm:$0xff] %v1918
      %1955 = vst [vmem:[#allocation2 + $0xf8] sm:$0xff] %v1919
      %1956 = vst [vmem:[#allocation3] sm:$0xff] %v1830
      %1957 = vst [vmem:[#allocation3 + $0x8] sm:$0xff] %v1831
      %1958 = vst [vmem:[#allocation3 + $0x10] sm:$0xff] %v1836
      %1959 = vst [vmem:[#allocation3 + $0x18] sm:$0xff] %v1837
      %1960 = vst [vmem:[#allocation3 + $0x20] sm:$0xff] %v1842
      %1961 = vst [vmem:[#allocation3 + $0x28] sm:$0xff] %v1843
      %1962 = vst [vmem:[#allocation3 + $0x30] sm:$0xff] %v1848
      %1963 = vst [vmem:[#allocation3 + $0x38] sm:$0xff] %v1849
      %1964 = vst [vmem:[#allocation3 + $0x40] sm:$0xff] %v1854
      %1965 = vst [vmem:[#allocation3 + $0x48] sm:$0xff] %v1855
      %1966 = vst [vmem:[#allocation3 + $0x50] sm:$0xff] %v1860
      %1967 = vst [vmem:[#allocation3 + $0x58] sm:$0xff] %v1861
      %1968 = vst [vmem:[#allocation3 + $0x60] sm:$0xff] %v1866
      %1969 = vst [vmem:[#allocation3 + $0x68] sm:$0xff] %v1867
      %1970 = vst [vmem:[#allocation3 + $0x70] sm:$0xff] %v1872
      %1971 = vst [vmem:[#allocation3 + $0x78] sm:$0xff] %v1873
      %1972 = vst [vmem:[#allocation3 + $0x80] sm:$0xff] %v1878
      %1973 = vst [vmem:[#allocation3 + $0x88] sm:$0xff] %v1879
      %1974 = vst [vmem:[#allocation3 + $0x90] sm:$0xff] %v1884
      %1975 = vst [vmem:[#allocation3 + $0x98] sm:$0xff] %v1885
      %1976 = vst [vmem:[#allocation3 + $0xa0] sm:$0xff] %v1890
      %1977 = vst [vmem:[#allocation3 + $0xa8] sm:$0xff] %v1891
      %1978 = vst [vmem:[#allocation3 + $0xb0] sm:$0xff] %v1896
      %1979 = vst [vmem:[#allocation3 + $0xb8] sm:$0xff] %v1897
      %1980 = vst [vmem:[#allocation3 + $0xc0] sm:$0xff] %v1902
      %1981 = vst [vmem:[#allocation3 + $0xc8] sm:$0xff] %v1903
      %1982 = vst [vmem:[#allocation3 + $0xd0] sm:$0xff] %v1908
      %1983 = vst [vmem:[#allocation3 + $0xd8] sm:$0xff] %v1909
      %1984 = vst [vmem:[#allocation3 + $0xe0] sm:$0xff] %v1914
      %1985 = vst [vmem:[#allocation3 + $0xe8] sm:$0xff] %v1915
      %1986 = vst [vmem:[#allocation3 + $0xf0] sm:$0xff] %v1920
      %1987 = vst [vmem:[#allocation3 + $0xf8] sm:$0xff] %v1921
      %1988 = vst [vmem:[#allocation4] sm:$0xff] %v1832
      %1989 = vst [vmem:[#allocation4 + $0x8] sm:$0xff] %v1833
      %1990 = vst [vmem:[#allocation4 + $0x10] sm:$0xff] %v1838
      %1991 = vst [vmem:[#allocation4 + $0x18] sm:$0xff] %v1839
      %1992 = vst [vmem:[#allocation4 + $0x20] sm:$0xff] %v1844
      %1993 = vst [vmem:[#allocation4 + $0x28] sm:$0xff] %v1845
      %1994 = vst [vmem:[#allocation4 + $0x30] sm:$0xff] %v1850
      %1995 = vst [vmem:[#allocation4 + $0x38] sm:$0xff] %v1851
      %1996 = vst [vmem:[#allocation4 + $0x40] sm:$0xff] %v1856
      %1997 = vst [vmem:[#allocation4 + $0x48] sm:$0xff] %v1857
      %1998 = vst [vmem:[#allocation4 + $0x50] sm:$0xff] %v1862
      %1999 = vst [vmem:[#allocation4 + $0x58] sm:$0xff] %v1863
      %2000 = vst [vmem:[#allocation4 + $0x60] sm:$0xff] %v1868
      %2001 = vst [vmem:[#allocation4 + $0x68] sm:$0xff] %v1869
      %2002 = vst [vmem:[#allocation4 + $0x70] sm:$0xff] %v1874
      %2003 = vst [vmem:[#allocation4 + $0x78] sm:$0xff] %v1875
      %2004 = vst [vmem:[#allocation4 + $0x80] sm:$0xff] %v1880
      %2005 = vst [vmem:[#allocation4 + $0x88] sm:$0xff] %v1881
      %2006 = vst [vmem:[#allocation4 + $0x90] sm:$0xff] %v1886
      %2007 = vst [vmem:[#allocation4 + $0x98] sm:$0xff] %v1887
      %2008 = vst [vmem:[#allocation4 + $0xa0] sm:$0xff] %v1892
      %2009 = vst [vmem:[#allocation4 + $0xa8] sm:$0xff] %v1893
      %2010 = vst [vmem:[#allocation4 + $0xb0] sm:$0xff] %v1898
      %2011 = vst [vmem:[#allocation4 + $0xb8] sm:$0xff] %v1899
      %2012 = vst [vmem:[#allocation4 + $0xc0] sm:$0xff] %v1904
      %2013 = vst [vmem:[#allocation4 + $0xc8] sm:$0xff] %v1905
      %2014 = vst [vmem:[#allocation4 + $0xd0] sm:$0xff] %v1910
      %2015 = vst [vmem:[#allocation4 + $0xd8] sm:$0xff] %v1911
      %2016 = vst [vmem:[#allocation4 + $0xe0] sm:$0xff] %v1916
      %2017 = vst [vmem:[#allocation4 + $0xe8] sm:$0xff] %v1917
      %2018 = vst [vmem:[#allocation4 + $0xf0] sm:$0xff] %v1922
      %2019 = vst [vmem:[#allocation4 + $0xf8] sm:$0xff] %v1923
      %v2020 = vlaneseq
      %v2021 = vand.u32 %v2020, 127
      %vm2022 = vcmp.lt.s32.totalorder %v2021, 17
      %v2023 = vsel %vm2022, 0.0, -1e+30
      loop: start=0, step=1, limit=2
      $region73: #{vision_transformer_forward.5} parent=71 // loop_pre_header
        _
      $region74: #{vision_transformer_forward.5} parent=71 // loop_header
        %s2025 = sphi 0, %s2029
        %p2026 = scmp.ge.s32.totalorder %s2025, 2
      $region75: #{vision_transformer_forward.5} parent=71 // loop_header_branch
        %2028 = sbr.rel (%p2026) target = $region79
      $region76: #{vision_transformer_forward.5} parent=71 // loop_body
        %s2030 = smul.u32 %s2025, 128
        %s2031 = sshra.s32 %s2030, 7
        %s2032 = sand.u32 %s2030, 127
        %s2033 = smul.addr %s2031, 8
        %s2034 = scalar_lea.vmem [#allocation2], %s2033
        %v2035 = vld [vmem:[%s2034] sm:$0xff]
        %v2036 = vld [vmem:[%s2034 + $0x10] sm:$0xff]
        %v2037 = vld [vmem:[%s2034 + $0x20] sm:$0xff]
        %v2038 = vld [vmem:[%s2034 + $0x30] sm:$0xff]
        %v2039 = vld [vmem:[%s2034 + $0x40] sm:$0xff]
        %v2040 = vld [vmem:[%s2034 + $0x50] sm:$0xff]
        %v2041 = vld [vmem:[%s2034 + $0x60] sm:$0xff]
        %v2042 = vld [vmem:[%s2034 + $0x70] sm:$0xff]
        %v2043 = vld [vmem:[%s2034 + $0x80] sm:$0xff]
        %v2044 = vld [vmem:[%s2034 + $0x90] sm:$0xff]
        %v2045 = vld [vmem:[%s2034 + $0xa0] sm:$0xff]
        %v2046 = vld [vmem:[%s2034 + $0xb0] sm:$0xff]
        %v2047 = vld [vmem:[%s2034 + $0xc0] sm:$0xff]
        %v2048 = vld [vmem:[%s2034 + $0xd0] sm:$0xff]
        %v2049 = vld [vmem:[%s2034 + $0xe0] sm:$0xff]
        %v2050 = vld [vmem:[%s2034 + $0xf0] sm:$0xff]
        %s2051 = smul.addr %s2031, 8
        %s2052 = scalar_lea.vmem [#allocation3], %s2051
        %v2053 = vld [vmem:[%s2052] sm:$0xff]
        %v2054 = vld [vmem:[%s2052 + $0x10] sm:$0xff]
        %v2055 = vld [vmem:[%s2052 + $0x20] sm:$0xff]
        %v2056 = vld [vmem:[%s2052 + $0x30] sm:$0xff]
        %v2057 = vld [vmem:[%s2052 + $0x40] sm:$0xff]
        %v2058 = vld [vmem:[%s2052 + $0x50] sm:$0xff]
        %v2059 = vld [vmem:[%s2052 + $0x60] sm:$0xff]
        %v2060 = vld [vmem:[%s2052 + $0x70] sm:$0xff]
        %v2061 = vld [vmem:[%s2052 + $0x80] sm:$0xff]
        %v2062 = vld [vmem:[%s2052 + $0x90] sm:$0xff]
        %v2063 = vld [vmem:[%s2052 + $0xa0] sm:$0xff]
        %v2064 = vld [vmem:[%s2052 + $0xb0] sm:$0xff]
        %v2065 = vld [vmem:[%s2052 + $0xc0] sm:$0xff]
        %v2066 = vld [vmem:[%s2052 + $0xd0] sm:$0xff]
        %v2067 = vld [vmem:[%s2052 + $0xe0] sm:$0xff]
        %v2068 = vld [vmem:[%s2052 + $0xf0] sm:$0xff]
        %s2069 = smul.addr %s2031, 8
        %s2070 = scalar_lea.vmem [#allocation4], %s2069
        %v2071 = vld [vmem:[%s2070] sm:$0xff]
        %v2072 = vld [vmem:[%s2070 + $0x10] sm:$0xff]
        %v2073 = vld [vmem:[%s2070 + $0x20] sm:$0xff]
        %v2074 = vld [vmem:[%s2070 + $0x30] sm:$0xff]
        %v2075 = vld [vmem:[%s2070 + $0x40] sm:$0xff]
        %v2076 = vld [vmem:[%s2070 + $0x50] sm:$0xff]
        %v2077 = vld [vmem:[%s2070 + $0x60] sm:$0xff]
        %v2078 = vld [vmem:[%s2070 + $0x70] sm:$0xff]
        %v2079 = vld [vmem:[%s2070 + $0x80] sm:$0xff]
        %v2080 = vld [vmem:[%s2070 + $0x90] sm:$0xff]
        %v2081 = vld [vmem:[%s2070 + $0xa0] sm:$0xff]
        %v2082 = vld [vmem:[%s2070 + $0xb0] sm:$0xff]
        %v2083 = vld [vmem:[%s2070 + $0xc0] sm:$0xff]
        %v2084 = vld [vmem:[%s2070 + $0xd0] sm:$0xff]
        %v2085 = vld [vmem:[%s2070 + $0xe0] sm:$0xff]
        %v2086 = vld [vmem:[%s2070 + $0xf0] sm:$0xff]
        %2087 = vmatprep.subr.bf16.mxu0 0
        %2088 = vmatpush1.bf16.xpose.msra.mxu0 %v2053
        %2089 = vmatprep.subr.bf16.mxu0 0
        %2090 = vmatpush1.bf16.xpose.msra.mxu0 %v2054
        %2091 = vmatprep.subr.bf16.mxu0 0
        %2092 = vmatpush1.bf16.xpose.msra.mxu0 %v2055
        %2093 = vmatprep.subr.bf16.mxu0 0
        %2094 = vmatpush1.bf16.xpose.msra.mxu0 %v2056
        %2095 = vmatprep.subr.bf16.mxu0 0
        %2096 = vmatpush1.bf16.xpose.msra.mxu0 %v2057
        %2097 = vmatprep.subr.bf16.mxu0 0
        %2098 = vmatpush1.bf16.xpose.msra.mxu0 %v2058
        %2099 = vmatprep.subr.bf16.mxu0 0
        %2100 = vmatpush1.bf16.xpose.msra.mxu0 %v2059
        %2101 = vmatprep.subr.bf16.mxu0 0
        %2102 = vmatpush1.bf16.xpose.msra.mxu0 %v2060
        %2103 = vmatprep.subr.bf16.mxu0 0
        %2104 = vmatpush1.bf16.xpose.msra.mxu0 0
        %2105 = vmatprep.subr.bf16.mxu0 0
        %2106 = vmatpush1.bf16.xpose.msra.mxu0 0
        %2107 = vmatprep.subr.bf16.mxu0 0
        %2108 = vmatpush1.bf16.xpose.msra.mxu0 0
        %2109 = vmatprep.subr.bf16.mxu0 0
        %2110 = vmatpush1.bf16.xpose.msra.mxu0 0
        %2111 = vmatprep.subr.bf16.mxu0 0
        %2112 = vmatpush1.bf16.xpose.msra.mxu0 0
        %2113 = vmatprep.subr.bf16.mxu0 0
        %2114 = vmatpush1.bf16.xpose.msra.mxu0 0
        %2115 = vmatprep.subr.bf16.mxu0 0
        %2116 = vmatpush1.bf16.xpose.msra.mxu0 0
        %2117 = vmatprep.subr.bf16.mxu0 0
        %2118 = vmatpush1.bf16.xpose.msra.mxu0 0
        %2119 = vmatprep.mubr.bf16.mxu0 0
        %2120 = vmatmul.mubr.bf16.gmra.mrb[0].mxu0 %v2035
        %v2121 = vpop.f32.mrb[0].mxu0
        %v2122 = vadd.f32 0.0, %v2121
        %v2123 = vpop.f32.mrb[0].mxu0
        %v2124 = vpop.f32.mrb[0].mxu0
        %v2125 = vadd.f32 0.0, %v2124
        %v2126 = vpop.f32.mrb[0].mxu0
        %2127 = vmatprep.mubr.bf16.mxu0 0
        %2128 = vmatmul.mubr.bf16.gmra.mrb[0].mxu0 %v2036
        %v2129 = vpop.f32.mrb[0].mxu0
        %v2130 = vadd.f32 0.0, %v2129
        %v2131 = vpop.f32.mrb[0].mxu0
        %v2132 = vpop.f32.mrb[0].mxu0
        %v2133 = vadd.f32 0.0, %v2132
        %v2134 = vpop.f32.mrb[0].mxu0
        %2135 = vmatprep.mubr.bf16.mxu0 0
        %2136 = vmatmul.mubr.bf16.gmra.mrb[0].mxu0 %v2037
        %v2137 = vpop.f32.mrb[0].mxu0
        %v2138 = vadd.f32 0.0, %v2137
        %v2139 = vpop.f32.mrb[0].mxu0
        %v2140 = vpop.f32.mrb[0].mxu0
        %v2141 = vadd.f32 0.0, %v2140
        %v2142 = vpop.f32.mrb[0].mxu0
        %2143 = vmatprep.mubr.bf16.mxu0 0
        %2144 = vmatmul.mubr.bf16.gmra.mrb[0].mxu0 %v2038
        %v2145 = vpop.f32.mrb[0].mxu0
        %v2146 = vadd.f32 0.0, %v2145
        %v2147 = vpop.f32.mrb[0].mxu0
        %v2148 = vpop.f32.mrb[0].mxu0
        %v2149 = vadd.f32 0.0, %v2148
        %v2150 = vpop.f32.mrb[0].mxu0
        %2151 = vmatprep.mubr.bf16.mxu0 0
        %2152 = vmatmul.mubr.bf16.gmra.mrb[0].mxu0 %v2039
        %v2153 = vpop.f32.mrb[0].mxu0
        %v2154 = vadd.f32 0.0, %v2153
        %v2155 = vpop.f32.mrb[0].mxu0
        %v2156 = vpop.f32.mrb[0].mxu0
        %v2157 = vadd.f32 0.0, %v2156
        %v2158 = vpop.f32.mrb[0].mxu0
        %2159 = vmatprep.mubr.bf16.mxu0 0
        %2160 = vmatmul.mubr.bf16.gmra.mrb[0].mxu0 %v2040
        %v2161 = vpop.f32.mrb[0].mxu0
        %v2162 = vadd.f32 0.0, %v2161
        %v2163 = vpop.f32.mrb[0].mxu0
        %v2164 = vpop.f32.mrb[0].mxu0
        %v2165 = vadd.f32 0.0, %v2164
        %v2166 = vpop.f32.mrb[0].mxu0
        %2167 = vmatprep.mubr.bf16.mxu0 0
        %2168 = vmatmul.mubr.bf16.gmra.mrb[0].mxu0 %v2041
        %v2169 = vpop.f32.mrb[0].mxu0
        %v2170 = vadd.f32 0.0, %v2169
        %v2171 = vpop.f32.mrb[0].mxu0
        %v2172 = vpop.f32.mrb[0].mxu0
        %v2173 = vadd.f32 0.0, %v2172
        %v2174 = vpop.f32.mrb[0].mxu0
        %2175 = vmatprep.mubr.bf16.mxu0 0
        %2176 = vmatmul.mubr.bf16.gmra.mrb[0].mxu0 %v2042
        %v2177 = vpop.f32.mrb[0].mxu0
        %v2178 = vadd.f32 0.0, %v2177
        %v2179 = vpop.f32.mrb[0].mxu0
        %v2180 = vpop.f32.mrb[0].mxu0
        %v2181 = vadd.f32 0.0, %v2180
        %v2182 = vpop.f32.mrb[0].mxu0
        %2183 = vdwg.mxu0
        %2184 = vmatprep.subr.bf16.mxu0 0
        %2185 = vmatpush1.bf16.xpose.msra.mxu0 %v2061
        %2186 = vmatprep.subr.bf16.mxu0 0
        %2187 = vmatpush1.bf16.xpose.msra.mxu0 %v2062
        %2188 = vmatprep.subr.bf16.mxu0 0
        %2189 = vmatpush1.bf16.xpose.msra.mxu0 %v2063
        %2190 = vmatprep.subr.bf16.mxu0 0
        %2191 = vmatpush1.bf16.xpose.msra.mxu0 %v2064
        %2192 = vmatprep.subr.bf16.mxu0 0
        %2193 = vmatpush1.bf16.xpose.msra.mxu0 %v2065
        %2194 = vmatprep.subr.bf16.mxu0 0
        %2195 = vmatpush1.bf16.xpose.msra.mxu0 %v2066
        %2196 = vmatprep.subr.bf16.mxu0 0
        %2197 = vmatpush1.bf16.xpose.msra.mxu0 %v2067
        %2198 = vmatprep.subr.bf16.mxu0 0
        %2199 = vmatpush1.bf16.xpose.msra.mxu0 %v2068
        %2200 = vmatprep.subr.bf16.mxu0 0
        %2201 = vmatpush1.bf16.xpose.msra.mxu0 0
        %2202 = vmatprep.subr.bf16.mxu0 0
        %2203 = vmatpush1.bf16.xpose.msra.mxu0 0
        %2204 = vmatprep.subr.bf16.mxu0 0
        %2205 = vmatpush1.bf16.xpose.msra.mxu0 0
        %2206 = vmatprep.subr.bf16.mxu0 0
        %2207 = vmatpush1.bf16.xpose.msra.mxu0 0
        %2208 = vmatprep.subr.bf16.mxu0 0
        %2209 = vmatpush1.bf16.xpose.msra.mxu0 0
        %2210 = vmatprep.subr.bf16.mxu0 0
        %2211 = vmatpush1.bf16.xpose.msra.mxu0 0
        %2212 = vmatprep.subr.bf16.mxu0 0
        %2213 = vmatpush1.bf16.xpose.msra.mxu0 0
        %2214 = vmatprep.subr.bf16.mxu0 0
        %2215 = vmatpush1.bf16.xpose.msra.mxu0 0
        %2216 = vmatprep.mubr.bf16.mxu0 0
        %2217 = vmatmul.mubr.bf16.gmra.mrb[0].mxu0 %v2043
        %v2218 = vpop.f32.mrb[0].mxu0
        %v2219 = vadd.f32 0.0, %v2218
        %v2220 = vpop.f32.mrb[0].mxu0
        %v2221 = vpop.f32.mrb[0].mxu0
        %v2222 = vadd.f32 0.0, %v2221
        %v2223 = vpop.f32.mrb[0].mxu0
        %2224 = vmatprep.mubr.bf16.mxu0 0
        %2225 = vmatmul.mubr.bf16.gmra.mrb[0].mxu0 %v2044
        %v2226 = vpop.f32.mrb[0].mxu0
        %v2227 = vadd.f32 0.0, %v2226
        %v2228 = vpop.f32.mrb[0].mxu0
        %v2229 = vpop.f32.mrb[0].mxu0
        %v2230 = vadd.f32 0.0, %v2229
        %v2231 = vpop.f32.mrb[0].mxu0
        %2232 = vmatprep.mubr.bf16.mxu0 0
        %2233 = vmatmul.mubr.bf16.gmra.mrb[0].mxu0 %v2045
        %v2234 = vpop.f32.mrb[0].mxu0
        %v2235 = vadd.f32 0.0, %v2234
        %v2236 = vpop.f32.mrb[0].mxu0
        %v2237 = vpop.f32.mrb[0].mxu0
        %v2238 = vadd.f32 0.0, %v2237
        %v2239 = vpop.f32.mrb[0].mxu0
        %2240 = vmatprep.mubr.bf16.mxu0 0
        %2241 = vmatmul.mubr.bf16.gmra.mrb[0].mxu0 %v2046
        %v2242 = vpop.f32.mrb[0].mxu0
        %v2243 = vadd.f32 0.0, %v2242
        %v2244 = vpop.f32.mrb[0].mxu0
        %v2245 = vpop.f32.mrb[0].mxu0
        %v2246 = vadd.f32 0.0, %v2245
        %v2247 = vpop.f32.mrb[0].mxu0
        %2248 = vmatprep.mubr.bf16.mxu0 0
        %2249 = vmatmul.mubr.bf16.gmra.mrb[0].mxu0 %v2047
        %v2250 = vpop.f32.mrb[0].mxu0
        %v2251 = vadd.f32 0.0, %v2250
        %v2252 = vpop.f32.mrb[0].mxu0
        %v2253 = vpop.f32.mrb[0].mxu0
        %v2254 = vadd.f32 0.0, %v2253
        %v2255 = vpop.f32.mrb[0].mxu0
        %2256 = vmatprep.mubr.bf16.mxu0 0
        %2257 = vmatmul.mubr.bf16.gmra.mrb[0].mxu0 %v2048
        %v2258 = vpop.f32.mrb[0].mxu0
        %v2259 = vadd.f32 0.0, %v2258
        %v2260 = vpop.f32.mrb[0].mxu0
        %v2261 = vpop.f32.mrb[0].mxu0
        %v2262 = vadd.f32 0.0, %v2261
        %v2263 = vpop.f32.mrb[0].mxu0
        %2264 = vmatprep.mubr.bf16.mxu0 0
        %2265 = vmatmul.mubr.bf16.gmra.mrb[0].mxu0 %v2049
        %v2266 = vpop.f32.mrb[0].mxu0
        %v2267 = vadd.f32 0.0, %v2266
        %v2268 = vpop.f32.mrb[0].mxu0
        %v2269 = vpop.f32.mrb[0].mxu0
        %v2270 = vadd.f32 0.0, %v2269
        %v2271 = vpop.f32.mrb[0].mxu0
        %2272 = vmatprep.mubr.bf16.mxu0 0
        %2273 = vmatmul.mubr.bf16.gmra.mrb[0].mxu0 %v2050
        %v2274 = vpop.f32.mrb[0].mxu0
        %v2275 = vadd.f32 0.0, %v2274
        %v2276 = vpop.f32.mrb[0].mxu0
        %v2277 = vpop.f32.mrb[0].mxu0
        %v2278 = vadd.f32 0.0, %v2277
        %v2279 = vpop.f32.mrb[0].mxu0
        %2280 = vdwg.mxu0
        %v2281 = vmul.f32 %v2122, 0.125
        %v2282 = vmul.f32 %v2125, 0.125
        %v2283 = vmul.f32 %v2130, 0.125
        %v2284 = vmul.f32 %v2133, 0.125
        %v2285 = vmul.f32 %v2138, 0.125
        %v2286 = vmul.f32 %v2141, 0.125
        %v2287 = vmul.f32 %v2146, 0.125
        %v2288 = vmul.f32 %v2149, 0.125
        %v2289 = vmul.f32 %v2154, 0.125
        %v2290 = vmul.f32 %v2157, 0.125
        %v2291 = vmul.f32 %v2162, 0.125
        %v2292 = vmul.f32 %v2165, 0.125
        %v2293 = vmul.f32 %v2170, 0.125
        %v2294 = vmul.f32 %v2173, 0.125
        %v2295 = vmul.f32 %v2178, 0.125
        %v2296 = vmul.f32 %v2181, 0.125
        %v2297 = vmul.f32 %v2219, 0.125
        %v2298 = vmul.f32 %v2222, 0.125
        %v2299 = vmul.f32 %v2227, 0.125
        %v2300 = vmul.f32 %v2230, 0.125
        %v2301 = vmul.f32 %v2235, 0.125
        %v2302 = vmul.f32 %v2238, 0.125
        %v2303 = vmul.f32 %v2243, 0.125
        %v2304 = vmul.f32 %v2246, 0.125
        %v2305 = vmul.f32 %v2251, 0.125
        %v2306 = vmul.f32 %v2254, 0.125
        %v2307 = vmul.f32 %v2259, 0.125
        %v2308 = vmul.f32 %v2262, 0.125
        %v2309 = vmul.f32 %v2267, 0.125
        %v2310 = vmul.f32 %v2270, 0.125
        %v2311 = vmul.f32 %v2275, 0.125
        %v2312 = vmul.f32 %v2278, 0.125
        %v2313 = vadd.f32 %v2281, %v2023
        %v2314 = vadd.f32 %v2282, %v2023
        %v2315 = vadd.f32 %v2283, %v2023
        %v2316 = vadd.f32 %v2284, %v2023
        %v2317 = vadd.f32 %v2285, %v2023
        %v2318 = vadd.f32 %v2286, %v2023
        %v2319 = vadd.f32 %v2287, %v2023
        %v2320 = vadd.f32 %v2288, %v2023
        %v2321 = vadd.f32 %v2289, %v2023
        %v2322 = vadd.f32 %v2290, %v2023
        %v2323 = vadd.f32 %v2291, %v2023
        %v2324 = vadd.f32 %v2292, %v2023
        %v2325 = vadd.f32 %v2293, %v2023
        %v2326 = vadd.f32 %v2294, %v2023
        %v2327 = vadd.f32 %v2295, %v2023
        %v2328 = vadd.f32 %v2296, %v2023
        %v2329 = vadd.f32 %v2297, %v2023
        %v2330 = vadd.f32 %v2298, %v2023
        %v2331 = vadd.f32 %v2299, %v2023
        %v2332 = vadd.f32 %v2300, %v2023
        %v2333 = vadd.f32 %v2301, %v2023
        %v2334 = vadd.f32 %v2302, %v2023
        %v2335 = vadd.f32 %v2303, %v2023
        %v2336 = vadd.f32 %v2304, %v2023
        %v2337 = vadd.f32 %v2305, %v2023
        %v2338 = vadd.f32 %v2306, %v2023
        %v2339 = vadd.f32 %v2307, %v2023
        %v2340 = vadd.f32 %v2308, %v2023
        %v2341 = vadd.f32 %v2309, %v2023
        %v2342 = vadd.f32 %v2310, %v2023
        %v2343 = vadd.f32 %v2311, %v2023
        %v2344 = vadd.f32 %v2312, %v2023
        %2345 = vmax.xlane.f32.xlu0 %v2313
        %v2346 = vpop.xlane.xlu0 %2345
        %2347 = vmax.xlane.f32.xlu0 %v2314
        %v2348 = vpop.xlane.xlu0 %2347
        %2349 = vmax.xlane.f32.xlu0 %v2315
        %v2350 = vpop.xlane.xlu0 %2349
        %2351 = vmax.xlane.f32.xlu0 %v2316
        %v2352 = vpop.xlane.xlu0 %2351
        %2353 = vmax.xlane.f32.xlu0 %v2317
        %v2354 = vpop.xlane.xlu0 %2353
        %2355 = vmax.xlane.f32.xlu0 %v2318
        %v2356 = vpop.xlane.xlu0 %2355
        %2357 = vmax.xlane.f32.xlu0 %v2319
        %v2358 = vpop.xlane.xlu0 %2357
        %2359 = vmax.xlane.f32.xlu0 %v2320
        %v2360 = vpop.xlane.xlu0 %2359
        %2361 = vmax.xlane.f32.xlu0 %v2321
        %v2362 = vpop.xlane.xlu0 %2361
        %2363 = vmax.xlane.f32.xlu0 %v2322
        %v2364 = vpop.xlane.xlu0 %2363
        %2365 = vmax.xlane.f32.xlu0 %v2323
        %v2366 = vpop.xlane.xlu0 %2365
        %2367 = vmax.xlane.f32.xlu0 %v2324
        %v2368 = vpop.xlane.xlu0 %2367
        %2369 = vmax.xlane.f32.xlu0 %v2325
        %v2370 = vpop.xlane.xlu0 %2369
        %2371 = vmax.xlane.f32.xlu0 %v2326
        %v2372 = vpop.xlane.xlu0 %2371
        %2373 = vmax.xlane.f32.xlu0 %v2327
        %v2374 = vpop.xlane.xlu0 %2373
        %2375 = vmax.xlane.f32.xlu0 %v2328
        %v2376 = vpop.xlane.xlu0 %2375
        %2377 = vmax.xlane.f32.xlu0 %v2329
        %v2378 = vpop.xlane.xlu0 %2377
        %2379 = vmax.xlane.f32.xlu0 %v2330
        %v2380 = vpop.xlane.xlu0 %2379
        %2381 = vmax.xlane.f32.xlu0 %v2331
        %v2382 = vpop.xlane.xlu0 %2381
        %2383 = vmax.xlane.f32.xlu0 %v2332
        %v2384 = vpop.xlane.xlu0 %2383
        %2385 = vmax.xlane.f32.xlu0 %v2333
        %v2386 = vpop.xlane.xlu0 %2385
        %2387 = vmax.xlane.f32.xlu0 %v2334
        %v2388 = vpop.xlane.xlu0 %2387
        %2389 = vmax.xlane.f32.xlu0 %v2335
        %v2390 = vpop.xlane.xlu0 %2389
        %2391 = vmax.xlane.f32.xlu0 %v2336
        %v2392 = vpop.xlane.xlu0 %2391
        %2393 = vmax.xlane.f32.xlu0 %v2337
        %v2394 = vpop.xlane.xlu0 %2393
        %2395 = vmax.xlane.f32.xlu0 %v2338
        %v2396 = vpop.xlane.xlu0 %2395
        %2397 = vmax.xlane.f32.xlu0 %v2339
        %v2398 = vpop.xlane.xlu0 %2397
        %2399 = vmax.xlane.f32.xlu0 %v2340
        %v2400 = vpop.xlane.xlu0 %2399
        %2401 = vmax.xlane.f32.xlu0 %v2341
        %v2402 = vpop.xlane.xlu0 %2401
        %2403 = vmax.xlane.f32.xlu0 %v2342
        %v2404 = vpop.xlane.xlu0 %2403
        %2405 = vmax.xlane.f32.xlu0 %v2343
        %v2406 = vpop.xlane.xlu0 %2405
        %2407 = vmax.xlane.f32.xlu0 %v2344
        %v2408 = vpop.xlane.xlu0 %2407
        %v2409 = vsub.f32 %v2313, %v2346
        %v2410 = vsub.f32 %v2314, %v2348
        %v2411 = vsub.f32 %v2315, %v2350
        %v2412 = vsub.f32 %v2316, %v2352
        %v2413 = vsub.f32 %v2317, %v2354
        %v2414 = vsub.f32 %v2318, %v2356
        %v2415 = vsub.f32 %v2319, %v2358
        %v2416 = vsub.f32 %v2320, %v2360
        %v2417 = vsub.f32 %v2321, %v2362
        %v2418 = vsub.f32 %v2322, %v2364
        %v2419 = vsub.f32 %v2323, %v2366
        %v2420 = vsub.f32 %v2324, %v2368
        %v2421 = vsub.f32 %v2325, %v2370
        %v2422 = vsub.f32 %v2326, %v2372
        %v2423 = vsub.f32 %v2327, %v2374
        %v2424 = vsub.f32 %v2328, %v2376
        %v2425 = vsub.f32 %v2329, %v2378
        %v2426 = vsub.f32 %v2330, %v2380
        %v2427 = vsub.f32 %v2331, %v2382
        %v2428 = vsub.f32 %v2332, %v2384
        %v2429 = vsub.f32 %v2333, %v2386
        %v2430 = vsub.f32 %v2334, %v2388
        %v2431 = vsub.f32 %v2335, %v2390
        %v2432 = vsub.f32 %v2336, %v2392
        %v2433 = vsub.f32 %v2337, %v2394
        %v2434 = vsub.f32 %v2338, %v2396
        %v2435 = vsub.f32 %v2339, %v2398
        %v2436 = vsub.f32 %v2340, %v2400
        %v2437 = vsub.f32 %v2341, %v2402
        %v2438 = vsub.f32 %v2342, %v2404
        %v2439 = vsub.f32 %v2343, %v2406
        %v2440 = vsub.f32 %v2344, %v2408
        %v2441 = vmul.f32 %v2409, 1.442695
        %v2442 = vpow.pop %v2441
        %v2443 = vmul.f32 %v2410, 1.442695
        %v2444 = vpow.pop %v2443
        %v2445 = vmul.f32 %v2411, 1.442695
        %v2446 = vpow.pop %v2445
        %v2447 = vmul.f32 %v2412, 1.442695
        %v2448 = vpow.pop %v2447
        %v2449 = vmul.f32 %v2413, 1.442695
        %v2450 = vpow.pop %v2449
        %v2451 = vmul.f32 %v2414, 1.442695
        %v2452 = vpow.pop %v2451
        %v2453 = vmul.f32 %v2415, 1.442695
        %v2454 = vpow.pop %v2453
        %v2455 = vmul.f32 %v2416, 1.442695
        %v2456 = vpow.pop %v2455
        %v2457 = vmul.f32 %v2417, 1.442695
        %v2458 = vpow.pop %v2457
        %v2459 = vmul.f32 %v2418, 1.442695
        %v2460 = vpow.pop %v2459
        %v2461 = vmul.f32 %v2419, 1.442695
        %v2462 = vpow.pop %v2461
        %v2463 = vmul.f32 %v2420, 1.442695
        %v2464 = vpow.pop %v2463
        %v2465 = vmul.f32 %v2421, 1.442695
        %v2466 = vpow.pop %v2465
        %v2467 = vmul.f32 %v2422, 1.442695
        %v2468 = vpow.pop %v2467
        %v2469 = vmul.f32 %v2423, 1.442695
        %v2470 = vpow.pop %v2469
        %v2471 = vmul.f32 %v2424, 1.442695
        %v2472 = vpow.pop %v2471
        %v2473 = vmul.f32 %v2425, 1.442695
        %v2474 = vpow.pop %v2473
        %v2475 = vmul.f32 %v2426, 1.442695
        %v2476 = vpow.pop %v2475
        %v2477 = vmul.f32 %v2427, 1.442695
        %v2478 = vpow.pop %v2477
        %v2479 = vmul.f32 %v2428, 1.442695
        %v2480 = vpow.pop %v2479
        %v2481 = vmul.f32 %v2429, 1.442695
        %v2482 = vpow.pop %v2481
        %v2483 = vmul.f32 %v2430, 1.442695
        %v2484 = vpow.pop %v2483
        %v2485 = vmul.f32 %v2431, 1.442695
        %v2486 = vpow.pop %v2485
        %v2487 = vmul.f32 %v2432, 1.442695
        %v2488 = vpow.pop %v2487
        %v2489 = vmul.f32 %v2433, 1.442695
        %v2490 = vpow.pop %v2489
        %v2491 = vmul.f32 %v2434, 1.442695
        %v2492 = vpow.pop %v2491
        %v2493 = vmul.f32 %v2435, 1.442695
        %v2494 = vpow.pop %v2493
        %v2495 = vmul.f32 %v2436, 1.442695
        %v2496 = vpow.pop %v2495
        %v2497 = vmul.f32 %v2437, 1.442695
        %v2498 = vpow.pop %v2497
        %v2499 = vmul.f32 %v2438, 1.442695
        %v2500 = vpow.pop %v2499
        %v2501 = vmul.f32 %v2439, 1.442695
        %v2502 = vpow.pop %v2501
        %v2503 = vmul.f32 %v2440, 1.442695
        %v2504 = vpow.pop %v2503
        %2505 = vadd.xlane.f32.xlu0 %v2442
        %v2506 = vpop.xlane.xlu0 %2505
        %2507 = vadd.xlane.f32.xlu0 %v2444
        %v2508 = vpop.xlane.xlu0 %2507
        %2509 = vadd.xlane.f32.xlu0 %v2446
        %v2510 = vpop.xlane.xlu0 %2509
        %2511 = vadd.xlane.f32.xlu0 %v2448
        %v2512 = vpop.xlane.xlu0 %2511
        %2513 = vadd.xlane.f32.xlu0 %v2450
        %v2514 = vpop.xlane.xlu0 %2513
        %2515 = vadd.xlane.f32.xlu0 %v2452
        %v2516 = vpop.xlane.xlu0 %2515
        %2517 = vadd.xlane.f32.xlu0 %v2454
        %v2518 = vpop.xlane.xlu0 %2517
        %2519 = vadd.xlane.f32.xlu0 %v2456
        %v2520 = vpop.xlane.xlu0 %2519
        %2521 = vadd.xlane.f32.xlu0 %v2458
        %v2522 = vpop.xlane.xlu0 %2521
        %2523 = vadd.xlane.f32.xlu0 %v2460
        %v2524 = vpop.xlane.xlu0 %2523
        %2525 = vadd.xlane.f32.xlu0 %v2462
        %v2526 = vpop.xlane.xlu0 %2525
        %2527 = vadd.xlane.f32.xlu0 %v2464
        %v2528 = vpop.xlane.xlu0 %2527
        %2529 = vadd.xlane.f32.xlu0 %v2466
        %v2530 = vpop.xlane.xlu0 %2529
        %2531 = vadd.xlane.f32.xlu0 %v2468
        %v2532 = vpop.xlane.xlu0 %2531
        %2533 = vadd.xlane.f32.xlu0 %v2470
        %v2534 = vpop.xlane.xlu0 %2533
        %2535 = vadd.xlane.f32.xlu0 %v2472
        %v2536 = vpop.xlane.xlu0 %2535
        %2537 = vadd.xlane.f32.xlu0 %v2474
        %v2538 = vpop.xlane.xlu0 %2537
        %2539 = vadd.xlane.f32.xlu0 %v2476
        %v2540 = vpop.xlane.xlu0 %2539
        %2541 = vadd.xlane.f32.xlu0 %v2478
        %v2542 = vpop.xlane.xlu0 %2541
        %2543 = vadd.xlane.f32.xlu0 %v2480
        %v2544 = vpop.xlane.xlu0 %2543
        %2545 = vadd.xlane.f32.xlu0 %v2482
        %v2546 = vpop.xlane.xlu0 %2545
        %2547 = vadd.xlane.f32.xlu0 %v2484
        %v2548 = vpop.xlane.xlu0 %2547
        %2549 = vadd.xlane.f32.xlu0 %v2486
        %v2550 = vpop.xlane.xlu0 %2549
        %2551 = vadd.xlane.f32.xlu0 %v2488
        %v2552 = vpop.xlane.xlu0 %2551
        %2553 = vadd.xlane.f32.xlu0 %v2490
        %v2554 = vpop.xlane.xlu0 %2553
        %2555 = vadd.xlane.f32.xlu0 %v2492
        %v2556 = vpop.xlane.xlu0 %2555
        %2557 = vadd.xlane.f32.xlu0 %v2494
        %v2558 = vpop.xlane.xlu0 %2557
        %2559 = vadd.xlane.f32.xlu0 %v2496
        %v2560 = vpop.xlane.xlu0 %2559
        %2561 = vadd.xlane.f32.xlu0 %v2498
        %v2562 = vpop.xlane.xlu0 %2561
        %2563 = vadd.xlane.f32.xlu0 %v2500
        %v2564 = vpop.xlane.xlu0 %2563
        %2565 = vadd.xlane.f32.xlu0 %v2502
        %v2566 = vpop.xlane.xlu0 %2565
        %2567 = vadd.xlane.f32.xlu0 %v2504
        %v2568 = vpop.xlane.xlu0 %2567
        %v2569 = vrcp.pop %v2506
        %v2570 = vrcp.pop %v2508
        %v2571 = vrcp.pop %v2510
        %v2572 = vrcp.pop %v2512
        %v2573 = vrcp.pop %v2514
        %v2574 = vrcp.pop %v2516
        %v2575 = vrcp.pop %v2518
        %v2576 = vrcp.pop %v2520
        %v2577 = vrcp.pop %v2522
        %v2578 = vrcp.pop %v2524
        %v2579 = vrcp.pop %v2526
        %v2580 = vrcp.pop %v2528
        %v2581 = vrcp.pop %v2530
        %v2582 = vrcp.pop %v2532
        %v2583 = vrcp.pop %v2534
        %v2584 = vrcp.pop %v2536
        %v2585 = vrcp.pop %v2538
        %v2586 = vrcp.pop %v2540
        %v2587 = vrcp.pop %v2542
        %v2588 = vrcp.pop %v2544
        %v2589 = vrcp.pop %v2546
        %v2590 = vrcp.pop %v2548
        %v2591 = vrcp.pop %v2550
        %v2592 = vrcp.pop %v2552
        %v2593 = vrcp.pop %v2554
        %v2594 = vrcp.pop %v2556
        %v2595 = vrcp.pop %v2558
        %v2596 = vrcp.pop %v2560
        %v2597 = vrcp.pop %v2562
        %v2598 = vrcp.pop %v2564
        %v2599 = vrcp.pop %v2566
        %v2600 = vrcp.pop %v2568
        %v2601 = vmul.f32 %v2442, %v2569
        %v2602 = vmul.f32 %v2444, %v2570
        %v2603 = vmul.f32 %v2446, %v2571
        %v2604 = vmul.f32 %v2448, %v2572
        %v2605 = vmul.f32 %v2450, %v2573
        %v2606 = vmul.f32 %v2452, %v2574
        %v2607 = vmul.f32 %v2454, %v2575
        %v2608 = vmul.f32 %v2456, %v2576
        %v2609 = vmul.f32 %v2458, %v2577
        %v2610 = vmul.f32 %v2460, %v2578
        %v2611 = vmul.f32 %v2462, %v2579
        %v2612 = vmul.f32 %v2464, %v2580
        %v2613 = vmul.f32 %v2466, %v2581
        %v2614 = vmul.f32 %v2468, %v2582
        %v2615 = vmul.f32 %v2470, %v2583
        %v2616 = vmul.f32 %v2472, %v2584
        %v2617 = vmul.f32 %v2474, %v2585
        %v2618 = vmul.f32 %v2476, %v2586
        %v2619 = vmul.f32 %v2478, %v2587
        %v2620 = vmul.f32 %v2480, %v2588
        %v2621 = vmul.f32 %v2482, %v2589
        %v2622 = vmul.f32 %v2484, %v2590
        %v2623 = vmul.f32 %v2486, %v2591
        %v2624 = vmul.f32 %v2488, %v2592
        %v2625 = vmul.f32 %v2490, %v2593
        %v2626 = vmul.f32 %v2492, %v2594
        %v2627 = vmul.f32 %v2494, %v2595
        %v2628 = vmul.f32 %v2496, %v2596
        %v2629 = vmul.f32 %v2498, %v2597
        %v2630 = vmul.f32 %v2500, %v2598
        %v2631 = vmul.f32 %v2502, %v2599
        %v2632 = vmul.f32 %v2504, %v2600
        %v2633 = vpack.c.bf16 %v2602, %v2601
        %v2634 = vpack.c.bf16 %v2604, %v2603
        %v2635 = vpack.c.bf16 %v2606, %v2605
        %v2636 = vpack.c.bf16 %v2608, %v2607
        %v2637 = vpack.c.bf16 %v2610, %v2609
        %v2638 = vpack.c.bf16 %v2612, %v2611
        %v2639 = vpack.c.bf16 %v2614, %v2613
        %v2640 = vpack.c.bf16 %v2616, %v2615
        %v2641 = vpack.c.bf16 %v2618, %v2617
        %v2642 = vpack.c.bf16 %v2620, %v2619
        %v2643 = vpack.c.bf16 %v2622, %v2621
        %v2644 = vpack.c.bf16 %v2624, %v2623
        %v2645 = vpack.c.bf16 %v2626, %v2625
        %v2646 = vpack.c.bf16 %v2628, %v2627
        %v2647 = vpack.c.bf16 %v2630, %v2629
        %v2648 = vpack.c.bf16 %v2632, %v2631
        %2649 = vmatprep.subr.bf16.mxu0 0
        %2650 = vmatpush1.bf16.msra.mxu0 %v2071
        %2651 = vmatprep.subr.bf16.mxu0 0
        %2652 = vmatpush1.bf16.msra.mxu0 %v2072
        %2653 = vmatprep.subr.bf16.mxu0 0
        %2654 = vmatpush1.bf16.msra.mxu0 %v2073
        %2655 = vmatprep.subr.bf16.mxu0 0
        %2656 = vmatpush1.bf16.msra.mxu0 %v2074
        %2657 = vmatprep.subr.bf16.mxu0 0
        %2658 = vmatpush1.bf16.msra.mxu0 %v2075
        %2659 = vmatprep.subr.bf16.mxu0 0
        %2660 = vmatpush1.bf16.msra.mxu0 %v2076
        %2661 = vmatprep.subr.bf16.mxu0 0
        %2662 = vmatpush1.bf16.msra.mxu0 %v2077
        %2663 = vmatprep.subr.bf16.mxu0 0
        %2664 = vmatpush1.bf16.msra.mxu0 %v2078
        %2665 = vmatprep.subr.bf16.mxu0 0
        %2666 = vmatpush1.bf16.msra.mxu0 0
        %2667 = vmatprep.subr.bf16.mxu0 0
        %2668 = vmatpush1.bf16.msra.mxu0 0
        %2669 = vmatprep.subr.bf16.mxu0 0
        %2670 = vmatpush1.bf16.msra.mxu0 0
        %2671 = vmatprep.subr.bf16.mxu0 0
        %2672 = vmatpush1.bf16.msra.mxu0 0
        %2673 = vmatprep.subr.bf16.mxu0 0
        %2674 = vmatpush1.bf16.msra.mxu0 0
        %2675 = vmatprep.subr.bf16.mxu0 0
        %2676 = vmatpush1.bf16.msra.mxu0 0
        %2677 = vmatprep.subr.bf16.mxu0 0
        %2678 = vmatpush1.bf16.msra.mxu0 0
        %2679 = vmatprep.subr.bf16.mxu0 0
        %2680 = vmatpush1.bf16.msra.mxu0 0
        %2681 = vmatprep.mubr.bf16.mxu0 0
        %2682 = vmatmul.mubr.bf16.gmra.mrb[0].mxu0 %v2633
        %v2683 = vpop.f32.mrb[0].mxu0
        %v2684 = vadd.f32 0.0, %v2683
        %v2685 = vpop.f32.mrb[0].mxu0
        %v2686 = vpop.f32.mrb[0].mxu0
        %v2687 = vadd.f32 0.0, %v2686
        %v2688 = vpop.f32.mrb[0].mxu0
        %2689 = vmatprep.mubr.bf16.mxu0 0
        %2690 = vmatmul.mubr.bf16.gmra.mrb[0].mxu0 %v2634
        %v2691 = vpop.f32.mrb[0].mxu0
        %v2692 = vadd.f32 0.0, %v2691
        %v2693 = vpop.f32.mrb[0].mxu0
        %v2694 = vpop.f32.mrb[0].mxu0
        %v2695 = vadd.f32 0.0, %v2694
        %v2696 = vpop.f32.mrb[0].mxu0
        %2697 = vmatprep.mubr.bf16.mxu0 0
        %2698 = vmatmul.mubr.bf16.gmra.mrb[0].mxu0 %v2635
        %v2699 = vpop.f32.mrb[0].mxu0
        %v2700 = vadd.f32 0.0, %v2699
        %v2701 = vpop.f32.mrb[0].mxu0
        %v2702 = vpop.f32.mrb[0].mxu0
        %v2703 = vadd.f32 0.0, %v2702
        %v2704 = vpop.f32.mrb[0].mxu0
        %2705 = vmatprep.mubr.bf16.mxu0 0
        %2706 = vmatmul.mubr.bf16.gmra.mrb[0].mxu0 %v2636
        %v2707 = vpop.f32.mrb[0].mxu0
        %v2708 = vadd.f32 0.0, %v2707
        %v2709 = vpop.f32.mrb[0].mxu0
        %v2710 = vpop.f32.mrb[0].mxu0
        %v2711 = vadd.f32 0.0, %v2710
        %v2712 = vpop.f32.mrb[0].mxu0
        %2713 = vmatprep.mubr.bf16.mxu0 0
        %2714 = vmatmul.mubr.bf16.gmra.mrb[0].mxu0 %v2637
        %v2715 = vpop.f32.mrb[0].mxu0
        %v2716 = vadd.f32 0.0, %v2715
        %v2717 = vpop.f32.mrb[0].mxu0
        %v2718 = vpop.f32.mrb[0].mxu0
        %v2719 = vadd.f32 0.0, %v2718
        %v2720 = vpop.f32.mrb[0].mxu0
        %2721 = vmatprep.mubr.bf16.mxu0 0
        %2722 = vmatmul.mubr.bf16.gmra.mrb[0].mxu0 %v2638
        %v2723 = vpop.f32.mrb[0].mxu0
        %v2724 = vadd.f32 0.0, %v2723
        %v2725 = vpop.f32.mrb[0].mxu0
        %v2726 = vpop.f32.mrb[0].mxu0
        %v2727 = vadd.f32 0.0, %v2726
        %v2728 = vpop.f32.mrb[0].mxu0
        %2729 = vmatprep.mubr.bf16.mxu0 0
        %2730 = vmatmul.mubr.bf16.gmra.mrb[0].mxu0 %v2639
        %v2731 = vpop.f32.mrb[0].mxu0
        %v2732 = vadd.f32 0.0, %v2731
        %v2733 = vpop.f32.mrb[0].mxu0
        %v2734 = vpop.f32.mrb[0].mxu0
        %v2735 = vadd.f32 0.0, %v2734
        %v2736 = vpop.f32.mrb[0].mxu0
        %2737 = vmatprep.mubr.bf16.mxu0 0
        %2738 = vmatmul.mubr.bf16.gmra.mrb[0].mxu0 %v2640
        %v2739 = vpop.f32.mrb[0].mxu0
        %v2740 = vadd.f32 0.0, %v2739
        %v2741 = vpop.f32.mrb[0].mxu0
        %v2742 = vpop.f32.mrb[0].mxu0
        %v2743 = vadd.f32 0.0, %v2742
        %v2744 = vpop.f32.mrb[0].mxu0
        %2745 = vdwg.mxu0
        %2746 = vmatprep.subr.bf16.mxu0 0
        %2747 = vmatpush1.bf16.msra.mxu0 %v2079
        %2748 = vmatprep.subr.bf16.mxu0 0
        %2749 = vmatpush1.bf16.msra.mxu0 %v2080
        %2750 = vmatprep.subr.bf16.mxu0 0
        %2751 = vmatpush1.bf16.msra.mxu0 %v2081
        %2752 = vmatprep.subr.bf16.mxu0 0
        %2753 = vmatpush1.bf16.msra.mxu0 %v2082
        %2754 = vmatprep.subr.bf16.mxu0 0
        %2755 = vmatpush1.bf16.msra.mxu0 %v2083
        %2756 = vmatprep.subr.bf16.mxu0 0
        %2757 = vmatpush1.bf16.msra.mxu0 %v2084
        %2758 = vmatprep.subr.bf16.mxu0 0
        %2759 = vmatpush1.bf16.msra.mxu0 %v2085
        %2760 = vmatprep.subr.bf16.mxu0 0
        %2761 = vmatpush1.bf16.msra.mxu0 %v2086
        %2762 = vmatprep.subr.bf16.mxu0 0
        %2763 = vmatpush1.bf16.msra.mxu0 0
        %2764 = vmatprep.subr.bf16.mxu0 0
        %2765 = vmatpush1.bf16.msra.mxu0 0
        %2766 = vmatprep.subr.bf16.mxu0 0
        %2767 = vmatpush1.bf16.msra.mxu0 0
        %2768 = vmatprep.subr.bf16.mxu0 0
        %2769 = vmatpush1.bf16.msra.mxu0 0
        %2770 = vmatprep.subr.bf16.mxu0 0
        %2771 = vmatpush1.bf16.msra.mxu0 0
        %2772 = vmatprep.subr.bf16.mxu0 0
        %2773 = vmatpush1.bf16.msra.mxu0 0
        %2774 = vmatprep.subr.bf16.mxu0 0
        %2775 = vmatpush1.bf16.msra.mxu0 0
        %2776 = vmatprep.subr.bf16.mxu0 0
        %2777 = vmatpush1.bf16.msra.mxu0 0
        %2778 = vmatprep.mubr.bf16.mxu0 0
        %2779 = vmatmul.mubr.bf16.gmra.mrb[0].mxu0 %v2641
        %v2780 = vpop.f32.mrb[0].mxu0
        %v2781 = vadd.f32 0.0, %v2780
        %v2782 = vpop.f32.mrb[0].mxu0
        %v2783 = vpop.f32.mrb[0].mxu0
        %v2784 = vadd.f32 0.0, %v2783
        %v2785 = vpop.f32.mrb[0].mxu0
        %2786 = vmatprep.mubr.bf16.mxu0 0
        %2787 = vmatmul.mubr.bf16.gmra.mrb[0].mxu0 %v2642
        %v2788 = vpop.f32.mrb[0].mxu0
        %v2789 = vadd.f32 0.0, %v2788
        %v2790 = vpop.f32.mrb[0].mxu0
        %v2791 = vpop.f32.mrb[0].mxu0
        %v2792 = vadd.f32 0.0, %v2791
        %v2793 = vpop.f32.mrb[0].mxu0
        %2794 = vmatprep.mubr.bf16.mxu0 0
        %2795 = vmatmul.mubr.bf16.gmra.mrb[0].mxu0 %v2643
        %v2796 = vpop.f32.mrb[0].mxu0
        %v2797 = vadd.f32 0.0, %v2796
        %v2798 = vpop.f32.mrb[0].mxu0
        %v2799 = vpop.f32.mrb[0].mxu0
        %v2800 = vadd.f32 0.0, %v2799
        %v2801 = vpop.f32.mrb[0].mxu0
        %2802 = vmatprep.mubr.bf16.mxu0 0
        %2803 = vmatmul.mubr.bf16.gmra.mrb[0].mxu0 %v2644
        %v2804 = vpop.f32.mrb[0].mxu0
        %v2805 = vadd.f32 0.0, %v2804
        %v2806 = vpop.f32.mrb[0].mxu0
        %v2807 = vpop.f32.mrb[0].mxu0
        %v2808 = vadd.f32 0.0, %v2807
        %v2809 = vpop.f32.mrb[0].mxu0
        %2810 = vmatprep.mubr.bf16.mxu0 0
        %2811 = vmatmul.mubr.bf16.gmra.mrb[0].mxu0 %v2645
        %v2812 = vpop.f32.mrb[0].mxu0
        %v2813 = vadd.f32 0.0, %v2812
        %v2814 = vpop.f32.mrb[0].mxu0
        %v2815 = vpop.f32.mrb[0].mxu0
        %v2816 = vadd.f32 0.0, %v2815
        %v2817 = vpop.f32.mrb[0].mxu0
        %2818 = vmatprep.mubr.bf16.mxu0 0
        %2819 = vmatmul.mubr.bf16.gmra.mrb[0].mxu0 %v2646
        %v2820 = vpop.f32.mrb[0].mxu0
        %v2821 = vadd.f32 0.0, %v2820
        %v2822 = vpop.f32.mrb[0].mxu0
        %v2823 = vpop.f32.mrb[0].mxu0
        %v2824 = vadd.f32 0.0, %v2823
        %v2825 = vpop.f32.mrb[0].mxu0
        %2826 = vmatprep.mubr.bf16.mxu0 0
        %2827 = vmatmul.mubr.bf16.gmra.mrb[0].mxu0 %v2647
        %v2828 = vpop.f32.mrb[0].mxu0
        %v2829 = vadd.f32 0.0, %v2828
        %v2830 = vpop.f32.mrb[0].mxu0
        %v2831 = vpop.f32.mrb[0].mxu0
        %v2832 = vadd.f32 0.0, %v2831
        %v2833 = vpop.f32.mrb[0].mxu0
        %2834 = vmatprep.mubr.bf16.mxu0 0
        %2835 = vmatmul.mubr.bf16.gmra.mrb[0].mxu0 %v2648
        %v2836 = vpop.f32.mrb[0].mxu0
        %v2837 = vadd.f32 0.0, %v2836
        %v2838 = vpop.f32.mrb[0].mxu0
        %v2839 = vpop.f32.mrb[0].mxu0
        %v2840 = vadd.f32 0.0, %v2839
        %v2841 = vpop.f32.mrb[0].mxu0
        %2842 = vdwg.mxu0
        %v2843 = vpack.c.bf16 %v2687, %v2684
        %v2844 = vpack.c.bf16 %v2695, %v2692
        %v2845 = vpack.c.bf16 %v2703, %v2700
        %v2846 = vpack.c.bf16 %v2711, %v2708
        %v2847 = vpack.c.bf16 %v2719, %v2716
        %v2848 = vpack.c.bf16 %v2727, %v2724
        %v2849 = vpack.c.bf16 %v2735, %v2732
        %v2850 = vpack.c.bf16 %v2743, %v2740
        %v2851 = vpack.c.bf16 %v2784, %v2781
        %v2852 = vpack.c.bf16 %v2792, %v2789
        %v2853 = vpack.c.bf16 %v2800, %v2797
        %v2854 = vpack.c.bf16 %v2808, %v2805
        %v2855 = vpack.c.bf16 %v2816, %v2813
        %v2856 = vpack.c.bf16 %v2824, %v2821
        %v2857 = vpack.c.bf16 %v2832, %v2829
        %v2858 = vpack.c.bf16 %v2840, %v2837
        %s2859 = smul.addr %s2031, 8
        %s2860 = scalar_lea.vmem [#allocation5], %s2859
        %2861 = vst [vmem:[%s2860] sm:$0xff] %v2843
        %2862 = vst [vmem:[%s2860 + $0x10] sm:$0xff] %v2844
        %2863 = vst [vmem:[%s2860 + $0x20] sm:$0xff] %v2845
        %2864 = vst [vmem:[%s2860 + $0x30] sm:$0xff] %v2846
        %2865 = vst [vmem:[%s2860 + $0x40] sm:$0xff] %v2847
        %2866 = vst [vmem:[%s2860 + $0x50] sm:$0xff] %v2848
        %2867 = vst [vmem:[%s2860 + $0x60] sm:$0xff] %v2849
        %2868 = vst [vmem:[%s2860 + $0x70] sm:$0xff] %v2850
        %2869 = vst [vmem:[%s2860 + $0x80] sm:$0xff] %v2851
        %2870 = vst [vmem:[%s2860 + $0x90] sm:$0xff] %v2852
        %2871 = vst [vmem:[%s2860 + $0xa0] sm:$0xff] %v2853
        %2872 = vst [vmem:[%s2860 + $0xb0] sm:$0xff] %v2854
        %2873 = vst [vmem:[%s2860 + $0xc0] sm:$0xff] %v2855
        %2874 = vst [vmem:[%s2860 + $0xd0] sm:$0xff] %v2856
        %2875 = vst [vmem:[%s2860 + $0xe0] sm:$0xff] %v2857
        %2876 = vst [vmem:[%s2860 + $0xf0] sm:$0xff] %v2858
      $region77: #{vision_transformer_forward.5} parent=71 // loop_footer
        %s2029 = sadd.s32 1, %s2025
      $region78: #{vision_transformer_forward.5} parent=71 // loop_footer_branch
        %2024 = sbr.rel target = $region74
      $region79: #{vision_transformer_forward.5} parent=71 // loop_exit
        _
      %v2877 = vld [vmem:[#allocation5] sm:$0xff]
      %v2878 = vld [vmem:[#allocation5 + $0x8] sm:$0xff]
      %v2879 = vld [vmem:[#allocation5 + $0x10] sm:$0xff]
      %v2880 = vld [vmem:[#allocation5 + $0x18] sm:$0xff]
      %v2881 = vld [vmem:[#allocation5 + $0x20] sm:$0xff]
      %v2882 = vld [vmem:[#allocation5 + $0x28] sm:$0xff]
      %v2883 = vld [vmem:[#allocation5 + $0x30] sm:$0xff]
      %v2884 = vld [vmem:[#allocation5 + $0x38] sm:$0xff]
      %v2885 = vld [vmem:[#allocation5 + $0x40] sm:$0xff]
      %v2886 = vld [vmem:[#allocation5 + $0x48] sm:$0xff]
      %v2887 = vld [vmem:[#allocation5 + $0x50] sm:$0xff]
      %v2888 = vld [vmem:[#allocation5 + $0x58] sm:$0xff]
      %v2889 = vld [vmem:[#allocation5 + $0x60] sm:$0xff]
      %v2890 = vld [vmem:[#allocation5 + $0x68] sm:$0xff]
      %v2891 = vld [vmem:[#allocation5 + $0x70] sm:$0xff]
      %v2892 = vld [vmem:[#allocation5 + $0x78] sm:$0xff]
      %v2893 = vld [vmem:[#allocation5 + $0x80] sm:$0xff]
      %v2894 = vld [vmem:[#allocation5 + $0x88] sm:$0xff]
      %v2895 = vld [vmem:[#allocation5 + $0x90] sm:$0xff]
      %v2896 = vld [vmem:[#allocation5 + $0x98] sm:$0xff]
      %v2897 = vld [vmem:[#allocation5 + $0xa0] sm:$0xff]
      %v2898 = vld [vmem:[#allocation5 + $0xa8] sm:$0xff]
      %v2899 = vld [vmem:[#allocation5 + $0xb0] sm:$0xff]
      %v2900 = vld [vmem:[#allocation5 + $0xb8] sm:$0xff]
      %v2901 = vld [vmem:[#allocation5 + $0xc0] sm:$0xff]
      %v2902 = vld [vmem:[#allocation5 + $0xc8] sm:$0xff]
      %v2903 = vld [vmem:[#allocation5 + $0xd0] sm:$0xff]
      %v2904 = vld [vmem:[#allocation5 + $0xd8] sm:$0xff]
      %v2905 = vld [vmem:[#allocation5 + $0xe0] sm:$0xff]
      %v2906 = vld [vmem:[#allocation5 + $0xe8] sm:$0xff]
      %v2907 = vld [vmem:[#allocation5 + $0xf0] sm:$0xff]
      %v2908 = vld [vmem:[#allocation5 + $0xf8] sm:$0xff]
      %v2909 = vld [vmem:[%s5] sm:$0xf]
      %v2910 = vld [vmem:[%s5 + $0x4] sm:$0xf]
      %v2911 = vld [vmem:[%s5 + $0x8] sm:$0xf]
      %v2912 = vld [vmem:[%s5 + $0xc] sm:$0xf]
      %v2913 = vld [vmem:[%s5 + $0x10] sm:$0xf]
      %v2914 = vld [vmem:[%s5 + $0x14] sm:$0xf]
      %v2915 = vld [vmem:[%s5 + $0x18] sm:$0xf]
      %v2916 = vld [vmem:[%s5 + $0x1c] sm:$0xf]
      %v2917 = vld [vmem:[%s5 + $0x20] sm:$0xf]
      %v2918 = vld [vmem:[%s5 + $0x24] sm:$0xf]
      %v2919 = vld [vmem:[%s5 + $0x28] sm:$0xf]
      %v2920 = vld [vmem:[%s5 + $0x2c] sm:$0xf]
      %v2921 = vld [vmem:[%s5 + $0x30] sm:$0xf]
      %v2922 = vld [vmem:[%s5 + $0x34] sm:$0xf]
      %v2923 = vld [vmem:[%s5 + $0x38] sm:$0xf]
      %v2924 = vld [vmem:[%s5 + $0x3c] sm:$0xf]
      %v2925 = vld [vmem:[%s5 + $0x40] sm:$0xf]
      %v2926 = vld [vmem:[%s5 + $0x44] sm:$0xf]
      %v2927 = vld [vmem:[%s5 + $0x48] sm:$0xf]
      %v2928 = vld [vmem:[%s5 + $0x4c] sm:$0xf]
      %v2929 = vld [vmem:[%s5 + $0x50] sm:$0xf]
      %v2930 = vld [vmem:[%s5 + $0x54] sm:$0xf]
      %v2931 = vld [vmem:[%s5 + $0x58] sm:$0xf]
      %v2932 = vld [vmem:[%s5 + $0x5c] sm:$0xf]
      %v2933 = vld [vmem:[%s5 + $0x60] sm:$0xf]
      %v2934 = vld [vmem:[%s5 + $0x64] sm:$0xf]
      %v2935 = vld [vmem:[%s5 + $0x68] sm:$0xf]
      %v2936 = vld [vmem:[%s5 + $0x6c] sm:$0xf]
      %v2937 = vld [vmem:[%s5 + $0x70] sm:$0xf]
      %v2938 = vld [vmem:[%s5 + $0x74] sm:$0xf]
      %v2939 = vld [vmem:[%s5 + $0x78] sm:$0xf]
      %v2940 = vld [vmem:[%s5 + $0x7c] sm:$0xf]
      %v2941 = vld [vmem:[%s6] sm:$0x1]
      %v2943 = vlaneseq
      %v2944 = vshrl.u32 %v2943, 7
      %v2945 = vsub.s32 0, %v2944
      %v2946 = vrot.slane %v2941, %v2945
      %v2980 = vunpack.c.l.b16 %v2909
      %v2981 = vunpack.c.l.b16 %v2910
      %v2982 = vunpack.c.l.b16 %v2911
      %v2983 = vunpack.c.l.b16 %v2912
      %v2984 = vunpack.c.l.b16 %v2913
      %v2985 = vunpack.c.l.b16 %v2914
      %v2986 = vunpack.c.l.b16 %v2915
      %v2987 = vunpack.c.l.b16 %v2916
      %v2988 = vunpack.c.l.b16 %v2917
      %v2989 = vunpack.c.l.b16 %v2918
      %v2990 = vunpack.c.l.b16 %v2919
      %v2991 = vunpack.c.l.b16 %v2920
      %v2992 = vunpack.c.l.b16 %v2921
      %v2993 = vunpack.c.l.b16 %v2922
      %v2994 = vunpack.c.l.b16 %v2923
      %v2995 = vunpack.c.l.b16 %v2924
      %v2996 = vunpack.c.l.b16 %v2925
      %v2997 = vunpack.c.l.b16 %v2926
      %v2998 = vunpack.c.l.b16 %v2927
      %v2999 = vunpack.c.l.b16 %v2928
      %v3000 = vunpack.c.l.b16 %v2929
      %v3001 = vunpack.c.l.b16 %v2930
      %v3002 = vunpack.c.l.b16 %v2931
      %v3003 = vunpack.c.l.b16 %v2932
      %v3004 = vunpack.c.l.b16 %v2933
      %v3005 = vunpack.c.l.b16 %v2934
      %v3006 = vunpack.c.l.b16 %v2935
      %v3007 = vunpack.c.l.b16 %v2936
      %v3008 = vunpack.c.l.b16 %v2937
      %v3009 = vunpack.c.l.b16 %v2938
      %v3010 = vunpack.c.l.b16 %v2939
      %v3011 = vunpack.c.l.b16 %v2940
      %v3012 = vpack.c.b16 %v2981, %v2980
      %v3013 = vpack.c.b16 %v2983, %v2982
      %v3014 = vpack.c.b16 %v2985, %v2984
      %v3015 = vpack.c.b16 %v2987, %v2986
      %v3016 = vpack.c.b16 %v2989, %v2988
      %v3017 = vpack.c.b16 %v2991, %v2990
      %v3018 = vpack.c.b16 %v2993, %v2992
      %v3019 = vpack.c.b16 %v2995, %v2994
      %v3020 = vpack.c.b16 %v2997, %v2996
      %v3021 = vpack.c.b16 %v2999, %v2998
      %v3022 = vpack.c.b16 %v3001, %v3000
      %v3023 = vpack.c.b16 %v3003, %v3002
      %v3024 = vpack.c.b16 %v3005, %v3004
      %v3025 = vpack.c.b16 %v3007, %v3006
      %v3026 = vpack.c.b16 %v3009, %v3008
      %v3027 = vpack.c.b16 %v3011, %v3010
      %3044 = vmatprep.subr.bf16.mxu0 0
      %3045 = vmatpush1.bf16.msra.mxu0 %v3012
      %3046 = vmatprep.subr.bf16.mxu0 0
      %3047 = vmatpush1.bf16.msra.mxu0 %v3013
      %3048 = vmatprep.subr.bf16.mxu0 0
      %3049 = vmatpush1.bf16.msra.mxu0 %v3014
      %3050 = vmatprep.subr.bf16.mxu0 0
      %3051 = vmatpush1.bf16.msra.mxu0 %v3015
      %3052 = vmatprep.subr.bf16.mxu0 0
      %3053 = vmatpush1.bf16.msra.mxu0 %v3016
      %3054 = vmatprep.subr.bf16.mxu0 0
      %3055 = vmatpush1.bf16.msra.mxu0 %v3017
      %3056 = vmatprep.subr.bf16.mxu0 0
      %3057 = vmatpush1.bf16.msra.mxu0 %v3018
      %3058 = vmatprep.subr.bf16.mxu0 0
      %3059 = vmatpush1.bf16.msra.mxu0 %v3019
      %3060 = vmatprep.subr.bf16.mxu0 0
      %3061 = vmatpush1.bf16.msra.mxu0 %v3020
      %3062 = vmatprep.subr.bf16.mxu0 0
      %3063 = vmatpush1.bf16.msra.mxu0 %v3021
      %3064 = vmatprep.subr.bf16.mxu0 0
      %3065 = vmatpush1.bf16.msra.mxu0 %v3022
      %3066 = vmatprep.subr.bf16.mxu0 0
      %3067 = vmatpush1.bf16.msra.mxu0 %v3023
      %3068 = vmatprep.subr.bf16.mxu0 0
      %3069 = vmatpush1.bf16.msra.mxu0 %v3024
      %3070 = vmatprep.subr.bf16.mxu0 0
      %3071 = vmatpush1.bf16.msra.mxu0 %v3025
      %3072 = vmatprep.subr.bf16.mxu0 0
      %3073 = vmatpush1.bf16.msra.mxu0 %v3026
      %3074 = vmatprep.subr.bf16.mxu0 0
      %3075 = vmatpush1.bf16.msra.mxu0 %v3027
      %3076 = vmatprep.mubr.bf16.mxu0 %v2878
      %3077 = vmatmul.mubr.bf16.gmra.mrb[0].mxu0 %v2877
      %v3078 = vpop.f32.mrb[0].mxu0
      %v3079 = vadd.f32 %v2946, %v3078
      %v3080 = vpop.f32.mrb[0].mxu0
      %v3081 = vpop.f32.mrb[0].mxu0
      %v3082 = vadd.f32 %v2946, %v3081
      %v3083 = vpop.f32.mrb[0].mxu0
      %3084 = vmatprep.mubr.bf16.mxu0 %v2880
      %3085 = vmatmul.mubr.bf16.gmra.mrb[0].mxu0 %v2879
      %v3086 = vpop.f32.mrb[0].mxu0
      %v3087 = vadd.f32 %v2946, %v3086
      %v3088 = vpop.f32.mrb[0].mxu0
      %v3089 = vpop.f32.mrb[0].mxu0
      %v3090 = vadd.f32 %v2946, %v3089
      %v3091 = vpop.f32.mrb[0].mxu0
      %3092 = vmatprep.mubr.bf16.mxu0 %v2882
      %3093 = vmatmul.mubr.bf16.gmra.mrb[0].mxu0 %v2881
      %v3094 = vpop.f32.mrb[0].mxu0
      %v3095 = vadd.f32 %v2946, %v3094
      %v3096 = vpop.f32.mrb[0].mxu0
      %v3097 = vpop.f32.mrb[0].mxu0
      %v3098 = vadd.f32 %v2946, %v3097
      %v3099 = vpop.f32.mrb[0].mxu0
      %3100 = vmatprep.mubr.bf16.mxu0 %v2884
      %3101 = vmatmul.mubr.bf16.gmra.mrb[0].mxu0 %v2883
      %v3102 = vpop.f32.mrb[0].mxu0
      %v3103 = vadd.f32 %v2946, %v3102
      %v3104 = vpop.f32.mrb[0].mxu0
      %v3105 = vpop.f32.mrb[0].mxu0
      %v3106 = vadd.f32 %v2946, %v3105
      %v3107 = vpop.f32.mrb[0].mxu0
      %3108 = vmatprep.mubr.bf16.mxu0 %v2886
      %3109 = vmatmul.mubr.bf16.gmra.mrb[0].mxu0 %v2885
      %v3110 = vpop.f32.mrb[0].mxu0
      %v3111 = vadd.f32 %v2946, %v3110
      %v3112 = vpop.f32.mrb[0].mxu0
      %v3113 = vpop.f32.mrb[0].mxu0
      %v3114 = vadd.f32 %v2946, %v3113
      %v3115 = vpop.f32.mrb[0].mxu0
      %3116 = vmatprep.mubr.bf16.mxu0 %v2888
      %3117 = vmatmul.mubr.bf16.gmra.mrb[0].mxu0 %v2887
      %v3118 = vpop.f32.mrb[0].mxu0
      %v3119 = vadd.f32 %v2946, %v3118
      %v3120 = vpop.f32.mrb[0].mxu0
      %v3121 = vpop.f32.mrb[0].mxu0
      %v3122 = vadd.f32 %v2946, %v3121
      %v3123 = vpop.f32.mrb[0].mxu0
      %3124 = vmatprep.mubr.bf16.mxu0 %v2890
      %3125 = vmatmul.mubr.bf16.gmra.mrb[0].mxu0 %v2889
      %v3126 = vpop.f32.mrb[0].mxu0
      %v3127 = vadd.f32 %v2946, %v3126
      %v3128 = vpop.f32.mrb[0].mxu0
      %v3129 = vpop.f32.mrb[0].mxu0
      %v3130 = vadd.f32 %v2946, %v3129
      %v3131 = vpop.f32.mrb[0].mxu0
      %3132 = vmatprep.mubr.bf16.mxu0 %v2892
      %3133 = vmatmul.mubr.bf16.gmra.mrb[0].mxu0 %v2891
      %v3134 = vpop.f32.mrb[0].mxu0
      %v3135 = vadd.f32 %v2946, %v3134
      %v3136 = vpop.f32.mrb[0].mxu0
      %v3137 = vpop.f32.mrb[0].mxu0
      %v3138 = vadd.f32 %v2946, %v3137
      %v3139 = vpop.f32.mrb[0].mxu0
      %3140 = vmatprep.mubr.bf16.mxu0 %v2894
      %3141 = vmatmul.mubr.bf16.gmra.mrb[0].mxu0 %v2893
      %v3142 = vpop.f32.mrb[0].mxu0
      %v3143 = vadd.f32 %v2946, %v3142
      %v3144 = vpop.f32.mrb[0].mxu0
      %v3145 = vpop.f32.mrb[0].mxu0
      %v3146 = vadd.f32 %v2946, %v3145
      %v3147 = vpop.f32.mrb[0].mxu0
      %3148 = vmatprep.mubr.bf16.mxu0 %v2896
      %3149 = vmatmul.mubr.bf16.gmra.mrb[0].mxu0 %v2895
      %v3150 = vpop.f32.mrb[0].mxu0
      %v3151 = vadd.f32 %v2946, %v3150
      %v3152 = vpop.f32.mrb[0].mxu0
      %v3153 = vpop.f32.mrb[0].mxu0
      %v3154 = vadd.f32 %v2946, %v3153
      %v3155 = vpop.f32.mrb[0].mxu0
      %3156 = vmatprep.mubr.bf16.mxu0 %v2898
      %3157 = vmatmul.mubr.bf16.gmra.mrb[0].mxu0 %v2897
      %v3158 = vpop.f32.mrb[0].mxu0
      %v3159 = vadd.f32 %v2946, %v3158
      %v3160 = vpop.f32.mrb[0].mxu0
      %v3161 = vpop.f32.mrb[0].mxu0
      %v3162 = vadd.f32 %v2946, %v3161
      %v3163 = vpop.f32.mrb[0].mxu0
      %3164 = vmatprep.mubr.bf16.mxu0 %v2900
      %3165 = vmatmul.mubr.bf16.gmra.mrb[0].mxu0 %v2899
      %v3166 = vpop.f32.mrb[0].mxu0
      %v3167 = vadd.f32 %v2946, %v3166
      %v3168 = vpop.f32.mrb[0].mxu0
      %v3169 = vpop.f32.mrb[0].mxu0
      %v3170 = vadd.f32 %v2946, %v3169
      %v3171 = vpop.f32.mrb[0].mxu0
      %3172 = vmatprep.mubr.bf16.mxu0 %v2902
      %3173 = vmatmul.mubr.bf16.gmra.mrb[0].mxu0 %v2901
      %v3174 = vpop.f32.mrb[0].mxu0
      %v3175 = vadd.f32 %v2946, %v3174
      %v3176 = vpop.f32.mrb[0].mxu0
      %v3177 = vpop.f32.mrb[0].mxu0
      %v3178 = vadd.f32 %v2946, %v3177
      %v3179 = vpop.f32.mrb[0].mxu0
      %3180 = vmatprep.mubr.bf16.mxu0 %v2904
      %3181 = vmatmul.mubr.bf16.gmra.mrb[0].mxu0 %v2903
      %v3182 = vpop.f32.mrb[0].mxu0
      %v3183 = vadd.f32 %v2946, %v3182
      %v3184 = vpop.f32.mrb[0].mxu0
      %v3185 = vpop.f32.mrb[0].mxu0
      %v3186 = vadd.f32 %v2946, %v3185
      %v3187 = vpop.f32.mrb[0].mxu0
      %3188 = vmatprep.mubr.bf16.mxu0 %v2906
      %3189 = vmatmul.mubr.bf16.gmra.mrb[0].mxu0 %v2905
      %v3190 = vpop.f32.mrb[0].mxu0
      %v3191 = vadd.f32 %v2946, %v3190
      %v3192 = vpop.f32.mrb[0].mxu0
      %v3193 = vpop.f32.mrb[0].mxu0
      %v3194 = vadd.f32 %v2946, %v3193
      %v3195 = vpop.f32.mrb[0].mxu0
      %3196 = vmatprep.mubr.bf16.mxu0 %v2908
      %3197 = vmatmul.mubr.bf16.gmra.mrb[0].mxu0 %v2907
      %v3198 = vpop.f32.mrb[0].mxu0
      %v3199 = vadd.f32 %v2946, %v3198
      %v3200 = vpop.f32.mrb[0].mxu0
      %v3201 = vpop.f32.mrb[0].mxu0
      %v3202 = vadd.f32 %v2946, %v3201
      %v3203 = vpop.f32.mrb[0].mxu0
      %3204 = vdwg.mxu0
      %v3205 = vadd.f32 %v450, %v3079
      %v3206 = vadd.f32 %v451, %v3082
      %v3207 = vadd.f32 %v452, %v3087
      %v3208 = vadd.f32 %v453, %v3090
      %v3209 = vadd.f32 %v454, %v3095
      %v3210 = vadd.f32 %v455, %v3098
      %v3211 = vadd.f32 %v456, %v3103
      %v3212 = vadd.f32 %v457, %v3106
      %v3213 = vadd.f32 %v458, %v3111
      %v3214 = vadd.f32 %v459, %v3114
      %v3215 = vadd.f32 %v460, %v3119
      %v3216 = vadd.f32 %v461, %v3122
      %v3217 = vadd.f32 %v462, %v3127
      %v3218 = vadd.f32 %v463, %v3130
      %v3219 = vadd.f32 %v464, %v3135
      %v3220 = vadd.f32 %v465, %v3138
      %v3221 = vadd.f32 %v466, %v3143
      %v3222 = vadd.f32 %v467, %v3146
      %v3223 = vadd.f32 %v468, %v3151
      %v3224 = vadd.f32 %v469, %v3154
      %v3225 = vadd.f32 %v470, %v3159
      %v3226 = vadd.f32 %v471, %v3162
      %v3227 = vadd.f32 %v472, %v3167
      %v3228 = vadd.f32 %v473, %v3170
      %v3229 = vadd.f32 %v474, %v3175
      %v3230 = vadd.f32 %v475, %v3178
      %v3231 = vadd.f32 %v476, %v3183
      %v3232 = vadd.f32 %v477, %v3186
      %v3233 = vadd.f32 %v478, %v3191
      %v3234 = vadd.f32 %v479, %v3194
      %v3235 = vadd.f32 %v480, %v3199
      %v3236 = vadd.f32 %v481, %v3202
      %v3237 = vld [vmem:[%s7] sm:$0x1]
      %v3238 = vld [vmem:[%s8] sm:$0x1]
      %3239 = vadd.xlane.f32.xlu0 %v3205
      %v3240 = vpop.xlane.xlu0 %3239
      %3241 = vadd.xlane.f32.xlu0 %v3206
      %v3242 = vpop.xlane.xlu0 %3241
      %3243 = vadd.xlane.f32.xlu0 %v3207
      %v3244 = vpop.xlane.xlu0 %3243
      %3245 = vadd.xlane.f32.xlu0 %v3208
      %v3246 = vpop.xlane.xlu0 %3245
      %3247 = vadd.xlane.f32.xlu0 %v3209
      %v3248 = vpop.xlane.xlu0 %3247
      %3249 = vadd.xlane.f32.xlu0 %v3210
      %v3250 = vpop.xlane.xlu0 %3249
      %3251 = vadd.xlane.f32.xlu0 %v3211
      %v3252 = vpop.xlane.xlu0 %3251
      %3253 = vadd.xlane.f32.xlu0 %v3212
      %v3254 = vpop.xlane.xlu0 %3253
      %3255 = vadd.xlane.f32.xlu0 %v3213
      %v3256 = vpop.xlane.xlu0 %3255
      %3257 = vadd.xlane.f32.xlu0 %v3214
      %v3258 = vpop.xlane.xlu0 %3257
      %3259 = vadd.xlane.f32.xlu0 %v3215
      %v3260 = vpop.xlane.xlu0 %3259
      %3261 = vadd.xlane.f32.xlu0 %v3216
      %v3262 = vpop.xlane.xlu0 %3261
      %3263 = vadd.xlane.f32.xlu0 %v3217
      %v3264 = vpop.xlane.xlu0 %3263
      %3265 = vadd.xlane.f32.xlu0 %v3218
      %v3266 = vpop.xlane.xlu0 %3265
      %3267 = vadd.xlane.f32.xlu0 %v3219
      %v3268 = vpop.xlane.xlu0 %3267
      %3269 = vadd.xlane.f32.xlu0 %v3220
      %v3270 = vpop.xlane.xlu0 %3269
      %3271 = vadd.xlane.f32.xlu0 %v3221
      %v3272 = vpop.xlane.xlu0 %3271
      %3273 = vadd.xlane.f32.xlu0 %v3222
      %v3274 = vpop.xlane.xlu0 %3273
      %3275 = vadd.xlane.f32.xlu0 %v3223
      %v3276 = vpop.xlane.xlu0 %3275
      %3277 = vadd.xlane.f32.xlu0 %v3224
      %v3278 = vpop.xlane.xlu0 %3277
      %3279 = vadd.xlane.f32.xlu0 %v3225
      %v3280 = vpop.xlane.xlu0 %3279
      %3281 = vadd.xlane.f32.xlu0 %v3226
      %v3282 = vpop.xlane.xlu0 %3281
      %3283 = vadd.xlane.f32.xlu0 %v3227
      %v3284 = vpop.xlane.xlu0 %3283
      %3285 = vadd.xlane.f32.xlu0 %v3228
      %v3286 = vpop.xlane.xlu0 %3285
      %3287 = vadd.xlane.f32.xlu0 %v3229
      %v3288 = vpop.xlane.xlu0 %3287
      %3289 = vadd.xlane.f32.xlu0 %v3230
      %v3290 = vpop.xlane.xlu0 %3289
      %3291 = vadd.xlane.f32.xlu0 %v3231
      %v3292 = vpop.xlane.xlu0 %3291
      %3293 = vadd.xlane.f32.xlu0 %v3232
      %v3294 = vpop.xlane.xlu0 %3293
      %3295 = vadd.xlane.f32.xlu0 %v3233
      %v3296 = vpop.xlane.xlu0 %3295
      %3297 = vadd.xlane.f32.xlu0 %v3234
      %v3298 = vpop.xlane.xlu0 %3297
      %3299 = vadd.xlane.f32.xlu0 %v3235
      %v3300 = vpop.xlane.xlu0 %3299
      %3301 = vadd.xlane.f32.xlu0 %v3236
      %v3302 = vpop.xlane.xlu0 %3301
      %v3303 = vmul.f32 %v3240, %v548
      %v3304 = vmul.f32 %v3242, %v548
      %v3305 = vmul.f32 %v3244, %v548
      %v3306 = vmul.f32 %v3246, %v548
      %v3307 = vmul.f32 %v3248, %v548
      %v3308 = vmul.f32 %v3250, %v548
      %v3309 = vmul.f32 %v3252, %v548
      %v3310 = vmul.f32 %v3254, %v548
      %v3311 = vmul.f32 %v3256, %v548
      %v3312 = vmul.f32 %v3258, %v548
      %v3313 = vmul.f32 %v3260, %v548
      %v3314 = vmul.f32 %v3262, %v548
      %v3315 = vmul.f32 %v3264, %v548
      %v3316 = vmul.f32 %v3266, %v548
      %v3317 = vmul.f32 %v3268, %v548
      %v3318 = vmul.f32 %v3270, %v548
      %v3319 = vmul.f32 %v3272, %v548
      %v3320 = vmul.f32 %v3274, %v548
      %v3321 = vmul.f32 %v3276, %v548
      %v3322 = vmul.f32 %v3278, %v548
      %v3323 = vmul.f32 %v3280, %v548
      %v3324 = vmul.f32 %v3282, %v548
      %v3325 = vmul.f32 %v3284, %v548
      %v3326 = vmul.f32 %v3286, %v548
      %v3327 = vmul.f32 %v3288, %v548
      %v3328 = vmul.f32 %v3290, %v548
      %v3329 = vmul.f32 %v3292, %v548
      %v3330 = vmul.f32 %v3294, %v548
      %v3331 = vmul.f32 %v3296, %v548
      %v3332 = vmul.f32 %v3298, %v548
      %v3333 = vmul.f32 %v3300, %v548
      %v3334 = vmul.f32 %v3302, %v548
      %v3335 = vsub.f32 %v3205, %v3303
      %v3336 = vsub.f32 %v3206, %v3304
      %v3337 = vsub.f32 %v3207, %v3305
      %v3338 = vsub.f32 %v3208, %v3306
      %v3339 = vsub.f32 %v3209, %v3307
      %v3340 = vsub.f32 %v3210, %v3308
      %v3341 = vsub.f32 %v3211, %v3309
      %v3342 = vsub.f32 %v3212, %v3310
      %v3343 = vsub.f32 %v3213, %v3311
      %v3344 = vsub.f32 %v3214, %v3312
      %v3345 = vsub.f32 %v3215, %v3313
      %v3346 = vsub.f32 %v3216, %v3314
      %v3347 = vsub.f32 %v3217, %v3315
      %v3348 = vsub.f32 %v3218, %v3316
      %v3349 = vsub.f32 %v3219, %v3317
      %v3350 = vsub.f32 %v3220, %v3318
      %v3351 = vsub.f32 %v3221, %v3319
      %v3352 = vsub.f32 %v3222, %v3320
      %v3353 = vsub.f32 %v3223, %v3321
      %v3354 = vsub.f32 %v3224, %v3322
      %v3355 = vsub.f32 %v3225, %v3323
      %v3356 = vsub.f32 %v3226, %v3324
      %v3357 = vsub.f32 %v3227, %v3325
      %v3358 = vsub.f32 %v3228, %v3326
      %v3359 = vsub.f32 %v3229, %v3327
      %v3360 = vsub.f32 %v3230, %v3328
      %v3361 = vsub.f32 %v3231, %v3329
      %v3362 = vsub.f32 %v3232, %v3330
      %v3363 = vsub.f32 %v3233, %v3331
      %v3364 = vsub.f32 %v3234, %v3332
      %v3365 = vsub.f32 %v3235, %v3333
      %v3366 = vsub.f32 %v3236, %v3334
      %v3367 = vmul.f32 %v3335, %v3335
      %v3368 = vmul.f32 %v3336, %v3336
      %v3369 = vmul.f32 %v3337, %v3337
      %v3370 = vmul.f32 %v3338, %v3338
      %v3371 = vmul.f32 %v3339, %v3339
      %v3372 = vmul.f32 %v3340, %v3340
      %v3373 = vmul.f32 %v3341, %v3341
      %v3374 = vmul.f32 %v3342, %v3342
      %v3375 = vmul.f32 %v3343, %v3343
      %v3376 = vmul.f32 %v3344, %v3344
      %v3377 = vmul.f32 %v3345, %v3345
      %v3378 = vmul.f32 %v3346, %v3346
      %v3379 = vmul.f32 %v3347, %v3347
      %v3380 = vmul.f32 %v3348, %v3348
      %v3381 = vmul.f32 %v3349, %v3349
      %v3382 = vmul.f32 %v3350, %v3350
      %v3383 = vmul.f32 %v3351, %v3351
      %v3384 = vmul.f32 %v3352, %v3352
      %v3385 = vmul.f32 %v3353, %v3353
      %v3386 = vmul.f32 %v3354, %v3354
      %v3387 = vmul.f32 %v3355, %v3355
      %v3388 = vmul.f32 %v3356, %v3356
      %v3389 = vmul.f32 %v3357, %v3357
      %v3390 = vmul.f32 %v3358, %v3358
      %v3391 = vmul.f32 %v3359, %v3359
      %v3392 = vmul.f32 %v3360, %v3360
      %v3393 = vmul.f32 %v3361, %v3361
      %v3394 = vmul.f32 %v3362, %v3362
      %v3395 = vmul.f32 %v3363, %v3363
      %v3396 = vmul.f32 %v3364, %v3364
      %v3397 = vmul.f32 %v3365, %v3365
      %v3398 = vmul.f32 %v3366, %v3366
      %3399 = vadd.xlane.f32.xlu0 %v3367
      %v3400 = vpop.xlane.xlu0 %3399
      %3401 = vadd.xlane.f32.xlu0 %v3368
      %v3402 = vpop.xlane.xlu0 %3401
      %3403 = vadd.xlane.f32.xlu0 %v3369
      %v3404 = vpop.xlane.xlu0 %3403
      %3405 = vadd.xlane.f32.xlu0 %v3370
      %v3406 = vpop.xlane.xlu0 %3405
      %3407 = vadd.xlane.f32.xlu0 %v3371
      %v3408 = vpop.xlane.xlu0 %3407
      %3409 = vadd.xlane.f32.xlu0 %v3372
      %v3410 = vpop.xlane.xlu0 %3409
      %3411 = vadd.xlane.f32.xlu0 %v3373
      %v3412 = vpop.xlane.xlu0 %3411
      %3413 = vadd.xlane.f32.xlu0 %v3374
      %v3414 = vpop.xlane.xlu0 %3413
      %3415 = vadd.xlane.f32.xlu0 %v3375
      %v3416 = vpop.xlane.xlu0 %3415
      %3417 = vadd.xlane.f32.xlu0 %v3376
      %v3418 = vpop.xlane.xlu0 %3417
      %3419 = vadd.xlane.f32.xlu0 %v3377
      %v3420 = vpop.xlane.xlu0 %3419
      %3421 = vadd.xlane.f32.xlu0 %v3378
      %v3422 = vpop.xlane.xlu0 %3421
      %3423 = vadd.xlane.f32.xlu0 %v3379
      %v3424 = vpop.xlane.xlu0 %3423
      %3425 = vadd.xlane.f32.xlu0 %v3380
      %v3426 = vpop.xlane.xlu0 %3425
      %3427 = vadd.xlane.f32.xlu0 %v3381
      %v3428 = vpop.xlane.xlu0 %3427
      %3429 = vadd.xlane.f32.xlu0 %v3382
      %v3430 = vpop.xlane.xlu0 %3429
      %3431 = vadd.xlane.f32.xlu0 %v3383
      %v3432 = vpop.xlane.xlu0 %3431
      %3433 = vadd.xlane.f32.xlu0 %v3384
      %v3434 = vpop.xlane.xlu0 %3433
      %3435 = vadd.xlane.f32.xlu0 %v3385
      %v3436 = vpop.xlane.xlu0 %3435
      %3437 = vadd.xlane.f32.xlu0 %v3386
      %v3438 = vpop.xlane.xlu0 %3437
      %3439 = vadd.xlane.f32.xlu0 %v3387
      %v3440 = vpop.xlane.xlu0 %3439
      %3441 = vadd.xlane.f32.xlu0 %v3388
      %v3442 = vpop.xlane.xlu0 %3441
      %3443 = vadd.xlane.f32.xlu0 %v3389
      %v3444 = vpop.xlane.xlu0 %3443
      %3445 = vadd.xlane.f32.xlu0 %v3390
      %v3446 = vpop.xlane.xlu0 %3445
      %3447 = vadd.xlane.f32.xlu0 %v3391
      %v3448 = vpop.xlane.xlu0 %3447
      %3449 = vadd.xlane.f32.xlu0 %v3392
      %v3450 = vpop.xlane.xlu0 %3449
      %3451 = vadd.xlane.f32.xlu0 %v3393
      %v3452 = vpop.xlane.xlu0 %3451
      %3453 = vadd.xlane.f32.xlu0 %v3394
      %v3454 = vpop.xlane.xlu0 %3453
      %3455 = vadd.xlane.f32.xlu0 %v3395
      %v3456 = vpop.xlane.xlu0 %3455
      %3457 = vadd.xlane.f32.xlu0 %v3396
      %v3458 = vpop.xlane.xlu0 %3457
      %3459 = vadd.xlane.f32.xlu0 %v3397
      %v3460 = vpop.xlane.xlu0 %3459
      %3461 = vadd.xlane.f32.xlu0 %v3398
      %v3462 = vpop.xlane.xlu0 %3461
      %v3463 = vmul.f32 %v3400, %v548
      %v3464 = vmul.f32 %v3402, %v548
      %v3465 = vmul.f32 %v3404, %v548
      %v3466 = vmul.f32 %v3406, %v548
      %v3467 = vmul.f32 %v3408, %v548
      %v3468 = vmul.f32 %v3410, %v548
      %v3469 = vmul.f32 %v3412, %v548
      %v3470 = vmul.f32 %v3414, %v548
      %v3471 = vmul.f32 %v3416, %v548
      %v3472 = vmul.f32 %v3418, %v548
      %v3473 = vmul.f32 %v3420, %v548
      %v3474 = vmul.f32 %v3422, %v548
      %v3475 = vmul.f32 %v3424, %v548
      %v3476 = vmul.f32 %v3426, %v548
      %v3477 = vmul.f32 %v3428, %v548
      %v3478 = vmul.f32 %v3430, %v548
      %v3479 = vmul.f32 %v3432, %v548
      %v3480 = vmul.f32 %v3434, %v548
      %v3481 = vmul.f32 %v3436, %v548
      %v3482 = vmul.f32 %v3438, %v548
      %v3483 = vmul.f32 %v3440, %v548
      %v3484 = vmul.f32 %v3442, %v548
      %v3485 = vmul.f32 %v3444, %v548
      %v3486 = vmul.f32 %v3446, %v548
      %v3487 = vmul.f32 %v3448, %v548
      %v3488 = vmul.f32 %v3450, %v548
      %v3489 = vmul.f32 %v3452, %v548
      %v3490 = vmul.f32 %v3454, %v548
      %v3491 = vmul.f32 %v3456, %v548
      %v3492 = vmul.f32 %v3458, %v548
      %v3493 = vmul.f32 %v3460, %v548
      %v3494 = vmul.f32 %v3462, %v548
      %v3495 = vadd.f32 %v3463, 1e-06
      %v3496 = vadd.f32 %v3464, 1e-06
      %v3497 = vadd.f32 %v3465, 1e-06
      %v3498 = vadd.f32 %v3466, 1e-06
      %v3499 = vadd.f32 %v3467, 1e-06
      %v3500 = vadd.f32 %v3468, 1e-06
      %v3501 = vadd.f32 %v3469, 1e-06
      %v3502 = vadd.f32 %v3470, 1e-06
      %v3503 = vadd.f32 %v3471, 1e-06
      %v3504 = vadd.f32 %v3472, 1e-06
      %v3505 = vadd.f32 %v3473, 1e-06
      %v3506 = vadd.f32 %v3474, 1e-06
      %v3507 = vadd.f32 %v3475, 1e-06
      %v3508 = vadd.f32 %v3476, 1e-06
      %v3509 = vadd.f32 %v3477, 1e-06
      %v3510 = vadd.f32 %v3478, 1e-06
      %v3511 = vadd.f32 %v3479, 1e-06
      %v3512 = vadd.f32 %v3480, 1e-06
      %v3513 = vadd.f32 %v3481, 1e-06
      %v3514 = vadd.f32 %v3482, 1e-06
      %v3515 = vadd.f32 %v3483, 1e-06
      %v3516 = vadd.f32 %v3484, 1e-06
      %v3517 = vadd.f32 %v3485, 1e-06
      %v3518 = vadd.f32 %v3486, 1e-06
      %v3519 = vadd.f32 %v3487, 1e-06
      %v3520 = vadd.f32 %v3488, 1e-06
      %v3521 = vadd.f32 %v3489, 1e-06
      %v3522 = vadd.f32 %v3490, 1e-06
      %v3523 = vadd.f32 %v3491, 1e-06
      %v3524 = vadd.f32 %v3492, 1e-06
      %v3525 = vadd.f32 %v3493, 1e-06
      %v3526 = vadd.f32 %v3494, 1e-06
      %v3527 = vrsqrt.pop %v3495
      %v3528 = vrsqrt.pop %v3496
      %v3529 = vrsqrt.pop %v3497
      %v3530 = vrsqrt.pop %v3498
      %v3531 = vrsqrt.pop %v3499
      %v3532 = vrsqrt.pop %v3500
      %v3533 = vrsqrt.pop %v3501
      %v3534 = vrsqrt.pop %v3502
      %v3535 = vrsqrt.pop %v3503
      %v3536 = vrsqrt.pop %v3504
      %v3537 = vrsqrt.pop %v3505
      %v3538 = vrsqrt.pop %v3506
      %v3539 = vrsqrt.pop %v3507
      %v3540 = vrsqrt.pop %v3508
      %v3541 = vrsqrt.pop %v3509
      %v3542 = vrsqrt.pop %v3510
      %v3543 = vrsqrt.pop %v3511
      %v3544 = vrsqrt.pop %v3512
      %v3545 = vrsqrt.pop %v3513
      %v3546 = vrsqrt.pop %v3514
      %v3547 = vrsqrt.pop %v3515
      %v3548 = vrsqrt.pop %v3516
      %v3549 = vrsqrt.pop %v3517
      %v3550 = vrsqrt.pop %v3518
      %v3551 = vrsqrt.pop %v3519
      %v3552 = vrsqrt.pop %v3520
      %v3553 = vrsqrt.pop %v3521
      %v3554 = vrsqrt.pop %v3522
      %v3555 = vrsqrt.pop %v3523
      %v3556 = vrsqrt.pop %v3524
      %v3557 = vrsqrt.pop %v3525
      %v3558 = vrsqrt.pop %v3526
      %v3559 = vmul.f32 %v3335, %v3527
      %v3560 = vmul.f32 %v3336, %v3528
      %v3561 = vmul.f32 %v3337, %v3529
      %v3562 = vmul.f32 %v3338, %v3530
      %v3563 = vmul.f32 %v3339, %v3531
      %v3564 = vmul.f32 %v3340, %v3532
      %v3565 = vmul.f32 %v3341, %v3533
      %v3566 = vmul.f32 %v3342, %v3534
      %v3567 = vmul.f32 %v3343, %v3535
      %v3568 = vmul.f32 %v3344, %v3536
      %v3569 = vmul.f32 %v3345, %v3537
      %v3570 = vmul.f32 %v3346, %v3538
      %v3571 = vmul.f32 %v3347, %v3539
      %v3572 = vmul.f32 %v3348, %v3540
      %v3573 = vmul.f32 %v3349, %v3541
      %v3574 = vmul.f32 %v3350, %v3542
      %v3575 = vmul.f32 %v3351, %v3543
      %v3576 = vmul.f32 %v3352, %v3544
      %v3577 = vmul.f32 %v3353, %v3545
      %v3578 = vmul.f32 %v3354, %v3546
      %v3579 = vmul.f32 %v3355, %v3547
      %v3580 = vmul.f32 %v3356, %v3548
      %v3581 = vmul.f32 %v3357, %v3549
      %v3582 = vmul.f32 %v3358, %v3550
      %v3583 = vmul.f32 %v3359, %v3551
      %v3584 = vmul.f32 %v3360, %v3552
      %v3585 = vmul.f32 %v3361, %v3553
      %v3586 = vmul.f32 %v3362, %v3554
      %v3587 = vmul.f32 %v3363, %v3555
      %v3588 = vmul.f32 %v3364, %v3556
      %v3589 = vmul.f32 %v3365, %v3557
      %v3590 = vmul.f32 %v3366, %v3558
      %v3592 = vlaneseq
      %v3593 = vshrl.u32 %v3592, 7
      %v3594 = vsub.s32 0, %v3593
      %v3595 = vrot.slane %v3237, %v3594
      %v3597 = vmul.f32 %v3559, %v3595
      %v3598 = vmul.f32 %v3560, %v3595
      %v3599 = vmul.f32 %v3561, %v3595
      %v3600 = vmul.f32 %v3562, %v3595
      %v3601 = vmul.f32 %v3563, %v3595
      %v3602 = vmul.f32 %v3564, %v3595
      %v3603 = vmul.f32 %v3565, %v3595
      %v3604 = vmul.f32 %v3566, %v3595
      %v3605 = vmul.f32 %v3567, %v3595
      %v3606 = vmul.f32 %v3568, %v3595
      %v3607 = vmul.f32 %v3569, %v3595
      %v3608 = vmul.f32 %v3570, %v3595
      %v3609 = vmul.f32 %v3571, %v3595
      %v3610 = vmul.f32 %v3572, %v3595
      %v3611 = vmul.f32 %v3573, %v3595
      %v3612 = vmul.f32 %v3574, %v3595
      %v3613 = vmul.f32 %v3575, %v3595
      %v3614 = vmul.f32 %v3576, %v3595
      %v3615 = vmul.f32 %v3577, %v3595
      %v3616 = vmul.f32 %v3578, %v3595
      %v3617 = vmul.f32 %v3579, %v3595
      %v3618 = vmul.f32 %v3580, %v3595
      %v3619 = vmul.f32 %v3581, %v3595
      %v3620 = vmul.f32 %v3582, %v3595
      %v3621 = vmul.f32 %v3583, %v3595
      %v3622 = vmul.f32 %v3584, %v3595
      %v3623 = vmul.f32 %v3585, %v3595
      %v3624 = vmul.f32 %v3586, %v3595
      %v3625 = vmul.f32 %v3587, %v3595
      %v3626 = vmul.f32 %v3588, %v3595
      %v3627 = vmul.f32 %v3589, %v3595
      %v3628 = vmul.f32 %v3590, %v3595
      %v3630 = vlaneseq
      %v3631 = vshrl.u32 %v3630, 7
      %v3632 = vsub.s32 0, %v3631
      %v3633 = vrot.slane %v3238, %v3632
      %v3635 = vadd.f32 %v3597, %v3633
      %v3636 = vadd.f32 %v3598, %v3633
      %v3637 = vadd.f32 %v3599, %v3633
      %v3638 = vadd.f32 %v3600, %v3633
      %v3639 = vadd.f32 %v3601, %v3633
      %v3640 = vadd.f32 %v3602, %v3633
      %v3641 = vadd.f32 %v3603, %v3633
      %v3642 = vadd.f32 %v3604, %v3633
      %v3643 = vadd.f32 %v3605, %v3633
      %v3644 = vadd.f32 %v3606, %v3633
      %v3645 = vadd.f32 %v3607, %v3633
      %v3646 = vadd.f32 %v3608, %v3633
      %v3647 = vadd.f32 %v3609, %v3633
      %v3648 = vadd.f32 %v3610, %v3633
      %v3649 = vadd.f32 %v3611, %v3633
      %v3650 = vadd.f32 %v3612, %v3633
      %v3651 = vadd.f32 %v3613, %v3633
      %v3652 = vadd.f32 %v3614, %v3633
      %v3653 = vadd.f32 %v3615, %v3633
      %v3654 = vadd.f32 %v3616, %v3633
      %v3655 = vadd.f32 %v3617, %v3633
      %v3656 = vadd.f32 %v3618, %v3633
      %v3657 = vadd.f32 %v3619, %v3633
      %v3658 = vadd.f32 %v3620, %v3633
      %v3659 = vadd.f32 %v3621, %v3633
      %v3660 = vadd.f32 %v3622, %v3633
      %v3661 = vadd.f32 %v3623, %v3633
      %v3662 = vadd.f32 %v3624, %v3633
      %v3663 = vadd.f32 %v3625, %v3633
      %v3664 = vadd.f32 %v3626, %v3633
      %v3665 = vadd.f32 %v3627, %v3633
      %v3666 = vadd.f32 %v3628, %v3633
      %v3667 = vpack.c.bf16 %v3636, %v3635
      %v3668 = vpack.c.bf16 %v3638, %v3637
      %v3669 = vpack.c.bf16 %v3640, %v3639
      %v3670 = vpack.c.bf16 %v3642, %v3641
      %v3671 = vpack.c.bf16 %v3644, %v3643
      %v3672 = vpack.c.bf16 %v3646, %v3645
      %v3673 = vpack.c.bf16 %v3648, %v3647
      %v3674 = vpack.c.bf16 %v3650, %v3649
      %v3675 = vpack.c.bf16 %v3652, %v3651
      %v3676 = vpack.c.bf16 %v3654, %v3653
      %v3677 = vpack.c.bf16 %v3656, %v3655
      %v3678 = vpack.c.bf16 %v3658, %v3657
      %v3679 = vpack.c.bf16 %v3660, %v3659
      %v3680 = vpack.c.bf16 %v3662, %v3661
      %v3681 = vpack.c.bf16 %v3664, %v3663
      %v3682 = vpack.c.bf16 %v3666, %v3665
      %v3683 = vld [vmem:[%s9] sm:$0xff]
      %v3684 = vld [vmem:[%s9 + $0x8] sm:$0xff]
      %v3685 = vld [vmem:[%s9 + $0x10] sm:$0xff]
      %v3686 = vld [vmem:[%s9 + $0x18] sm:$0xff]
      %v3687 = vld [vmem:[%s9 + $0x20] sm:$0xff]
      %v3688 = vld [vmem:[%s9 + $0x28] sm:$0xff]
      %v3689 = vld [vmem:[%s9 + $0x30] sm:$0xff]
      %v3690 = vld [vmem:[%s9 + $0x38] sm:$0xff]
      %v3691 = vld [vmem:[%s9 + $0x40] sm:$0xff]
      %v3692 = vld [vmem:[%s9 + $0x48] sm:$0xff]
      %v3693 = vld [vmem:[%s9 + $0x50] sm:$0xff]
      %v3694 = vld [vmem:[%s9 + $0x58] sm:$0xff]
      %v3695 = vld [vmem:[%s9 + $0x60] sm:$0xff]
      %v3696 = vld [vmem:[%s9 + $0x68] sm:$0xff]
      %v3697 = vld [vmem:[%s9 + $0x70] sm:$0xff]
      %v3698 = vld [vmem:[%s9 + $0x78] sm:$0xff]
      %v3699 = vld [vmem:[%s9 + $0x80] sm:$0xff]
      %v3700 = vld [vmem:[%s9 + $0x88] sm:$0xff]
      %v3701 = vld [vmem:[%s9 + $0x90] sm:$0xff]
      %v3702 = vld [vmem:[%s9 + $0x98] sm:$0xff]
      %v3703 = vld [vmem:[%s9 + $0xa0] sm:$0xff]
      %v3704 = vld [vmem:[%s9 + $0xa8] sm:$0xff]
      %v3705 = vld [vmem:[%s9 + $0xb0] sm:$0xff]
      %v3706 = vld [vmem:[%s9 + $0xb8] sm:$0xff]
      %v3707 = vld [vmem:[%s9 + $0xc0] sm:$0xff]
      %v3708 = vld [vmem:[%s9 + $0xc8] sm:$0xff]
      %v3709 = vld [vmem:[%s9 + $0xd0] sm:$0xff]
      %v3710 = vld [vmem:[%s9 + $0xd8] sm:$0xff]
      %v3711 = vld [vmem:[%s9 + $0xe0] sm:$0xff]
      %v3712 = vld [vmem:[%s9 + $0xe8] sm:$0xff]
      %v3713 = vld [vmem:[%s9 + $0xf0] sm:$0xff]
      %v3714 = vld [vmem:[%s9 + $0xf8] sm:$0xff]
      %v3715 = vld [vmem:[%s10] sm:$0xf]
      %v3717 = vlaneseq
      %v3718 = vshrl.u32 %v3717, 7
      %v3719 = vsub.s32 0, %v3718
      %v3720 = vrot.slane %v3715, %v3719
      %v3721 = vlaneseq
      %v3722 = vshrl.u32 %v3721, 7
      %v3723 = vsub.s32 1, %v3722
      %v3724 = vrot.slane %v3715, %v3723
      %v3725 = vlaneseq
      %v3726 = vshrl.u32 %v3725, 7
      %v3727 = vsub.s32 2, %v3726
      %v3728 = vrot.slane %v3715, %v3727
      %v3729 = vlaneseq
      %v3730 = vshrl.u32 %v3729, 7
      %v3731 = vsub.s32 3, %v3730
      %v3732 = vrot.slane %v3715, %v3731
      %v3769 = vunpack.c.l.b16 %v3683
      %v3770 = vunpack.c.h.b16 %v3683
      %v3771 = vunpack.c.l.b16 %v3684
      %v3772 = vunpack.c.h.b16 %v3684
      %v3773 = vunpack.c.l.b16 %v3685
      %v3774 = vunpack.c.h.b16 %v3685
      %v3775 = vunpack.c.l.b16 %v3686
      %v3776 = vunpack.c.h.b16 %v3686
      %v3777 = vunpack.c.l.b16 %v3687
      %v3778 = vunpack.c.h.b16 %v3687
      %v3779 = vunpack.c.l.b16 %v3688
      %v3780 = vunpack.c.h.b16 %v3688
      %v3781 = vunpack.c.l.b16 %v3689
      %v3782 = vunpack.c.h.b16 %v3689
      %v3783 = vunpack.c.l.b16 %v3690
      %v3784 = vunpack.c.h.b16 %v3690
      %v3785 = vunpack.c.l.b16 %v3691
      %v3786 = vunpack.c.h.b16 %v3691
      %v3787 = vunpack.c.l.b16 %v3692
      %v3788 = vunpack.c.h.b16 %v3692
      %v3789 = vunpack.c.l.b16 %v3693
      %v3790 = vunpack.c.h.b16 %v3693
      %v3791 = vunpack.c.l.b16 %v3694
      %v3792 = vunpack.c.h.b16 %v3694
      %v3793 = vunpack.c.l.b16 %v3695
      %v3794 = vunpack.c.h.b16 %v3695
      %v3795 = vunpack.c.l.b16 %v3696
      %v3796 = vunpack.c.h.b16 %v3696
      %v3797 = vunpack.c.l.b16 %v3697
      %v3798 = vunpack.c.h.b16 %v3697
      %v3799 = vunpack.c.l.b16 %v3698
      %v3800 = vunpack.c.h.b16 %v3698
      %v3801 = vunpack.c.l.b16 %v3699
      %v3802 = vunpack.c.h.b16 %v3699
      %v3803 = vunpack.c.l.b16 %v3700
      %v3804 = vunpack.c.h.b16 %v3700
      %v3805 = vunpack.c.l.b16 %v3701
      %v3806 = vunpack.c.h.b16 %v3701
      %v3807 = vunpack.c.l.b16 %v3702
      %v3808 = vunpack.c.h.b16 %v3702
      %v3809 = vunpack.c.l.b16 %v3703
      %v3810 = vunpack.c.h.b16 %v3703
      %v3811 = vunpack.c.l.b16 %v3704
      %v3812 = vunpack.c.h.b16 %v3704
      %v3813 = vunpack.c.l.b16 %v3705
      %v3814 = vunpack.c.h.b16 %v3705
      %v3815 = vunpack.c.l.b16 %v3706
      %v3816 = vunpack.c.h.b16 %v3706
      %v3817 = vunpack.c.l.b16 %v3707
      %v3818 = vunpack.c.h.b16 %v3707
      %v3819 = vunpack.c.l.b16 %v3708
      %v3820 = vunpack.c.h.b16 %v3708
      %v3821 = vunpack.c.l.b16 %v3709
      %v3822 = vunpack.c.h.b16 %v3709
      %v3823 = vunpack.c.l.b16 %v3710
      %v3824 = vunpack.c.h.b16 %v3710
      %v3825 = vunpack.c.l.b16 %v3711
      %v3826 = vunpack.c.h.b16 %v3711
      %v3827 = vunpack.c.l.b16 %v3712
      %v3828 = vunpack.c.h.b16 %v3712
      %v3829 = vunpack.c.l.b16 %v3713
      %v3830 = vunpack.c.h.b16 %v3713
      %v3831 = vunpack.c.l.b16 %v3714
      %v3832 = vunpack.c.h.b16 %v3714
      %v3833 = vpack.c.b16 %v3773, %v3769
      %v3834 = vpack.c.b16 %v3774, %v3770
      %v3835 = vpack.c.b16 %v3775, %v3771
      %v3836 = vpack.c.b16 %v3776, %v3772
      %v3837 = vpack.c.b16 %v3781, %v3777
      %v3838 = vpack.c.b16 %v3782, %v3778
      %v3839 = vpack.c.b16 %v3783, %v3779
      %v3840 = vpack.c.b16 %v3784, %v3780
      %v3841 = vpack.c.b16 %v3789, %v3785
      %v3842 = vpack.c.b16 %v3790, %v3786
      %v3843 = vpack.c.b16 %v3791, %v3787
      %v3844 = vpack.c.b16 %v3792, %v3788
      %v3845 = vpack.c.b16 %v3797, %v3793
      %v3846 = vpack.c.b16 %v3798, %v3794
      %v3847 = vpack.c.b16 %v3799, %v3795
      %v3848 = vpack.c.b16 %v3800, %v3796
      %v3849 = vpack.c.b16 %v3805, %v3801
      %v3850 = vpack.c.b16 %v3806, %v3802
      %v3851 = vpack.c.b16 %v3807, %v3803
      %v3852 = vpack.c.b16 %v3808, %v3804
      %v3853 = vpack.c.b16 %v3813, %v3809
      %v3854 = vpack.c.b16 %v3814, %v3810
      %v3855 = vpack.c.b16 %v3815, %v3811
      %v3856 = vpack.c.b16 %v3816, %v3812
      %v3857 = vpack.c.b16 %v3821, %v3817
      %v3858 = vpack.c.b16 %v3822, %v3818
      %v3859 = vpack.c.b16 %v3823, %v3819
      %v3860 = vpack.c.b16 %v3824, %v3820
      %v3861 = vpack.c.b16 %v3829, %v3825
      %v3862 = vpack.c.b16 %v3830, %v3826
      %v3863 = vpack.c.b16 %v3831, %v3827
      %v3864 = vpack.c.b16 %v3832, %v3828
      %3897 = vmatprep.subr.bf16.mxu0 %v3834
      %3898 = vmatpush1.bf16.msra.mxu0 %v3833
      %3899 = vmatprep.subr.bf16.mxu0 %v3838
      %3900 = vmatpush1.bf16.msra.mxu0 %v3837
      %3901 = vmatprep.subr.bf16.mxu0 %v3842
      %3902 = vmatpush1.bf16.msra.mxu0 %v3841
      %3903 = vmatprep.subr.bf16.mxu0 %v3846
      %3904 = vmatpush1.bf16.msra.mxu0 %v3845
      %3905 = vmatprep.subr.bf16.mxu0 %v3850
      %3906 = vmatpush1.bf16.msra.mxu0 %v3849
      %3907 = vmatprep.subr.bf16.mxu0 %v3854
      %3908 = vmatpush1.bf16.msra.mxu0 %v3853
      %3909 = vmatprep.subr.bf16.mxu0 %v3858
      %3910 = vmatpush1.bf16.msra.mxu0 %v3857
      %3911 = vmatprep.subr.bf16.mxu0 %v3862
      %3912 = vmatpush1.bf16.msra.mxu0 %v3861
      %3913 = vmatprep.subr.bf16.mxu0 0
      %3914 = vmatpush1.bf16.msra.mxu0 0
      %3915 = vmatprep.subr.bf16.mxu0 0
      %3916 = vmatpush1.bf16.msra.mxu0 0
      %3917 = vmatprep.subr.bf16.mxu0 0
      %3918 = vmatpush1.bf16.msra.mxu0 0
      %3919 = vmatprep.subr.bf16.mxu0 0
      %3920 = vmatpush1.bf16.msra.mxu0 0
      %3921 = vmatprep.subr.bf16.mxu0 0
      %3922 = vmatpush1.bf16.msra.mxu0 0
      %3923 = vmatprep.subr.bf16.mxu0 0
      %3924 = vmatpush1.bf16.msra.mxu0 0
      %3925 = vmatprep.subr.bf16.mxu0 0
      %3926 = vmatpush1.bf16.msra.mxu0 0
      %3927 = vmatprep.subr.bf16.mxu0 0
      %3928 = vmatpush1.bf16.msra.mxu0 0
      %3929 = vmatprep.mubr.bf16.mxu0 0
      %3930 = vmatmul.mubr.bf16.gmra.mrb[0].mxu0 %v3667
      %v3931 = vpop.f32.mrb[0].mxu0
      %v3932 = vadd.f32 %v3720, %v3931
      %v3933 = vpop.f32.mrb[0].mxu0
      %v3934 = vadd.f32 %v3724, %v3933
      %v3935 = vpop.f32.mrb[0].mxu0
      %v3936 = vadd.f32 %v3720, %v3935
      %v3937 = vpop.f32.mrb[0].mxu0
      %v3938 = vadd.f32 %v3724, %v3937
      %3939 = vmatprep.mubr.bf16.mxu0 0
      %3940 = vmatmul.mubr.bf16.gmra.mrb[0].mxu0 %v3668
      %v3941 = vpop.f32.mrb[0].mxu0
      %v3942 = vadd.f32 %v3720, %v3941
      %v3943 = vpop.f32.mrb[0].mxu0
      %v3944 = vadd.f32 %v3724, %v3943
      %v3945 = vpop.f32.mrb[0].mxu0
      %v3946 = vadd.f32 %v3720, %v3945
      %v3947 = vpop.f32.mrb[0].mxu0
      %v3948 = vadd.f32 %v3724, %v3947
      %3949 = vmatprep.mubr.bf16.mxu0 0
      %3950 = vmatmul.mubr.bf16.gmra.mrb[0].mxu0 %v3669
      %v3951 = vpop.f32.mrb[0].mxu0
      %v3952 = vadd.f32 %v3720, %v3951
      %v3953 = vpop.f32.mrb[0].mxu0
      %v3954 = vadd.f32 %v3724, %v3953
      %v3955 = vpop.f32.mrb[0].mxu0
      %v3956 = vadd.f32 %v3720, %v3955
      %v3957 = vpop.f32.mrb[0].mxu0
      %v3958 = vadd.f32 %v3724, %v3957
      %3959 = vmatprep.mubr.bf16.mxu0 0
      %3960 = vmatmul.mubr.bf16.gmra.mrb[0].mxu0 %v3670
      %v3961 = vpop.f32.mrb[0].mxu0
      %v3962 = vadd.f32 %v3720, %v3961
      %v3963 = vpop.f32.mrb[0].mxu0
      %v3964 = vadd.f32 %v3724, %v3963
      %v3965 = vpop.f32.mrb[0].mxu0
      %v3966 = vadd.f32 %v3720, %v3965
      %v3967 = vpop.f32.mrb[0].mxu0
      %v3968 = vadd.f32 %v3724, %v3967
      %3969 = vmatprep.mubr.bf16.mxu0 0
      %3970 = vmatmul.mubr.bf16.gmra.mrb[0].mxu0 %v3671
      %v3971 = vpop.f32.mrb[0].mxu0
      %v3972 = vadd.f32 %v3720, %v3971
      %v3973 = vpop.f32.mrb[0].mxu0
      %v3974 = vadd.f32 %v3724, %v3973
      %v3975 = vpop.f32.mrb[0].mxu0
      %v3976 = vadd.f32 %v3720, %v3975
      %v3977 = vpop.f32.mrb[0].mxu0
      %v3978 = vadd.f32 %v3724, %v3977
      %3979 = vmatprep.mubr.bf16.mxu0 0
      %3980 = vmatmul.mubr.bf16.gmra.mrb[0].mxu0 %v3672
      %v3981 = vpop.f32.mrb[0].mxu0
      %v3982 = vadd.f32 %v3720, %v3981
      %v3983 = vpop.f32.mrb[0].mxu0
      %v3984 = vadd.f32 %v3724, %v3983
      %v3985 = vpop.f32.mrb[0].mxu0
      %v3986 = vadd.f32 %v3720, %v3985
      %v3987 = vpop.f32.mrb[0].mxu0
      %v3988 = vadd.f32 %v3724, %v3987
      %3989 = vmatprep.mubr.bf16.mxu0 0
      %3990 = vmatmul.mubr.bf16.gmra.mrb[0].mxu0 %v3673
      %v3991 = vpop.f32.mrb[0].mxu0
      %v3992 = vadd.f32 %v3720, %v3991
      %v3993 = vpop.f32.mrb[0].mxu0
      %v3994 = vadd.f32 %v3724, %v3993
      %v3995 = vpop.f32.mrb[0].mxu0
      %v3996 = vadd.f32 %v3720, %v3995
      %v3997 = vpop.f32.mrb[0].mxu0
      %v3998 = vadd.f32 %v3724, %v3997
      %3999 = vmatprep.mubr.bf16.mxu0 0
      %4000 = vmatmul.mubr.bf16.gmra.mrb[0].mxu0 %v3674
      %v4001 = vpop.f32.mrb[0].mxu0
      %v4002 = vadd.f32 %v3720, %v4001
      %v4003 = vpop.f32.mrb[0].mxu0
      %v4004 = vadd.f32 %v3724, %v4003
      %v4005 = vpop.f32.mrb[0].mxu0
      %v4006 = vadd.f32 %v3720, %v4005
      %v4007 = vpop.f32.mrb[0].mxu0
      %v4008 = vadd.f32 %v3724, %v4007
      %4009 = vmatprep.mubr.bf16.mxu0 0
      %4010 = vmatmul.mubr.bf16.gmra.mrb[0].mxu0 %v3675
      %v4011 = vpop.f32.mrb[0].mxu0
      %v4012 = vadd.f32 %v3720, %v4011
      %v4013 = vpop.f32.mrb[0].mxu0
      %v4014 = vadd.f32 %v3724, %v4013
      %v4015 = vpop.f32.mrb[0].mxu0
      %v4016 = vadd.f32 %v3720, %v4015
      %v4017 = vpop.f32.mrb[0].mxu0
      %v4018 = vadd.f32 %v3724, %v4017
      %4019 = vmatprep.mubr.bf16.mxu0 0
      %4020 = vmatmul.mubr.bf16.gmra.mrb[0].mxu0 %v3676
      %v4021 = vpop.f32.mrb[0].mxu0
      %v4022 = vadd.f32 %v3720, %v4021
      %v4023 = vpop.f32.mrb[0].mxu0
      %v4024 = vadd.f32 %v3724, %v4023
      %v4025 = vpop.f32.mrb[0].mxu0
      %v4026 = vadd.f32 %v3720, %v4025
      %v4027 = vpop.f32.mrb[0].mxu0
      %v4028 = vadd.f32 %v3724, %v4027
      %4029 = vmatprep.mubr.bf16.mxu0 0
      %4030 = vmatmul.mubr.bf16.gmra.mrb[0].mxu0 %v3677
      %v4031 = vpop.f32.mrb[0].mxu0
      %v4032 = vadd.f32 %v3720, %v4031
      %v4033 = vpop.f32.mrb[0].mxu0
      %v4034 = vadd.f32 %v3724, %v4033
      %v4035 = vpop.f32.mrb[0].mxu0
      %v4036 = vadd.f32 %v3720, %v4035
      %v4037 = vpop.f32.mrb[0].mxu0
      %v4038 = vadd.f32 %v3724, %v4037
      %4039 = vmatprep.mubr.bf16.mxu0 0
      %4040 = vmatmul.mubr.bf16.gmra.mrb[0].mxu0 %v3678
      %v4041 = vpop.f32.mrb[0].mxu0
      %v4042 = vadd.f32 %v3720, %v4041
      %v4043 = vpop.f32.mrb[0].mxu0
      %v4044 = vadd.f32 %v3724, %v4043
      %v4045 = vpop.f32.mrb[0].mxu0
      %v4046 = vadd.f32 %v3720, %v4045
      %v4047 = vpop.f32.mrb[0].mxu0
      %v4048 = vadd.f32 %v3724, %v4047
      %4049 = vmatprep.mubr.bf16.mxu0 0
      %4050 = vmatmul.mubr.bf16.gmra.mrb[0].mxu0 %v3679
      %v4051 = vpop.f32.mrb[0].mxu0
      %v4052 = vadd.f32 %v3720, %v4051
      %v4053 = vpop.f32.mrb[0].mxu0
      %v4054 = vadd.f32 %v3724, %v4053
      %v4055 = vpop.f32.mrb[0].mxu0
      %v4056 = vadd.f32 %v3720, %v4055
      %v4057 = vpop.f32.mrb[0].mxu0
      %v4058 = vadd.f32 %v3724, %v4057
      %4059 = vmatprep.mubr.bf16.mxu0 0
      %4060 = vmatmul.mubr.bf16.gmra.mrb[0].mxu0 %v3680
      %v4061 = vpop.f32.mrb[0].mxu0
      %v4062 = vadd.f32 %v3720, %v4061
      %v4063 = vpop.f32.mrb[0].mxu0
      %v4064 = vadd.f32 %v3724, %v4063
      %v4065 = vpop.f32.mrb[0].mxu0
      %v4066 = vadd.f32 %v3720, %v4065
      %v4067 = vpop.f32.mrb[0].mxu0
      %v4068 = vadd.f32 %v3724, %v4067
      %4069 = vmatprep.mubr.bf16.mxu0 0
      %4070 = vmatmul.mubr.bf16.gmra.mrb[0].mxu0 %v3681
      %v4071 = vpop.f32.mrb[0].mxu0
      %v4072 = vadd.f32 %v3720, %v4071
      %v4073 = vpop.f32.mrb[0].mxu0
      %v4074 = vadd.f32 %v3724, %v4073
      %v4075 = vpop.f32.mrb[0].mxu0
      %v4076 = vadd.f32 %v3720, %v4075
      %v4077 = vpop.f32.mrb[0].mxu0
      %v4078 = vadd.f32 %v3724, %v4077
      %4079 = vmatprep.mubr.bf16.mxu0 0
      %4080 = vmatmul.mubr.bf16.gmra.mrb[0].mxu0 %v3682
      %v4081 = vpop.f32.mrb[0].mxu0
      %v4082 = vadd.f32 %v3720, %v4081
      %v4083 = vpop.f32.mrb[0].mxu0
      %v4084 = vadd.f32 %v3724, %v4083
      %v4085 = vpop.f32.mrb[0].mxu0
      %v4086 = vadd.f32 %v3720, %v4085
      %v4087 = vpop.f32.mrb[0].mxu0
      %v4088 = vadd.f32 %v3724, %v4087
      %4089 = vdwg.mxu0
      %4090 = vmatprep.subr.bf16.mxu0 %v3836
      %4091 = vmatpush1.bf16.msra.mxu0 %v3835
      %4092 = vmatprep.subr.bf16.mxu0 %v3840
      %4093 = vmatpush1.bf16.msra.mxu0 %v3839
      %4094 = vmatprep.subr.bf16.mxu0 %v3844
      %4095 = vmatpush1.bf16.msra.mxu0 %v3843
      %4096 = vmatprep.subr.bf16.mxu0 %v3848
      %4097 = vmatpush1.bf16.msra.mxu0 %v3847
      %4098 = vmatprep.subr.bf16.mxu0 %v3852
      %4099 = vmatpush1.bf16.msra.mxu0 %v3851
      %4100 = vmatprep.subr.bf16.mxu0 %v3856
      %4101 = vmatpush1.bf16.msra.mxu0 %v3855
      %4102 = vmatprep.subr.bf16.mxu0 %v3860
      %4103 = vmatpush1.bf16.msra.mxu0 %v3859
      %4104 = vmatprep.subr.bf16.mxu0 %v3864
      %4105 = vmatpush1.bf16.msra.mxu0 %v3863
      %4106 = vmatprep.subr.bf16.mxu0 0
      %4107 = vmatpush1.bf16.msra.mxu0 0
      %4108 = vmatprep.subr.bf16.mxu0 0
      %4109 = vmatpush1.bf16.msra.mxu0 0
      %4110 = vmatprep.subr.bf16.mxu0 0
      %4111 = vmatpush1.bf16.msra.mxu0 0
      %4112 = vmatprep.subr.bf16.mxu0 0
      %4113 = vmatpush1.bf16.msra.mxu0 0
      %4114 = vmatprep.subr.bf16.mxu0 0
      %4115 = vmatpush1.bf16.msra.mxu0 0
      %4116 = vmatprep.subr.bf16.mxu0 0
      %4117 = vmatpush1.bf16.msra.mxu0 0
      %4118 = vmatprep.subr.bf16.mxu0 0
      %4119 = vmatpush1.bf16.msra.mxu0 0
      %4120 = vmatprep.subr.bf16.mxu0 0
      %4121 = vmatpush1.bf16.msra.mxu0 0
      %4122 = vmatprep.mubr.bf16.mxu0 0
      %4123 = vmatmul.mubr.bf16.gmra.mrb[0].mxu0 %v3667
      %v4124 = vpop.f32.mrb[0].mxu0
      %v4125 = vadd.f32 %v3728, %v4124
      %v4126 = vpop.f32.mrb[0].mxu0
      %v4127 = vadd.f32 %v3732, %v4126
      %v4128 = vpop.f32.mrb[0].mxu0
      %v4129 = vadd.f32 %v3728, %v4128
      %v4130 = vpop.f32.mrb[0].mxu0
      %v4131 = vadd.f32 %v3732, %v4130
      %4132 = vmatprep.mubr.bf16.mxu0 0
      %4133 = vmatmul.mubr.bf16.gmra.mrb[0].mxu0 %v3668
      %v4134 = vpop.f32.mrb[0].mxu0
      %v4135 = vadd.f32 %v3728, %v4134
      %v4136 = vpop.f32.mrb[0].mxu0
      %v4137 = vadd.f32 %v3732, %v4136
      %v4138 = vpop.f32.mrb[0].mxu0
      %v4139 = vadd.f32 %v3728, %v4138
      %v4140 = vpop.f32.mrb[0].mxu0
      %v4141 = vadd.f32 %v3732, %v4140
      %4142 = vmatprep.mubr.bf16.mxu0 0
      %4143 = vmatmul.mubr.bf16.gmra.mrb[0].mxu0 %v3669
      %v4144 = vpop.f32.mrb[0].mxu0
      %v4145 = vadd.f32 %v3728, %v4144
      %v4146 = vpop.f32.mrb[0].mxu0
      %v4147 = vadd.f32 %v3732, %v4146
      %v4148 = vpop.f32.mrb[0].mxu0
      %v4149 = vadd.f32 %v3728, %v4148
      %v4150 = vpop.f32.mrb[0].mxu0
      %v4151 = vadd.f32 %v3732, %v4150
      %4152 = vmatprep.mubr.bf16.mxu0 0
      %4153 = vmatmul.mubr.bf16.gmra.mrb[0].mxu0 %v3670
      %v4154 = vpop.f32.mrb[0].mxu0
      %v4155 = vadd.f32 %v3728, %v4154
      %v4156 = vpop.f32.mrb[0].mxu0
      %v4157 = vadd.f32 %v3732, %v4156
      %v4158 = vpop.f32.mrb[0].mxu0
      %v4159 = vadd.f32 %v3728, %v4158
      %v4160 = vpop.f32.mrb[0].mxu0
      %v4161 = vadd.f32 %v3732, %v4160
      %4162 = vmatprep.mubr.bf16.mxu0 0
      %4163 = vmatmul.mubr.bf16.gmra.mrb[0].mxu0 %v3671
      %v4164 = vpop.f32.mrb[0].mxu0
      %v4165 = vadd.f32 %v3728, %v4164
      %v4166 = vpop.f32.mrb[0].mxu0
      %v4167 = vadd.f32 %v3732, %v4166
      %v4168 = vpop.f32.mrb[0].mxu0
      %v4169 = vadd.f32 %v3728, %v4168
      %v4170 = vpop.f32.mrb[0].mxu0
      %v4171 = vadd.f32 %v3732, %v4170
      %4172 = vmatprep.mubr.bf16.mxu0 0
      %4173 = vmatmul.mubr.bf16.gmra.mrb[0].mxu0 %v3672
      %v4174 = vpop.f32.mrb[0].mxu0
      %v4175 = vadd.f32 %v3728, %v4174
      %v4176 = vpop.f32.mrb[0].mxu0
      %v4177 = vadd.f32 %v3732, %v4176
      %v4178 = vpop.f32.mrb[0].mxu0
      %v4179 = vadd.f32 %v3728, %v4178
      %v4180 = vpop.f32.mrb[0].mxu0
      %v4181 = vadd.f32 %v3732, %v4180
      %4182 = vmatprep.mubr.bf16.mxu0 0
      %4183 = vmatmul.mubr.bf16.gmra.mrb[0].mxu0 %v3673
      %v4184 = vpop.f32.mrb[0].mxu0
      %v4185 = vadd.f32 %v3728, %v4184
      %v4186 = vpop.f32.mrb[0].mxu0
      %v4187 = vadd.f32 %v3732, %v4186
      %v4188 = vpop.f32.mrb[0].mxu0
      %v4189 = vadd.f32 %v3728, %v4188
      %v4190 = vpop.f32.mrb[0].mxu0
      %v4191 = vadd.f32 %v3732, %v4190
      %4192 = vmatprep.mubr.bf16.mxu0 0
      %4193 = vmatmul.mubr.bf16.gmra.mrb[0].mxu0 %v3674
      %v4194 = vpop.f32.mrb[0].mxu0
      %v4195 = vadd.f32 %v3728, %v4194
      %v4196 = vpop.f32.mrb[0].mxu0
      %v4197 = vadd.f32 %v3732, %v4196
      %v4198 = vpop.f32.mrb[0].mxu0
      %v4199 = vadd.f32 %v3728, %v4198
      %v4200 = vpop.f32.mrb[0].mxu0
      %v4201 = vadd.f32 %v3732, %v4200
      %4202 = vmatprep.mubr.bf16.mxu0 0
      %4203 = vmatmul.mubr.bf16.gmra.mrb[0].mxu0 %v3675
      %v4204 = vpop.f32.mrb[0].mxu0
      %v4205 = vadd.f32 %v3728, %v4204
      %v4206 = vpop.f32.mrb[0].mxu0
      %v4207 = vadd.f32 %v3732, %v4206
      %v4208 = vpop.f32.mrb[0].mxu0
      %v4209 = vadd.f32 %v3728, %v4208
      %v4210 = vpop.f32.mrb[0].mxu0
      %v4211 = vadd.f32 %v3732, %v4210
      %4212 = vmatprep.mubr.bf16.mxu0 0
      %4213 = vmatmul.mubr.bf16.gmra.mrb[0].mxu0 %v3676
      %v4214 = vpop.f32.mrb[0].mxu0
      %v4215 = vadd.f32 %v3728, %v4214
      %v4216 = vpop.f32.mrb[0].mxu0
      %v4217 = vadd.f32 %v3732, %v4216
      %v4218 = vpop.f32.mrb[0].mxu0
      %v4219 = vadd.f32 %v3728, %v4218
      %v4220 = vpop.f32.mrb[0].mxu0
      %v4221 = vadd.f32 %v3732, %v4220
      %4222 = vmatprep.mubr.bf16.mxu0 0
      %4223 = vmatmul.mubr.bf16.gmra.mrb[0].mxu0 %v3677
      %v4224 = vpop.f32.mrb[0].mxu0
      %v4225 = vadd.f32 %v3728, %v4224
      %v4226 = vpop.f32.mrb[0].mxu0
      %v4227 = vadd.f32 %v3732, %v4226
      %v4228 = vpop.f32.mrb[0].mxu0
      %v4229 = vadd.f32 %v3728, %v4228
      %v4230 = vpop.f32.mrb[0].mxu0
      %v4231 = vadd.f32 %v3732, %v4230
      %4232 = vmatprep.mubr.bf16.mxu0 0
      %4233 = vmatmul.mubr.bf16.gmra.mrb[0].mxu0 %v3678
      %v4234 = vpop.f32.mrb[0].mxu0
      %v4235 = vadd.f32 %v3728, %v4234
      %v4236 = vpop.f32.mrb[0].mxu0
      %v4237 = vadd.f32 %v3732, %v4236
      %v4238 = vpop.f32.mrb[0].mxu0
      %v4239 = vadd.f32 %v3728, %v4238
      %v4240 = vpop.f32.mrb[0].mxu0
      %v4241 = vadd.f32 %v3732, %v4240
      %4242 = vmatprep.mubr.bf16.mxu0 0
      %4243 = vmatmul.mubr.bf16.gmra.mrb[0].mxu0 %v3679
      %v4244 = vpop.f32.mrb[0].mxu0
      %v4245 = vadd.f32 %v3728, %v4244
      %v4246 = vpop.f32.mrb[0].mxu0
      %v4247 = vadd.f32 %v3732, %v4246
      %v4248 = vpop.f32.mrb[0].mxu0
      %v4249 = vadd.f32 %v3728, %v4248
      %v4250 = vpop.f32.mrb[0].mxu0
      %v4251 = vadd.f32 %v3732, %v4250
      %4252 = vmatprep.mubr.bf16.mxu0 0
      %4253 = vmatmul.mubr.bf16.gmra.mrb[0].mxu0 %v3680
      %v4254 = vpop.f32.mrb[0].mxu0
      %v4255 = vadd.f32 %v3728, %v4254
      %v4256 = vpop.f32.mrb[0].mxu0
      %v4257 = vadd.f32 %v3732, %v4256
      %v4258 = vpop.f32.mrb[0].mxu0
      %v4259 = vadd.f32 %v3728, %v4258
      %v4260 = vpop.f32.mrb[0].mxu0
      %v4261 = vadd.f32 %v3732, %v4260
      %4262 = vmatprep.mubr.bf16.mxu0 0
      %4263 = vmatmul.mubr.bf16.gmra.mrb[0].mxu0 %v3681
      %v4264 = vpop.f32.mrb[0].mxu0
      %v4265 = vadd.f32 %v3728, %v4264
      %v4266 = vpop.f32.mrb[0].mxu0
      %v4267 = vadd.f32 %v3732, %v4266
      %v4268 = vpop.f32.mrb[0].mxu0
      %v4269 = vadd.f32 %v3728, %v4268
      %v4270 = vpop.f32.mrb[0].mxu0
      %v4271 = vadd.f32 %v3732, %v4270
      %4272 = vmatprep.mubr.bf16.mxu0 0
      %4273 = vmatmul.mubr.bf16.gmra.mrb[0].mxu0 %v3682
      %v4274 = vpop.f32.mrb[0].mxu0
      %v4275 = vadd.f32 %v3728, %v4274
      %v4276 = vpop.f32.mrb[0].mxu0
      %v4277 = vadd.f32 %v3732, %v4276
      %v4278 = vpop.f32.mrb[0].mxu0
      %v4279 = vadd.f32 %v3728, %v4278
      %v4280 = vpop.f32.mrb[0].mxu0
      %v4281 = vadd.f32 %v3732, %v4280
      %4282 = vdwg.mxu0
      %v4283 = vmul.f32 %v3932, 0.5
      %v4284 = vmul.f32 %v3934, 0.5
      %v4285 = vmul.f32 %v4125, 0.5
      %v4286 = vmul.f32 %v4127, 0.5
      %v4287 = vmul.f32 %v3936, 0.5
      %v4288 = vmul.f32 %v3938, 0.5
      %v4289 = vmul.f32 %v4129, 0.5
      %v4290 = vmul.f32 %v4131, 0.5
      %v4291 = vmul.f32 %v3942, 0.5
      %v4292 = vmul.f32 %v3944, 0.5
      %v4293 = vmul.f32 %v4135, 0.5
      %v4294 = vmul.f32 %v4137, 0.5
      %v4295 = vmul.f32 %v3946, 0.5
      %v4296 = vmul.f32 %v3948, 0.5
      %v4297 = vmul.f32 %v4139, 0.5
      %v4298 = vmul.f32 %v4141, 0.5
      %v4299 = vmul.f32 %v3952, 0.5
      %v4300 = vmul.f32 %v3954, 0.5
      %v4301 = vmul.f32 %v4145, 0.5
      %v4302 = vmul.f32 %v4147, 0.5
      %v4303 = vmul.f32 %v3956, 0.5
      %v4304 = vmul.f32 %v3958, 0.5
      %v4305 = vmul.f32 %v4149, 0.5
      %v4306 = vmul.f32 %v4151, 0.5
      %v4307 = vmul.f32 %v3962, 0.5
      %v4308 = vmul.f32 %v3964, 0.5
      %v4309 = vmul.f32 %v4155, 0.5
      %v4310 = vmul.f32 %v4157, 0.5
      %v4311 = vmul.f32 %v3966, 0.5
      %v4312 = vmul.f32 %v3968, 0.5
      %v4313 = vmul.f32 %v4159, 0.5
      %v4314 = vmul.f32 %v4161, 0.5
      %v4315 = vmul.f32 %v3972, 0.5
      %v4316 = vmul.f32 %v3974, 0.5
      %v4317 = vmul.f32 %v4165, 0.5
      %v4318 = vmul.f32 %v4167, 0.5
      %v4319 = vmul.f32 %v3976, 0.5
      %v4320 = vmul.f32 %v3978, 0.5
      %v4321 = vmul.f32 %v4169, 0.5
      %v4322 = vmul.f32 %v4171, 0.5
      %v4323 = vmul.f32 %v3982, 0.5
      %v4324 = vmul.f32 %v3984, 0.5
      %v4325 = vmul.f32 %v4175, 0.5
      %v4326 = vmul.f32 %v4177, 0.5
      %v4327 = vmul.f32 %v3986, 0.5
      %v4328 = vmul.f32 %v3988, 0.5
      %v4329 = vmul.f32 %v4179, 0.5
      %v4330 = vmul.f32 %v4181, 0.5
      %v4331 = vmul.f32 %v3992, 0.5
      %v4332 = vmul.f32 %v3994, 0.5
      %v4333 = vmul.f32 %v4185, 0.5
      %v4334 = vmul.f32 %v4187, 0.5
      %v4335 = vmul.f32 %v3996, 0.5
      %v4336 = vmul.f32 %v3998, 0.5
      %v4337 = vmul.f32 %v4189, 0.5
      %v4338 = vmul.f32 %v4191, 0.5
      %v4339 = vmul.f32 %v4002, 0.5
      %v4340 = vmul.f32 %v4004, 0.5
      %v4341 = vmul.f32 %v4195, 0.5
      %v4342 = vmul.f32 %v4197, 0.5
      %v4343 = vmul.f32 %v4006, 0.5
      %v4344 = vmul.f32 %v4008, 0.5
      %v4345 = vmul.f32 %v4199, 0.5
      %v4346 = vmul.f32 %v4201, 0.5
      %v4347 = vmul.f32 %v4012, 0.5
      %v4348 = vmul.f32 %v4014, 0.5
      %v4349 = vmul.f32 %v4205, 0.5
      %v4350 = vmul.f32 %v4207, 0.5
      %v4351 = vmul.f32 %v4016, 0.5
      %v4352 = vmul.f32 %v4018, 0.5
      %v4353 = vmul.f32 %v4209, 0.5
      %v4354 = vmul.f32 %v4211, 0.5
      %v4355 = vmul.f32 %v4022, 0.5
      %v4356 = vmul.f32 %v4024, 0.5
      %v4357 = vmul.f32 %v4215, 0.5
      %v4358 = vmul.f32 %v4217, 0.5
      %v4359 = vmul.f32 %v4026, 0.5
      %v4360 = vmul.f32 %v4028, 0.5
      %v4361 = vmul.f32 %v4219, 0.5
      %v4362 = vmul.f32 %v4221, 0.5
      %v4363 = vmul.f32 %v4032, 0.5
      %v4364 = vmul.f32 %v4034, 0.5
      %v4365 = vmul.f32 %v4225, 0.5
      %v4366 = vmul.f32 %v4227, 0.5
      %v4367 = vmul.f32 %v4036, 0.5
      %v4368 = vmul.f32 %v4038, 0.5
      %v4369 = vmul.f32 %v4229, 0.5
      %v4370 = vmul.f32 %v4231, 0.5
      %v4371 = vmul.f32 %v4042, 0.5
      %v4372 = vmul.f32 %v4044, 0.5
      %v4373 = vmul.f32 %v4235, 0.5
      %v4374 = vmul.f32 %v4237, 0.5
      %v4375 = vmul.f32 %v4046, 0.5
      %v4376 = vmul.f32 %v4048, 0.5
      %v4377 = vmul.f32 %v4239, 0.5
      %v4378 = vmul.f32 %v4241, 0.5
      %v4379 = vmul.f32 %v4052, 0.5
      %v4380 = vmul.f32 %v4054, 0.5
      %v4381 = vmul.f32 %v4245, 0.5
      %v4382 = vmul.f32 %v4247, 0.5
      %v4383 = vmul.f32 %v4056, 0.5
      %v4384 = vmul.f32 %v4058, 0.5
      %v4385 = vmul.f32 %v4249, 0.5
      %v4386 = vmul.f32 %v4251, 0.5
      %v4387 = vmul.f32 %v4062, 0.5
      %v4388 = vmul.f32 %v4064, 0.5
      %v4389 = vmul.f32 %v4255, 0.5
      %v4390 = vmul.f32 %v4257, 0.5
      %v4391 = vmul.f32 %v4066, 0.5
      %v4392 = vmul.f32 %v4068, 0.5
      %v4393 = vmul.f32 %v4259, 0.5
      %v4394 = vmul.f32 %v4261, 0.5
      %v4395 = vmul.f32 %v4072, 0.5
      %v4396 = vmul.f32 %v4074, 0.5
      %v4397 = vmul.f32 %v4265, 0.5
      %v4398 = vmul.f32 %v4267, 0.5
      %v4399 = vmul.f32 %v4076, 0.5
      %v4400 = vmul.f32 %v4078, 0.5
      %v4401 = vmul.f32 %v4269, 0.5
      %v4402 = vmul.f32 %v4271, 0.5
      %v4403 = vmul.f32 %v4082, 0.5
      %v4404 = vmul.f32 %v4084, 0.5
      %v4405 = vmul.f32 %v4275, 0.5
      %v4406 = vmul.f32 %v4277, 0.5
      %v4407 = vmul.f32 %v4086, 0.5
      %v4408 = vmul.f32 %v4088, 0.5
      %v4409 = vmul.f32 %v4279, 0.5
      %v4410 = vmul.f32 %v4281, 0.5
      %v4411 = vmul.f32 %v3932, 0.70710677
      %v4412 = vmul.f32 %v3934, 0.70710677
      %v4413 = vmul.f32 %v4125, 0.70710677
      %v4414 = vmul.f32 %v4127, 0.70710677
      %v4415 = vmul.f32 %v3936, 0.70710677
      %v4416 = vmul.f32 %v3938, 0.70710677
      %v4417 = vmul.f32 %v4129, 0.70710677
      %v4418 = vmul.f32 %v4131, 0.70710677
      %v4419 = vmul.f32 %v3942, 0.70710677
      %v4420 = vmul.f32 %v3944, 0.70710677
      %v4421 = vmul.f32 %v4135, 0.70710677
      %v4422 = vmul.f32 %v4137, 0.70710677
      %v4423 = vmul.f32 %v3946, 0.70710677
      %v4424 = vmul.f32 %v3948, 0.70710677
      %v4425 = vmul.f32 %v4139, 0.70710677
      %v4426 = vmul.f32 %v4141, 0.70710677
      %v4427 = vmul.f32 %v3952, 0.70710677
      %v4428 = vmul.f32 %v3954, 0.70710677
      %v4429 = vmul.f32 %v4145, 0.70710677
      %v4430 = vmul.f32 %v4147, 0.70710677
      %v4431 = vmul.f32 %v3956, 0.70710677
      %v4432 = vmul.f32 %v3958, 0.70710677
      %v4433 = vmul.f32 %v4149, 0.70710677
      %v4434 = vmul.f32 %v4151, 0.70710677
      %v4435 = vmul.f32 %v3962, 0.70710677
      %v4436 = vmul.f32 %v3964, 0.70710677
      %v4437 = vmul.f32 %v4155, 0.70710677
      %v4438 = vmul.f32 %v4157, 0.70710677
      %v4439 = vmul.f32 %v3966, 0.70710677
      %v4440 = vmul.f32 %v3968, 0.70710677
      %v4441 = vmul.f32 %v4159, 0.70710677
      %v4442 = vmul.f32 %v4161, 0.70710677
      %v4443 = vmul.f32 %v3972, 0.70710677
      %v4444 = vmul.f32 %v3974, 0.70710677
      %v4445 = vmul.f32 %v4165, 0.70710677
      %v4446 = vmul.f32 %v4167, 0.70710677
      %v4447 = vmul.f32 %v3976, 0.70710677
      %v4448 = vmul.f32 %v3978, 0.70710677
      %v4449 = vmul.f32 %v4169, 0.70710677
      %v4450 = vmul.f32 %v4171, 0.70710677
      %v4451 = vmul.f32 %v3982, 0.70710677
      %v4452 = vmul.f32 %v3984, 0.70710677
      %v4453 = vmul.f32 %v4175, 0.70710677
      %v4454 = vmul.f32 %v4177, 0.70710677
      %v4455 = vmul.f32 %v3986, 0.70710677
      %v4456 = vmul.f32 %v3988, 0.70710677
      %v4457 = vmul.f32 %v4179, 0.70710677
      %v4458 = vmul.f32 %v4181, 0.70710677
      %v4459 = vmul.f32 %v3992, 0.70710677
      %v4460 = vmul.f32 %v3994, 0.70710677
      %v4461 = vmul.f32 %v4185, 0.70710677
      %v4462 = vmul.f32 %v4187, 0.70710677
      %v4463 = vmul.f32 %v3996, 0.70710677
      %v4464 = vmul.f32 %v3998, 0.70710677
      %v4465 = vmul.f32 %v4189, 0.70710677
      %v4466 = vmul.f32 %v4191, 0.70710677
      %v4467 = vmul.f32 %v4002, 0.70710677
      %v4468 = vmul.f32 %v4004, 0.70710677
      %v4469 = vmul.f32 %v4195, 0.70710677
      %v4470 = vmul.f32 %v4197, 0.70710677
      %v4471 = vmul.f32 %v4006, 0.70710677
      %v4472 = vmul.f32 %v4008, 0.70710677
      %v4473 = vmul.f32 %v4199, 0.70710677
      %v4474 = vmul.f32 %v4201, 0.70710677
      %v4475 = vmul.f32 %v4012, 0.70710677
      %v4476 = vmul.f32 %v4014, 0.70710677
      %v4477 = vmul.f32 %v4205, 0.70710677
      %v4478 = vmul.f32 %v4207, 0.70710677
      %v4479 = vmul.f32 %v4016, 0.70710677
      %v4480 = vmul.f32 %v4018, 0.70710677
      %v4481 = vmul.f32 %v4209, 0.70710677
      %v4482 = vmul.f32 %v4211, 0.70710677
      %v4483 = vmul.f32 %v4022, 0.70710677
      %v4484 = vmul.f32 %v4024, 0.70710677
      %v4485 = vmul.f32 %v4215, 0.70710677
      %v4486 = vmul.f32 %v4217, 0.70710677
      %v4487 = vmul.f32 %v4026, 0.70710677
      %v4488 = vmul.f32 %v4028, 0.70710677
      %v4489 = vmul.f32 %v4219, 0.70710677
      %v4490 = vmul.f32 %v4221, 0.70710677
      %v4491 = vmul.f32 %v4032, 0.70710677
      %v4492 = vmul.f32 %v4034, 0.70710677
      %v4493 = vmul.f32 %v4225, 0.70710677
      %v4494 = vmul.f32 %v4227, 0.70710677
      %v4495 = vmul.f32 %v4036, 0.70710677
      %v4496 = vmul.f32 %v4038, 0.70710677
      %v4497 = vmul.f32 %v4229, 0.70710677
      %v4498 = vmul.f32 %v4231, 0.70710677
      %v4499 = vmul.f32 %v4042, 0.70710677
      %v4500 = vmul.f32 %v4044, 0.70710677
      %v4501 = vmul.f32 %v4235, 0.70710677
      %v4502 = vmul.f32 %v4237, 0.70710677
      %v4503 = vmul.f32 %v4046, 0.70710677
      %v4504 = vmul.f32 %v4048, 0.70710677
      %v4505 = vmul.f32 %v4239, 0.70710677
      %v4506 = vmul.f32 %v4241, 0.70710677
      %v4507 = vmul.f32 %v4052, 0.70710677
      %v4508 = vmul.f32 %v4054, 0.70710677
      %v4509 = vmul.f32 %v4245, 0.70710677
      %v4510 = vmul.f32 %v4247, 0.70710677
      %v4511 = vmul.f32 %v4056, 0.70710677
      %v4512 = vmul.f32 %v4058, 0.70710677
      %v4513 = vmul.f32 %v4249, 0.70710677
      %v4514 = vmul.f32 %v4251, 0.70710677
      %v4515 = vmul.f32 %v4062, 0.70710677
      %v4516 = vmul.f32 %v4064, 0.70710677
      %v4517 = vmul.f32 %v4255, 0.70710677
      %v4518 = vmul.f32 %v4257, 0.70710677
      %v4519 = vmul.f32 %v4066, 0.70710677
      %v4520 = vmul.f32 %v4068, 0.70710677
      %v4521 = vmul.f32 %v4259, 0.70710677
      %v4522 = vmul.f32 %v4261, 0.70710677
      %v4523 = vmul.f32 %v4072, 0.70710677
      %v4524 = vmul.f32 %v4074, 0.70710677
      %v4525 = vmul.f32 %v4265, 0.70710677
      %v4526 = vmul.f32 %v4267, 0.70710677
      %v4527 = vmul.f32 %v4076, 0.70710677
      %v4528 = vmul.f32 %v4078, 0.70710677
      %v4529 = vmul.f32 %v4269, 0.70710677
      %v4530 = vmul.f32 %v4271, 0.70710677
      %v4531 = vmul.f32 %v4082, 0.70710677
      %v4532 = vmul.f32 %v4084, 0.70710677
      %v4533 = vmul.f32 %v4275, 0.70710677
      %v4534 = vmul.f32 %v4277, 0.70710677
      %v4535 = vmul.f32 %v4086, 0.70710677
      %v4536 = vmul.f32 %v4088, 0.70710677
      %v4537 = vmul.f32 %v4279, 0.70710677
      %v4538 = vmul.f32 %v4281, 0.70710677
      %vm4539 = vcmp.ge.f32.partialorder %v4411, 0.0
      %vm4540 = vcmp.ge.f32.partialorder %v4412, 0.0
      %vm4541 = vcmp.ge.f32.partialorder %v4413, 0.0
      %vm4542 = vcmp.ge.f32.partialorder %v4414, 0.0
      %vm4543 = vcmp.ge.f32.partialorder %v4415, 0.0
      %vm4544 = vcmp.ge.f32.partialorder %v4416, 0.0
      %vm4545 = vcmp.ge.f32.partialorder %v4417, 0.0
      %vm4546 = vcmp.ge.f32.partialorder %v4418, 0.0
      %vm4547 = vcmp.ge.f32.partialorder %v4419, 0.0
      %vm4548 = vcmp.ge.f32.partialorder %v4420, 0.0
      %vm4549 = vcmp.ge.f32.partialorder %v4421, 0.0
      %vm4550 = vcmp.ge.f32.partialorder %v4422, 0.0
      %vm4551 = vcmp.ge.f32.partialorder %v4423, 0.0
      %vm4552 = vcmp.ge.f32.partialorder %v4424, 0.0
      %vm4553 = vcmp.ge.f32.partialorder %v4425, 0.0
      %vm4554 = vcmp.ge.f32.partialorder %v4426, 0.0
      %vm4555 = vcmp.ge.f32.partialorder %v4427, 0.0
      %vm4556 = vcmp.ge.f32.partialorder %v4428, 0.0
      %vm4557 = vcmp.ge.f32.partialorder %v4429, 0.0
      %vm4558 = vcmp.ge.f32.partialorder %v4430, 0.0
      %vm4559 = vcmp.ge.f32.partialorder %v4431, 0.0
      %vm4560 = vcmp.ge.f32.partialorder %v4432, 0.0
      %vm4561 = vcmp.ge.f32.partialorder %v4433, 0.0
      %vm4562 = vcmp.ge.f32.partialorder %v4434, 0.0
      %vm4563 = vcmp.ge.f32.partialorder %v4435, 0.0
      %vm4564 = vcmp.ge.f32.partialorder %v4436, 0.0
      %vm4565 = vcmp.ge.f32.partialorder %v4437, 0.0
      %vm4566 = vcmp.ge.f32.partialorder %v4438, 0.0
      %vm4567 = vcmp.ge.f32.partialorder %v4439, 0.0
      %vm4568 = vcmp.ge.f32.partialorder %v4440, 0.0
      %vm4569 = vcmp.ge.f32.partialorder %v4441, 0.0
      %vm4570 = vcmp.ge.f32.partialorder %v4442, 0.0
      %vm4571 = vcmp.ge.f32.partialorder %v4443, 0.0
      %vm4572 = vcmp.ge.f32.partialorder %v4444, 0.0
      %vm4573 = vcmp.ge.f32.partialorder %v4445, 0.0
      %vm4574 = vcmp.ge.f32.partialorder %v4446, 0.0
      %vm4575 = vcmp.ge.f32.partialorder %v4447, 0.0
      %vm4576 = vcmp.ge.f32.partialorder %v4448, 0.0
      %vm4577 = vcmp.ge.f32.partialorder %v4449, 0.0
      %vm4578 = vcmp.ge.f32.partialorder %v4450, 0.0
      %vm4579 = vcmp.ge.f32.partialorder %v4451, 0.0
      %vm4580 = vcmp.ge.f32.partialorder %v4452, 0.0
      %vm4581 = vcmp.ge.f32.partialorder %v4453, 0.0
      %vm4582 = vcmp.ge.f32.partialorder %v4454, 0.0
      %vm4583 = vcmp.ge.f32.partialorder %v4455, 0.0
      %vm4584 = vcmp.ge.f32.partialorder %v4456, 0.0
      %vm4585 = vcmp.ge.f32.partialorder %v4457, 0.0
      %vm4586 = vcmp.ge.f32.partialorder %v4458, 0.0
      %vm4587 = vcmp.ge.f32.partialorder %v4459, 0.0
      %vm4588 = vcmp.ge.f32.partialorder %v4460, 0.0
      %vm4589 = vcmp.ge.f32.partialorder %v4461, 0.0
      %vm4590 = vcmp.ge.f32.partialorder %v4462, 0.0
      %vm4591 = vcmp.ge.f32.partialorder %v4463, 0.0
      %vm4592 = vcmp.ge.f32.partialorder %v4464, 0.0
      %vm4593 = vcmp.ge.f32.partialorder %v4465, 0.0
      %vm4594 = vcmp.ge.f32.partialorder %v4466, 0.0
      %vm4595 = vcmp.ge.f32.partialorder %v4467, 0.0
      %vm4596 = vcmp.ge.f32.partialorder %v4468, 0.0
      %vm4597 = vcmp.ge.f32.partialorder %v4469, 0.0
      %vm4598 = vcmp.ge.f32.partialorder %v4470, 0.0
      %vm4599 = vcmp.ge.f32.partialorder %v4471, 0.0
      %vm4600 = vcmp.ge.f32.partialorder %v4472, 0.0
      %vm4601 = vcmp.ge.f32.partialorder %v4473, 0.0
      %vm4602 = vcmp.ge.f32.partialorder %v4474, 0.0
      %vm4603 = vcmp.ge.f32.partialorder %v4475, 0.0
      %vm4604 = vcmp.ge.f32.partialorder %v4476, 0.0
      %vm4605 = vcmp.ge.f32.partialorder %v4477, 0.0
      %vm4606 = vcmp.ge.f32.partialorder %v4478, 0.0
      %vm4607 = vcmp.ge.f32.partialorder %v4479, 0.0
      %vm4608 = vcmp.ge.f32.partialorder %v4480, 0.0
      %vm4609 = vcmp.ge.f32.partialorder %v4481, 0.0
      %vm4610 = vcmp.ge.f32.partialorder %v4482, 0.0
      %vm4611 = vcmp.ge.f32.partialorder %v4483, 0.0
      %vm4612 = vcmp.ge.f32.partialorder %v4484, 0.0
      %vm4613 = vcmp.ge.f32.partialorder %v4485, 0.0
      %vm4614 = vcmp.ge.f32.partialorder %v4486, 0.0
      %vm4615 = vcmp.ge.f32.partialorder %v4487, 0.0
      %vm4616 = vcmp.ge.f32.partialorder %v4488, 0.0
      %vm4617 = vcmp.ge.f32.partialorder %v4489, 0.0
      %vm4618 = vcmp.ge.f32.partialorder %v4490, 0.0
      %vm4619 = vcmp.ge.f32.partialorder %v4491, 0.0
      %vm4620 = vcmp.ge.f32.partialorder %v4492, 0.0
      %vm4621 = vcmp.ge.f32.partialorder %v4493, 0.0
      %vm4622 = vcmp.ge.f32.partialorder %v4494, 0.0
      %vm4623 = vcmp.ge.f32.partialorder %v4495, 0.0
      %vm4624 = vcmp.ge.f32.partialorder %v4496, 0.0
      %vm4625 = vcmp.ge.f32.partialorder %v4497, 0.0
      %vm4626 = vcmp.ge.f32.partialorder %v4498, 0.0
      %vm4627 = vcmp.ge.f32.partialorder %v4499, 0.0
      %vm4628 = vcmp.ge.f32.partialorder %v4500, 0.0
      %vm4629 = vcmp.ge.f32.partialorder %v4501, 0.0
      %vm4630 = vcmp.ge.f32.partialorder %v4502, 0.0
      %vm4631 = vcmp.ge.f32.partialorder %v4503, 0.0
      %vm4632 = vcmp.ge.f32.partialorder %v4504, 0.0
      %vm4633 = vcmp.ge.f32.partialorder %v4505, 0.0
      %vm4634 = vcmp.ge.f32.partialorder %v4506, 0.0
      %vm4635 = vcmp.ge.f32.partialorder %v4507, 0.0
      %vm4636 = vcmp.ge.f32.partialorder %v4508, 0.0
      %vm4637 = vcmp.ge.f32.partialorder %v4509, 0.0
      %vm4638 = vcmp.ge.f32.partialorder %v4510, 0.0
      %vm4639 = vcmp.ge.f32.partialorder %v4511, 0.0
      %vm4640 = vcmp.ge.f32.partialorder %v4512, 0.0
      %vm4641 = vcmp.ge.f32.partialorder %v4513, 0.0
      %vm4642 = vcmp.ge.f32.partialorder %v4514, 0.0
      %vm4643 = vcmp.ge.f32.partialorder %v4515, 0.0
      %vm4644 = vcmp.ge.f32.partialorder %v4516, 0.0
      %vm4645 = vcmp.ge.f32.partialorder %v4517, 0.0
      %vm4646 = vcmp.ge.f32.partialorder %v4518, 0.0
      %vm4647 = vcmp.ge.f32.partialorder %v4519, 0.0
      %vm4648 = vcmp.ge.f32.partialorder %v4520, 0.0
      %vm4649 = vcmp.ge.f32.partialorder %v4521, 0.0
      %vm4650 = vcmp.ge.f32.partialorder %v4522, 0.0
      %vm4651 = vcmp.ge.f32.partialorder %v4523, 0.0
      %vm4652 = vcmp.ge.f32.partialorder %v4524, 0.0
      %vm4653 = vcmp.ge.f32.partialorder %v4525, 0.0
      %vm4654 = vcmp.ge.f32.partialorder %v4526, 0.0
      %vm4655 = vcmp.ge.f32.partialorder %v4527, 0.0
      %vm4656 = vcmp.ge.f32.partialorder %v4528, 0.0
      %vm4657 = vcmp.ge.f32.partialorder %v4529, 0.0
      %vm4658 = vcmp.ge.f32.partialorder %v4530, 0.0
      %vm4659 = vcmp.ge.f32.partialorder %v4531, 0.0
      %vm4660 = vcmp.ge.f32.partialorder %v4532, 0.0
      %vm4661 = vcmp.ge.f32.partialorder %v4533, 0.0
      %vm4662 = vcmp.ge.f32.partialorder %v4534, 0.0
      %vm4663 = vcmp.ge.f32.partialorder %v4535, 0.0
      %vm4664 = vcmp.ge.f32.partialorder %v4536, 0.0
      %vm4665 = vcmp.ge.f32.partialorder %v4537, 0.0
      %vm4666 = vcmp.ge.f32.partialorder %v4538, 0.0
      %v4667 = vsel %vm4539, 1.0, -1.0
      %v4668 = vsel %vm4540, 1.0, -1.0
      %v4669 = vsel %vm4541, 1.0, -1.0
      %v4670 = vsel %vm4542, 1.0, -1.0
      %v4671 = vsel %vm4543, 1.0, -1.0
      %v4672 = vsel %vm4544, 1.0, -1.0
      %v4673 = vsel %vm4545, 1.0, -1.0
      %v4674 = vsel %vm4546, 1.0, -1.0
      %v4675 = vsel %vm4547, 1.0, -1.0
      %v4676 = vsel %vm4548, 1.0, -1.0
      %v4677 = vsel %vm4549, 1.0, -1.0
      %v4678 = vsel %vm4550, 1.0, -1.0
      %v4679 = vsel %vm4551, 1.0, -1.0
      %v4680 = vsel %vm4552, 1.0, -1.0
      %v4681 = vsel %vm4553, 1.0, -1.0
      %v4682 = vsel %vm4554, 1.0, -1.0
      %v4683 = vsel %vm4555, 1.0, -1.0
      %v4684 = vsel %vm4556, 1.0, -1.0
      %v4685 = vsel %vm4557, 1.0, -1.0
      %v4686 = vsel %vm4558, 1.0, -1.0
      %v4687 = vsel %vm4559, 1.0, -1.0
      %v4688 = vsel %vm4560, 1.0, -1.0
      %v4689 = vsel %vm4561, 1.0, -1.0
      %v4690 = vsel %vm4562, 1.0, -1.0
      %v4691 = vsel %vm4563, 1.0, -1.0
      %v4692 = vsel %vm4564, 1.0, -1.0
      %v4693 = vsel %vm4565, 1.0, -1.0
      %v4694 = vsel %vm4566, 1.0, -1.0
      %v4695 = vsel %vm4567, 1.0, -1.0
      %v4696 = vsel %vm4568, 1.0, -1.0
      %v4697 = vsel %vm4569, 1.0, -1.0
      %v4698 = vsel %vm4570, 1.0, -1.0
      %v4699 = vsel %vm4571, 1.0, -1.0
      %v4700 = vsel %vm4572, 1.0, -1.0
      %v4701 = vsel %vm4573, 1.0, -1.0
      %v4702 = vsel %vm4574, 1.0, -1.0
      %v4703 = vsel %vm4575, 1.0, -1.0
      %v4704 = vsel %vm4576, 1.0, -1.0
      %v4705 = vsel %vm4577, 1.0, -1.0
      %v4706 = vsel %vm4578, 1.0, -1.0
      %v4707 = vsel %vm4579, 1.0, -1.0
      %v4708 = vsel %vm4580, 1.0, -1.0
      %v4709 = vsel %vm4581, 1.0, -1.0
      %v4710 = vsel %vm4582, 1.0, -1.0
      %v4711 = vsel %vm4583, 1.0, -1.0
      %v4712 = vsel %vm4584, 1.0, -1.0
      %v4713 = vsel %vm4585, 1.0, -1.0
      %v4714 = vsel %vm4586, 1.0, -1.0
      %v4715 = vsel %vm4587, 1.0, -1.0
      %v4716 = vsel %vm4588, 1.0, -1.0
      %v4717 = vsel %vm4589, 1.0, -1.0
      %v4718 = vsel %vm4590, 1.0, -1.0
      %v4719 = vsel %vm4591, 1.0, -1.0
      %v4720 = vsel %vm4592, 1.0, -1.0
      %v4721 = vsel %vm4593, 1.0, -1.0
      %v4722 = vsel %vm4594, 1.0, -1.0
      %v4723 = vsel %vm4595, 1.0, -1.0
      %v4724 = vsel %vm4596, 1.0, -1.0
      %v4725 = vsel %vm4597, 1.0, -1.0
      %v4726 = vsel %vm4598, 1.0, -1.0
      %v4727 = vsel %vm4599, 1.0, -1.0
      %v4728 = vsel %vm4600, 1.0, -1.0
      %v4729 = vsel %vm4601, 1.0, -1.0
      %v4730 = vsel %vm4602, 1.0, -1.0
      %v4731 = vsel %vm4603, 1.0, -1.0
      %v4732 = vsel %vm4604, 1.0, -1.0
      %v4733 = vsel %vm4605, 1.0, -1.0
      %v4734 = vsel %vm4606, 1.0, -1.0
      %v4735 = vsel %vm4607, 1.0, -1.0
      %v4736 = vsel %vm4608, 1.0, -1.0
      %v4737 = vsel %vm4609, 1.0, -1.0
      %v4738 = vsel %vm4610, 1.0, -1.0
      %v4739 = vsel %vm4611, 1.0, -1.0
      %v4740 = vsel %vm4612, 1.0, -1.0
      %v4741 = vsel %vm4613, 1.0, -1.0
      %v4742 = vsel %vm4614, 1.0, -1.0
      %v4743 = vsel %vm4615, 1.0, -1.0
      %v4744 = vsel %vm4616, 1.0, -1.0
      %v4745 = vsel %vm4617, 1.0, -1.0
      %v4746 = vsel %vm4618, 1.0, -1.0
      %v4747 = vsel %vm4619, 1.0, -1.0
      %v4748 = vsel %vm4620, 1.0, -1.0
      %v4749 = vsel %vm4621, 1.0, -1.0
      %v4750 = vsel %vm4622, 1.0, -1.0
      %v4751 = vsel %vm4623, 1.0, -1.0
      %v4752 = vsel %vm4624, 1.0, -1.0
      %v4753 = vsel %vm4625, 1.0, -1.0
      %v4754 = vsel %vm4626, 1.0, -1.0
      %v4755 = vsel %vm4627, 1.0, -1.0
      %v4756 = vsel %vm4628, 1.0, -1.0
      %v4757 = vsel %vm4629, 1.0, -1.0
      %v4758 = vsel %vm4630, 1.0, -1.0
      %v4759 = vsel %vm4631, 1.0, -1.0
      %v4760 = vsel %vm4632, 1.0, -1.0
      %v4761 = vsel %vm4633, 1.0, -1.0
      %v4762 = vsel %vm4634, 1.0, -1.0
      %v4763 = vsel %vm4635, 1.0, -1.0
      %v4764 = vsel %vm4636, 1.0, -1.0
      %v4765 = vsel %vm4637, 1.0, -1.0
      %v4766 = vsel %vm4638, 1.0, -1.0
      %v4767 = vsel %vm4639, 1.0, -1.0
      %v4768 = vsel %vm4640, 1.0, -1.0
      %v4769 = vsel %vm4641, 1.0, -1.0
      %v4770 = vsel %vm4642, 1.0, -1.0
      %v4771 = vsel %vm4643, 1.0, -1.0
      %v4772 = vsel %vm4644, 1.0, -1.0
      %v4773 = vsel %vm4645, 1.0, -1.0
      %v4774 = vsel %vm4646, 1.0, -1.0
      %v4775 = vsel %vm4647, 1.0, -1.0
      %v4776 = vsel %vm4648, 1.0, -1.0
      %v4777 = vsel %vm4649, 1.0, -1.0
      %v4778 = vsel %vm4650, 1.0, -1.0
      %v4779 = vsel %vm4651, 1.0, -1.0
      %v4780 = vsel %vm4652, 1.0, -1.0
      %v4781 = vsel %vm4653, 1.0, -1.0
      %v4782 = vsel %vm4654, 1.0, -1.0
      %v4783 = vsel %vm4655, 1.0, -1.0
      %v4784 = vsel %vm4656, 1.0, -1.0
      %v4785 = vsel %vm4657, 1.0, -1.0
      %v4786 = vsel %vm4658, 1.0, -1.0
      %v4787 = vsel %vm4659, 1.0, -1.0
      %v4788 = vsel %vm4660, 1.0, -1.0
      %v4789 = vsel %vm4661, 1.0, -1.0
      %v4790 = vsel %vm4662, 1.0, -1.0
      %v4791 = vsel %vm4663, 1.0, -1.0
      %v4792 = vsel %vm4664, 1.0, -1.0
      %v4793 = vsel %vm4665, 1.0, -1.0
      %v4794 = vsel %vm4666, 1.0, -1.0
      %v4795 = vand.u32 2147483647, %v4411
      %v4796 = vand.u32 2147483647, %v4412
      %v4797 = vand.u32 2147483647, %v4413
      %v4798 = vand.u32 2147483647, %v4414
      %v4799 = vand.u32 2147483647, %v4415
      %v4800 = vand.u32 2147483647, %v4416
      %v4801 = vand.u32 2147483647, %v4417
      %v4802 = vand.u32 2147483647, %v4418
      %v4803 = vand.u32 2147483647, %v4419
      %v4804 = vand.u32 2147483647, %v4420
      %v4805 = vand.u32 2147483647, %v4421
      %v4806 = vand.u32 2147483647, %v4422
      %v4807 = vand.u32 2147483647, %v4423
      %v4808 = vand.u32 2147483647, %v4424
      %v4809 = vand.u32 2147483647, %v4425
      %v4810 = vand.u32 2147483647, %v4426
      %v4811 = vand.u32 2147483647, %v4427
      %v4812 = vand.u32 2147483647, %v4428
      %v4813 = vand.u32 2147483647, %v4429
      %v4814 = vand.u32 2147483647, %v4430
      %v4815 = vand.u32 2147483647, %v4431
      %v4816 = vand.u32 2147483647, %v4432
      %v4817 = vand.u32 2147483647, %v4433
      %v4818 = vand.u32 2147483647, %v4434
      %v4819 = vand.u32 2147483647, %v4435
      %v4820 = vand.u32 2147483647, %v4436
      %v4821 = vand.u32 2147483647, %v4437
      %v4822 = vand.u32 2147483647, %v4438
      %v4823 = vand.u32 2147483647, %v4439
      %v4824 = vand.u32 2147483647, %v4440
      %v4825 = vand.u32 2147483647, %v4441
      %v4826 = vand.u32 2147483647, %v4442
      %v4827 = vand.u32 2147483647, %v4443
      %v4828 = vand.u32 2147483647, %v4444
      %v4829 = vand.u32 2147483647, %v4445
      %v4830 = vand.u32 2147483647, %v4446
      %v4831 = vand.u32 2147483647, %v4447
      %v4832 = vand.u32 2147483647, %v4448
      %v4833 = vand.u32 2147483647, %v4449
      %v4834 = vand.u32 2147483647, %v4450
      %v4835 = vand.u32 2147483647, %v4451
      %v4836 = vand.u32 2147483647, %v4452
      %v4837 = vand.u32 2147483647, %v4453
      %v4838 = vand.u32 2147483647, %v4454
      %v4839 = vand.u32 2147483647, %v4455
      %v4840 = vand.u32 2147483647, %v4456
      %v4841 = vand.u32 2147483647, %v4457
      %v4842 = vand.u32 2147483647, %v4458
      %v4843 = vand.u32 2147483647, %v4459
      %v4844 = vand.u32 2147483647, %v4460
      %v4845 = vand.u32 2147483647, %v4461
      %v4846 = vand.u32 2147483647, %v4462
      %v4847 = vand.u32 2147483647, %v4463
      %v4848 = vand.u32 2147483647, %v4464
      %v4849 = vand.u32 2147483647, %v4465
      %v4850 = vand.u32 2147483647, %v4466
      %v4851 = vand.u32 2147483647, %v4467
      %v4852 = vand.u32 2147483647, %v4468
      %v4853 = vand.u32 2147483647, %v4469
      %v4854 = vand.u32 2147483647, %v4470
      %v4855 = vand.u32 2147483647, %v4471
      %v4856 = vand.u32 2147483647, %v4472
      %v4857 = vand.u32 2147483647, %v4473
      %v4858 = vand.u32 2147483647, %v4474
      %v4859 = vand.u32 2147483647, %v4475
      %v4860 = vand.u32 2147483647, %v4476
      %v4861 = vand.u32 2147483647, %v4477
      %v4862 = vand.u32 2147483647, %v4478
      %v4863 = vand.u32 2147483647, %v4479
      %v4864 = vand.u32 2147483647, %v4480
      %v4865 = vand.u32 2147483647, %v4481
      %v4866 = vand.u32 2147483647, %v4482
      %v4867 = vand.u32 2147483647, %v4483
      %v4868 = vand.u32 2147483647, %v4484
      %v4869 = vand.u32 2147483647, %v4485
      %v4870 = vand.u32 2147483647, %v4486
      %v4871 = vand.u32 2147483647, %v4487
      %v4872 = vand.u32 2147483647, %v4488
      %v4873 = vand.u32 2147483647, %v4489
      %v4874 = vand.u32 2147483647, %v4490
      %v4875 = vand.u32 2147483647, %v4491
      %v4876 = vand.u32 2147483647, %v4492
      %v4877 = vand.u32 2147483647, %v4493
      %v4878 = vand.u32 2147483647, %v4494
      %v4879 = vand.u32 2147483647, %v4495
      %v4880 = vand.u32 2147483647, %v4496
      %v4881 = vand.u32 2147483647, %v4497
      %v4882 = vand.u32 2147483647, %v4498
      %v4883 = vand.u32 2147483647, %v4499
      %v4884 = vand.u32 2147483647, %v4500
      %v4885 = vand.u32 2147483647, %v4501
      %v4886 = vand.u32 2147483647, %v4502
      %v4887 = vand.u32 2147483647, %v4503
      %v4888 = vand.u32 2147483647, %v4504
      %v4889 = vand.u32 2147483647, %v4505
      %v4890 = vand.u32 2147483647, %v4506
      %v4891 = vand.u32 2147483647, %v4507
      %v4892 = vand.u32 2147483647, %v4508
      %v4893 = vand.u32 2147483647, %v4509
      %v4894 = vand.u32 2147483647, %v4510
      %v4895 = vand.u32 2147483647, %v4511
      %v4896 = vand.u32 2147483647, %v4512
      %v4897 = vand.u32 2147483647, %v4513
      %v4898 = vand.u32 2147483647, %v4514
      %v4899 = vand.u32 2147483647, %v4515
      %v4900 = vand.u32 2147483647, %v4516
      %v4901 = vand.u32 2147483647, %v4517
      %v4902 = vand.u32 2147483647, %v4518
      %v4903 = vand.u32 2147483647, %v4519
      %v4904 = vand.u32 2147483647, %v4520
      %v4905 = vand.u32 2147483647, %v4521
      %v4906 = vand.u32 2147483647, %v4522
      %v4907 = vand.u32 2147483647, %v4523
      %v4908 = vand.u32 2147483647, %v4524
      %v4909 = vand.u32 2147483647, %v4525
      %v4910 = vand.u32 2147483647, %v4526
      %v4911 = vand.u32 2147483647, %v4527
      %v4912 = vand.u32 2147483647, %v4528
      %v4913 = vand.u32 2147483647, %v4529
      %v4914 = vand.u32 2147483647, %v4530
      %v4915 = vand.u32 2147483647, %v4531
      %v4916 = vand.u32 2147483647, %v4532
      %v4917 = vand.u32 2147483647, %v4533
      %v4918 = vand.u32 2147483647, %v4534
      %v4919 = vand.u32 2147483647, %v4535
      %v4920 = vand.u32 2147483647, %v4536
      %v4921 = vand.u32 2147483647, %v4537
      %v4922 = vand.u32 2147483647, %v4538
      %v4923 = vmul.f32 %v4795, 0.3275911
      %v4924 = vmul.f32 %v4796, 0.3275911
      %v4925 = vmul.f32 %v4797, 0.3275911
      %v4926 = vmul.f32 %v4798, 0.3275911
      %v4927 = vmul.f32 %v4799, 0.3275911
      %v4928 = vmul.f32 %v4800, 0.3275911
      %v4929 = vmul.f32 %v4801, 0.3275911
      %v4930 = vmul.f32 %v4802, 0.3275911
      %v4931 = vmul.f32 %v4803, 0.3275911
      %v4932 = vmul.f32 %v4804, 0.3275911
      %v4933 = vmul.f32 %v4805, 0.3275911
      %v4934 = vmul.f32 %v4806, 0.3275911
      %v4935 = vmul.f32 %v4807, 0.3275911
      %v4936 = vmul.f32 %v4808, 0.3275911
      %v4937 = vmul.f32 %v4809, 0.3275911
      %v4938 = vmul.f32 %v4810, 0.3275911
      %v4939 = vmul.f32 %v4811, 0.3275911
      %v4940 = vmul.f32 %v4812, 0.3275911
      %v4941 = vmul.f32 %v4813, 0.3275911
      %v4942 = vmul.f32 %v4814, 0.3275911
      %v4943 = vmul.f32 %v4815, 0.3275911
      %v4944 = vmul.f32 %v4816, 0.3275911
      %v4945 = vmul.f32 %v4817, 0.3275911
      %v4946 = vmul.f32 %v4818, 0.3275911
      %v4947 = vmul.f32 %v4819, 0.3275911
      %v4948 = vmul.f32 %v4820, 0.3275911
      %v4949 = vmul.f32 %v4821, 0.3275911
      %v4950 = vmul.f32 %v4822, 0.3275911
      %v4951 = vmul.f32 %v4823, 0.3275911
      %v4952 = vmul.f32 %v4824, 0.3275911
      %v4953 = vmul.f32 %v4825, 0.3275911
      %v4954 = vmul.f32 %v4826, 0.3275911
      %v4955 = vmul.f32 %v4827, 0.3275911
      %v4956 = vmul.f32 %v4828, 0.3275911
      %v4957 = vmul.f32 %v4829, 0.3275911
      %v4958 = vmul.f32 %v4830, 0.3275911
      %v4959 = vmul.f32 %v4831, 0.3275911
      %v4960 = vmul.f32 %v4832, 0.3275911
      %v4961 = vmul.f32 %v4833, 0.3275911
      %v4962 = vmul.f32 %v4834, 0.3275911
      %v4963 = vmul.f32 %v4835, 0.3275911
      %v4964 = vmul.f32 %v4836, 0.3275911
      %v4965 = vmul.f32 %v4837, 0.3275911
      %v4966 = vmul.f32 %v4838, 0.3275911
      %v4967 = vmul.f32 %v4839, 0.3275911
      %v4968 = vmul.f32 %v4840, 0.3275911
      %v4969 = vmul.f32 %v4841, 0.3275911
      %v4970 = vmul.f32 %v4842, 0.3275911
      %v4971 = vmul.f32 %v4843, 0.3275911
      %v4972 = vmul.f32 %v4844, 0.3275911
      %v4973 = vmul.f32 %v4845, 0.3275911
      %v4974 = vmul.f32 %v4846, 0.3275911
      %v4975 = vmul.f32 %v4847, 0.3275911
      %v4976 = vmul.f32 %v4848, 0.3275911
      %v4977 = vmul.f32 %v4849, 0.3275911
      %v4978 = vmul.f32 %v4850, 0.3275911
      %v4979 = vmul.f32 %v4851, 0.3275911
      %v4980 = vmul.f32 %v4852, 0.3275911
      %v4981 = vmul.f32 %v4853, 0.3275911
      %v4982 = vmul.f32 %v4854, 0.3275911
      %v4983 = vmul.f32 %v4855, 0.3275911
      %v4984 = vmul.f32 %v4856, 0.3275911
      %v4985 = vmul.f32 %v4857, 0.3275911
      %v4986 = vmul.f32 %v4858, 0.3275911
      %v4987 = vmul.f32 %v4859, 0.3275911
      %v4988 = vmul.f32 %v4860, 0.3275911
      %v4989 = vmul.f32 %v4861, 0.3275911
      %v4990 = vmul.f32 %v4862, 0.3275911
      %v4991 = vmul.f32 %v4863, 0.3275911
      %v4992 = vmul.f32 %v4864, 0.3275911
      %v4993 = vmul.f32 %v4865, 0.3275911
      %v4994 = vmul.f32 %v4866, 0.3275911
      %v4995 = vmul.f32 %v4867, 0.3275911
      %v4996 = vmul.f32 %v4868, 0.3275911
      %v4997 = vmul.f32 %v4869, 0.3275911
      %v4998 = vmul.f32 %v4870, 0.3275911
      %v4999 = vmul.f32 %v4871, 0.3275911
      %v5000 = vmul.f32 %v4872, 0.3275911
      %v5001 = vmul.f32 %v4873, 0.3275911
      %v5002 = vmul.f32 %v4874, 0.3275911
      %v5003 = vmul.f32 %v4875, 0.3275911
      %v5004 = vmul.f32 %v4876, 0.3275911
      %v5005 = vmul.f32 %v4877, 0.3275911
      %v5006 = vmul.f32 %v4878, 0.3275911
      %v5007 = vmul.f32 %v4879, 0.3275911
      %v5008 = vmul.f32 %v4880, 0.3275911
      %v5009 = vmul.f32 %v4881, 0.3275911
      %v5010 = vmul.f32 %v4882, 0.3275911
      %v5011 = vmul.f32 %v4883, 0.3275911
      %v5012 = vmul.f32 %v4884, 0.3275911
      %v5013 = vmul.f32 %v4885, 0.3275911
      %v5014 = vmul.f32 %v4886, 0.3275911
      %v5015 = vmul.f32 %v4887, 0.3275911
      %v5016 = vmul.f32 %v4888, 0.3275911
      %v5017 = vmul.f32 %v4889, 0.3275911
      %v5018 = vmul.f32 %v4890, 0.3275911
      %v5019 = vmul.f32 %v4891, 0.3275911
      %v5020 = vmul.f32 %v4892, 0.3275911
      %v5021 = vmul.f32 %v4893, 0.3275911
      %v5022 = vmul.f32 %v4894, 0.3275911
      %v5023 = vmul.f32 %v4895, 0.3275911
      %v5024 = vmul.f32 %v4896, 0.3275911
      %v5025 = vmul.f32 %v4897, 0.3275911
      %v5026 = vmul.f32 %v4898, 0.3275911
      %v5027 = vmul.f32 %v4899, 0.3275911
      %v5028 = vmul.f32 %v4900, 0.3275911
      %v5029 = vmul.f32 %v4901, 0.3275911
      %v5030 = vmul.f32 %v4902, 0.3275911
      %v5031 = vmul.f32 %v4903, 0.3275911
      %v5032 = vmul.f32 %v4904, 0.3275911
      %v5033 = vmul.f32 %v4905, 0.3275911
      %v5034 = vmul.f32 %v4906, 0.3275911
      %v5035 = vmul.f32 %v4907, 0.3275911
      %v5036 = vmul.f32 %v4908, 0.3275911
      %v5037 = vmul.f32 %v4909, 0.3275911
      %v5038 = vmul.f32 %v4910, 0.3275911
      %v5039 = vmul.f32 %v4911, 0.3275911
      %v5040 = vmul.f32 %v4912, 0.3275911
      %v5041 = vmul.f32 %v4913, 0.3275911
      %v5042 = vmul.f32 %v4914, 0.3275911
      %v5043 = vmul.f32 %v4915, 0.3275911
      %v5044 = vmul.f32 %v4916, 0.3275911
      %v5045 = vmul.f32 %v4917, 0.3275911
      %v5046 = vmul.f32 %v4918, 0.3275911
      %v5047 = vmul.f32 %v4919, 0.3275911
      %v5048 = vmul.f32 %v4920, 0.3275911
      %v5049 = vmul.f32 %v4921, 0.3275911
      %v5050 = vmul.f32 %v4922, 0.3275911
      %v5051 = vadd.f32 %v4923, 1.0
      %v5052 = vadd.f32 %v4924, 1.0
      %v5053 = vadd.f32 %v4925, 1.0
      %v5054 = vadd.f32 %v4926, 1.0
      %v5055 = vadd.f32 %v4927, 1.0
      %v5056 = vadd.f32 %v4928, 1.0
      %v5057 = vadd.f32 %v4929, 1.0
      %v5058 = vadd.f32 %v4930, 1.0
      %v5059 = vadd.f32 %v4931, 1.0
      %v5060 = vadd.f32 %v4932, 1.0
      %v5061 = vadd.f32 %v4933, 1.0
      %v5062 = vadd.f32 %v4934, 1.0
      %v5063 = vadd.f32 %v4935, 1.0
      %v5064 = vadd.f32 %v4936, 1.0
      %v5065 = vadd.f32 %v4937, 1.0
      %v5066 = vadd.f32 %v4938, 1.0
      %v5067 = vadd.f32 %v4939, 1.0
      %v5068 = vadd.f32 %v4940, 1.0
      %v5069 = vadd.f32 %v4941, 1.0
      %v5070 = vadd.f32 %v4942, 1.0
      %v5071 = vadd.f32 %v4943, 1.0
      %v5072 = vadd.f32 %v4944, 1.0
      %v5073 = vadd.f32 %v4945, 1.0
      %v5074 = vadd.f32 %v4946, 1.0
      %v5075 = vadd.f32 %v4947, 1.0
      %v5076 = vadd.f32 %v4948, 1.0
      %v5077 = vadd.f32 %v4949, 1.0
      %v5078 = vadd.f32 %v4950, 1.0
      %v5079 = vadd.f32 %v4951, 1.0
      %v5080 = vadd.f32 %v4952, 1.0
      %v5081 = vadd.f32 %v4953, 1.0
      %v5082 = vadd.f32 %v4954, 1.0
      %v5083 = vadd.f32 %v4955, 1.0
      %v5084 = vadd.f32 %v4956, 1.0
      %v5085 = vadd.f32 %v4957, 1.0
      %v5086 = vadd.f32 %v4958, 1.0
      %v5087 = vadd.f32 %v4959, 1.0
      %v5088 = vadd.f32 %v4960, 1.0
      %v5089 = vadd.f32 %v4961, 1.0
      %v5090 = vadd.f32 %v4962, 1.0
      %v5091 = vadd.f32 %v4963, 1.0
      %v5092 = vadd.f32 %v4964, 1.0
      %v5093 = vadd.f32 %v4965, 1.0
      %v5094 = vadd.f32 %v4966, 1.0
      %v5095 = vadd.f32 %v4967, 1.0
      %v5096 = vadd.f32 %v4968, 1.0
      %v5097 = vadd.f32 %v4969, 1.0
      %v5098 = vadd.f32 %v4970, 1.0
      %v5099 = vadd.f32 %v4971, 1.0
      %v5100 = vadd.f32 %v4972, 1.0
      %v5101 = vadd.f32 %v4973, 1.0
      %v5102 = vadd.f32 %v4974, 1.0
      %v5103 = vadd.f32 %v4975, 1.0
      %v5104 = vadd.f32 %v4976, 1.0
      %v5105 = vadd.f32 %v4977, 1.0
      %v5106 = vadd.f32 %v4978, 1.0
      %v5107 = vadd.f32 %v4979, 1.0
      %v5108 = vadd.f32 %v4980, 1.0
      %v5109 = vadd.f32 %v4981, 1.0
      %v5110 = vadd.f32 %v4982, 1.0
      %v5111 = vadd.f32 %v4983, 1.0
      %v5112 = vadd.f32 %v4984, 1.0
      %v5113 = vadd.f32 %v4985, 1.0
      %v5114 = vadd.f32 %v4986, 1.0
      %v5115 = vadd.f32 %v4987, 1.0
      %v5116 = vadd.f32 %v4988, 1.0
      %v5117 = vadd.f32 %v4989, 1.0
      %v5118 = vadd.f32 %v4990, 1.0
      %v5119 = vadd.f32 %v4991, 1.0
      %v5120 = vadd.f32 %v4992, 1.0
      %v5121 = vadd.f32 %v4993, 1.0
      %v5122 = vadd.f32 %v4994, 1.0
      %v5123 = vadd.f32 %v4995, 1.0
      %v5124 = vadd.f32 %v4996, 1.0
      %v5125 = vadd.f32 %v4997, 1.0
      %v5126 = vadd.f32 %v4998, 1.0
      %v5127 = vadd.f32 %v4999, 1.0
      %v5128 = vadd.f32 %v5000, 1.0
      %v5129 = vadd.f32 %v5001, 1.0
      %v5130 = vadd.f32 %v5002, 1.0
      %v5131 = vadd.f32 %v5003, 1.0
      %v5132 = vadd.f32 %v5004, 1.0
      %v5133 = vadd.f32 %v5005, 1.0
      %v5134 = vadd.f32 %v5006, 1.0
      %v5135 = vadd.f32 %v5007, 1.0
      %v5136 = vadd.f32 %v5008, 1.0
      %v5137 = vadd.f32 %v5009, 1.0
      %v5138 = vadd.f32 %v5010, 1.0
      %v5139 = vadd.f32 %v5011, 1.0
      %v5140 = vadd.f32 %v5012, 1.0
      %v5141 = vadd.f32 %v5013, 1.0
      %v5142 = vadd.f32 %v5014, 1.0
      %v5143 = vadd.f32 %v5015, 1.0
      %v5144 = vadd.f32 %v5016, 1.0
      %v5145 = vadd.f32 %v5017, 1.0
      %v5146 = vadd.f32 %v5018, 1.0
      %v5147 = vadd.f32 %v5019, 1.0
      %v5148 = vadd.f32 %v5020, 1.0
      %v5149 = vadd.f32 %v5021, 1.0
      %v5150 = vadd.f32 %v5022, 1.0
      %v5151 = vadd.f32 %v5023, 1.0
      %v5152 = vadd.f32 %v5024, 1.0
      %v5153 = vadd.f32 %v5025, 1.0
      %v5154 = vadd.f32 %v5026, 1.0
      %v5155 = vadd.f32 %v5027, 1.0
      %v5156 = vadd.f32 %v5028, 1.0
      %v5157 = vadd.f32 %v5029, 1.0
      %v5158 = vadd.f32 %v5030, 1.0
      %v5159 = vadd.f32 %v5031, 1.0
      %v5160 = vadd.f32 %v5032, 1.0
      %v5161 = vadd.f32 %v5033, 1.0
      %v5162 = vadd.f32 %v5034, 1.0
      %v5163 = vadd.f32 %v5035, 1.0
      %v5164 = vadd.f32 %v5036, 1.0
      %v5165 = vadd.f32 %v5037, 1.0
      %v5166 = vadd.f32 %v5038, 1.0
      %v5167 = vadd.f32 %v5039, 1.0
      %v5168 = vadd.f32 %v5040, 1.0
      %v5169 = vadd.f32 %v5041, 1.0
      %v5170 = vadd.f32 %v5042, 1.0
      %v5171 = vadd.f32 %v5043, 1.0
      %v5172 = vadd.f32 %v5044, 1.0
      %v5173 = vadd.f32 %v5045, 1.0
      %v5174 = vadd.f32 %v5046, 1.0
      %v5175 = vadd.f32 %v5047, 1.0
      %v5176 = vadd.f32 %v5048, 1.0
      %v5177 = vadd.f32 %v5049, 1.0
      %v5178 = vadd.f32 %v5050, 1.0
      %v5179 = vrcp.pop %v5051
      %v5180 = vmul.f32 1.0, %v5179
      %v5181 = vrcp.pop %v5052
      %v5182 = vmul.f32 1.0, %v5181
      %v5183 = vrcp.pop %v5053
      %v5184 = vmul.f32 1.0, %v5183
      %v5185 = vrcp.pop %v5054
      %v5186 = vmul.f32 1.0, %v5185
      %v5187 = vrcp.pop %v5055
      %v5188 = vmul.f32 1.0, %v5187
      %v5189 = vrcp.pop %v5056
      %v5190 = vmul.f32 1.0, %v5189
      %v5191 = vrcp.pop %v5057
      %v5192 = vmul.f32 1.0, %v5191
      %v5193 = vrcp.pop %v5058
      %v5194 = vmul.f32 1.0, %v5193
      %v5195 = vrcp.pop %v5059
      %v5196 = vmul.f32 1.0, %v5195
      %v5197 = vrcp.pop %v5060
      %v5198 = vmul.f32 1.0, %v5197
      %v5199 = vrcp.pop %v5061
      %v5200 = vmul.f32 1.0, %v5199
      %v5201 = vrcp.pop %v5062
      %v5202 = vmul.f32 1.0, %v5201
      %v5203 = vrcp.pop %v5063
      %v5204 = vmul.f32 1.0, %v5203
      %v5205 = vrcp.pop %v5064
      %v5206 = vmul.f32 1.0, %v5205
      %v5207 = vrcp.pop %v5065
      %v5208 = vmul.f32 1.0, %v5207
      %v5209 = vrcp.pop %v5066
      %v5210 = vmul.f32 1.0, %v5209
      %v5211 = vrcp.pop %v5067
      %v5212 = vmul.f32 1.0, %v5211
      %v5213 = vrcp.pop %v5068
      %v5214 = vmul.f32 1.0, %v5213
      %v5215 = vrcp.pop %v5069
      %v5216 = vmul.f32 1.0, %v5215
      %v5217 = vrcp.pop %v5070
      %v5218 = vmul.f32 1.0, %v5217
      %v5219 = vrcp.pop %v5071
      %v5220 = vmul.f32 1.0, %v5219
      %v5221 = vrcp.pop %v5072
      %v5222 = vmul.f32 1.0, %v5221
      %v5223 = vrcp.pop %v5073
      %v5224 = vmul.f32 1.0, %v5223
      %v5225 = vrcp.pop %v5074
      %v5226 = vmul.f32 1.0, %v5225
      %v5227 = vrcp.pop %v5075
      %v5228 = vmul.f32 1.0, %v5227
      %v5229 = vrcp.pop %v5076
      %v5230 = vmul.f32 1.0, %v5229
      %v5231 = vrcp.pop %v5077
      %v5232 = vmul.f32 1.0, %v5231
      %v5233 = vrcp.pop %v5078
      %v5234 = vmul.f32 1.0, %v5233
      %v5235 = vrcp.pop %v5079
      %v5236 = vmul.f32 1.0, %v5235
      %v5237 = vrcp.pop %v5080
      %v5238 = vmul.f32 1.0, %v5237
      %v5239 = vrcp.pop %v5081
      %v5240 = vmul.f32 1.0, %v5239
      %v5241 = vrcp.pop %v5082
      %v5242 = vmul.f32 1.0, %v5241
      %v5243 = vrcp.pop %v5083
      %v5244 = vmul.f32 1.0, %v5243
      %v5245 = vrcp.pop %v5084
      %v5246 = vmul.f32 1.0, %v5245
      %v5247 = vrcp.pop %v5085
      %v5248 = vmul.f32 1.0, %v5247
      %v5249 = vrcp.pop %v5086
      %v5250 = vmul.f32 1.0, %v5249
      %v5251 = vrcp.pop %v5087
      %v5252 = vmul.f32 1.0, %v5251
      %v5253 = vrcp.pop %v5088
      %v5254 = vmul.f32 1.0, %v5253
      %v5255 = vrcp.pop %v5089
      %v5256 = vmul.f32 1.0, %v5255
      %v5257 = vrcp.pop %v5090
      %v5258 = vmul.f32 1.0, %v5257
      %v5259 = vrcp.pop %v5091
      %v5260 = vmul.f32 1.0, %v5259
      %v5261 = vrcp.pop %v5092
      %v5262 = vmul.f32 1.0, %v5261
      %v5263 = vrcp.pop %v5093
      %v5264 = vmul.f32 1.0, %v5263
      %v5265 = vrcp.pop %v5094
      %v5266 = vmul.f32 1.0, %v5265
      %v5267 = vrcp.pop %v5095
      %v5268 = vmul.f32 1.0, %v5267
      %v5269 = vrcp.pop %v5096
      %v5270 = vmul.f32 1.0, %v5269
      %v5271 = vrcp.pop %v5097
      %v5272 = vmul.f32 1.0, %v5271
      %v5273 = vrcp.pop %v5098
      %v5274 = vmul.f32 1.0, %v5273
      %v5275 = vrcp.pop %v5099
      %v5276 = vmul.f32 1.0, %v5275
      %v5277 = vrcp.pop %v5100
      %v5278 = vmul.f32 1.0, %v5277
      %v5279 = vrcp.pop %v5101
      %v5280 = vmul.f32 1.0, %v5279
      %v5281 = vrcp.pop %v5102
      %v5282 = vmul.f32 1.0, %v5281
      %v5283 = vrcp.pop %v5103
      %v5284 = vmul.f32 1.0, %v5283
      %v5285 = vrcp.pop %v5104
      %v5286 = vmul.f32 1.0, %v5285
      %v5287 = vrcp.pop %v5105
      %v5288 = vmul.f32 1.0, %v5287
      %v5289 = vrcp.pop %v5106
      %v5290 = vmul.f32 1.0, %v5289
      %v5291 = vrcp.pop %v5107
      %v5292 = vmul.f32 1.0, %v5291
      %v5293 = vrcp.pop %v5108
      %v5294 = vmul.f32 1.0, %v5293
      %v5295 = vrcp.pop %v5109
      %v5296 = vmul.f32 1.0, %v5295
      %v5297 = vrcp.pop %v5110
      %v5298 = vmul.f32 1.0, %v5297
      %v5299 = vrcp.pop %v5111
      %v5300 = vmul.f32 1.0, %v5299
      %v5301 = vrcp.pop %v5112
      %v5302 = vmul.f32 1.0, %v5301
      %v5303 = vrcp.pop %v5113
      %v5304 = vmul.f32 1.0, %v5303
      %v5305 = vrcp.pop %v5114
      %v5306 = vmul.f32 1.0, %v5305
      %v5307 = vrcp.pop %v5115
      %v5308 = vmul.f32 1.0, %v5307
      %v5309 = vrcp.pop %v5116
      %v5310 = vmul.f32 1.0, %v5309
      %v5311 = vrcp.pop %v5117
      %v5312 = vmul.f32 1.0, %v5311
      %v5313 = vrcp.pop %v5118
      %v5314 = vmul.f32 1.0, %v5313
      %v5315 = vrcp.pop %v5119
      %v5316 = vmul.f32 1.0, %v5315
      %v5317 = vrcp.pop %v5120
      %v5318 = vmul.f32 1.0, %v5317
      %v5319 = vrcp.pop %v5121
      %v5320 = vmul.f32 1.0, %v5319
      %v5321 = vrcp.pop %v5122
      %v5322 = vmul.f32 1.0, %v5321
      %v5323 = vrcp.pop %v5123
      %v5324 = vmul.f32 1.0, %v5323
      %v5325 = vrcp.pop %v5124
      %v5326 = vmul.f32 1.0, %v5325
      %v5327 = vrcp.pop %v5125
      %v5328 = vmul.f32 1.0, %v5327
      %v5329 = vrcp.pop %v5126
      %v5330 = vmul.f32 1.0, %v5329
      %v5331 = vrcp.pop %v5127
      %v5332 = vmul.f32 1.0, %v5331
      %v5333 = vrcp.pop %v5128
      %v5334 = vmul.f32 1.0, %v5333
      %v5335 = vrcp.pop %v5129
      %v5336 = vmul.f32 1.0, %v5335
      %v5337 = vrcp.pop %v5130
      %v5338 = vmul.f32 1.0, %v5337
      %v5339 = vrcp.pop %v5131
      %v5340 = vmul.f32 1.0, %v5339
      %v5341 = vrcp.pop %v5132
      %v5342 = vmul.f32 1.0, %v5341
      %v5343 = vrcp.pop %v5133
      %v5344 = vmul.f32 1.0, %v5343
      %v5345 = vrcp.pop %v5134
      %v5346 = vmul.f32 1.0, %v5345
      %v5347 = vrcp.pop %v5135
      %v5348 = vmul.f32 1.0, %v5347
      %v5349 = vrcp.pop %v5136
      %v5350 = vmul.f32 1.0, %v5349
      %v5351 = vrcp.pop %v5137
      %v5352 = vmul.f32 1.0, %v5351
      %v5353 = vrcp.pop %v5138
      %v5354 = vmul.f32 1.0, %v5353
      %v5355 = vrcp.pop %v5139
      %v5356 = vmul.f32 1.0, %v5355
      %v5357 = vrcp.pop %v5140
      %v5358 = vmul.f32 1.0, %v5357
      %v5359 = vrcp.pop %v5141
      %v5360 = vmul.f32 1.0, %v5359
      %v5361 = vrcp.pop %v5142
      %v5362 = vmul.f32 1.0, %v5361
      %v5363 = vrcp.pop %v5143
      %v5364 = vmul.f32 1.0, %v5363
      %v5365 = vrcp.pop %v5144
      %v5366 = vmul.f32 1.0, %v5365
      %v5367 = vrcp.pop %v5145
      %v5368 = vmul.f32 1.0, %v5367
      %v5369 = vrcp.pop %v5146
      %v5370 = vmul.f32 1.0, %v5369
      %v5371 = vrcp.pop %v5147
      %v5372 = vmul.f32 1.0, %v5371
      %v5373 = vrcp.pop %v5148
      %v5374 = vmul.f32 1.0, %v5373
      %v5375 = vrcp.pop %v5149
      %v5376 = vmul.f32 1.0, %v5375
      %v5377 = vrcp.pop %v5150
      %v5378 = vmul.f32 1.0, %v5377
      %v5379 = vrcp.pop %v5151
      %v5380 = vmul.f32 1.0, %v5379
      %v5381 = vrcp.pop %v5152
      %v5382 = vmul.f32 1.0, %v5381
      %v5383 = vrcp.pop %v5153
      %v5384 = vmul.f32 1.0, %v5383
      %v5385 = vrcp.pop %v5154
      %v5386 = vmul.f32 1.0, %v5385
      %v5387 = vrcp.pop %v5155
      %v5388 = vmul.f32 1.0, %v5387
      %v5389 = vrcp.pop %v5156
      %v5390 = vmul.f32 1.0, %v5389
      %v5391 = vrcp.pop %v5157
      %v5392 = vmul.f32 1.0, %v5391
      %v5393 = vrcp.pop %v5158
      %v5394 = vmul.f32 1.0, %v5393
      %v5395 = vrcp.pop %v5159
      %v5396 = vmul.f32 1.0, %v5395
      %v5397 = vrcp.pop %v5160
      %v5398 = vmul.f32 1.0, %v5397
      %v5399 = vrcp.pop %v5161
      %v5400 = vmul.f32 1.0, %v5399
      %v5401 = vrcp.pop %v5162
      %v5402 = vmul.f32 1.0, %v5401
      %v5403 = vrcp.pop %v5163
      %v5404 = vmul.f32 1.0, %v5403
      %v5405 = vrcp.pop %v5164
      %v5406 = vmul.f32 1.0, %v5405
      %v5407 = vrcp.pop %v5165
      %v5408 = vmul.f32 1.0, %v5407
      %v5409 = vrcp.pop %v5166
      %v5410 = vmul.f32 1.0, %v5409
      %v5411 = vrcp.pop %v5167
      %v5412 = vmul.f32 1.0, %v5411
      %v5413 = vrcp.pop %v5168
      %v5414 = vmul.f32 1.0, %v5413
      %v5415 = vrcp.pop %v5169
      %v5416 = vmul.f32 1.0, %v5415
      %v5417 = vrcp.pop %v5170
      %v5418 = vmul.f32 1.0, %v5417
      %v5419 = vrcp.pop %v5171
      %v5420 = vmul.f32 1.0, %v5419
      %v5421 = vrcp.pop %v5172
      %v5422 = vmul.f32 1.0, %v5421
      %v5423 = vrcp.pop %v5173
      %v5424 = vmul.f32 1.0, %v5423
      %v5425 = vrcp.pop %v5174
      %v5426 = vmul.f32 1.0, %v5425
      %v5427 = vrcp.pop %v5175
      %v5428 = vmul.f32 1.0, %v5427
      %v5429 = vrcp.pop %v5176
      %v5430 = vmul.f32 1.0, %v5429
      %v5431 = vrcp.pop %v5177
      %v5432 = vmul.f32 1.0, %v5431
      %v5433 = vrcp.pop %v5178
      %v5434 = vmul.f32 1.0, %v5433
      %v5435 = vmul.f32 %v5180, 1.0614054
      %v5436 = vmul.f32 %v5182, 1.0614054
      %v5437 = vmul.f32 %v5184, 1.0614054
      %v5438 = vmul.f32 %v5186, 1.0614054
      %v5439 = vmul.f32 %v5188, 1.0614054
      %v5440 = vmul.f32 %v5190, 1.0614054
      %v5441 = vmul.f32 %v5192, 1.0614054
      %v5442 = vmul.f32 %v5194, 1.0614054
      %v5443 = vmul.f32 %v5196, 1.0614054
      %v5444 = vmul.f32 %v5198, 1.0614054
      %v5445 = vmul.f32 %v5200, 1.0614054
      %v5446 = vmul.f32 %v5202, 1.0614054
      %v5447 = vmul.f32 %v5204, 1.0614054
      %v5448 = vmul.f32 %v5206, 1.0614054
      %v5449 = vmul.f32 %v5208, 1.0614054
      %v5450 = vmul.f32 %v5210, 1.0614054
      %v5451 = vmul.f32 %v5212, 1.0614054
      %v5452 = vmul.f32 %v5214, 1.0614054
      %v5453 = vmul.f32 %v5216, 1.0614054
      %v5454 = vmul.f32 %v5218, 1.0614054
      %v5455 = vmul.f32 %v5220, 1.0614054
      %v5456 = vmul.f32 %v5222, 1.0614054
      %v5457 = vmul.f32 %v5224, 1.0614054
      %v5458 = vmul.f32 %v5226, 1.0614054
      %v5459 = vmul.f32 %v5228, 1.0614054
      %v5460 = vmul.f32 %v5230, 1.0614054
      %v5461 = vmul.f32 %v5232, 1.0614054
      %v5462 = vmul.f32 %v5234, 1.0614054
      %v5463 = vmul.f32 %v5236, 1.0614054
      %v5464 = vmul.f32 %v5238, 1.0614054
      %v5465 = vmul.f32 %v5240, 1.0614054
      %v5466 = vmul.f32 %v5242, 1.0614054
      %v5467 = vmul.f32 %v5244, 1.0614054
      %v5468 = vmul.f32 %v5246, 1.0614054
      %v5469 = vmul.f32 %v5248, 1.0614054
      %v5470 = vmul.f32 %v5250, 1.0614054
      %v5471 = vmul.f32 %v5252, 1.0614054
      %v5472 = vmul.f32 %v5254, 1.0614054
      %v5473 = vmul.f32 %v5256, 1.0614054
      %v5474 = vmul.f32 %v5258, 1.0614054
      %v5475 = vmul.f32 %v5260, 1.0614054
      %v5476 = vmul.f32 %v5262, 1.0614054
      %v5477 = vmul.f32 %v5264, 1.0614054
      %v5478 = vmul.f32 %v5266, 1.0614054
      %v5479 = vmul.f32 %v5268, 1.0614054
      %v5480 = vmul.f32 %v5270, 1.0614054
      %v5481 = vmul.f32 %v5272, 1.0614054
      %v5482 = vmul.f32 %v5274, 1.0614054
      %v5483 = vmul.f32 %v5276, 1.0614054
      %v5484 = vmul.f32 %v5278, 1.0614054
      %v5485 = vmul.f32 %v5280, 1.0614054
      %v5486 = vmul.f32 %v5282, 1.0614054
      %v5487 = vmul.f32 %v5284, 1.0614054
      %v5488 = vmul.f32 %v5286, 1.0614054
      %v5489 = vmul.f32 %v5288, 1.0614054
      %v5490 = vmul.f32 %v5290, 1.0614054
      %v5491 = vmul.f32 %v5292, 1.0614054
      %v5492 = vmul.f32 %v5294, 1.0614054
      %v5493 = vmul.f32 %v5296, 1.0614054
      %v5494 = vmul.f32 %v5298, 1.0614054
      %v5495 = vmul.f32 %v5300, 1.0614054
      %v5496 = vmul.f32 %v5302, 1.0614054
      %v5497 = vmul.f32 %v5304, 1.0614054
      %v5498 = vmul.f32 %v5306, 1.0614054
      %v5499 = vmul.f32 %v5308, 1.0614054
      %v5500 = vmul.f32 %v5310, 1.0614054
      %v5501 = vmul.f32 %v5312, 1.0614054
      %v5502 = vmul.f32 %v5314, 1.0614054
      %v5503 = vmul.f32 %v5316, 1.0614054
      %v5504 = vmul.f32 %v5318, 1.0614054
      %v5505 = vmul.f32 %v5320, 1.0614054
      %v5506 = vmul.f32 %v5322, 1.0614054
      %v5507 = vmul.f32 %v5324, 1.0614054
      %v5508 = vmul.f32 %v5326, 1.0614054
      %v5509 = vmul.f32 %v5328, 1.0614054
      %v5510 = vmul.f32 %v5330, 1.0614054
      %v5511 = vmul.f32 %v5332, 1.0614054
      %v5512 = vmul.f32 %v5334, 1.0614054
      %v5513 = vmul.f32 %v5336, 1.0614054
      %v5514 = vmul.f32 %v5338, 1.0614054
      %v5515 = vmul.f32 %v5340, 1.0614054
      %v5516 = vmul.f32 %v5342, 1.0614054
      %v5517 = vmul.f32 %v5344, 1.0614054
      %v5518 = vmul.f32 %v5346, 1.0614054
      %v5519 = vmul.f32 %v5348, 1.0614054
      %v5520 = vmul.f32 %v5350, 1.0614054
      %v5521 = vmul.f32 %v5352, 1.0614054
      %v5522 = vmul.f32 %v5354, 1.0614054
      %v5523 = vmul.f32 %v5356, 1.0614054
      %v5524 = vmul.f32 %v5358, 1.0614054
      %v5525 = vmul.f32 %v5360, 1.0614054
      %v5526 = vmul.f32 %v5362, 1.0614054
      %v5527 = vmul.f32 %v5364, 1.0614054
      %v5528 = vmul.f32 %v5366, 1.0614054
      %v5529 = vmul.f32 %v5368, 1.0614054
      %v5530 = vmul.f32 %v5370, 1.0614054
      %v5531 = vmul.f32 %v5372, 1.0614054
      %v5532 = vmul.f32 %v5374, 1.0614054
      %v5533 = vmul.f32 %v5376, 1.0614054
      %v5534 = vmul.f32 %v5378, 1.0614054
      %v5535 = vmul.f32 %v5380, 1.0614054
      %v5536 = vmul.f32 %v5382, 1.0614054
      %v5537 = vmul.f32 %v5384, 1.0614054
      %v5538 = vmul.f32 %v5386, 1.0614054
      %v5539 = vmul.f32 %v5388, 1.0614054
      %v5540 = vmul.f32 %v5390, 1.0614054
      %v5541 = vmul.f32 %v5392, 1.0614054
      %v5542 = vmul.f32 %v5394, 1.0614054
      %v5543 = vmul.f32 %v5396, 1.0614054
      %v5544 = vmul.f32 %v5398, 1.0614054
      %v5545 = vmul.f32 %v5400, 1.0614054
      %v5546 = vmul.f32 %v5402, 1.0614054
      %v5547 = vmul.f32 %v5404, 1.0614054
      %v5548 = vmul.f32 %v5406, 1.0614054
      %v5549 = vmul.f32 %v5408, 1.0614054
      %v5550 = vmul.f32 %v5410, 1.0614054
      %v5551 = vmul.f32 %v5412, 1.0614054
      %v5552 = vmul.f32 %v5414, 1.0614054
      %v5553 = vmul.f32 %v5416, 1.0614054
      %v5554 = vmul.f32 %v5418, 1.0614054
      %v5555 = vmul.f32 %v5420, 1.0614054
      %v5556 = vmul.f32 %v5422, 1.0614054
      %v5557 = vmul.f32 %v5424, 1.0614054
      %v5558 = vmul.f32 %v5426, 1.0614054
      %v5559 = vmul.f32 %v5428, 1.0614054
      %v5560 = vmul.f32 %v5430, 1.0614054
      %v5561 = vmul.f32 %v5432, 1.0614054
      %v5562 = vmul.f32 %v5434, 1.0614054
      %v5563 = vadd.f32 %v5435, -1.4531521
      %v5564 = vadd.f32 %v5436, -1.4531521
      %v5565 = vadd.f32 %v5437, -1.4531521
      %v5566 = vadd.f32 %v5438, -1.4531521
      %v5567 = vadd.f32 %v5439, -1.4531521
      %v5568 = vadd.f32 %v5440, -1.4531521
      %v5569 = vadd.f32 %v5441, -1.4531521
      %v5570 = vadd.f32 %v5442, -1.4531521
      %v5571 = vadd.f32 %v5443, -1.4531521
      %v5572 = vadd.f32 %v5444, -1.4531521
      %v5573 = vadd.f32 %v5445, -1.4531521
      %v5574 = vadd.f32 %v5446, -1.4531521
      %v5575 = vadd.f32 %v5447, -1.4531521
      %v5576 = vadd.f32 %v5448, -1.4531521
      %v5577 = vadd.f32 %v5449, -1.4531521
      %v5578 = vadd.f32 %v5450, -1.4531521
      %v5579 = vadd.f32 %v5451, -1.4531521
      %v5580 = vadd.f32 %v5452, -1.4531521
      %v5581 = vadd.f32 %v5453, -1.4531521
      %v5582 = vadd.f32 %v5454, -1.4531521
      %v5583 = vadd.f32 %v5455, -1.4531521
      %v5584 = vadd.f32 %v5456, -1.4531521
      %v5585 = vadd.f32 %v5457, -1.4531521
      %v5586 = vadd.f32 %v5458, -1.4531521
      %v5587 = vadd.f32 %v5459, -1.4531521
      %v5588 = vadd.f32 %v5460, -1.4531521
      %v5589 = vadd.f32 %v5461, -1.4531521
      %v5590 = vadd.f32 %v5462, -1.4531521
      %v5591 = vadd.f32 %v5463, -1.4531521
      %v5592 = vadd.f32 %v5464, -1.4531521
      %v5593 = vadd.f32 %v5465, -1.4531521
      %v5594 = vadd.f32 %v5466, -1.4531521
      %v5595 = vadd.f32 %v5467, -1.4531521
      %v5596 = vadd.f32 %v5468, -1.4531521
      %v5597 = vadd.f32 %v5469, -1.4531521
      %v5598 = vadd.f32 %v5470, -1.4531521
      %v5599 = vadd.f32 %v5471, -1.4531521
      %v5600 = vadd.f32 %v5472, -1.4531521
      %v5601 = vadd.f32 %v5473, -1.4531521
      %v5602 = vadd.f32 %v5474, -1.4531521
      %v5603 = vadd.f32 %v5475, -1.4531521
      %v5604 = vadd.f32 %v5476, -1.4531521
      %v5605 = vadd.f32 %v5477, -1.4531521
      %v5606 = vadd.f32 %v5478, -1.4531521
      %v5607 = vadd.f32 %v5479, -1.4531521
      %v5608 = vadd.f32 %v5480, -1.4531521
      %v5609 = vadd.f32 %v5481, -1.4531521
      %v5610 = vadd.f32 %v5482, -1.4531521
      %v5611 = vadd.f32 %v5483, -1.4531521
      %v5612 = vadd.f32 %v5484, -1.4531521
      %v5613 = vadd.f32 %v5485, -1.4531521
      %v5614 = vadd.f32 %v5486, -1.4531521
      %v5615 = vadd.f32 %v5487, -1.4531521
      %v5616 = vadd.f32 %v5488, -1.4531521
      %v5617 = vadd.f32 %v5489, -1.4531521
      %v5618 = vadd.f32 %v5490, -1.4531521
      %v5619 = vadd.f32 %v5491, -1.4531521
      %v5620 = vadd.f32 %v5492, -1.4531521
      %v5621 = vadd.f32 %v5493, -1.4531521
      %v5622 = vadd.f32 %v5494, -1.4531521
      %v5623 = vadd.f32 %v5495, -1.4531521
      %v5624 = vadd.f32 %v5496, -1.4531521
      %v5625 = vadd.f32 %v5497, -1.4531521
      %v5626 = vadd.f32 %v5498, -1.4531521
      %v5627 = vadd.f32 %v5499, -1.4531521
      %v5628 = vadd.f32 %v5500, -1.4531521
      %v5629 = vadd.f32 %v5501, -1.4531521
      %v5630 = vadd.f32 %v5502, -1.4531521
      %v5631 = vadd.f32 %v5503, -1.4531521
      %v5632 = vadd.f32 %v5504, -1.4531521
      %v5633 = vadd.f32 %v5505, -1.4531521
      %v5634 = vadd.f32 %v5506, -1.4531521
      %v5635 = vadd.f32 %v5507, -1.4531521
      %v5636 = vadd.f32 %v5508, -1.4531521
      %v5637 = vadd.f32 %v5509, -1.4531521
      %v5638 = vadd.f32 %v5510, -1.4531521
      %v5639 = vadd.f32 %v5511, -1.4531521
      %v5640 = vadd.f32 %v5512, -1.4531521
      %v5641 = vadd.f32 %v5513, -1.4531521
      %v5642 = vadd.f32 %v5514, -1.4531521
      %v5643 = vadd.f32 %v5515, -1.4531521
      %v5644 = vadd.f32 %v5516, -1.4531521
      %v5645 = vadd.f32 %v5517, -1.4531521
      %v5646 = vadd.f32 %v5518, -1.4531521
      %v5647 = vadd.f32 %v5519, -1.4531521
      %v5648 = vadd.f32 %v5520, -1.4531521
      %v5649 = vadd.f32 %v5521, -1.4531521
      %v5650 = vadd.f32 %v5522, -1.4531521
      %v5651 = vadd.f32 %v5523, -1.4531521
      %v5652 = vadd.f32 %v5524, -1.4531521
      %v5653 = vadd.f32 %v5525, -1.4531521
      %v5654 = vadd.f32 %v5526, -1.4531521
      %v5655 = vadd.f32 %v5527, -1.4531521
      %v5656 = vadd.f32 %v5528, -1.4531521
      %v5657 = vadd.f32 %v5529, -1.4531521
      %v5658 = vadd.f32 %v5530, -1.4531521
      %v5659 = vadd.f32 %v5531, -1.4531521
      %v5660 = vadd.f32 %v5532, -1.4531521
      %v5661 = vadd.f32 %v5533, -1.4531521
      %v5662 = vadd.f32 %v5534, -1.4531521
      %v5663 = vadd.f32 %v5535, -1.4531521
      %v5664 = vadd.f32 %v5536, -1.4531521
      %v5665 = vadd.f32 %v5537, -1.4531521
      %v5666 = vadd.f32 %v5538, -1.4531521
      %v5667 = vadd.f32 %v5539, -1.4531521
      %v5668 = vadd.f32 %v5540, -1.4531521
      %v5669 = vadd.f32 %v5541, -1.4531521
      %v5670 = vadd.f32 %v5542, -1.4531521
      %v5671 = vadd.f32 %v5543, -1.4531521
      %v5672 = vadd.f32 %v5544, -1.4531521
      %v5673 = vadd.f32 %v5545, -1.4531521
      %v5674 = vadd.f32 %v5546, -1.4531521
      %v5675 = vadd.f32 %v5547, -1.4531521
      %v5676 = vadd.f32 %v5548, -1.4531521
      %v5677 = vadd.f32 %v5549, -1.4531521
      %v5678 = vadd.f32 %v5550, -1.4531521
      %v5679 = vadd.f32 %v5551, -1.4531521
      %v5680 = vadd.f32 %v5552, -1.4531521
      %v5681 = vadd.f32 %v5553, -1.4531521
      %v5682 = vadd.f32 %v5554, -1.4531521
      %v5683 = vadd.f32 %v5555, -1.4531521
      %v5684 = vadd.f32 %v5556, -1.4531521
      %v5685 = vadd.f32 %v5557, -1.4531521
      %v5686 = vadd.f32 %v5558, -1.4531521
      %v5687 = vadd.f32 %v5559, -1.4531521
      %v5688 = vadd.f32 %v5560, -1.4531521
      %v5689 = vadd.f32 %v5561, -1.4531521
      %v5690 = vadd.f32 %v5562, -1.4531521
      %v5691 = vmul.f32 %v5563, %v5180
      %v5692 = vmul.f32 %v5564, %v5182
      %v5693 = vmul.f32 %v5565, %v5184
      %v5694 = vmul.f32 %v5566, %v5186
      %v5695 = vmul.f32 %v5567, %v5188
      %v5696 = vmul.f32 %v5568, %v5190
      %v5697 = vmul.f32 %v5569, %v5192
      %v5698 = vmul.f32 %v5570, %v5194
      %v5699 = vmul.f32 %v5571, %v5196
      %v5700 = vmul.f32 %v5572, %v5198
      %v5701 = vmul.f32 %v5573, %v5200
      %v5702 = vmul.f32 %v5574, %v5202
      %v5703 = vmul.f32 %v5575, %v5204
      %v5704 = vmul.f32 %v5576, %v5206
      %v5705 = vmul.f32 %v5577, %v5208
      %v5706 = vmul.f32 %v5578, %v5210
      %v5707 = vmul.f32 %v5579, %v5212
      %v5708 = vmul.f32 %v5580, %v5214
      %v5709 = vmul.f32 %v5581, %v5216
      %v5710 = vmul.f32 %v5582, %v5218
      %v5711 = vmul.f32 %v5583, %v5220
      %v5712 = vmul.f32 %v5584, %v5222
      %v5713 = vmul.f32 %v5585, %v5224
      %v5714 = vmul.f32 %v5586, %v5226
      %v5715 = vmul.f32 %v5587, %v5228
      %v5716 = vmul.f32 %v5588, %v5230
      %v5717 = vmul.f32 %v5589, %v5232
      %v5718 = vmul.f32 %v5590, %v5234
      %v5719 = vmul.f32 %v5591, %v5236
      %v5720 = vmul.f32 %v5592, %v5238
      %v5721 = vmul.f32 %v5593, %v5240
      %v5722 = vmul.f32 %v5594, %v5242
      %v5723 = vmul.f32 %v5595, %v5244
      %v5724 = vmul.f32 %v5596, %v5246
      %v5725 = vmul.f32 %v5597, %v5248
      %v5726 = vmul.f32 %v5598, %v5250
      %v5727 = vmul.f32 %v5599, %v5252
      %v5728 = vmul.f32 %v5600, %v5254
      %v5729 = vmul.f32 %v5601, %v5256
      %v5730 = vmul.f32 %v5602, %v5258
      %v5731 = vmul.f32 %v5603, %v5260
      %v5732 = vmul.f32 %v5604, %v5262
      %v5733 = vmul.f32 %v5605, %v5264
      %v5734 = vmul.f32 %v5606, %v5266
      %v5735 = vmul.f32 %v5607, %v5268
      %v5736 = vmul.f32 %v5608, %v5270
      %v5737 = vmul.f32 %v5609, %v5272
      %v5738 = vmul.f32 %v5610, %v5274
      %v5739 = vmul.f32 %v5611, %v5276
      %v5740 = vmul.f32 %v5612, %v5278
      %v5741 = vmul.f32 %v5613, %v5280
      %v5742 = vmul.f32 %v5614, %v5282
      %v5743 = vmul.f32 %v5615, %v5284
      %v5744 = vmul.f32 %v5616, %v5286
      %v5745 = vmul.f32 %v5617, %v5288
      %v5746 = vmul.f32 %v5618, %v5290
      %v5747 = vmul.f32 %v5619, %v5292
      %v5748 = vmul.f32 %v5620, %v5294
      %v5749 = vmul.f32 %v5621, %v5296
      %v5750 = vmul.f32 %v5622, %v5298
      %v5751 = vmul.f32 %v5623, %v5300
      %v5752 = vmul.f32 %v5624, %v5302
      %v5753 = vmul.f32 %v5625, %v5304
      %v5754 = vmul.f32 %v5626, %v5306
      %v5755 = vmul.f32 %v5627, %v5308
      %v5756 = vmul.f32 %v5628, %v5310
      %v5757 = vmul.f32 %v5629, %v5312
      %v5758 = vmul.f32 %v5630, %v5314
      %v5759 = vmul.f32 %v5631, %v5316
      %v5760 = vmul.f32 %v5632, %v5318
      %v5761 = vmul.f32 %v5633, %v5320
      %v5762 = vmul.f32 %v5634, %v5322
      %v5763 = vmul.f32 %v5635, %v5324
      %v5764 = vmul.f32 %v5636, %v5326
      %v5765 = vmul.f32 %v5637, %v5328
      %v5766 = vmul.f32 %v5638, %v5330
      %v5767 = vmul.f32 %v5639, %v5332
      %v5768 = vmul.f32 %v5640, %v5334
      %v5769 = vmul.f32 %v5641, %v5336
      %v5770 = vmul.f32 %v5642, %v5338
      %v5771 = vmul.f32 %v5643, %v5340
      %v5772 = vmul.f32 %v5644, %v5342
      %v5773 = vmul.f32 %v5645, %v5344
      %v5774 = vmul.f32 %v5646, %v5346
      %v5775 = vmul.f32 %v5647, %v5348
      %v5776 = vmul.f32 %v5648, %v5350
      %v5777 = vmul.f32 %v5649, %v5352
      %v5778 = vmul.f32 %v5650, %v5354
      %v5779 = vmul.f32 %v5651, %v5356
      %v5780 = vmul.f32 %v5652, %v5358
      %v5781 = vmul.f32 %v5653, %v5360
      %v5782 = vmul.f32 %v5654, %v5362
      %v5783 = vmul.f32 %v5655, %v5364
      %v5784 = vmul.f32 %v5656, %v5366
      %v5785 = vmul.f32 %v5657, %v5368
      %v5786 = vmul.f32 %v5658, %v5370
      %v5787 = vmul.f32 %v5659, %v5372
      %v5788 = vmul.f32 %v5660, %v5374
      %v5789 = vmul.f32 %v5661, %v5376
      %v5790 = vmul.f32 %v5662, %v5378
      %v5791 = vmul.f32 %v5663, %v5380
      %v5792 = vmul.f32 %v5664, %v5382
      %v5793 = vmul.f32 %v5665, %v5384
      %v5794 = vmul.f32 %v5666, %v5386
      %v5795 = vmul.f32 %v5667, %v5388
      %v5796 = vmul.f32 %v5668, %v5390
      %v5797 = vmul.f32 %v5669, %v5392
      %v5798 = vmul.f32 %v5670, %v5394
      %v5799 = vmul.f32 %v5671, %v5396
      %v5800 = vmul.f32 %v5672, %v5398
      %v5801 = vmul.f32 %v5673, %v5400
      %v5802 = vmul.f32 %v5674, %v5402
      %v5803 = vmul.f32 %v5675, %v5404
      %v5804 = vmul.f32 %v5676, %v5406
      %v5805 = vmul.f32 %v5677, %v5408
      %v5806 = vmul.f32 %v5678, %v5410
      %v5807 = vmul.f32 %v5679, %v5412
      %v5808 = vmul.f32 %v5680, %v5414
      %v5809 = vmul.f32 %v5681, %v5416
      %v5810 = vmul.f32 %v5682, %v5418
      %v5811 = vmul.f32 %v5683, %v5420
      %v5812 = vmul.f32 %v5684, %v5422
      %v5813 = vmul.f32 %v5685, %v5424
      %v5814 = vmul.f32 %v5686, %v5426
      %v5815 = vmul.f32 %v5687, %v5428
      %v5816 = vmul.f32 %v5688, %v5430
      %v5817 = vmul.f32 %v5689, %v5432
      %v5818 = vmul.f32 %v5690, %v5434
      %v5819 = vadd.f32 %v5691, 1.4214138
      %v5820 = vadd.f32 %v5692, 1.4214138
      %v5821 = vadd.f32 %v5693, 1.4214138
      %v5822 = vadd.f32 %v5694, 1.4214138
      %v5823 = vadd.f32 %v5695, 1.4214138
      %v5824 = vadd.f32 %v5696, 1.4214138
      %v5825 = vadd.f32 %v5697, 1.4214138
      %v5826 = vadd.f32 %v5698, 1.4214138
      %v5827 = vadd.f32 %v5699, 1.4214138
      %v5828 = vadd.f32 %v5700, 1.4214138
      %v5829 = vadd.f32 %v5701, 1.4214138
      %v5830 = vadd.f32 %v5702, 1.4214138
      %v5831 = vadd.f32 %v5703, 1.4214138
      %v5832 = vadd.f32 %v5704, 1.4214138
      %v5833 = vadd.f32 %v5705, 1.4214138
      %v5834 = vadd.f32 %v5706, 1.4214138
      %v5835 = vadd.f32 %v5707, 1.4214138
      %v5836 = vadd.f32 %v5708, 1.4214138
      %v5837 = vadd.f32 %v5709, 1.4214138
      %v5838 = vadd.f32 %v5710, 1.4214138
      %v5839 = vadd.f32 %v5711, 1.4214138
      %v5840 = vadd.f32 %v5712, 1.4214138
      %v5841 = vadd.f32 %v5713, 1.4214138
      %v5842 = vadd.f32 %v5714, 1.4214138
      %v5843 = vadd.f32 %v5715, 1.4214138
      %v5844 = vadd.f32 %v5716, 1.4214138
      %v5845 = vadd.f32 %v5717, 1.4214138
      %v5846 = vadd.f32 %v5718, 1.4214138
      %v5847 = vadd.f32 %v5719, 1.4214138
      %v5848 = vadd.f32 %v5720, 1.4214138
      %v5849 = vadd.f32 %v5721, 1.4214138
      %v5850 = vadd.f32 %v5722, 1.4214138
      %v5851 = vadd.f32 %v5723, 1.4214138
      %v5852 = vadd.f32 %v5724, 1.4214138
      %v5853 = vadd.f32 %v5725, 1.4214138
      %v5854 = vadd.f32 %v5726, 1.4214138
      %v5855 = vadd.f32 %v5727, 1.4214138
      %v5856 = vadd.f32 %v5728, 1.4214138
      %v5857 = vadd.f32 %v5729, 1.4214138
      %v5858 = vadd.f32 %v5730, 1.4214138
      %v5859 = vadd.f32 %v5731, 1.4214138
      %v5860 = vadd.f32 %v5732, 1.4214138
      %v5861 = vadd.f32 %v5733, 1.4214138
      %v5862 = vadd.f32 %v5734, 1.4214138
      %v5863 = vadd.f32 %v5735, 1.4214138
      %v5864 = vadd.f32 %v5736, 1.4214138
      %v5865 = vadd.f32 %v5737, 1.4214138
      %v5866 = vadd.f32 %v5738, 1.4214138
      %v5867 = vadd.f32 %v5739, 1.4214138
      %v5868 = vadd.f32 %v5740, 1.4214138
      %v5869 = vadd.f32 %v5741, 1.4214138
      %v5870 = vadd.f32 %v5742, 1.4214138
      %v5871 = vadd.f32 %v5743, 1.4214138
      %v5872 = vadd.f32 %v5744, 1.4214138
      %v5873 = vadd.f32 %v5745, 1.4214138
      %v5874 = vadd.f32 %v5746, 1.4214138
      %v5875 = vadd.f32 %v5747, 1.4214138
      %v5876 = vadd.f32 %v5748, 1.4214138
      %v5877 = vadd.f32 %v5749, 1.4214138
      %v5878 = vadd.f32 %v5750, 1.4214138
      %v5879 = vadd.f32 %v5751, 1.4214138
      %v5880 = vadd.f32 %v5752, 1.4214138
      %v5881 = vadd.f32 %v5753, 1.4214138
      %v5882 = vadd.f32 %v5754, 1.4214138
      %v5883 = vadd.f32 %v5755, 1.4214138
      %v5884 = vadd.f32 %v5756, 1.4214138
      %v5885 = vadd.f32 %v5757, 1.4214138
      %v5886 = vadd.f32 %v5758, 1.4214138
      %v5887 = vadd.f32 %v5759, 1.4214138
      %v5888 = vadd.f32 %v5760, 1.4214138
      %v5889 = vadd.f32 %v5761, 1.4214138
      %v5890 = vadd.f32 %v5762, 1.4214138
      %v5891 = vadd.f32 %v5763, 1.4214138
      %v5892 = vadd.f32 %v5764, 1.4214138
      %v5893 = vadd.f32 %v5765, 1.4214138
      %v5894 = vadd.f32 %v5766, 1.4214138
      %v5895 = vadd.f32 %v5767, 1.4214138
      %v5896 = vadd.f32 %v5768, 1.4214138
      %v5897 = vadd.f32 %v5769, 1.4214138
      %v5898 = vadd.f32 %v5770, 1.4214138
      %v5899 = vadd.f32 %v5771, 1.4214138
      %v5900 = vadd.f32 %v5772, 1.4214138
      %v5901 = vadd.f32 %v5773, 1.4214138
      %v5902 = vadd.f32 %v5774, 1.4214138
      %v5903 = vadd.f32 %v5775, 1.4214138
      %v5904 = vadd.f32 %v5776, 1.4214138
      %v5905 = vadd.f32 %v5777, 1.4214138
      %v5906 = vadd.f32 %v5778, 1.4214138
      %v5907 = vadd.f32 %v5779, 1.4214138
      %v5908 = vadd.f32 %v5780, 1.4214138
      %v5909 = vadd.f32 %v5781, 1.4214138
      %v5910 = vadd.f32 %v5782, 1.4214138
      %v5911 = vadd.f32 %v5783, 1.4214138
      %v5912 = vadd.f32 %v5784, 1.4214138
      %v5913 = vadd.f32 %v5785, 1.4214138
      %v5914 = vadd.f32 %v5786, 1.4214138
      %v5915 = vadd.f32 %v5787, 1.4214138
      %v5916 = vadd.f32 %v5788, 1.4214138
      %v5917 = vadd.f32 %v5789, 1.4214138
      %v5918 = vadd.f32 %v5790, 1.4214138
      %v5919 = vadd.f32 %v5791, 1.4214138
      %v5920 = vadd.f32 %v5792, 1.4214138
      %v5921 = vadd.f32 %v5793, 1.4214138
      %v5922 = vadd.f32 %v5794, 1.4214138
      %v5923 = vadd.f32 %v5795, 1.4214138
      %v5924 = vadd.f32 %v5796, 1.4214138
      %v5925 = vadd.f32 %v5797, 1.4214138
      %v5926 = vadd.f32 %v5798, 1.4214138
      %v5927 = vadd.f32 %v5799, 1.4214138
      %v5928 = vadd.f32 %v5800, 1.4214138
      %v5929 = vadd.f32 %v5801, 1.4214138
      %v5930 = vadd.f32 %v5802, 1.4214138
      %v5931 = vadd.f32 %v5803, 1.4214138
      %v5932 = vadd.f32 %v5804, 1.4214138
      %v5933 = vadd.f32 %v5805, 1.4214138
      %v5934 = vadd.f32 %v5806, 1.4214138
      %v5935 = vadd.f32 %v5807, 1.4214138
      %v5936 = vadd.f32 %v5808, 1.4214138
      %v5937 = vadd.f32 %v5809, 1.4214138
      %v5938 = vadd.f32 %v5810, 1.4214138
      %v5939 = vadd.f32 %v5811, 1.4214138
      %v5940 = vadd.f32 %v5812, 1.4214138
      %v5941 = vadd.f32 %v5813, 1.4214138
      %v5942 = vadd.f32 %v5814, 1.4214138
      %v5943 = vadd.f32 %v5815, 1.4214138
      %v5944 = vadd.f32 %v5816, 1.4214138
      %v5945 = vadd.f32 %v5817, 1.4214138
      %v5946 = vadd.f32 %v5818, 1.4214138
      %v5947 = vmul.f32 %v5819, %v5180
      %v5948 = vmul.f32 %v5820, %v5182
      %v5949 = vmul.f32 %v5821, %v5184
      %v5950 = vmul.f32 %v5822, %v5186
      %v5951 = vmul.f32 %v5823, %v5188
      %v5952 = vmul.f32 %v5824, %v5190
      %v5953 = vmul.f32 %v5825, %v5192
      %v5954 = vmul.f32 %v5826, %v5194
      %v5955 = vmul.f32 %v5827, %v5196
      %v5956 = vmul.f32 %v5828, %v5198
      %v5957 = vmul.f32 %v5829, %v5200
      %v5958 = vmul.f32 %v5830, %v5202
      %v5959 = vmul.f32 %v5831, %v5204
      %v5960 = vmul.f32 %v5832, %v5206
      %v5961 = vmul.f32 %v5833, %v5208
      %v5962 = vmul.f32 %v5834, %v5210
      %v5963 = vmul.f32 %v5835, %v5212
      %v5964 = vmul.f32 %v5836, %v5214
      %v5965 = vmul.f32 %v5837, %v5216
      %v5966 = vmul.f32 %v5838, %v5218
      %v5967 = vmul.f32 %v5839, %v5220
      %v5968 = vmul.f32 %v5840, %v5222
      %v5969 = vmul.f32 %v5841, %v5224
      %v5970 = vmul.f32 %v5842, %v5226
      %v5971 = vmul.f32 %v5843, %v5228
      %v5972 = vmul.f32 %v5844, %v5230
      %v5973 = vmul.f32 %v5845, %v5232
      %v5974 = vmul.f32 %v5846, %v5234
      %v5975 = vmul.f32 %v5847, %v5236
      %v5976 = vmul.f32 %v5848, %v5238
      %v5977 = vmul.f32 %v5849, %v5240
      %v5978 = vmul.f32 %v5850, %v5242
      %v5979 = vmul.f32 %v5851, %v5244
      %v5980 = vmul.f32 %v5852, %v5246
      %v5981 = vmul.f32 %v5853, %v5248
      %v5982 = vmul.f32 %v5854, %v5250
      %v5983 = vmul.f32 %v5855, %v5252
      %v5984 = vmul.f32 %v5856, %v5254
      %v5985 = vmul.f32 %v5857, %v5256
      %v5986 = vmul.f32 %v5858, %v5258
      %v5987 = vmul.f32 %v5859, %v5260
      %v5988 = vmul.f32 %v5860, %v5262
      %v5989 = vmul.f32 %v5861, %v5264
      %v5990 = vmul.f32 %v5862, %v5266
      %v5991 = vmul.f32 %v5863, %v5268
      %v5992 = vmul.f32 %v5864, %v5270
      %v5993 = vmul.f32 %v5865, %v5272
      %v5994 = vmul.f32 %v5866, %v5274
      %v5995 = vmul.f32 %v5867, %v5276
      %v5996 = vmul.f32 %v5868, %v5278
      %v5997 = vmul.f32 %v5869, %v5280
      %v5998 = vmul.f32 %v5870, %v5282
      %v5999 = vmul.f32 %v5871, %v5284
      %v6000 = vmul.f32 %v5872, %v5286
      %v6001 = vmul.f32 %v5873, %v5288
      %v6002 = vmul.f32 %v5874, %v5290
      %v6003 = vmul.f32 %v5875, %v5292
      %v6004 = vmul.f32 %v5876, %v5294
      %v6005 = vmul.f32 %v5877, %v5296
      %v6006 = vmul.f32 %v5878, %v5298
      %v6007 = vmul.f32 %v5879, %v5300
      %v6008 = vmul.f32 %v5880, %v5302
      %v6009 = vmul.f32 %v5881, %v5304
      %v6010 = vmul.f32 %v5882, %v5306
      %v6011 = vmul.f32 %v5883, %v5308
      %v6012 = vmul.f32 %v5884, %v5310
      %v6013 = vmul.f32 %v5885, %v5312
      %v6014 = vmul.f32 %v5886, %v5314
      %v6015 = vmul.f32 %v5887, %v5316
      %v6016 = vmul.f32 %v5888, %v5318
      %v6017 = vmul.f32 %v5889, %v5320
      %v6018 = vmul.f32 %v5890, %v5322
      %v6019 = vmul.f32 %v5891, %v5324
      %v6020 = vmul.f32 %v5892, %v5326
      %v6021 = vmul.f32 %v5893, %v5328
      %v6022 = vmul.f32 %v5894, %v5330
      %v6023 = vmul.f32 %v5895, %v5332
      %v6024 = vmul.f32 %v5896, %v5334
      %v6025 = vmul.f32 %v5897, %v5336
      %v6026 = vmul.f32 %v5898, %v5338
      %v6027 = vmul.f32 %v5899, %v5340
      %v6028 = vmul.f32 %v5900, %v5342
      %v6029 = vmul.f32 %v5901, %v5344
      %v6030 = vmul.f32 %v5902, %v5346
      %v6031 = vmul.f32 %v5903, %v5348
      %v6032 = vmul.f32 %v5904, %v5350
      %v6033 = vmul.f32 %v5905, %v5352
      %v6034 = vmul.f32 %v5906, %v5354
      %v6035 = vmul.f32 %v5907, %v5356
      %v6036 = vmul.f32 %v5908, %v5358
      %v6037 = vmul.f32 %v5909, %v5360
      %v6038 = vmul.f32 %v5910, %v5362
      %v6039 = vmul.f32 %v5911, %v5364
      %v6040 = vmul.f32 %v5912, %v5366
      %v6041 = vmul.f32 %v5913, %v5368
      %v6042 = vmul.f32 %v5914, %v5370
      %v6043 = vmul.f32 %v5915, %v5372
      %v6044 = vmul.f32 %v5916, %v5374
      %v6045 = vmul.f32 %v5917, %v5376
      %v6046 = vmul.f32 %v5918, %v5378
      %v6047 = vmul.f32 %v5919, %v5380
      %v6048 = vmul.f32 %v5920, %v5382
      %v6049 = vmul.f32 %v5921, %v5384
      %v6050 = vmul.f32 %v5922, %v5386
      %v6051 = vmul.f32 %v5923, %v5388
      %v6052 = vmul.f32 %v5924, %v5390
      %v6053 = vmul.f32 %v5925, %v5392
      %v6054 = vmul.f32 %v5926, %v5394
      %v6055 = vmul.f32 %v5927, %v5396
      %v6056 = vmul.f32 %v5928, %v5398
      %v6057 = vmul.f32 %v5929, %v5400
      %v6058 = vmul.f32 %v5930, %v5402
      %v6059 = vmul.f32 %v5931, %v5404
      %v6060 = vmul.f32 %v5932, %v5406
      %v6061 = vmul.f32 %v5933, %v5408
      %v6062 = vmul.f32 %v5934, %v5410
      %v6063 = vmul.f32 %v5935, %v5412
      %v6064 = vmul.f32 %v5936, %v5414
      %v6065 = vmul.f32 %v5937, %v5416
      %v6066 = vmul.f32 %v5938, %v5418
      %v6067 = vmul.f32 %v5939, %v5420
      %v6068 = vmul.f32 %v5940, %v5422
      %v6069 = vmul.f32 %v5941, %v5424
      %v6070 = vmul.f32 %v5942, %v5426
      %v6071 = vmul.f32 %v5943, %v5428
      %v6072 = vmul.f32 %v5944, %v5430
      %v6073 = vmul.f32 %v5945, %v5432
      %v6074 = vmul.f32 %v5946, %v5434
      %v6075 = vadd.f32 %v5947, -0.28449672
      %v6076 = vadd.f32 %v5948, -0.28449672
      %v6077 = vadd.f32 %v5949, -0.28449672
      %v6078 = vadd.f32 %v5950, -0.28449672
      %v6079 = vadd.f32 %v5951, -0.28449672
      %v6080 = vadd.f32 %v5952, -0.28449672
      %v6081 = vadd.f32 %v5953, -0.28449672
      %v6082 = vadd.f32 %v5954, -0.28449672
      %v6083 = vadd.f32 %v5955, -0.28449672
      %v6084 = vadd.f32 %v5956, -0.28449672
      %v6085 = vadd.f32 %v5957, -0.28449672
      %v6086 = vadd.f32 %v5958, -0.28449672
      %v6087 = vadd.f32 %v5959, -0.28449672
      %v6088 = vadd.f32 %v5960, -0.28449672
      %v6089 = vadd.f32 %v5961, -0.28449672
      %v6090 = vadd.f32 %v5962, -0.28449672
      %v6091 = vadd.f32 %v5963, -0.28449672
      %v6092 = vadd.f32 %v5964, -0.28449672
      %v6093 = vadd.f32 %v5965, -0.28449672
      %v6094 = vadd.f32 %v5966, -0.28449672
      %v6095 = vadd.f32 %v5967, -0.28449672
      %v6096 = vadd.f32 %v5968, -0.28449672
      %v6097 = vadd.f32 %v5969, -0.28449672
      %v6098 = vadd.f32 %v5970, -0.28449672
      %v6099 = vadd.f32 %v5971, -0.28449672
      %v6100 = vadd.f32 %v5972, -0.28449672
      %v6101 = vadd.f32 %v5973, -0.28449672
      %v6102 = vadd.f32 %v5974, -0.28449672
      %v6103 = vadd.f32 %v5975, -0.28449672
      %v6104 = vadd.f32 %v5976, -0.28449672
      %v6105 = vadd.f32 %v5977, -0.28449672
      %v6106 = vadd.f32 %v5978, -0.28449672
      %v6107 = vadd.f32 %v5979, -0.28449672
      %v6108 = vadd.f32 %v5980, -0.28449672
      %v6109 = vadd.f32 %v5981, -0.28449672
      %v6110 = vadd.f32 %v5982, -0.28449672
      %v6111 = vadd.f32 %v5983, -0.28449672
      %v6112 = vadd.f32 %v5984, -0.28449672
      %v6113 = vadd.f32 %v5985, -0.28449672
      %v6114 = vadd.f32 %v5986, -0.28449672
      %v6115 = vadd.f32 %v5987, -0.28449672
      %v6116 = vadd.f32 %v5988, -0.28449672
      %v6117 = vadd.f32 %v5989, -0.28449672
      %v6118 = vadd.f32 %v5990, -0.28449672
      %v6119 = vadd.f32 %v5991, -0.28449672
      %v6120 = vadd.f32 %v5992, -0.28449672
      %v6121 = vadd.f32 %v5993, -0.28449672
      %v6122 = vadd.f32 %v5994, -0.28449672
      %v6123 = vadd.f32 %v5995, -0.28449672
      %v6124 = vadd.f32 %v5996, -0.28449672
      %v6125 = vadd.f32 %v5997, -0.28449672
      %v6126 = vadd.f32 %v5998, -0.28449672
      %v6127 = vadd.f32 %v5999, -0.28449672
      %v6128 = vadd.f32 %v6000, -0.28449672
      %v6129 = vadd.f32 %v6001, -0.28449672
      %v6130 = vadd.f32 %v6002, -0.28449672
      %v6131 = vadd.f32 %v6003, -0.28449672
      %v6132 = vadd.f32 %v6004, -0.28449672
      %v6133 = vadd.f32 %v6005, -0.28449672
      %v6134 = vadd.f32 %v6006, -0.28449672
      %v6135 = vadd.f32 %v6007, -0.28449672
      %v6136 = vadd.f32 %v6008, -0.28449672
      %v6137 = vadd.f32 %v6009, -0.28449672
      %v6138 = vadd.f32 %v6010, -0.28449672
      %v6139 = vadd.f32 %v6011, -0.28449672
      %v6140 = vadd.f32 %v6012, -0.28449672
      %v6141 = vadd.f32 %v6013, -0.28449672
      %v6142 = vadd.f32 %v6014, -0.28449672
      %v6143 = vadd.f32 %v6015, -0.28449672
      %v6144 = vadd.f32 %v6016, -0.28449672
      %v6145 = vadd.f32 %v6017, -0.28449672
      %v6146 = vadd.f32 %v6018, -0.28449672
      %v6147 = vadd.f32 %v6019, -0.28449672
      %v6148 = vadd.f32 %v6020, -0.28449672
      %v6149 = vadd.f32 %v6021, -0.28449672
      %v6150 = vadd.f32 %v6022, -0.28449672
      %v6151 = vadd.f32 %v6023, -0.28449672
      %v6152 = vadd.f32 %v6024, -0.28449672
      %v6153 = vadd.f32 %v6025, -0.28449672
      %v6154 = vadd.f32 %v6026, -0.28449672
      %v6155 = vadd.f32 %v6027, -0.28449672
      %v6156 = vadd.f32 %v6028, -0.28449672
      %v6157 = vadd.f32 %v6029, -0.28449672
      %v6158 = vadd.f32 %v6030, -0.28449672
      %v6159 = vadd.f32 %v6031, -0.28449672
      %v6160 = vadd.f32 %v6032, -0.28449672
      %v6161 = vadd.f32 %v6033, -0.28449672
      %v6162 = vadd.f32 %v6034, -0.28449672
      %v6163 = vadd.f32 %v6035, -0.28449672
      %v6164 = vadd.f32 %v6036, -0.28449672
      %v6165 = vadd.f32 %v6037, -0.28449672
      %v6166 = vadd.f32 %v6038, -0.28449672
      %v6167 = vadd.f32 %v6039, -0.28449672
      %v6168 = vadd.f32 %v6040, -0.28449672
      %v6169 = vadd.f32 %v6041, -0.28449672
      %v6170 = vadd.f32 %v6042, -0.28449672
      %v6171 = vadd.f32 %v6043, -0.28449672
      %v6172 = vadd.f32 %v6044, -0.28449672
      %v6173 = vadd.f32 %v6045, -0.28449672
      %v6174 = vadd.f32 %v6046, -0.28449672
      %v6175 = vadd.f32 %v6047, -0.28449672
      %v6176 = vadd.f32 %v6048, -0.28449672
      %v6177 = vadd.f32 %v6049, -0.28449672
      %v6178 = vadd.f32 %v6050, -0.28449672
      %v6179 = vadd.f32 %v6051, -0.28449672
      %v6180 = vadd.f32 %v6052, -0.28449672
      %v6181 = vadd.f32 %v6053, -0.28449672
      %v6182 = vadd.f32 %v6054, -0.28449672
      %v6183 = vadd.f32 %v6055, -0.28449672
      %v6184 = vadd.f32 %v6056, -0.28449672
      %v6185 = vadd.f32 %v6057, -0.28449672
      %v6186 = vadd.f32 %v6058, -0.28449672
      %v6187 = vadd.f32 %v6059, -0.28449672
      %v6188 = vadd.f32 %v6060, -0.28449672
      %v6189 = vadd.f32 %v6061, -0.28449672
      %v6190 = vadd.f32 %v6062, -0.28449672
      %v6191 = vadd.f32 %v6063, -0.28449672
      %v6192 = vadd.f32 %v6064, -0.28449672
      %v6193 = vadd.f32 %v6065, -0.28449672
      %v6194 = vadd.f32 %v6066, -0.28449672
      %v6195 = vadd.f32 %v6067, -0.28449672
      %v6196 = vadd.f32 %v6068, -0.28449672
      %v6197 = vadd.f32 %v6069, -0.28449672
      %v6198 = vadd.f32 %v6070, -0.28449672
      %v6199 = vadd.f32 %v6071, -0.28449672
      %v6200 = vadd.f32 %v6072, -0.28449672
      %v6201 = vadd.f32 %v6073, -0.28449672
      %v6202 = vadd.f32 %v6074, -0.28449672
      %v6203 = vmul.f32 %v6075, %v5180
      %v6204 = vmul.f32 %v6076, %v5182
      %v6205 = vmul.f32 %v6077, %v5184
      %v6206 = vmul.f32 %v6078, %v5186
      %v6207 = vmul.f32 %v6079, %v5188
      %v6208 = vmul.f32 %v6080, %v5190
      %v6209 = vmul.f32 %v6081, %v5192
      %v6210 = vmul.f32 %v6082, %v5194
      %v6211 = vmul.f32 %v6083, %v5196
      %v6212 = vmul.f32 %v6084, %v5198
      %v6213 = vmul.f32 %v6085, %v5200
      %v6214 = vmul.f32 %v6086, %v5202
      %v6215 = vmul.f32 %v6087, %v5204
      %v6216 = vmul.f32 %v6088, %v5206
      %v6217 = vmul.f32 %v6089, %v5208
      %v6218 = vmul.f32 %v6090, %v5210
      %v6219 = vmul.f32 %v6091, %v5212
      %v6220 = vmul.f32 %v6092, %v5214
      %v6221 = vmul.f32 %v6093, %v5216
      %v6222 = vmul.f32 %v6094, %v5218
      %v6223 = vmul.f32 %v6095, %v5220
      %v6224 = vmul.f32 %v6096, %v5222
      %v6225 = vmul.f32 %v6097, %v5224
      %v6226 = vmul.f32 %v6098, %v5226
      %v6227 = vmul.f32 %v6099, %v5228
      %v6228 = vmul.f32 %v6100, %v5230
      %v6229 = vmul.f32 %v6101, %v5232
      %v6230 = vmul.f32 %v6102, %v5234
      %v6231 = vmul.f32 %v6103, %v5236
      %v6232 = vmul.f32 %v6104, %v5238
      %v6233 = vmul.f32 %v6105, %v5240
      %v6234 = vmul.f32 %v6106, %v5242
      %v6235 = vmul.f32 %v6107, %v5244
      %v6236 = vmul.f32 %v6108, %v5246
      %v6237 = vmul.f32 %v6109, %v5248
      %v6238 = vmul.f32 %v6110, %v5250
      %v6239 = vmul.f32 %v6111, %v5252
      %v6240 = vmul.f32 %v6112, %v5254
      %v6241 = vmul.f32 %v6113, %v5256
      %v6242 = vmul.f32 %v6114, %v5258
      %v6243 = vmul.f32 %v6115, %v5260
      %v6244 = vmul.f32 %v6116, %v5262
      %v6245 = vmul.f32 %v6117, %v5264
      %v6246 = vmul.f32 %v6118, %v5266
      %v6247 = vmul.f32 %v6119, %v5268
      %v6248 = vmul.f32 %v6120, %v5270
      %v6249 = vmul.f32 %v6121, %v5272
      %v6250 = vmul.f32 %v6122, %v5274
      %v6251 = vmul.f32 %v6123, %v5276
      %v6252 = vmul.f32 %v6124, %v5278
      %v6253 = vmul.f32 %v6125, %v5280
      %v6254 = vmul.f32 %v6126, %v5282
      %v6255 = vmul.f32 %v6127, %v5284
      %v6256 = vmul.f32 %v6128, %v5286
      %v6257 = vmul.f32 %v6129, %v5288
      %v6258 = vmul.f32 %v6130, %v5290
      %v6259 = vmul.f32 %v6131, %v5292
      %v6260 = vmul.f32 %v6132, %v5294
      %v6261 = vmul.f32 %v6133, %v5296
      %v6262 = vmul.f32 %v6134, %v5298
      %v6263 = vmul.f32 %v6135, %v5300
      %v6264 = vmul.f32 %v6136, %v5302
      %v6265 = vmul.f32 %v6137, %v5304
      %v6266 = vmul.f32 %v6138, %v5306
      %v6267 = vmul.f32 %v6139, %v5308
      %v6268 = vmul.f32 %v6140, %v5310
      %v6269 = vmul.f32 %v6141, %v5312
      %v6270 = vmul.f32 %v6142, %v5314
      %v6271 = vmul.f32 %v6143, %v5316
      %v6272 = vmul.f32 %v6144, %v5318
      %v6273 = vmul.f32 %v6145, %v5320
      %v6274 = vmul.f32 %v6146, %v5322
      %v6275 = vmul.f32 %v6147, %v5324
      %v6276 = vmul.f32 %v6148, %v5326
      %v6277 = vmul.f32 %v6149, %v5328
      %v6278 = vmul.f32 %v6150, %v5330
      %v6279 = vmul.f32 %v6151, %v5332
      %v6280 = vmul.f32 %v6152, %v5334
      %v6281 = vmul.f32 %v6153, %v5336
      %v6282 = vmul.f32 %v6154, %v5338
      %v6283 = vmul.f32 %v6155, %v5340
      %v6284 = vmul.f32 %v6156, %v5342
      %v6285 = vmul.f32 %v6157, %v5344
      %v6286 = vmul.f32 %v6158, %v5346
      %v6287 = vmul.f32 %v6159, %v5348
      %v6288 = vmul.f32 %v6160, %v5350
      %v6289 = vmul.f32 %v6161, %v5352
      %v6290 = vmul.f32 %v6162, %v5354
      %v6291 = vmul.f32 %v6163, %v5356
      %v6292 = vmul.f32 %v6164, %v5358
      %v6293 = vmul.f32 %v6165, %v5360
      %v6294 = vmul.f32 %v6166, %v5362
      %v6295 = vmul.f32 %v6167, %v5364
      %v6296 = vmul.f32 %v6168, %v5366
      %v6297 = vmul.f32 %v6169, %v5368
      %v6298 = vmul.f32 %v6170, %v5370
      %v6299 = vmul.f32 %v6171, %v5372
      %v6300 = vmul.f32 %v6172, %v5374
      %v6301 = vmul.f32 %v6173, %v5376
      %v6302 = vmul.f32 %v6174, %v5378
      %v6303 = vmul.f32 %v6175, %v5380
      %v6304 = vmul.f32 %v6176, %v5382
      %v6305 = vmul.f32 %v6177, %v5384
      %v6306 = vmul.f32 %v6178, %v5386
      %v6307 = vmul.f32 %v6179, %v5388
      %v6308 = vmul.f32 %v6180, %v5390
      %v6309 = vmul.f32 %v6181, %v5392
      %v6310 = vmul.f32 %v6182, %v5394
      %v6311 = vmul.f32 %v6183, %v5396
      %v6312 = vmul.f32 %v6184, %v5398
      %v6313 = vmul.f32 %v6185, %v5400
      %v6314 = vmul.f32 %v6186, %v5402
      %v6315 = vmul.f32 %v6187, %v5404
      %v6316 = vmul.f32 %v6188, %v5406
      %v6317 = vmul.f32 %v6189, %v5408
      %v6318 = vmul.f32 %v6190, %v5410
      %v6319 = vmul.f32 %v6191, %v5412
      %v6320 = vmul.f32 %v6192, %v5414
      %v6321 = vmul.f32 %v6193, %v5416
      %v6322 = vmul.f32 %v6194, %v5418
      %v6323 = vmul.f32 %v6195, %v5420
      %v6324 = vmul.f32 %v6196, %v5422
      %v6325 = vmul.f32 %v6197, %v5424
      %v6326 = vmul.f32 %v6198, %v5426
      %v6327 = vmul.f32 %v6199, %v5428
      %v6328 = vmul.f32 %v6200, %v5430
      %v6329 = vmul.f32 %v6201, %v5432
      %v6330 = vmul.f32 %v6202, %v5434
      %v6331 = vadd.f32 %v6203, 0.2548296
      %v6332 = vadd.f32 %v6204, 0.2548296
      %v6333 = vadd.f32 %v6205, 0.2548296
      %v6334 = vadd.f32 %v6206, 0.2548296
      %v6335 = vadd.f32 %v6207, 0.2548296
      %v6336 = vadd.f32 %v6208, 0.2548296
      %v6337 = vadd.f32 %v6209, 0.2548296
      %v6338 = vadd.f32 %v6210, 0.2548296
      %v6339 = vadd.f32 %v6211, 0.2548296
      %v6340 = vadd.f32 %v6212, 0.2548296
      %v6341 = vadd.f32 %v6213, 0.2548296
      %v6342 = vadd.f32 %v6214, 0.2548296
      %v6343 = vadd.f32 %v6215, 0.2548296
      %v6344 = vadd.f32 %v6216, 0.2548296
      %v6345 = vadd.f32 %v6217, 0.2548296
      %v6346 = vadd.f32 %v6218, 0.2548296
      %v6347 = vadd.f32 %v6219, 0.2548296
      %v6348 = vadd.f32 %v6220, 0.2548296
      %v6349 = vadd.f32 %v6221, 0.2548296
      %v6350 = vadd.f32 %v6222, 0.2548296
      %v6351 = vadd.f32 %v6223, 0.2548296
      %v6352 = vadd.f32 %v6224, 0.2548296
      %v6353 = vadd.f32 %v6225, 0.2548296
      %v6354 = vadd.f32 %v6226, 0.2548296
      %v6355 = vadd.f32 %v6227, 0.2548296
      %v6356 = vadd.f32 %v6228, 0.2548296
      %v6357 = vadd.f32 %v6229, 0.2548296
      %v6358 = vadd.f32 %v6230, 0.2548296
      %v6359 = vadd.f32 %v6231, 0.2548296
      %v6360 = vadd.f32 %v6232, 0.2548296
      %v6361 = vadd.f32 %v6233, 0.2548296
      %v6362 = vadd.f32 %v6234, 0.2548296
      %v6363 = vadd.f32 %v6235, 0.2548296
      %v6364 = vadd.f32 %v6236, 0.2548296
      %v6365 = vadd.f32 %v6237, 0.2548296
      %v6366 = vadd.f32 %v6238, 0.2548296
      %v6367 = vadd.f32 %v6239, 0.2548296
      %v6368 = vadd.f32 %v6240, 0.2548296
      %v6369 = vadd.f32 %v6241, 0.2548296
      %v6370 = vadd.f32 %v6242, 0.2548296
      %v6371 = vadd.f32 %v6243, 0.2548296
      %v6372 = vadd.f32 %v6244, 0.2548296
      %v6373 = vadd.f32 %v6245, 0.2548296
      %v6374 = vadd.f32 %v6246, 0.2548296
      %v6375 = vadd.f32 %v6247, 0.2548296
      %v6376 = vadd.f32 %v6248, 0.2548296
      %v6377 = vadd.f32 %v6249, 0.2548296
      %v6378 = vadd.f32 %v6250, 0.2548296
      %v6379 = vadd.f32 %v6251, 0.2548296
      %v6380 = vadd.f32 %v6252, 0.2548296
      %v6381 = vadd.f32 %v6253, 0.2548296
      %v6382 = vadd.f32 %v6254, 0.2548296
      %v6383 = vadd.f32 %v6255, 0.2548296
      %v6384 = vadd.f32 %v6256, 0.2548296
      %v6385 = vadd.f32 %v6257, 0.2548296
      %v6386 = vadd.f32 %v6258, 0.2548296
      %v6387 = vadd.f32 %v6259, 0.2548296
      %v6388 = vadd.f32 %v6260, 0.2548296
      %v6389 = vadd.f32 %v6261, 0.2548296
      %v6390 = vadd.f32 %v6262, 0.2548296
      %v6391 = vadd.f32 %v6263, 0.2548296
      %v6392 = vadd.f32 %v6264, 0.2548296
      %v6393 = vadd.f32 %v6265, 0.2548296
      %v6394 = vadd.f32 %v6266, 0.2548296
      %v6395 = vadd.f32 %v6267, 0.2548296
      %v6396 = vadd.f32 %v6268, 0.2548296
      %v6397 = vadd.f32 %v6269, 0.2548296
      %v6398 = vadd.f32 %v6270, 0.2548296
      %v6399 = vadd.f32 %v6271, 0.2548296
      %v6400 = vadd.f32 %v6272, 0.2548296
      %v6401 = vadd.f32 %v6273, 0.2548296
      %v6402 = vadd.f32 %v6274, 0.2548296
      %v6403 = vadd.f32 %v6275, 0.2548296
      %v6404 = vadd.f32 %v6276, 0.2548296
      %v6405 = vadd.f32 %v6277, 0.2548296
      %v6406 = vadd.f32 %v6278, 0.2548296
      %v6407 = vadd.f32 %v6279, 0.2548296
      %v6408 = vadd.f32 %v6280, 0.2548296
      %v6409 = vadd.f32 %v6281, 0.2548296
      %v6410 = vadd.f32 %v6282, 0.2548296
      %v6411 = vadd.f32 %v6283, 0.2548296
      %v6412 = vadd.f32 %v6284, 0.2548296
      %v6413 = vadd.f32 %v6285, 0.2548296
      %v6414 = vadd.f32 %v6286, 0.2548296
      %v6415 = vadd.f32 %v6287, 0.2548296
      %v6416 = vadd.f32 %v6288, 0.2548296
      %v6417 = vadd.f32 %v6289, 0.2548296
      %v6418 = vadd.f32 %v6290, 0.2548296
      %v6419 = vadd.f32 %v6291, 0.2548296
      %v6420 = vadd.f32 %v6292, 0.2548296
      %v6421 = vadd.f32 %v6293, 0.2548296
      %v6422 = vadd.f32 %v6294, 0.2548296
      %v6423 = vadd.f32 %v6295, 0.2548296
      %v6424 = vadd.f32 %v6296, 0.2548296
      %v6425 = vadd.f32 %v6297, 0.2548296
      %v6426 = vadd.f32 %v6298, 0.2548296
      %v6427 = vadd.f32 %v6299, 0.2548296
      %v6428 = vadd.f32 %v6300, 0.2548296
      %v6429 = vadd.f32 %v6301, 0.2548296
      %v6430 = vadd.f32 %v6302, 0.2548296
      %v6431 = vadd.f32 %v6303, 0.2548296
      %v6432 = vadd.f32 %v6304, 0.2548296
      %v6433 = vadd.f32 %v6305, 0.2548296
      %v6434 = vadd.f32 %v6306, 0.2548296
      %v6435 = vadd.f32 %v6307, 0.2548296
      %v6436 = vadd.f32 %v6308, 0.2548296
      %v6437 = vadd.f32 %v6309, 0.2548296
      %v6438 = vadd.f32 %v6310, 0.2548296
      %v6439 = vadd.f32 %v6311, 0.2548296
      %v6440 = vadd.f32 %v6312, 0.2548296
      %v6441 = vadd.f32 %v6313, 0.2548296
      %v6442 = vadd.f32 %v6314, 0.2548296
      %v6443 = vadd.f32 %v6315, 0.2548296
      %v6444 = vadd.f32 %v6316, 0.2548296
      %v6445 = vadd.f32 %v6317, 0.2548296
      %v6446 = vadd.f32 %v6318, 0.2548296
      %v6447 = vadd.f32 %v6319, 0.2548296
      %v6448 = vadd.f32 %v6320, 0.2548296
      %v6449 = vadd.f32 %v6321, 0.2548296
      %v6450 = vadd.f32 %v6322, 0.2548296
      %v6451 = vadd.f32 %v6323, 0.2548296
      %v6452 = vadd.f32 %v6324, 0.2548296
      %v6453 = vadd.f32 %v6325, 0.2548296
      %v6454 = vadd.f32 %v6326, 0.2548296
      %v6455 = vadd.f32 %v6327, 0.2548296
      %v6456 = vadd.f32 %v6328, 0.2548296
      %v6457 = vadd.f32 %v6329, 0.2548296
      %v6458 = vadd.f32 %v6330, 0.2548296
      %v6459 = vmul.f32 %v6331, %v5180
      %v6460 = vmul.f32 %v6332, %v5182
      %v6461 = vmul.f32 %v6333, %v5184
      %v6462 = vmul.f32 %v6334, %v5186
      %v6463 = vmul.f32 %v6335, %v5188
      %v6464 = vmul.f32 %v6336, %v5190
      %v6465 = vmul.f32 %v6337, %v5192
      %v6466 = vmul.f32 %v6338, %v5194
      %v6467 = vmul.f32 %v6339, %v5196
      %v6468 = vmul.f32 %v6340, %v5198
      %v6469 = vmul.f32 %v6341, %v5200
      %v6470 = vmul.f32 %v6342, %v5202
      %v6471 = vmul.f32 %v6343, %v5204
      %v6472 = vmul.f32 %v6344, %v5206
      %v6473 = vmul.f32 %v6345, %v5208
      %v6474 = vmul.f32 %v6346, %v5210
      %v6475 = vmul.f32 %v6347, %v5212
      %v6476 = vmul.f32 %v6348, %v5214
      %v6477 = vmul.f32 %v6349, %v5216
      %v6478 = vmul.f32 %v6350, %v5218
      %v6479 = vmul.f32 %v6351, %v5220
      %v6480 = vmul.f32 %v6352, %v5222
      %v6481 = vmul.f32 %v6353, %v5224
      %v6482 = vmul.f32 %v6354, %v5226
      %v6483 = vmul.f32 %v6355, %v5228
      %v6484 = vmul.f32 %v6356, %v5230
      %v6485 = vmul.f32 %v6357, %v5232
      %v6486 = vmul.f32 %v6358, %v5234
      %v6487 = vmul.f32 %v6359, %v5236
      %v6488 = vmul.f32 %v6360, %v5238
      %v6489 = vmul.f32 %v6361, %v5240
      %v6490 = vmul.f32 %v6362, %v5242
      %v6491 = vmul.f32 %v6363, %v5244
      %v6492 = vmul.f32 %v6364, %v5246
      %v6493 = vmul.f32 %v6365, %v5248
      %v6494 = vmul.f32 %v6366, %v5250
      %v6495 = vmul.f32 %v6367, %v5252
      %v6496 = vmul.f32 %v6368, %v5254
      %v6497 = vmul.f32 %v6369, %v5256
      %v6498 = vmul.f32 %v6370, %v5258
      %v6499 = vmul.f32 %v6371, %v5260
      %v6500 = vmul.f32 %v6372, %v5262
      %v6501 = vmul.f32 %v6373, %v5264
      %v6502 = vmul.f32 %v6374, %v5266
      %v6503 = vmul.f32 %v6375, %v5268
      %v6504 = vmul.f32 %v6376, %v5270
      %v6505 = vmul.f32 %v6377, %v5272
      %v6506 = vmul.f32 %v6378, %v5274
      %v6507 = vmul.f32 %v6379, %v5276
      %v6508 = vmul.f32 %v6380, %v5278
      %v6509 = vmul.f32 %v6381, %v5280
      %v6510 = vmul.f32 %v6382, %v5282
      %v6511 = vmul.f32 %v6383, %v5284
      %v6512 = vmul.f32 %v6384, %v5286
      %v6513 = vmul.f32 %v6385, %v5288
      %v6514 = vmul.f32 %v6386, %v5290
      %v6515 = vmul.f32 %v6387, %v5292
      %v6516 = vmul.f32 %v6388, %v5294
      %v6517 = vmul.f32 %v6389, %v5296
      %v6518 = vmul.f32 %v6390, %v5298
      %v6519 = vmul.f32 %v6391, %v5300
      %v6520 = vmul.f32 %v6392, %v5302
      %v6521 = vmul.f32 %v6393, %v5304
      %v6522 = vmul.f32 %v6394, %v5306
      %v6523 = vmul.f32 %v6395, %v5308
      %v6524 = vmul.f32 %v6396, %v5310
      %v6525 = vmul.f32 %v6397, %v5312
      %v6526 = vmul.f32 %v6398, %v5314
      %v6527 = vmul.f32 %v6399, %v5316
      %v6528 = vmul.f32 %v6400, %v5318
      %v6529 = vmul.f32 %v6401, %v5320
      %v6530 = vmul.f32 %v6402, %v5322
      %v6531 = vmul.f32 %v6403, %v5324
      %v6532 = vmul.f32 %v6404, %v5326
      %v6533 = vmul.f32 %v6405, %v5328
      %v6534 = vmul.f32 %v6406, %v5330
      %v6535 = vmul.f32 %v6407, %v5332
      %v6536 = vmul.f32 %v6408, %v5334
      %v6537 = vmul.f32 %v6409, %v5336
      %v6538 = vmul.f32 %v6410, %v5338
      %v6539 = vmul.f32 %v6411, %v5340
      %v6540 = vmul.f32 %v6412, %v5342
      %v6541 = vmul.f32 %v6413, %v5344
      %v6542 = vmul.f32 %v6414, %v5346
      %v6543 = vmul.f32 %v6415, %v5348
      %v6544 = vmul.f32 %v6416, %v5350
      %v6545 = vmul.f32 %v6417, %v5352
      %v6546 = vmul.f32 %v6418, %v5354
      %v6547 = vmul.f32 %v6419, %v5356
      %v6548 = vmul.f32 %v6420, %v5358
      %v6549 = vmul.f32 %v6421, %v5360
      %v6550 = vmul.f32 %v6422, %v5362
      %v6551 = vmul.f32 %v6423, %v5364
      %v6552 = vmul.f32 %v6424, %v5366
      %v6553 = vmul.f32 %v6425, %v5368
      %v6554 = vmul.f32 %v6426, %v5370
      %v6555 = vmul.f32 %v6427, %v5372
      %v6556 = vmul.f32 %v6428, %v5374
      %v6557 = vmul.f32 %v6429, %v5376
      %v6558 = vmul.f32 %v6430, %v5378
      %v6559 = vmul.f32 %v6431, %v5380
      %v6560 = vmul.f32 %v6432, %v5382
      %v6561 = vmul.f32 %v6433, %v5384
      %v6562 = vmul.f32 %v6434, %v5386
      %v6563 = vmul.f32 %v6435, %v5388
      %v6564 = vmul.f32 %v6436, %v5390
      %v6565 = vmul.f32 %v6437, %v5392
      %v6566 = vmul.f32 %v6438, %v5394
      %v6567 = vmul.f32 %v6439, %v5396
      %v6568 = vmul.f32 %v6440, %v5398
      %v6569 = vmul.f32 %v6441, %v5400
      %v6570 = vmul.f32 %v6442, %v5402
      %v6571 = vmul.f32 %v6443, %v5404
      %v6572 = vmul.f32 %v6444, %v5406
      %v6573 = vmul.f32 %v6445, %v5408
      %v6574 = vmul.f32 %v6446, %v5410
      %v6575 = vmul.f32 %v6447, %v5412
      %v6576 = vmul.f32 %v6448, %v5414
      %v6577 = vmul.f32 %v6449, %v5416
      %v6578 = vmul.f32 %v6450, %v5418
      %v6579 = vmul.f32 %v6451, %v5420
      %v6580 = vmul.f32 %v6452, %v5422
      %v6581 = vmul.f32 %v6453, %v5424
      %v6582 = vmul.f32 %v6454, %v5426
      %v6583 = vmul.f32 %v6455, %v5428
      %v6584 = vmul.f32 %v6456, %v5430
      %v6585 = vmul.f32 %v6457, %v5432
      %v6586 = vmul.f32 %v6458, %v5434
      %v6587 = vsub.f32 0.0, %v4795
      %v6588 = vsub.f32 0.0, %v4796
      %v6589 = vsub.f32 0.0, %v4797
      %v6590 = vsub.f32 0.0, %v4798
      %v6591 = vsub.f32 0.0, %v4799
      %v6592 = vsub.f32 0.0, %v4800
      %v6593 = vsub.f32 0.0, %v4801
      %v6594 = vsub.f32 0.0, %v4802
      %v6595 = vsub.f32 0.0, %v4803
      %v6596 = vsub.f32 0.0, %v4804
      %v6597 = vsub.f32 0.0, %v4805
      %v6598 = vsub.f32 0.0, %v4806
      %v6599 = vsub.f32 0.0, %v4807
      %v6600 = vsub.f32 0.0, %v4808
      %v6601 = vsub.f32 0.0, %v4809
      %v6602 = vsub.f32 0.0, %v4810
      %v6603 = vsub.f32 0.0, %v4811
      %v6604 = vsub.f32 0.0, %v4812
      %v6605 = vsub.f32 0.0, %v4813
      %v6606 = vsub.f32 0.0, %v4814
      %v6607 = vsub.f32 0.0, %v4815
      %v6608 = vsub.f32 0.0, %v4816
      %v6609 = vsub.f32 0.0, %v4817
      %v6610 = vsub.f32 0.0, %v4818
      %v6611 = vsub.f32 0.0, %v4819
      %v6612 = vsub.f32 0.0, %v4820
      %v6613 = vsub.f32 0.0, %v4821
      %v6614 = vsub.f32 0.0, %v4822
      %v6615 = vsub.f32 0.0, %v4823
      %v6616 = vsub.f32 0.0, %v4824
      %v6617 = vsub.f32 0.0, %v4825
      %v6618 = vsub.f32 0.0, %v4826
      %v6619 = vsub.f32 0.0, %v4827
      %v6620 = vsub.f32 0.0, %v4828
      %v6621 = vsub.f32 0.0, %v4829
      %v6622 = vsub.f32 0.0, %v4830
      %v6623 = vsub.f32 0.0, %v4831
      %v6624 = vsub.f32 0.0, %v4832
      %v6625 = vsub.f32 0.0, %v4833
      %v6626 = vsub.f32 0.0, %v4834
      %v6627 = vsub.f32 0.0, %v4835
      %v6628 = vsub.f32 0.0, %v4836
      %v6629 = vsub.f32 0.0, %v4837
      %v6630 = vsub.f32 0.0, %v4838
      %v6631 = vsub.f32 0.0, %v4839
      %v6632 = vsub.f32 0.0, %v4840
      %v6633 = vsub.f32 0.0, %v4841
      %v6634 = vsub.f32 0.0, %v4842
      %v6635 = vsub.f32 0.0, %v4843
      %v6636 = vsub.f32 0.0, %v4844
      %v6637 = vsub.f32 0.0, %v4845
      %v6638 = vsub.f32 0.0, %v4846
      %v6639 = vsub.f32 0.0, %v4847
      %v6640 = vsub.f32 0.0, %v4848
      %v6641 = vsub.f32 0.0, %v4849
      %v6642 = vsub.f32 0.0, %v4850
      %v6643 = vsub.f32 0.0, %v4851
      %v6644 = vsub.f32 0.0, %v4852
      %v6645 = vsub.f32 0.0, %v4853
      %v6646 = vsub.f32 0.0, %v4854
      %v6647 = vsub.f32 0.0, %v4855
      %v6648 = vsub.f32 0.0, %v4856
      %v6649 = vsub.f32 0.0, %v4857
      %v6650 = vsub.f32 0.0, %v4858
      %v6651 = vsub.f32 0.0, %v4859
      %v6652 = vsub.f32 0.0, %v4860
      %v6653 = vsub.f32 0.0, %v4861
      %v6654 = vsub.f32 0.0, %v4862
      %v6655 = vsub.f32 0.0, %v4863
      %v6656 = vsub.f32 0.0, %v4864
      %v6657 = vsub.f32 0.0, %v4865
      %v6658 = vsub.f32 0.0, %v4866
      %v6659 = vsub.f32 0.0, %v4867
      %v6660 = vsub.f32 0.0, %v4868
      %v6661 = vsub.f32 0.0, %v4869
      %v6662 = vsub.f32 0.0, %v4870
      %v6663 = vsub.f32 0.0, %v4871
      %v6664 = vsub.f32 0.0, %v4872
      %v6665 = vsub.f32 0.0, %v4873
      %v6666 = vsub.f32 0.0, %v4874
      %v6667 = vsub.f32 0.0, %v4875
      %v6668 = vsub.f32 0.0, %v4876
      %v6669 = vsub.f32 0.0, %v4877
      %v6670 = vsub.f32 0.0, %v4878
      %v6671 = vsub.f32 0.0, %v4879
      %v6672 = vsub.f32 0.0, %v4880
      %v6673 = vsub.f32 0.0, %v4881
      %v6674 = vsub.f32 0.0, %v4882
      %v6675 = vsub.f32 0.0, %v4883
      %v6676 = vsub.f32 0.0, %v4884
      %v6677 = vsub.f32 0.0, %v4885
      %v6678 = vsub.f32 0.0, %v4886
      %v6679 = vsub.f32 0.0, %v4887
      %v6680 = vsub.f32 0.0, %v4888
      %v6681 = vsub.f32 0.0, %v4889
      %v6682 = vsub.f32 0.0, %v4890
      %v6683 = vsub.f32 0.0, %v4891
      %v6684 = vsub.f32 0.0, %v4892
      %v6685 = vsub.f32 0.0, %v4893
      %v6686 = vsub.f32 0.0, %v4894
      %v6687 = vsub.f32 0.0, %v4895
      %v6688 = vsub.f32 0.0, %v4896
      %v6689 = vsub.f32 0.0, %v4897
      %v6690 = vsub.f32 0.0, %v4898
      %v6691 = vsub.f32 0.0, %v4899
      %v6692 = vsub.f32 0.0, %v4900
      %v6693 = vsub.f32 0.0, %v4901
      %v6694 = vsub.f32 0.0, %v4902
      %v6695 = vsub.f32 0.0, %v4903
      %v6696 = vsub.f32 0.0, %v4904
      %v6697 = vsub.f32 0.0, %v4905
      %v6698 = vsub.f32 0.0, %v4906
      %v6699 = vsub.f32 0.0, %v4907
      %v6700 = vsub.f32 0.0, %v4908
      %v6701 = vsub.f32 0.0, %v4909
      %v6702 = vsub.f32 0.0, %v4910
      %v6703 = vsub.f32 0.0, %v4911
      %v6704 = vsub.f32 0.0, %v4912
      %v6705 = vsub.f32 0.0, %v4913
      %v6706 = vsub.f32 0.0, %v4914
      %v6707 = vsub.f32 0.0, %v4915
      %v6708 = vsub.f32 0.0, %v4916
      %v6709 = vsub.f32 0.0, %v4917
      %v6710 = vsub.f32 0.0, %v4918
      %v6711 = vsub.f32 0.0, %v4919
      %v6712 = vsub.f32 0.0, %v4920
      %v6713 = vsub.f32 0.0, %v4921
      %v6714 = vsub.f32 0.0, %v4922
      %v6715 = vmul.f32 %v6587, %v4795
      %v6716 = vmul.f32 %v6588, %v4796
      %v6717 = vmul.f32 %v6589, %v4797
      %v6718 = vmul.f32 %v6590, %v4798
      %v6719 = vmul.f32 %v6591, %v4799
      %v6720 = vmul.f32 %v6592, %v4800
      %v6721 = vmul.f32 %v6593, %v4801
      %v6722 = vmul.f32 %v6594, %v4802
      %v6723 = vmul.f32 %v6595, %v4803
      %v6724 = vmul.f32 %v6596, %v4804
      %v6725 = vmul.f32 %v6597, %v4805
      %v6726 = vmul.f32 %v6598, %v4806
      %v6727 = vmul.f32 %v6599, %v4807
      %v6728 = vmul.f32 %v6600, %v4808
      %v6729 = vmul.f32 %v6601, %v4809
      %v6730 = vmul.f32 %v6602, %v4810
      %v6731 = vmul.f32 %v6603, %v4811
      %v6732 = vmul.f32 %v6604, %v4812
      %v6733 = vmul.f32 %v6605, %v4813
      %v6734 = vmul.f32 %v6606, %v4814
      %v6735 = vmul.f32 %v6607, %v4815
      %v6736 = vmul.f32 %v6608, %v4816
      %v6737 = vmul.f32 %v6609, %v4817
      %v6738 = vmul.f32 %v6610, %v4818
      %v6739 = vmul.f32 %v6611, %v4819
      %v6740 = vmul.f32 %v6612, %v4820
      %v6741 = vmul.f32 %v6613, %v4821
      %v6742 = vmul.f32 %v6614, %v4822
      %v6743 = vmul.f32 %v6615, %v4823
      %v6744 = vmul.f32 %v6616, %v4824
      %v6745 = vmul.f32 %v6617, %v4825
      %v6746 = vmul.f32 %v6618, %v4826
      %v6747 = vmul.f32 %v6619, %v4827
      %v6748 = vmul.f32 %v6620, %v4828
      %v6749 = vmul.f32 %v6621, %v4829
      %v6750 = vmul.f32 %v6622, %v4830
      %v6751 = vmul.f32 %v6623, %v4831
      %v6752 = vmul.f32 %v6624, %v4832
      %v6753 = vmul.f32 %v6625, %v4833
      %v6754 = vmul.f32 %v6626, %v4834
      %v6755 = vmul.f32 %v6627, %v4835
      %v6756 = vmul.f32 %v6628, %v4836
      %v6757 = vmul.f32 %v6629, %v4837
      %v6758 = vmul.f32 %v6630, %v4838
      %v6759 = vmul.f32 %v6631, %v4839
      %v6760 = vmul.f32 %v6632, %v4840
      %v6761 = vmul.f32 %v6633, %v4841
      %v6762 = vmul.f32 %v6634, %v4842
      %v6763 = vmul.f32 %v6635, %v4843
      %v6764 = vmul.f32 %v6636, %v4844
      %v6765 = vmul.f32 %v6637, %v4845
      %v6766 = vmul.f32 %v6638, %v4846
      %v6767 = vmul.f32 %v6639, %v4847
      %v6768 = vmul.f32 %v6640, %v4848
      %v6769 = vmul.f32 %v6641, %v4849
      %v6770 = vmul.f32 %v6642, %v4850
      %v6771 = vmul.f32 %v6643, %v4851
      %v6772 = vmul.f32 %v6644, %v4852
      %v6773 = vmul.f32 %v6645, %v4853
      %v6774 = vmul.f32 %v6646, %v4854
      %v6775 = vmul.f32 %v6647, %v4855
      %v6776 = vmul.f32 %v6648, %v4856
      %v6777 = vmul.f32 %v6649, %v4857
      %v6778 = vmul.f32 %v6650, %v4858
      %v6779 = vmul.f32 %v6651, %v4859
      %v6780 = vmul.f32 %v6652, %v4860
      %v6781 = vmul.f32 %v6653, %v4861
      %v6782 = vmul.f32 %v6654, %v4862
      %v6783 = vmul.f32 %v6655, %v4863
      %v6784 = vmul.f32 %v6656, %v4864
      %v6785 = vmul.f32 %v6657, %v4865
      %v6786 = vmul.f32 %v6658, %v4866
      %v6787 = vmul.f32 %v6659, %v4867
      %v6788 = vmul.f32 %v6660, %v4868
      %v6789 = vmul.f32 %v6661, %v4869
      %v6790 = vmul.f32 %v6662, %v4870
      %v6791 = vmul.f32 %v6663, %v4871
      %v6792 = vmul.f32 %v6664, %v4872
      %v6793 = vmul.f32 %v6665, %v4873
      %v6794 = vmul.f32 %v6666, %v4874
      %v6795 = vmul.f32 %v6667, %v4875
      %v6796 = vmul.f32 %v6668, %v4876
      %v6797 = vmul.f32 %v6669, %v4877
      %v6798 = vmul.f32 %v6670, %v4878
      %v6799 = vmul.f32 %v6671, %v4879
      %v6800 = vmul.f32 %v6672, %v4880
      %v6801 = vmul.f32 %v6673, %v4881
      %v6802 = vmul.f32 %v6674, %v4882
      %v6803 = vmul.f32 %v6675, %v4883
      %v6804 = vmul.f32 %v6676, %v4884
      %v6805 = vmul.f32 %v6677, %v4885
      %v6806 = vmul.f32 %v6678, %v4886
      %v6807 = vmul.f32 %v6679, %v4887
      %v6808 = vmul.f32 %v6680, %v4888
      %v6809 = vmul.f32 %v6681, %v4889
      %v6810 = vmul.f32 %v6682, %v4890
      %v6811 = vmul.f32 %v6683, %v4891
      %v6812 = vmul.f32 %v6684, %v4892
      %v6813 = vmul.f32 %v6685, %v4893
      %v6814 = vmul.f32 %v6686, %v4894
      %v6815 = vmul.f32 %v6687, %v4895
      %v6816 = vmul.f32 %v6688, %v4896
      %v6817 = vmul.f32 %v6689, %v4897
      %v6818 = vmul.f32 %v6690, %v4898
      %v6819 = vmul.f32 %v6691, %v4899
      %v6820 = vmul.f32 %v6692, %v4900
      %v6821 = vmul.f32 %v6693, %v4901
      %v6822 = vmul.f32 %v6694, %v4902
      %v6823 = vmul.f32 %v6695, %v4903
      %v6824 = vmul.f32 %v6696, %v4904
      %v6825 = vmul.f32 %v6697, %v4905
      %v6826 = vmul.f32 %v6698, %v4906
      %v6827 = vmul.f32 %v6699, %v4907
      %v6828 = vmul.f32 %v6700, %v4908
      %v6829 = vmul.f32 %v6701, %v4909
      %v6830 = vmul.f32 %v6702, %v4910
      %v6831 = vmul.f32 %v6703, %v4911
      %v6832 = vmul.f32 %v6704, %v4912
      %v6833 = vmul.f32 %v6705, %v4913
      %v6834 = vmul.f32 %v6706, %v4914
      %v6835 = vmul.f32 %v6707, %v4915
      %v6836 = vmul.f32 %v6708, %v4916
      %v6837 = vmul.f32 %v6709, %v4917
      %v6838 = vmul.f32 %v6710, %v4918
      %v6839 = vmul.f32 %v6711, %v4919
      %v6840 = vmul.f32 %v6712, %v4920
      %v6841 = vmul.f32 %v6713, %v4921
      %v6842 = vmul.f32 %v6714, %v4922
      %v6843 = vmul.f32 %v6715, 1.442695
      %v6844 = vpow.pop %v6843
      %v6845 = vmul.f32 %v6716, 1.442695
      %v6846 = vpow.pop %v6845
      %v6847 = vmul.f32 %v6717, 1.442695
      %v6848 = vpow.pop %v6847
      %v6849 = vmul.f32 %v6718, 1.442695
      %v6850 = vpow.pop %v6849
      %v6851 = vmul.f32 %v6719, 1.442695
      %v6852 = vpow.pop %v6851
      %v6853 = vmul.f32 %v6720, 1.442695
      %v6854 = vpow.pop %v6853
      %v6855 = vmul.f32 %v6721, 1.442695
      %v6856 = vpow.pop %v6855
      %v6857 = vmul.f32 %v6722, 1.442695
      %v6858 = vpow.pop %v6857
      %v6859 = vmul.f32 %v6723, 1.442695
      %v6860 = vpow.pop %v6859
      %v6861 = vmul.f32 %v6724, 1.442695
      %v6862 = vpow.pop %v6861
      %v6863 = vmul.f32 %v6725, 1.442695
      %v6864 = vpow.pop %v6863
      %v6865 = vmul.f32 %v6726, 1.442695
      %v6866 = vpow.pop %v6865
      %v6867 = vmul.f32 %v6727, 1.442695
      %v6868 = vpow.pop %v6867
      %v6869 = vmul.f32 %v6728, 1.442695
      %v6870 = vpow.pop %v6869
      %v6871 = vmul.f32 %v6729, 1.442695
      %v6872 = vpow.pop %v6871
      %v6873 = vmul.f32 %v6730, 1.442695
      %v6874 = vpow.pop %v6873
      %v6875 = vmul.f32 %v6731, 1.442695
      %v6876 = vpow.pop %v6875
      %v6877 = vmul.f32 %v6732, 1.442695
      %v6878 = vpow.pop %v6877
      %v6879 = vmul.f32 %v6733, 1.442695
      %v6880 = vpow.pop %v6879
      %v6881 = vmul.f32 %v6734, 1.442695
      %v6882 = vpow.pop %v6881
      %v6883 = vmul.f32 %v6735, 1.442695
      %v6884 = vpow.pop %v6883
      %v6885 = vmul.f32 %v6736, 1.442695
      %v6886 = vpow.pop %v6885
      %v6887 = vmul.f32 %v6737, 1.442695
      %v6888 = vpow.pop %v6887
      %v6889 = vmul.f32 %v6738, 1.442695
      %v6890 = vpow.pop %v6889
      %v6891 = vmul.f32 %v6739, 1.442695
      %v6892 = vpow.pop %v6891
      %v6893 = vmul.f32 %v6740, 1.442695
      %v6894 = vpow.pop %v6893
      %v6895 = vmul.f32 %v6741, 1.442695
      %v6896 = vpow.pop %v6895
      %v6897 = vmul.f32 %v6742, 1.442695
      %v6898 = vpow.pop %v6897
      %v6899 = vmul.f32 %v6743, 1.442695
      %v6900 = vpow.pop %v6899
      %v6901 = vmul.f32 %v6744, 1.442695
      %v6902 = vpow.pop %v6901
      %v6903 = vmul.f32 %v6745, 1.442695
      %v6904 = vpow.pop %v6903
      %v6905 = vmul.f32 %v6746, 1.442695
      %v6906 = vpow.pop %v6905
      %v6907 = vmul.f32 %v6747, 1.442695
      %v6908 = vpow.pop %v6907
      %v6909 = vmul.f32 %v6748, 1.442695
      %v6910 = vpow.pop %v6909
      %v6911 = vmul.f32 %v6749, 1.442695
      %v6912 = vpow.pop %v6911
      %v6913 = vmul.f32 %v6750, 1.442695
      %v6914 = vpow.pop %v6913
      %v6915 = vmul.f32 %v6751, 1.442695
      %v6916 = vpow.pop %v6915
      %v6917 = vmul.f32 %v6752, 1.442695
      %v6918 = vpow.pop %v6917
      %v6919 = vmul.f32 %v6753, 1.442695
      %v6920 = vpow.pop %v6919
      %v6921 = vmul.f32 %v6754, 1.442695
      %v6922 = vpow.pop %v6921
      %v6923 = vmul.f32 %v6755, 1.442695
      %v6924 = vpow.pop %v6923
      %v6925 = vmul.f32 %v6756, 1.442695
      %v6926 = vpow.pop %v6925
      %v6927 = vmul.f32 %v6757, 1.442695
      %v6928 = vpow.pop %v6927
      %v6929 = vmul.f32 %v6758, 1.442695
      %v6930 = vpow.pop %v6929
      %v6931 = vmul.f32 %v6759, 1.442695
      %v6932 = vpow.pop %v6931
      %v6933 = vmul.f32 %v6760, 1.442695
      %v6934 = vpow.pop %v6933
      %v6935 = vmul.f32 %v6761, 1.442695
      %v6936 = vpow.pop %v6935
      %v6937 = vmul.f32 %v6762, 1.442695
      %v6938 = vpow.pop %v6937
      %v6939 = vmul.f32 %v6763, 1.442695
      %v6940 = vpow.pop %v6939
      %v6941 = vmul.f32 %v6764, 1.442695
      %v6942 = vpow.pop %v6941
      %v6943 = vmul.f32 %v6765, 1.442695
      %v6944 = vpow.pop %v6943
      %v6945 = vmul.f32 %v6766, 1.442695
      %v6946 = vpow.pop %v6945
      %v6947 = vmul.f32 %v6767, 1.442695
      %v6948 = vpow.pop %v6947
      %v6949 = vmul.f32 %v6768, 1.442695
      %v6950 = vpow.pop %v6949
      %v6951 = vmul.f32 %v6769, 1.442695
      %v6952 = vpow.pop %v6951
      %v6953 = vmul.f32 %v6770, 1.442695
      %v6954 = vpow.pop %v6953
      %v6955 = vmul.f32 %v6771, 1.442695
      %v6956 = vpow.pop %v6955
      %v6957 = vmul.f32 %v6772, 1.442695
      %v6958 = vpow.pop %v6957
      %v6959 = vmul.f32 %v6773, 1.442695
      %v6960 = vpow.pop %v6959
      %v6961 = vmul.f32 %v6774, 1.442695
      %v6962 = vpow.pop %v6961
      %v6963 = vmul.f32 %v6775, 1.442695
      %v6964 = vpow.pop %v6963
      %v6965 = vmul.f32 %v6776, 1.442695
      %v6966 = vpow.pop %v6965
      %v6967 = vmul.f32 %v6777, 1.442695
      %v6968 = vpow.pop %v6967
      %v6969 = vmul.f32 %v6778, 1.442695
      %v6970 = vpow.pop %v6969
      %v6971 = vmul.f32 %v6779, 1.442695
      %v6972 = vpow.pop %v6971
      %v6973 = vmul.f32 %v6780, 1.442695
      %v6974 = vpow.pop %v6973
      %v6975 = vmul.f32 %v6781, 1.442695
      %v6976 = vpow.pop %v6975
      %v6977 = vmul.f32 %v6782, 1.442695
      %v6978 = vpow.pop %v6977
      %v6979 = vmul.f32 %v6783, 1.442695
      %v6980 = vpow.pop %v6979
      %v6981 = vmul.f32 %v6784, 1.442695
      %v6982 = vpow.pop %v6981
      %v6983 = vmul.f32 %v6785, 1.442695
      %v6984 = vpow.pop %v6983
      %v6985 = vmul.f32 %v6786, 1.442695
      %v6986 = vpow.pop %v6985
      %v6987 = vmul.f32 %v6787, 1.442695
      %v6988 = vpow.pop %v6987
      %v6989 = vmul.f32 %v6788, 1.442695
      %v6990 = vpow.pop %v6989
      %v6991 = vmul.f32 %v6789, 1.442695
      %v6992 = vpow.pop %v6991
      %v6993 = vmul.f32 %v6790, 1.442695
      %v6994 = vpow.pop %v6993
      %v6995 = vmul.f32 %v6791, 1.442695
      %v6996 = vpow.pop %v6995
      %v6997 = vmul.f32 %v6792, 1.442695
      %v6998 = vpow.pop %v6997
      %v6999 = vmul.f32 %v6793, 1.442695
      %v7000 = vpow.pop %v6999
      %v7001 = vmul.f32 %v6794, 1.442695
      %v7002 = vpow.pop %v7001
      %v7003 = vmul.f32 %v6795, 1.442695
      %v7004 = vpow.pop %v7003
      %v7005 = vmul.f32 %v6796, 1.442695
      %v7006 = vpow.pop %v7005
      %v7007 = vmul.f32 %v6797, 1.442695
      %v7008 = vpow.pop %v7007
      %v7009 = vmul.f32 %v6798, 1.442695
      %v7010 = vpow.pop %v7009
      %v7011 = vmul.f32 %v6799, 1.442695
      %v7012 = vpow.pop %v7011
      %v7013 = vmul.f32 %v6800, 1.442695
      %v7014 = vpow.pop %v7013
      %v7015 = vmul.f32 %v6801, 1.442695
      %v7016 = vpow.pop %v7015
      %v7017 = vmul.f32 %v6802, 1.442695
      %v7018 = vpow.pop %v7017
      %v7019 = vmul.f32 %v6803, 1.442695
      %v7020 = vpow.pop %v7019
      %v7021 = vmul.f32 %v6804, 1.442695
      %v7022 = vpow.pop %v7021
      %v7023 = vmul.f32 %v6805, 1.442695
      %v7024 = vpow.pop %v7023
      %v7025 = vmul.f32 %v6806, 1.442695
      %v7026 = vpow.pop %v7025
      %v7027 = vmul.f32 %v6807, 1.442695
      %v7028 = vpow.pop %v7027
      %v7029 = vmul.f32 %v6808, 1.442695
      %v7030 = vpow.pop %v7029
      %v7031 = vmul.f32 %v6809, 1.442695
      %v7032 = vpow.pop %v7031
      %v7033 = vmul.f32 %v6810, 1.442695
      %v7034 = vpow.pop %v7033
      %v7035 = vmul.f32 %v6811, 1.442695
      %v7036 = vpow.pop %v7035
      %v7037 = vmul.f32 %v6812, 1.442695
      %v7038 = vpow.pop %v7037
      %v7039 = vmul.f32 %v6813, 1.442695
      %v7040 = vpow.pop %v7039
      %v7041 = vmul.f32 %v6814, 1.442695
      %v7042 = vpow.pop %v7041
      %v7043 = vmul.f32 %v6815, 1.442695
      %v7044 = vpow.pop %v7043
      %v7045 = vmul.f32 %v6816, 1.442695
      %v7046 = vpow.pop %v7045
      %v7047 = vmul.f32 %v6817, 1.442695
      %v7048 = vpow.pop %v7047
      %v7049 = vmul.f32 %v6818, 1.442695
      %v7050 = vpow.pop %v7049
      %v7051 = vmul.f32 %v6819, 1.442695
      %v7052 = vpow.pop %v7051
      %v7053 = vmul.f32 %v6820, 1.442695
      %v7054 = vpow.pop %v7053
      %v7055 = vmul.f32 %v6821, 1.442695
      %v7056 = vpow.pop %v7055
      %v7057 = vmul.f32 %v6822, 1.442695
      %v7058 = vpow.pop %v7057
      %v7059 = vmul.f32 %v6823, 1.442695
      %v7060 = vpow.pop %v7059
      %v7061 = vmul.f32 %v6824, 1.442695
      %v7062 = vpow.pop %v7061
      %v7063 = vmul.f32 %v6825, 1.442695
      %v7064 = vpow.pop %v7063
      %v7065 = vmul.f32 %v6826, 1.442695
      %v7066 = vpow.pop %v7065
      %v7067 = vmul.f32 %v6827, 1.442695
      %v7068 = vpow.pop %v7067
      %v7069 = vmul.f32 %v6828, 1.442695
      %v7070 = vpow.pop %v7069
      %v7071 = vmul.f32 %v6829, 1.442695
      %v7072 = vpow.pop %v7071
      %v7073 = vmul.f32 %v6830, 1.442695
      %v7074 = vpow.pop %v7073
      %v7075 = vmul.f32 %v6831, 1.442695
      %v7076 = vpow.pop %v7075
      %v7077 = vmul.f32 %v6832, 1.442695
      %v7078 = vpow.pop %v7077
      %v7079 = vmul.f32 %v6833, 1.442695
      %v7080 = vpow.pop %v7079
      %v7081 = vmul.f32 %v6834, 1.442695
      %v7082 = vpow.pop %v7081
      %v7083 = vmul.f32 %v6835, 1.442695
      %v7084 = vpow.pop %v7083
      %v7085 = vmul.f32 %v6836, 1.442695
      %v7086 = vpow.pop %v7085
      %v7087 = vmul.f32 %v6837, 1.442695
      %v7088 = vpow.pop %v7087
      %v7089 = vmul.f32 %v6838, 1.442695
      %v7090 = vpow.pop %v7089
      %v7091 = vmul.f32 %v6839, 1.442695
      %v7092 = vpow.pop %v7091
      %v7093 = vmul.f32 %v6840, 1.442695
      %v7094 = vpow.pop %v7093
      %v7095 = vmul.f32 %v6841, 1.442695
      %v7096 = vpow.pop %v7095
      %v7097 = vmul.f32 %v6842, 1.442695
      %v7098 = vpow.pop %v7097
      %v7099 = vmul.f32 %v6459, %v6844
      %v7100 = vmul.f32 %v6460, %v6846
      %v7101 = vmul.f32 %v6461, %v6848
      %v7102 = vmul.f32 %v6462, %v6850
      %v7103 = vmul.f32 %v6463, %v6852
      %v7104 = vmul.f32 %v6464, %v6854
      %v7105 = vmul.f32 %v6465, %v6856
      %v7106 = vmul.f32 %v6466, %v6858
      %v7107 = vmul.f32 %v6467, %v6860
      %v7108 = vmul.f32 %v6468, %v6862
      %v7109 = vmul.f32 %v6469, %v6864
      %v7110 = vmul.f32 %v6470, %v6866
      %v7111 = vmul.f32 %v6471, %v6868
      %v7112 = vmul.f32 %v6472, %v6870
      %v7113 = vmul.f32 %v6473, %v6872
      %v7114 = vmul.f32 %v6474, %v6874
      %v7115 = vmul.f32 %v6475, %v6876
      %v7116 = vmul.f32 %v6476, %v6878
      %v7117 = vmul.f32 %v6477, %v6880
      %v7118 = vmul.f32 %v6478, %v6882
      %v7119 = vmul.f32 %v6479, %v6884
      %v7120 = vmul.f32 %v6480, %v6886
      %v7121 = vmul.f32 %v6481, %v6888
      %v7122 = vmul.f32 %v6482, %v6890
      %v7123 = vmul.f32 %v6483, %v6892
      %v7124 = vmul.f32 %v6484, %v6894
      %v7125 = vmul.f32 %v6485, %v6896
      %v7126 = vmul.f32 %v6486, %v6898
      %v7127 = vmul.f32 %v6487, %v6900
      %v7128 = vmul.f32 %v6488, %v6902
      %v7129 = vmul.f32 %v6489, %v6904
      %v7130 = vmul.f32 %v6490, %v6906
      %v7131 = vmul.f32 %v6491, %v6908
      %v7132 = vmul.f32 %v6492, %v6910
      %v7133 = vmul.f32 %v6493, %v6912
      %v7134 = vmul.f32 %v6494, %v6914
      %v7135 = vmul.f32 %v6495, %v6916
      %v7136 = vmul.f32 %v6496, %v6918
      %v7137 = vmul.f32 %v6497, %v6920
      %v7138 = vmul.f32 %v6498, %v6922
      %v7139 = vmul.f32 %v6499, %v6924
      %v7140 = vmul.f32 %v6500, %v6926
      %v7141 = vmul.f32 %v6501, %v6928
      %v7142 = vmul.f32 %v6502, %v6930
      %v7143 = vmul.f32 %v6503, %v6932
      %v7144 = vmul.f32 %v6504, %v6934
      %v7145 = vmul.f32 %v6505, %v6936
      %v7146 = vmul.f32 %v6506, %v6938
      %v7147 = vmul.f32 %v6507, %v6940
      %v7148 = vmul.f32 %v6508, %v6942
      %v7149 = vmul.f32 %v6509, %v6944
      %v7150 = vmul.f32 %v6510, %v6946
      %v7151 = vmul.f32 %v6511, %v6948
      %v7152 = vmul.f32 %v6512, %v6950
      %v7153 = vmul.f32 %v6513, %v6952
      %v7154 = vmul.f32 %v6514, %v6954
      %v7155 = vmul.f32 %v6515, %v6956
      %v7156 = vmul.f32 %v6516, %v6958
      %v7157 = vmul.f32 %v6517, %v6960
      %v7158 = vmul.f32 %v6518, %v6962
      %v7159 = vmul.f32 %v6519, %v6964
      %v7160 = vmul.f32 %v6520, %v6966
      %v7161 = vmul.f32 %v6521, %v6968
      %v7162 = vmul.f32 %v6522, %v6970
      %v7163 = vmul.f32 %v6523, %v6972
      %v7164 = vmul.f32 %v6524, %v6974
      %v7165 = vmul.f32 %v6525, %v6976
      %v7166 = vmul.f32 %v6526, %v6978
      %v7167 = vmul.f32 %v6527, %v6980
      %v7168 = vmul.f32 %v6528, %v6982
      %v7169 = vmul.f32 %v6529, %v6984
      %v7170 = vmul.f32 %v6530, %v6986
      %v7171 = vmul.f32 %v6531, %v6988
      %v7172 = vmul.f32 %v6532, %v6990
      %v7173 = vmul.f32 %v6533, %v6992
      %v7174 = vmul.f32 %v6534, %v6994
      %v7175 = vmul.f32 %v6535, %v6996
      %v7176 = vmul.f32 %v6536, %v6998
      %v7177 = vmul.f32 %v6537, %v7000
      %v7178 = vmul.f32 %v6538, %v7002
      %v7179 = vmul.f32 %v6539, %v7004
      %v7180 = vmul.f32 %v6540, %v7006
      %v7181 = vmul.f32 %v6541, %v7008
      %v7182 = vmul.f32 %v6542, %v7010
      %v7183 = vmul.f32 %v6543, %v7012
      %v7184 = vmul.f32 %v6544, %v7014
      %v7185 = vmul.f32 %v6545, %v7016
      %v7186 = vmul.f32 %v6546, %v7018
      %v7187 = vmul.f32 %v6547, %v7020
      %v7188 = vmul.f32 %v6548, %v7022
      %v7189 = vmul.f32 %v6549, %v7024
      %v7190 = vmul.f32 %v6550, %v7026
      %v7191 = vmul.f32 %v6551, %v7028
      %v7192 = vmul.f32 %v6552, %v7030
      %v7193 = vmul.f32 %v6553, %v7032
      %v7194 = vmul.f32 %v6554, %v7034
      %v7195 = vmul.f32 %v6555, %v7036
      %v7196 = vmul.f32 %v6556, %v7038
      %v7197 = vmul.f32 %v6557, %v7040
      %v7198 = vmul.f32 %v6558, %v7042
      %v7199 = vmul.f32 %v6559, %v7044
      %v7200 = vmul.f32 %v6560, %v7046
      %v7201 = vmul.f32 %v6561, %v7048
      %v7202 = vmul.f32 %v6562, %v7050
      %v7203 = vmul.f32 %v6563, %v7052
      %v7204 = vmul.f32 %v6564, %v7054
      %v7205 = vmul.f32 %v6565, %v7056
      %v7206 = vmul.f32 %v6566, %v7058
      %v7207 = vmul.f32 %v6567, %v7060
      %v7208 = vmul.f32 %v6568, %v7062
      %v7209 = vmul.f32 %v6569, %v7064
      %v7210 = vmul.f32 %v6570, %v7066
      %v7211 = vmul.f32 %v6571, %v7068
      %v7212 = vmul.f32 %v6572, %v7070
      %v7213 = vmul.f32 %v6573, %v7072
      %v7214 = vmul.f32 %v6574, %v7074
      %v7215 = vmul.f32 %v6575, %v7076
      %v7216 = vmul.f32 %v6576, %v7078
      %v7217 = vmul.f32 %v6577, %v7080
      %v7218 = vmul.f32 %v6578, %v7082
      %v7219 = vmul.f32 %v6579, %v7084
      %v7220 = vmul.f32 %v6580, %v7086
      %v7221 = vmul.f32 %v6581, %v7088
      %v7222 = vmul.f32 %v6582, %v7090
      %v7223 = vmul.f32 %v6583, %v7092
      %v7224 = vmul.f32 %v6584, %v7094
      %v7225 = vmul.f32 %v6585, %v7096
      %v7226 = vmul.f32 %v6586, %v7098
      %v7227 = vsub.f32 1.0, %v7099
      %v7228 = vsub.f32 1.0, %v7100
      %v7229 = vsub.f32 1.0, %v7101
      %v7230 = vsub.f32 1.0, %v7102
      %v7231 = vsub.f32 1.0, %v7103
      %v7232 = vsub.f32 1.0, %v7104
      %v7233 = vsub.f32 1.0, %v7105
      %v7234 = vsub.f32 1.0, %v7106
      %v7235 = vsub.f32 1.0, %v7107
      %v7236 = vsub.f32 1.0, %v7108
      %v7237 = vsub.f32 1.0, %v7109
      %v7238 = vsub.f32 1.0, %v7110
      %v7239 = vsub.f32 1.0, %v7111
      %v7240 = vsub.f32 1.0, %v7112
      %v7241 = vsub.f32 1.0, %v7113
      %v7242 = vsub.f32 1.0, %v7114
      %v7243 = vsub.f32 1.0, %v7115
      %v7244 = vsub.f32 1.0, %v7116
      %v7245 = vsub.f32 1.0, %v7117
      %v7246 = vsub.f32 1.0, %v7118
      %v7247 = vsub.f32 1.0, %v7119
      %v7248 = vsub.f32 1.0, %v7120
      %v7249 = vsub.f32 1.0, %v7121
      %v7250 = vsub.f32 1.0, %v7122
      %v7251 = vsub.f32 1.0, %v7123
      %v7252 = vsub.f32 1.0, %v7124
      %v7253 = vsub.f32 1.0, %v7125
      %v7254 = vsub.f32 1.0, %v7126
      %v7255 = vsub.f32 1.0, %v7127
      %v7256 = vsub.f32 1.0, %v7128
      %v7257 = vsub.f32 1.0, %v7129
      %v7258 = vsub.f32 1.0, %v7130
      %v7259 = vsub.f32 1.0, %v7131
      %v7260 = vsub.f32 1.0, %v7132
      %v7261 = vsub.f32 1.0, %v7133
      %v7262 = vsub.f32 1.0, %v7134
      %v7263 = vsub.f32 1.0, %v7135
      %v7264 = vsub.f32 1.0, %v7136
      %v7265 = vsub.f32 1.0, %v7137
      %v7266 = vsub.f32 1.0, %v7138
      %v7267 = vsub.f32 1.0, %v7139
      %v7268 = vsub.f32 1.0, %v7140
      %v7269 = vsub.f32 1.0, %v7141
      %v7270 = vsub.f32 1.0, %v7142
      %v7271 = vsub.f32 1.0, %v7143
      %v7272 = vsub.f32 1.0, %v7144
      %v7273 = vsub.f32 1.0, %v7145
      %v7274 = vsub.f32 1.0, %v7146
      %v7275 = vsub.f32 1.0, %v7147
      %v7276 = vsub.f32 1.0, %v7148
      %v7277 = vsub.f32 1.0, %v7149
      %v7278 = vsub.f32 1.0, %v7150
      %v7279 = vsub.f32 1.0, %v7151
      %v7280 = vsub.f32 1.0, %v7152
      %v7281 = vsub.f32 1.0, %v7153
      %v7282 = vsub.f32 1.0, %v7154
      %v7283 = vsub.f32 1.0, %v7155
      %v7284 = vsub.f32 1.0, %v7156
      %v7285 = vsub.f32 1.0, %v7157
      %v7286 = vsub.f32 1.0, %v7158
      %v7287 = vsub.f32 1.0, %v7159
      %v7288 = vsub.f32 1.0, %v7160
      %v7289 = vsub.f32 1.0, %v7161
      %v7290 = vsub.f32 1.0, %v7162
      %v7291 = vsub.f32 1.0, %v7163
      %v7292 = vsub.f32 1.0, %v7164
      %v7293 = vsub.f32 1.0, %v7165
      %v7294 = vsub.f32 1.0, %v7166
      %v7295 = vsub.f32 1.0, %v7167
      %v7296 = vsub.f32 1.0, %v7168
      %v7297 = vsub.f32 1.0, %v7169
      %v7298 = vsub.f32 1.0, %v7170
      %v7299 = vsub.f32 1.0, %v7171
      %v7300 = vsub.f32 1.0, %v7172
      %v7301 = vsub.f32 1.0, %v7173
      %v7302 = vsub.f32 1.0, %v7174
      %v7303 = vsub.f32 1.0, %v7175
      %v7304 = vsub.f32 1.0, %v7176
      %v7305 = vsub.f32 1.0, %v7177
      %v7306 = vsub.f32 1.0, %v7178
      %v7307 = vsub.f32 1.0, %v7179
      %v7308 = vsub.f32 1.0, %v7180
      %v7309 = vsub.f32 1.0, %v7181
      %v7310 = vsub.f32 1.0, %v7182
      %v7311 = vsub.f32 1.0, %v7183
      %v7312 = vsub.f32 1.0, %v7184
      %v7313 = vsub.f32 1.0, %v7185
      %v7314 = vsub.f32 1.0, %v7186
      %v7315 = vsub.f32 1.0, %v7187
      %v7316 = vsub.f32 1.0, %v7188
      %v7317 = vsub.f32 1.0, %v7189
      %v7318 = vsub.f32 1.0, %v7190
      %v7319 = vsub.f32 1.0, %v7191
      %v7320 = vsub.f32 1.0, %v7192
      %v7321 = vsub.f32 1.0, %v7193
      %v7322 = vsub.f32 1.0, %v7194
      %v7323 = vsub.f32 1.0, %v7195
      %v7324 = vsub.f32 1.0, %v7196
      %v7325 = vsub.f32 1.0, %v7197
      %v7326 = vsub.f32 1.0, %v7198
      %v7327 = vsub.f32 1.0, %v7199
      %v7328 = vsub.f32 1.0, %v7200
      %v7329 = vsub.f32 1.0, %v7201
      %v7330 = vsub.f32 1.0, %v7202
      %v7331 = vsub.f32 1.0, %v7203
      %v7332 = vsub.f32 1.0, %v7204
      %v7333 = vsub.f32 1.0, %v7205
      %v7334 = vsub.f32 1.0, %v7206
      %v7335 = vsub.f32 1.0, %v7207
      %v7336 = vsub.f32 1.0, %v7208
      %v7337 = vsub.f32 1.0, %v7209
      %v7338 = vsub.f32 1.0, %v7210
      %v7339 = vsub.f32 1.0, %v7211
      %v7340 = vsub.f32 1.0, %v7212
      %v7341 = vsub.f32 1.0, %v7213
      %v7342 = vsub.f32 1.0, %v7214
      %v7343 = vsub.f32 1.0, %v7215
      %v7344 = vsub.f32 1.0, %v7216
      %v7345 = vsub.f32 1.0, %v7217
      %v7346 = vsub.f32 1.0, %v7218
      %v7347 = vsub.f32 1.0, %v7219
      %v7348 = vsub.f32 1.0, %v7220
      %v7349 = vsub.f32 1.0, %v7221
      %v7350 = vsub.f32 1.0, %v7222
      %v7351 = vsub.f32 1.0, %v7223
      %v7352 = vsub.f32 1.0, %v7224
      %v7353 = vsub.f32 1.0, %v7225
      %v7354 = vsub.f32 1.0, %v7226
      %v7355 = vmul.f32 %v4667, %v7227
      %v7356 = vmul.f32 %v4668, %v7228
      %v7357 = vmul.f32 %v4669, %v7229
      %v7358 = vmul.f32 %v4670, %v7230
      %v7359 = vmul.f32 %v4671, %v7231
      %v7360 = vmul.f32 %v4672, %v7232
      %v7361 = vmul.f32 %v4673, %v7233
      %v7362 = vmul.f32 %v4674, %v7234
      %v7363 = vmul.f32 %v4675, %v7235
      %v7364 = vmul.f32 %v4676, %v7236
      %v7365 = vmul.f32 %v4677, %v7237
      %v7366 = vmul.f32 %v4678, %v7238
      %v7367 = vmul.f32 %v4679, %v7239
      %v7368 = vmul.f32 %v4680, %v7240
      %v7369 = vmul.f32 %v4681, %v7241
      %v7370 = vmul.f32 %v4682, %v7242
      %v7371 = vmul.f32 %v4683, %v7243
      %v7372 = vmul.f32 %v4684, %v7244
      %v7373 = vmul.f32 %v4685, %v7245
      %v7374 = vmul.f32 %v4686, %v7246
      %v7375 = vmul.f32 %v4687, %v7247
      %v7376 = vmul.f32 %v4688, %v7248
      %v7377 = vmul.f32 %v4689, %v7249
      %v7378 = vmul.f32 %v4690, %v7250
      %v7379 = vmul.f32 %v4691, %v7251
      %v7380 = vmul.f32 %v4692, %v7252
      %v7381 = vmul.f32 %v4693, %v7253
      %v7382 = vmul.f32 %v4694, %v7254
      %v7383 = vmul.f32 %v4695, %v7255
      %v7384 = vmul.f32 %v4696, %v7256
      %v7385 = vmul.f32 %v4697, %v7257
      %v7386 = vmul.f32 %v4698, %v7258
      %v7387 = vmul.f32 %v4699, %v7259
      %v7388 = vmul.f32 %v4700, %v7260
      %v7389 = vmul.f32 %v4701, %v7261
      %v7390 = vmul.f32 %v4702, %v7262
      %v7391 = vmul.f32 %v4703, %v7263
      %v7392 = vmul.f32 %v4704, %v7264
      %v7393 = vmul.f32 %v4705, %v7265
      %v7394 = vmul.f32 %v4706, %v7266
      %v7395 = vmul.f32 %v4707, %v7267
      %v7396 = vmul.f32 %v4708, %v7268
      %v7397 = vmul.f32 %v4709, %v7269
      %v7398 = vmul.f32 %v4710, %v7270
      %v7399 = vmul.f32 %v4711, %v7271
      %v7400 = vmul.f32 %v4712, %v7272
      %v7401 = vmul.f32 %v4713, %v7273
      %v7402 = vmul.f32 %v4714, %v7274
      %v7403 = vmul.f32 %v4715, %v7275
      %v7404 = vmul.f32 %v4716, %v7276
      %v7405 = vmul.f32 %v4717, %v7277
      %v7406 = vmul.f32 %v4718, %v7278
      %v7407 = vmul.f32 %v4719, %v7279
      %v7408 = vmul.f32 %v4720, %v7280
      %v7409 = vmul.f32 %v4721, %v7281
      %v7410 = vmul.f32 %v4722, %v7282
      %v7411 = vmul.f32 %v4723, %v7283
      %v7412 = vmul.f32 %v4724, %v7284
      %v7413 = vmul.f32 %v4725, %v7285
      %v7414 = vmul.f32 %v4726, %v7286
      %v7415 = vmul.f32 %v4727, %v7287
      %v7416 = vmul.f32 %v4728, %v7288
      %v7417 = vmul.f32 %v4729, %v7289
      %v7418 = vmul.f32 %v4730, %v7290
      %v7419 = vmul.f32 %v4731, %v7291
      %v7420 = vmul.f32 %v4732, %v7292
      %v7421 = vmul.f32 %v4733, %v7293
      %v7422 = vmul.f32 %v4734, %v7294
      %v7423 = vmul.f32 %v4735, %v7295
      %v7424 = vmul.f32 %v4736, %v7296
      %v7425 = vmul.f32 %v4737, %v7297
      %v7426 = vmul.f32 %v4738, %v7298
      %v7427 = vmul.f32 %v4739, %v7299
      %v7428 = vmul.f32 %v4740, %v7300
      %v7429 = vmul.f32 %v4741, %v7301
      %v7430 = vmul.f32 %v4742, %v7302
      %v7431 = vmul.f32 %v4743, %v7303
      %v7432 = vmul.f32 %v4744, %v7304
      %v7433 = vmul.f32 %v4745, %v7305
      %v7434 = vmul.f32 %v4746, %v7306
      %v7435 = vmul.f32 %v4747, %v7307
      %v7436 = vmul.f32 %v4748, %v7308
      %v7437 = vmul.f32 %v4749, %v7309
      %v7438 = vmul.f32 %v4750, %v7310
      %v7439 = vmul.f32 %v4751, %v7311
      %v7440 = vmul.f32 %v4752, %v7312
      %v7441 = vmul.f32 %v4753, %v7313
      %v7442 = vmul.f32 %v4754, %v7314
      %v7443 = vmul.f32 %v4755, %v7315
      %v7444 = vmul.f32 %v4756, %v7316
      %v7445 = vmul.f32 %v4757, %v7317
      %v7446 = vmul.f32 %v4758, %v7318
      %v7447 = vmul.f32 %v4759, %v7319
      %v7448 = vmul.f32 %v4760, %v7320
      %v7449 = vmul.f32 %v4761, %v7321
      %v7450 = vmul.f32 %v4762, %v7322
      %v7451 = vmul.f32 %v4763, %v7323
      %v7452 = vmul.f32 %v4764, %v7324
      %v7453 = vmul.f32 %v4765, %v7325
      %v7454 = vmul.f32 %v4766, %v7326
      %v7455 = vmul.f32 %v4767, %v7327
      %v7456 = vmul.f32 %v4768, %v7328
      %v7457 = vmul.f32 %v4769, %v7329
      %v7458 = vmul.f32 %v4770, %v7330
      %v7459 = vmul.f32 %v4771, %v7331
      %v7460 = vmul.f32 %v4772, %v7332
      %v7461 = vmul.f32 %v4773, %v7333
      %v7462 = vmul.f32 %v4774, %v7334
      %v7463 = vmul.f32 %v4775, %v7335
      %v7464 = vmul.f32 %v4776, %v7336
      %v7465 = vmul.f32 %v4777, %v7337
      %v7466 = vmul.f32 %v4778, %v7338
      %v7467 = vmul.f32 %v4779, %v7339
      %v7468 = vmul.f32 %v4780, %v7340
      %v7469 = vmul.f32 %v4781, %v7341
      %v7470 = vmul.f32 %v4782, %v7342
      %v7471 = vmul.f32 %v4783, %v7343
      %v7472 = vmul.f32 %v4784, %v7344
      %v7473 = vmul.f32 %v4785, %v7345
      %v7474 = vmul.f32 %v4786, %v7346
      %v7475 = vmul.f32 %v4787, %v7347
      %v7476 = vmul.f32 %v4788, %v7348
      %v7477 = vmul.f32 %v4789, %v7349
      %v7478 = vmul.f32 %v4790, %v7350
      %v7479 = vmul.f32 %v4791, %v7351
      %v7480 = vmul.f32 %v4792, %v7352
      %v7481 = vmul.f32 %v4793, %v7353
      %v7482 = vmul.f32 %v4794, %v7354
      %v7483 = vadd.f32 %v7355, 1.0
      %v7484 = vadd.f32 %v7356, 1.0
      %v7485 = vadd.f32 %v7357, 1.0
      %v7486 = vadd.f32 %v7358, 1.0
      %v7487 = vadd.f32 %v7359, 1.0
      %v7488 = vadd.f32 %v7360, 1.0
      %v7489 = vadd.f32 %v7361, 1.0
      %v7490 = vadd.f32 %v7362, 1.0
      %v7491 = vadd.f32 %v7363, 1.0
      %v7492 = vadd.f32 %v7364, 1.0
      %v7493 = vadd.f32 %v7365, 1.0
      %v7494 = vadd.f32 %v7366, 1.0
      %v7495 = vadd.f32 %v7367, 1.0
      %v7496 = vadd.f32 %v7368, 1.0
      %v7497 = vadd.f32 %v7369, 1.0
      %v7498 = vadd.f32 %v7370, 1.0
      %v7499 = vadd.f32 %v7371, 1.0
      %v7500 = vadd.f32 %v7372, 1.0
      %v7501 = vadd.f32 %v7373, 1.0
      %v7502 = vadd.f32 %v7374, 1.0
      %v7503 = vadd.f32 %v7375, 1.0
      %v7504 = vadd.f32 %v7376, 1.0
      %v7505 = vadd.f32 %v7377, 1.0
      %v7506 = vadd.f32 %v7378, 1.0
      %v7507 = vadd.f32 %v7379, 1.0
      %v7508 = vadd.f32 %v7380, 1.0
      %v7509 = vadd.f32 %v7381, 1.0
      %v7510 = vadd.f32 %v7382, 1.0
      %v7511 = vadd.f32 %v7383, 1.0
      %v7512 = vadd.f32 %v7384, 1.0
      %v7513 = vadd.f32 %v7385, 1.0
      %v7514 = vadd.f32 %v7386, 1.0
      %v7515 = vadd.f32 %v7387, 1.0
      %v7516 = vadd.f32 %v7388, 1.0
      %v7517 = vadd.f32 %v7389, 1.0
      %v7518 = vadd.f32 %v7390, 1.0
      %v7519 = vadd.f32 %v7391, 1.0
      %v7520 = vadd.f32 %v7392, 1.0
      %v7521 = vadd.f32 %v7393, 1.0
      %v7522 = vadd.f32 %v7394, 1.0
      %v7523 = vadd.f32 %v7395, 1.0
      %v7524 = vadd.f32 %v7396, 1.0
      %v7525 = vadd.f32 %v7397, 1.0
      %v7526 = vadd.f32 %v7398, 1.0
      %v7527 = vadd.f32 %v7399, 1.0
      %v7528 = vadd.f32 %v7400, 1.0
      %v7529 = vadd.f32 %v7401, 1.0
      %v7530 = vadd.f32 %v7402, 1.0
      %v7531 = vadd.f32 %v7403, 1.0
      %v7532 = vadd.f32 %v7404, 1.0
      %v7533 = vadd.f32 %v7405, 1.0
      %v7534 = vadd.f32 %v7406, 1.0
      %v7535 = vadd.f32 %v7407, 1.0
      %v7536 = vadd.f32 %v7408, 1.0
      %v7537 = vadd.f32 %v7409, 1.0
      %v7538 = vadd.f32 %v7410, 1.0
      %v7539 = vadd.f32 %v7411, 1.0
      %v7540 = vadd.f32 %v7412, 1.0
      %v7541 = vadd.f32 %v7413, 1.0
      %v7542 = vadd.f32 %v7414, 1.0
      %v7543 = vadd.f32 %v7415, 1.0
      %v7544 = vadd.f32 %v7416, 1.0
      %v7545 = vadd.f32 %v7417, 1.0
      %v7546 = vadd.f32 %v7418, 1.0
      %v7547 = vadd.f32 %v7419, 1.0
      %v7548 = vadd.f32 %v7420, 1.0
      %v7549 = vadd.f32 %v7421, 1.0
      %v7550 = vadd.f32 %v7422, 1.0
      %v7551 = vadd.f32 %v7423, 1.0
      %v7552 = vadd.f32 %v7424, 1.0
      %v7553 = vadd.f32 %v7425, 1.0
      %v7554 = vadd.f32 %v7426, 1.0
      %v7555 = vadd.f32 %v7427, 1.0
      %v7556 = vadd.f32 %v7428, 1.0
      %v7557 = vadd.f32 %v7429, 1.0
      %v7558 = vadd.f32 %v7430, 1.0
      %v7559 = vadd.f32 %v7431, 1.0
      %v7560 = vadd.f32 %v7432, 1.0
      %v7561 = vadd.f32 %v7433, 1.0
      %v7562 = vadd.f32 %v7434, 1.0
      %v7563 = vadd.f32 %v7435, 1.0
      %v7564 = vadd.f32 %v7436, 1.0
      %v7565 = vadd.f32 %v7437, 1.0
      %v7566 = vadd.f32 %v7438, 1.0
      %v7567 = vadd.f32 %v7439, 1.0
      %v7568 = vadd.f32 %v7440, 1.0
      %v7569 = vadd.f32 %v7441, 1.0
      %v7570 = vadd.f32 %v7442, 1.0
      %v7571 = vadd.f32 %v7443, 1.0
      %v7572 = vadd.f32 %v7444, 1.0
      %v7573 = vadd.f32 %v7445, 1.0
      %v7574 = vadd.f32 %v7446, 1.0
      %v7575 = vadd.f32 %v7447, 1.0
      %v7576 = vadd.f32 %v7448, 1.0
      %v7577 = vadd.f32 %v7449, 1.0
      %v7578 = vadd.f32 %v7450, 1.0
      %v7579 = vadd.f32 %v7451, 1.0
      %v7580 = vadd.f32 %v7452, 1.0
      %v7581 = vadd.f32 %v7453, 1.0
      %v7582 = vadd.f32 %v7454, 1.0
      %v7583 = vadd.f32 %v7455, 1.0
      %v7584 = vadd.f32 %v7456, 1.0
      %v7585 = vadd.f32 %v7457, 1.0
      %v7586 = vadd.f32 %v7458, 1.0
      %v7587 = vadd.f32 %v7459, 1.0
      %v7588 = vadd.f32 %v7460, 1.0
      %v7589 = vadd.f32 %v7461, 1.0
      %v7590 = vadd.f32 %v7462, 1.0
      %v7591 = vadd.f32 %v7463, 1.0
      %v7592 = vadd.f32 %v7464, 1.0
      %v7593 = vadd.f32 %v7465, 1.0
      %v7594 = vadd.f32 %v7466, 1.0
      %v7595 = vadd.f32 %v7467, 1.0
      %v7596 = vadd.f32 %v7468, 1.0
      %v7597 = vadd.f32 %v7469, 1.0
      %v7598 = vadd.f32 %v7470, 1.0
      %v7599 = vadd.f32 %v7471, 1.0
      %v7600 = vadd.f32 %v7472, 1.0
      %v7601 = vadd.f32 %v7473, 1.0
      %v7602 = vadd.f32 %v7474, 1.0
      %v7603 = vadd.f32 %v7475, 1.0
      %v7604 = vadd.f32 %v7476, 1.0
      %v7605 = vadd.f32 %v7477, 1.0
      %v7606 = vadd.f32 %v7478, 1.0
      %v7607 = vadd.f32 %v7479, 1.0
      %v7608 = vadd.f32 %v7480, 1.0
      %v7609 = vadd.f32 %v7481, 1.0
      %v7610 = vadd.f32 %v7482, 1.0
      %v7611 = vmul.f32 %v4283, %v7483
      %v7612 = vmul.f32 %v4284, %v7484
      %v7613 = vmul.f32 %v4285, %v7485
      %v7614 = vmul.f32 %v4286, %v7486
      %v7615 = vmul.f32 %v4287, %v7487
      %v7616 = vmul.f32 %v4288, %v7488
      %v7617 = vmul.f32 %v4289, %v7489
      %v7618 = vmul.f32 %v4290, %v7490
      %v7619 = vmul.f32 %v4291, %v7491
      %v7620 = vmul.f32 %v4292, %v7492
      %v7621 = vmul.f32 %v4293, %v7493
      %v7622 = vmul.f32 %v4294, %v7494
      %v7623 = vmul.f32 %v4295, %v7495
      %v7624 = vmul.f32 %v4296, %v7496
      %v7625 = vmul.f32 %v4297, %v7497
      %v7626 = vmul.f32 %v4298, %v7498
      %v7627 = vmul.f32 %v4299, %v7499
      %v7628 = vmul.f32 %v4300, %v7500
      %v7629 = vmul.f32 %v4301, %v7501
      %v7630 = vmul.f32 %v4302, %v7502
      %v7631 = vmul.f32 %v4303, %v7503
      %v7632 = vmul.f32 %v4304, %v7504
      %v7633 = vmul.f32 %v4305, %v7505
      %v7634 = vmul.f32 %v4306, %v7506
      %v7635 = vmul.f32 %v4307, %v7507
      %v7636 = vmul.f32 %v4308, %v7508
      %v7637 = vmul.f32 %v4309, %v7509
      %v7638 = vmul.f32 %v4310, %v7510
      %v7639 = vmul.f32 %v4311, %v7511
      %v7640 = vmul.f32 %v4312, %v7512
      %v7641 = vmul.f32 %v4313, %v7513
      %v7642 = vmul.f32 %v4314, %v7514
      %v7643 = vmul.f32 %v4315, %v7515
      %v7644 = vmul.f32 %v4316, %v7516
      %v7645 = vmul.f32 %v4317, %v7517
      %v7646 = vmul.f32 %v4318, %v7518
      %v7647 = vmul.f32 %v4319, %v7519
      %v7648 = vmul.f32 %v4320, %v7520
      %v7649 = vmul.f32 %v4321, %v7521
      %v7650 = vmul.f32 %v4322, %v7522
      %v7651 = vmul.f32 %v4323, %v7523
      %v7652 = vmul.f32 %v4324, %v7524
      %v7653 = vmul.f32 %v4325, %v7525
      %v7654 = vmul.f32 %v4326, %v7526
      %v7655 = vmul.f32 %v4327, %v7527
      %v7656 = vmul.f32 %v4328, %v7528
      %v7657 = vmul.f32 %v4329, %v7529
      %v7658 = vmul.f32 %v4330, %v7530
      %v7659 = vmul.f32 %v4331, %v7531
      %v7660 = vmul.f32 %v4332, %v7532
      %v7661 = vmul.f32 %v4333, %v7533
      %v7662 = vmul.f32 %v4334, %v7534
      %v7663 = vmul.f32 %v4335, %v7535
      %v7664 = vmul.f32 %v4336, %v7536
      %v7665 = vmul.f32 %v4337, %v7537
      %v7666 = vmul.f32 %v4338, %v7538
      %v7667 = vmul.f32 %v4339, %v7539
      %v7668 = vmul.f32 %v4340, %v7540
      %v7669 = vmul.f32 %v4341, %v7541
      %v7670 = vmul.f32 %v4342, %v7542
      %v7671 = vmul.f32 %v4343, %v7543
      %v7672 = vmul.f32 %v4344, %v7544
      %v7673 = vmul.f32 %v4345, %v7545
      %v7674 = vmul.f32 %v4346, %v7546
      %v7675 = vmul.f32 %v4347, %v7547
      %v7676 = vmul.f32 %v4348, %v7548
      %v7677 = vmul.f32 %v4349, %v7549
      %v7678 = vmul.f32 %v4350, %v7550
      %v7679 = vmul.f32 %v4351, %v7551
      %v7680 = vmul.f32 %v4352, %v7552
      %v7681 = vmul.f32 %v4353, %v7553
      %v7682 = vmul.f32 %v4354, %v7554
      %v7683 = vmul.f32 %v4355, %v7555
      %v7684 = vmul.f32 %v4356, %v7556
      %v7685 = vmul.f32 %v4357, %v7557
      %v7686 = vmul.f32 %v4358, %v7558
      %v7687 = vmul.f32 %v4359, %v7559
      %v7688 = vmul.f32 %v4360, %v7560
      %v7689 = vmul.f32 %v4361, %v7561
      %v7690 = vmul.f32 %v4362, %v7562
      %v7691 = vmul.f32 %v4363, %v7563
      %v7692 = vmul.f32 %v4364, %v7564
      %v7693 = vmul.f32 %v4365, %v7565
      %v7694 = vmul.f32 %v4366, %v7566
      %v7695 = vmul.f32 %v4367, %v7567
      %v7696 = vmul.f32 %v4368, %v7568
      %v7697 = vmul.f32 %v4369, %v7569
      %v7698 = vmul.f32 %v4370, %v7570
      %v7699 = vmul.f32 %v4371, %v7571
      %v7700 = vmul.f32 %v4372, %v7572
      %v7701 = vmul.f32 %v4373, %v7573
      %v7702 = vmul.f32 %v4374, %v7574
      %v7703 = vmul.f32 %v4375, %v7575
      %v7704 = vmul.f32 %v4376, %v7576
      %v7705 = vmul.f32 %v4377, %v7577
      %v7706 = vmul.f32 %v4378, %v7578
      %v7707 = vmul.f32 %v4379, %v7579
      %v7708 = vmul.f32 %v4380, %v7580
      %v7709 = vmul.f32 %v4381, %v7581
      %v7710 = vmul.f32 %v4382, %v7582
      %v7711 = vmul.f32 %v4383, %v7583
      %v7712 = vmul.f32 %v4384, %v7584
      %v7713 = vmul.f32 %v4385, %v7585
      %v7714 = vmul.f32 %v4386, %v7586
      %v7715 = vmul.f32 %v4387, %v7587
      %v7716 = vmul.f32 %v4388, %v7588
      %v7717 = vmul.f32 %v4389, %v7589
      %v7718 = vmul.f32 %v4390, %v7590
      %v7719 = vmul.f32 %v4391, %v7591
      %v7720 = vmul.f32 %v4392, %v7592
      %v7721 = vmul.f32 %v4393, %v7593
      %v7722 = vmul.f32 %v4394, %v7594
      %v7723 = vmul.f32 %v4395, %v7595
      %v7724 = vmul.f32 %v4396, %v7596
      %v7725 = vmul.f32 %v4397, %v7597
      %v7726 = vmul.f32 %v4398, %v7598
      %v7727 = vmul.f32 %v4399, %v7599
      %v7728 = vmul.f32 %v4400, %v7600
      %v7729 = vmul.f32 %v4401, %v7601
      %v7730 = vmul.f32 %v4402, %v7602
      %v7731 = vmul.f32 %v4403, %v7603
      %v7732 = vmul.f32 %v4404, %v7604
      %v7733 = vmul.f32 %v4405, %v7605
      %v7734 = vmul.f32 %v4406, %v7606
      %v7735 = vmul.f32 %v4407, %v7607
      %v7736 = vmul.f32 %v4408, %v7608
      %v7737 = vmul.f32 %v4409, %v7609
      %v7738 = vmul.f32 %v4410, %v7610
      %v7739 = vpack.c.bf16 %v7615, %v7611
      %v7740 = vpack.c.bf16 %v7616, %v7612
      %v7741 = vpack.c.bf16 %v7617, %v7613
      %v7742 = vpack.c.bf16 %v7618, %v7614
      %v7743 = vpack.c.bf16 %v7623, %v7619
      %v7744 = vpack.c.bf16 %v7624, %v7620
      %v7745 = vpack.c.bf16 %v7625, %v7621
      %v7746 = vpack.c.bf16 %v7626, %v7622
      %v7747 = vpack.c.bf16 %v7631, %v7627
      %v7748 = vpack.c.bf16 %v7632, %v7628
      %v7749 = vpack.c.bf16 %v7633, %v7629
      %v7750 = vpack.c.bf16 %v7634, %v7630
      %v7751 = vpack.c.bf16 %v7639, %v7635
      %v7752 = vpack.c.bf16 %v7640, %v7636
      %v7753 = vpack.c.bf16 %v7641, %v7637
      %v7754 = vpack.c.bf16 %v7642, %v7638
      %v7755 = vpack.c.bf16 %v7647, %v7643
      %v7756 = vpack.c.bf16 %v7648, %v7644
      %v7757 = vpack.c.bf16 %v7649, %v7645
      %v7758 = vpack.c.bf16 %v7650, %v7646
      %v7759 = vpack.c.bf16 %v7655, %v7651
      %v7760 = vpack.c.bf16 %v7656, %v7652
      %v7761 = vpack.c.bf16 %v7657, %v7653
      %v7762 = vpack.c.bf16 %v7658, %v7654
      %v7763 = vpack.c.bf16 %v7663, %v7659
      %v7764 = vpack.c.bf16 %v7664, %v7660
      %v7765 = vpack.c.bf16 %v7665, %v7661
      %v7766 = vpack.c.bf16 %v7666, %v7662
      %v7767 = vpack.c.bf16 %v7671, %v7667
      %v7768 = vpack.c.bf16 %v7672, %v7668
      %v7769 = vpack.c.bf16 %v7673, %v7669
      %v7770 = vpack.c.bf16 %v7674, %v7670
      %v7771 = vpack.c.bf16 %v7679, %v7675
      %v7772 = vpack.c.bf16 %v7680, %v7676
      %v7773 = vpack.c.bf16 %v7681, %v7677
      %v7774 = vpack.c.bf16 %v7682, %v7678
      %v7775 = vpack.c.bf16 %v7687, %v7683
      %v7776 = vpack.c.bf16 %v7688, %v7684
      %v7777 = vpack.c.bf16 %v7689, %v7685
      %v7778 = vpack.c.bf16 %v7690, %v7686
      %v7779 = vpack.c.bf16 %v7695, %v7691
      %v7780 = vpack.c.bf16 %v7696, %v7692
      %v7781 = vpack.c.bf16 %v7697, %v7693
      %v7782 = vpack.c.bf16 %v7698, %v7694
      %v7783 = vpack.c.bf16 %v7703, %v7699
      %v7784 = vpack.c.bf16 %v7704, %v7700
      %v7785 = vpack.c.bf16 %v7705, %v7701
      %v7786 = vpack.c.bf16 %v7706, %v7702
      %v7787 = vpack.c.bf16 %v7711, %v7707
      %v7788 = vpack.c.bf16 %v7712, %v7708
      %v7789 = vpack.c.bf16 %v7713, %v7709
      %v7790 = vpack.c.bf16 %v7714, %v7710
      %v7791 = vpack.c.bf16 %v7719, %v7715
      %v7792 = vpack.c.bf16 %v7720, %v7716
      %v7793 = vpack.c.bf16 %v7721, %v7717
      %v7794 = vpack.c.bf16 %v7722, %v7718
      %v7795 = vpack.c.bf16 %v7727, %v7723
      %v7796 = vpack.c.bf16 %v7728, %v7724
      %v7797 = vpack.c.bf16 %v7729, %v7725
      %v7798 = vpack.c.bf16 %v7730, %v7726
      %v7799 = vpack.c.bf16 %v7735, %v7731
      %v7800 = vpack.c.bf16 %v7736, %v7732
      %v7801 = vpack.c.bf16 %v7737, %v7733
      %v7802 = vpack.c.bf16 %v7738, %v7734
      %v7803 = vld [vmem:[%s11] sm:$0xf]
      %v7804 = vld [vmem:[%s11 + $0x4] sm:$0xf]
      %v7805 = vld [vmem:[%s11 + $0x8] sm:$0xf]
      %v7806 = vld [vmem:[%s11 + $0xc] sm:$0xf]
      %v7807 = vld [vmem:[%s11 + $0x10] sm:$0xf]
      %v7808 = vld [vmem:[%s11 + $0x14] sm:$0xf]
      %v7809 = vld [vmem:[%s11 + $0x18] sm:$0xf]
      %v7810 = vld [vmem:[%s11 + $0x1c] sm:$0xf]
      %v7811 = vld [vmem:[%s11 + $0x20] sm:$0xf]
      %v7812 = vld [vmem:[%s11 + $0x24] sm:$0xf]
      %v7813 = vld [vmem:[%s11 + $0x28] sm:$0xf]
      %v7814 = vld [vmem:[%s11 + $0x2c] sm:$0xf]
      %v7815 = vld [vmem:[%s11 + $0x30] sm:$0xf]
      %v7816 = vld [vmem:[%s11 + $0x34] sm:$0xf]
      %v7817 = vld [vmem:[%s11 + $0x38] sm:$0xf]
      %v7818 = vld [vmem:[%s11 + $0x3c] sm:$0xf]
      %v7819 = vld [vmem:[%s11 + $0x40] sm:$0xf]
      %v7820 = vld [vmem:[%s11 + $0x44] sm:$0xf]
      %v7821 = vld [vmem:[%s11 + $0x48] sm:$0xf]
      %v7822 = vld [vmem:[%s11 + $0x4c] sm:$0xf]
      %v7823 = vld [vmem:[%s11 + $0x50] sm:$0xf]
      %v7824 = vld [vmem:[%s11 + $0x54] sm:$0xf]
      %v7825 = vld [vmem:[%s11 + $0x58] sm:$0xf]
      %v7826 = vld [vmem:[%s11 + $0x5c] sm:$0xf]
      %v7827 = vld [vmem:[%s11 + $0x60] sm:$0xf]
      %v7828 = vld [vmem:[%s11 + $0x64] sm:$0xf]
      %v7829 = vld [vmem:[%s11 + $0x68] sm:$0xf]
      %v7830 = vld [vmem:[%s11 + $0x6c] sm:$0xf]
      %v7831 = vld [vmem:[%s11 + $0x70] sm:$0xf]
      %v7832 = vld [vmem:[%s11 + $0x74] sm:$0xf]
      %v7833 = vld [vmem:[%s11 + $0x78] sm:$0xf]
      %v7834 = vld [vmem:[%s11 + $0x7c] sm:$0xf]
      %v7835 = vld [vmem:[%s11 + $0x80] sm:$0xf]
      %v7836 = vld [vmem:[%s11 + $0x84] sm:$0xf]
      %v7837 = vld [vmem:[%s11 + $0x88] sm:$0xf]
      %v7838 = vld [vmem:[%s11 + $0x8c] sm:$0xf]
      %v7839 = vld [vmem:[%s11 + $0x90] sm:$0xf]
      %v7840 = vld [vmem:[%s11 + $0x94] sm:$0xf]
      %v7841 = vld [vmem:[%s11 + $0x98] sm:$0xf]
      %v7842 = vld [vmem:[%s11 + $0x9c] sm:$0xf]
      %v7843 = vld [vmem:[%s11 + $0xa0] sm:$0xf]
      %v7844 = vld [vmem:[%s11 + $0xa4] sm:$0xf]
      %v7845 = vld [vmem:[%s11 + $0xa8] sm:$0xf]
      %v7846 = vld [vmem:[%s11 + $0xac] sm:$0xf]
      %v7847 = vld [vmem:[%s11 + $0xb0] sm:$0xf]
      %v7848 = vld [vmem:[%s11 + $0xb4] sm:$0xf]
      %v7849 = vld [vmem:[%s11 + $0xb8] sm:$0xf]
      %v7850 = vld [vmem:[%s11 + $0xbc] sm:$0xf]
      %v7851 = vld [vmem:[%s11 + $0xc0] sm:$0xf]
      %v7852 = vld [vmem:[%s11 + $0xc4] sm:$0xf]
      %v7853 = vld [vmem:[%s11 + $0xc8] sm:$0xf]
      %v7854 = vld [vmem:[%s11 + $0xcc] sm:$0xf]
      %v7855 = vld [vmem:[%s11 + $0xd0] sm:$0xf]
      %v7856 = vld [vmem:[%s11 + $0xd4] sm:$0xf]
      %v7857 = vld [vmem:[%s11 + $0xd8] sm:$0xf]
      %v7858 = vld [vmem:[%s11 + $0xdc] sm:$0xf]
      %v7859 = vld [vmem:[%s11 + $0xe0] sm:$0xf]
      %v7860 = vld [vmem:[%s11 + $0xe4] sm:$0xf]
      %v7861 = vld [vmem:[%s11 + $0xe8] sm:$0xf]
      %v7862 = vld [vmem:[%s11 + $0xec] sm:$0xf]
      %v7863 = vld [vmem:[%s11 + $0xf0] sm:$0xf]
      %v7864 = vld [vmem:[%s11 + $0xf4] sm:$0xf]
      %v7865 = vld [vmem:[%s11 + $0xf8] sm:$0xf]
      %v7866 = vld [vmem:[%s11 + $0xfc] sm:$0xf]
      %v7867 = vld [vmem:[%s12] sm:$0x1]
      %v7869 = vlaneseq
      %v7870 = vshrl.u32 %v7869, 7
      %v7871 = vsub.s32 0, %v7870
      %v7872 = vrot.slane %v7867, %v7871
      %v7938 = vunpack.c.l.b16 %v7803
      %v7939 = vunpack.c.l.b16 %v7804
      %v7940 = vunpack.c.l.b16 %v7805
      %v7941 = vunpack.c.l.b16 %v7806
      %v7942 = vunpack.c.l.b16 %v7807
      %v7943 = vunpack.c.l.b16 %v7808
      %v7944 = vunpack.c.l.b16 %v7809
      %v7945 = vunpack.c.l.b16 %v7810
      %v7946 = vunpack.c.l.b16 %v7811
      %v7947 = vunpack.c.l.b16 %v7812
      %v7948 = vunpack.c.l.b16 %v7813
      %v7949 = vunpack.c.l.b16 %v7814
      %v7950 = vunpack.c.l.b16 %v7815
      %v7951 = vunpack.c.l.b16 %v7816
      %v7952 = vunpack.c.l.b16 %v7817
      %v7953 = vunpack.c.l.b16 %v7818
      %v7954 = vunpack.c.l.b16 %v7819
      %v7955 = vunpack.c.l.b16 %v7820
      %v7956 = vunpack.c.l.b16 %v7821
      %v7957 = vunpack.c.l.b16 %v7822
      %v7958 = vunpack.c.l.b16 %v7823
      %v7959 = vunpack.c.l.b16 %v7824
      %v7960 = vunpack.c.l.b16 %v7825
      %v7961 = vunpack.c.l.b16 %v7826
      %v7962 = vunpack.c.l.b16 %v7827
      %v7963 = vunpack.c.l.b16 %v7828
      %v7964 = vunpack.c.l.b16 %v7829
      %v7965 = vunpack.c.l.b16 %v7830
      %v7966 = vunpack.c.l.b16 %v7831
      %v7967 = vunpack.c.l.b16 %v7832
      %v7968 = vunpack.c.l.b16 %v7833
      %v7969 = vunpack.c.l.b16 %v7834
      %v7970 = vunpack.c.l.b16 %v7835
      %v7971 = vunpack.c.l.b16 %v7836
      %v7972 = vunpack.c.l.b16 %v7837
      %v7973 = vunpack.c.l.b16 %v7838
      %v7974 = vunpack.c.l.b16 %v7839
      %v7975 = vunpack.c.l.b16 %v7840
      %v7976 = vunpack.c.l.b16 %v7841
      %v7977 = vunpack.c.l.b16 %v7842
      %v7978 = vunpack.c.l.b16 %v7843
      %v7979 = vunpack.c.l.b16 %v7844
      %v7980 = vunpack.c.l.b16 %v7845
      %v7981 = vunpack.c.l.b16 %v7846
      %v7982 = vunpack.c.l.b16 %v7847
      %v7983 = vunpack.c.l.b16 %v7848
      %v7984 = vunpack.c.l.b16 %v7849
      %v7985 = vunpack.c.l.b16 %v7850
      %v7986 = vunpack.c.l.b16 %v7851
      %v7987 = vunpack.c.l.b16 %v7852
      %v7988 = vunpack.c.l.b16 %v7853
      %v7989 = vunpack.c.l.b16 %v7854
      %v7990 = vunpack.c.l.b16 %v7855
      %v7991 = vunpack.c.l.b16 %v7856
      %v7992 = vunpack.c.l.b16 %v7857
      %v7993 = vunpack.c.l.b16 %v7858
      %v7994 = vunpack.c.l.b16 %v7859
      %v7995 = vunpack.c.l.b16 %v7860
      %v7996 = vunpack.c.l.b16 %v7861
      %v7997 = vunpack.c.l.b16 %v7862
      %v7998 = vunpack.c.l.b16 %v7863
      %v7999 = vunpack.c.l.b16 %v7864
      %v8000 = vunpack.c.l.b16 %v7865
      %v8001 = vunpack.c.l.b16 %v7866
      %v8002 = vpack.c.b16 %v7939, %v7938
      %v8003 = vpack.c.b16 %v7941, %v7940
      %v8004 = vpack.c.b16 %v7943, %v7942
      %v8005 = vpack.c.b16 %v7945, %v7944
      %v8006 = vpack.c.b16 %v7947, %v7946
      %v8007 = vpack.c.b16 %v7949, %v7948
      %v8008 = vpack.c.b16 %v7951, %v7950
      %v8009 = vpack.c.b16 %v7953, %v7952
      %v8010 = vpack.c.b16 %v7955, %v7954
      %v8011 = vpack.c.b16 %v7957, %v7956
      %v8012 = vpack.c.b16 %v7959, %v7958
      %v8013 = vpack.c.b16 %v7961, %v7960
      %v8014 = vpack.c.b16 %v7963, %v7962
      %v8015 = vpack.c.b16 %v7965, %v7964
      %v8016 = vpack.c.b16 %v7967, %v7966
      %v8017 = vpack.c.b16 %v7969, %v7968
      %v8018 = vpack.c.b16 %v7971, %v7970
      %v8019 = vpack.c.b16 %v7973, %v7972
      %v8020 = vpack.c.b16 %v7975, %v7974
      %v8021 = vpack.c.b16 %v7977, %v7976
      %v8022 = vpack.c.b16 %v7979, %v7978
      %v8023 = vpack.c.b16 %v7981, %v7980
      %v8024 = vpack.c.b16 %v7983, %v7982
      %v8025 = vpack.c.b16 %v7985, %v7984
      %v8026 = vpack.c.b16 %v7987, %v7986
      %v8027 = vpack.c.b16 %v7989, %v7988
      %v8028 = vpack.c.b16 %v7991, %v7990
      %v8029 = vpack.c.b16 %v7993, %v7992
      %v8030 = vpack.c.b16 %v7995, %v7994
      %v8031 = vpack.c.b16 %v7997, %v7996
      %v8032 = vpack.c.b16 %v7999, %v7998
      %v8033 = vpack.c.b16 %v8001, %v8000
      %8066 = vmatprep.subr.bf16.mxu0 0
      %8067 = vmatpush1.bf16.msra.mxu0 %v8002
      %8068 = vmatprep.subr.bf16.mxu0 0
      %8069 = vmatpush1.bf16.msra.mxu0 %v8003
      %8070 = vmatprep.subr.bf16.mxu0 0
      %8071 = vmatpush1.bf16.msra.mxu0 %v8004
      %8072 = vmatprep.subr.bf16.mxu0 0
      %8073 = vmatpush1.bf16.msra.mxu0 %v8005
      %8074 = vmatprep.subr.bf16.mxu0 0
      %8075 = vmatpush1.bf16.msra.mxu0 %v8006
      %8076 = vmatprep.subr.bf16.mxu0 0
      %8077 = vmatpush1.bf16.msra.mxu0 %v8007
      %8078 = vmatprep.subr.bf16.mxu0 0
      %8079 = vmatpush1.bf16.msra.mxu0 %v8008
      %8080 = vmatprep.subr.bf16.mxu0 0
      %8081 = vmatpush1.bf16.msra.mxu0 %v8009
      %8082 = vmatprep.subr.bf16.mxu0 0
      %8083 = vmatpush1.bf16.msra.mxu0 %v8010
      %8084 = vmatprep.subr.bf16.mxu0 0
      %8085 = vmatpush1.bf16.msra.mxu0 %v8011
      %8086 = vmatprep.subr.bf16.mxu0 0
      %8087 = vmatpush1.bf16.msra.mxu0 %v8012
      %8088 = vmatprep.subr.bf16.mxu0 0
      %8089 = vmatpush1.bf16.msra.mxu0 %v8013
      %8090 = vmatprep.subr.bf16.mxu0 0
      %8091 = vmatpush1.bf16.msra.mxu0 %v8014
      %8092 = vmatprep.subr.bf16.mxu0 0
      %8093 = vmatpush1.bf16.msra.mxu0 %v8015
      %8094 = vmatprep.subr.bf16.mxu0 0
      %8095 = vmatpush1.bf16.msra.mxu0 %v8016
      %8096 = vmatprep.subr.bf16.mxu0 0
      %8097 = vmatpush1.bf16.msra.mxu0 %v8017
      %8098 = vmatprep.mubr.bf16.mxu0 %v7740
      %8099 = vmatmul.mubr.bf16.gmra.mrb[0].mxu0 %v7739
      %v8100 = vpop.f32.mrb[0].mxu0
      %v8101 = vadd.f32 %v7872, %v8100
      %v8102 = vpop.f32.mrb[0].mxu0
      %v8103 = vpop.f32.mrb[0].mxu0
      %v8104 = vadd.f32 %v7872, %v8103
      %v8105 = vpop.f32.mrb[0].mxu0
      %8106 = vmatprep.mubr.bf16.mxu0 %v7744
      %8107 = vmatmul.mubr.bf16.gmra.mrb[0].mxu0 %v7743
      %v8108 = vpop.f32.mrb[0].mxu0
      %v8109 = vadd.f32 %v7872, %v8108
      %v8110 = vpop.f32.mrb[0].mxu0
      %v8111 = vpop.f32.mrb[0].mxu0
      %v8112 = vadd.f32 %v7872, %v8111
      %v8113 = vpop.f32.mrb[0].mxu0
      %8114 = vmatprep.mubr.bf16.mxu0 %v7748
      %8115 = vmatmul.mubr.bf16.gmra.mrb[0].mxu0 %v7747
      %v8116 = vpop.f32.mrb[0].mxu0
      %v8117 = vadd.f32 %v7872, %v8116
      %v8118 = vpop.f32.mrb[0].mxu0
      %v8119 = vpop.f32.mrb[0].mxu0
      %v8120 = vadd.f32 %v7872, %v8119
      %v8121 = vpop.f32.mrb[0].mxu0
      %8122 = vmatprep.mubr.bf16.mxu0 %v7752
      %8123 = vmatmul.mubr.bf16.gmra.mrb[0].mxu0 %v7751
      %v8124 = vpop.f32.mrb[0].mxu0
      %v8125 = vadd.f32 %v7872, %v8124
      %v8126 = vpop.f32.mrb[0].mxu0
      %v8127 = vpop.f32.mrb[0].mxu0
      %v8128 = vadd.f32 %v7872, %v8127
      %v8129 = vpop.f32.mrb[0].mxu0
      %8130 = vmatprep.mubr.bf16.mxu0 %v7756
      %8131 = vmatmul.mubr.bf16.gmra.mrb[0].mxu0 %v7755
      %v8132 = vpop.f32.mrb[0].mxu0
      %v8133 = vadd.f32 %v7872, %v8132
      %v8134 = vpop.f32.mrb[0].mxu0
      %v8135 = vpop.f32.mrb[0].mxu0
      %v8136 = vadd.f32 %v7872, %v8135
      %v8137 = vpop.f32.mrb[0].mxu0
      %8138 = vmatprep.mubr.bf16.mxu0 %v7760
      %8139 = vmatmul.mubr.bf16.gmra.mrb[0].mxu0 %v7759
      %v8140 = vpop.f32.mrb[0].mxu0
      %v8141 = vadd.f32 %v7872, %v8140
      %v8142 = vpop.f32.mrb[0].mxu0
      %v8143 = vpop.f32.mrb[0].mxu0
      %v8144 = vadd.f32 %v7872, %v8143
      %v8145 = vpop.f32.mrb[0].mxu0
      %8146 = vmatprep.mubr.bf16.mxu0 %v7764
      %8147 = vmatmul.mubr.bf16.gmra.mrb[0].mxu0 %v7763
      %v8148 = vpop.f32.mrb[0].mxu0
      %v8149 = vadd.f32 %v7872, %v8148
      %v8150 = vpop.f32.mrb[0].mxu0
      %v8151 = vpop.f32.mrb[0].mxu0
      %v8152 = vadd.f32 %v7872, %v8151
      %v8153 = vpop.f32.mrb[0].mxu0
      %8154 = vmatprep.mubr.bf16.mxu0 %v7768
      %8155 = vmatmul.mubr.bf16.gmra.mrb[0].mxu0 %v7767
      %v8156 = vpop.f32.mrb[0].mxu0
      %v8157 = vadd.f32 %v7872, %v8156
      %v8158 = vpop.f32.mrb[0].mxu0
      %v8159 = vpop.f32.mrb[0].mxu0
      %v8160 = vadd.f32 %v7872, %v8159
      %v8161 = vpop.f32.mrb[0].mxu0
      %8162 = vmatprep.mubr.bf16.mxu0 %v7772
      %8163 = vmatmul.mubr.bf16.gmra.mrb[0].mxu0 %v7771
      %v8164 = vpop.f32.mrb[0].mxu0
      %v8165 = vadd.f32 %v7872, %v8164
      %v8166 = vpop.f32.mrb[0].mxu0
      %v8167 = vpop.f32.mrb[0].mxu0
      %v8168 = vadd.f32 %v7872, %v8167
      %v8169 = vpop.f32.mrb[0].mxu0
      %8170 = vmatprep.mubr.bf16.mxu0 %v7776
      %8171 = vmatmul.mubr.bf16.gmra.mrb[0].mxu0 %v7775
      %v8172 = vpop.f32.mrb[0].mxu0
      %v8173 = vadd.f32 %v7872, %v8172
      %v8174 = vpop.f32.mrb[0].mxu0
      %v8175 = vpop.f32.mrb[0].mxu0
      %v8176 = vadd.f32 %v7872, %v8175
      %v8177 = vpop.f32.mrb[0].mxu0
      %8178 = vmatprep.mubr.bf16.mxu0 %v7780
      %8179 = vmatmul.mubr.bf16.gmra.mrb[0].mxu0 %v7779
      %v8180 = vpop.f32.mrb[0].mxu0
      %v8181 = vadd.f32 %v7872, %v8180
      %v8182 = vpop.f32.mrb[0].mxu0
      %v8183 = vpop.f32.mrb[0].mxu0
      %v8184 = vadd.f32 %v7872, %v8183
      %v8185 = vpop.f32.mrb[0].mxu0
      %8186 = vmatprep.mubr.bf16.mxu0 %v7784
      %8187 = vmatmul.mubr.bf16.gmra.mrb[0].mxu0 %v7783
      %v8188 = vpop.f32.mrb[0].mxu0
      %v8189 = vadd.f32 %v7872, %v8188
      %v8190 = vpop.f32.mrb[0].mxu0
      %v8191 = vpop.f32.mrb[0].mxu0
      %v8192 = vadd.f32 %v7872, %v8191
      %v8193 = vpop.f32.mrb[0].mxu0
      %8194 = vmatprep.mubr.bf16.mxu0 %v7788
      %8195 = vmatmul.mubr.bf16.gmra.mrb[0].mxu0 %v7787
      %v8196 = vpop.f32.mrb[0].mxu0
      %v8197 = vadd.f32 %v7872, %v8196
      %v8198 = vpop.f32.mrb[0].mxu0
      %v8199 = vpop.f32.mrb[0].mxu0
      %v8200 = vadd.f32 %v7872, %v8199
      %v8201 = vpop.f32.mrb[0].mxu0
      %8202 = vmatprep.mubr.bf16.mxu0 %v7792
      %8203 = vmatmul.mubr.bf16.gmra.mrb[0].mxu0 %v7791
      %v8204 = vpop.f32.mrb[0].mxu0
      %v8205 = vadd.f32 %v7872, %v8204
      %v8206 = vpop.f32.mrb[0].mxu0
      %v8207 = vpop.f32.mrb[0].mxu0
      %v8208 = vadd.f32 %v7872, %v8207
      %v8209 = vpop.f32.mrb[0].mxu0
      %8210 = vmatprep.mubr.bf16.mxu0 %v7796
      %8211 = vmatmul.mubr.bf16.gmra.mrb[0].mxu0 %v7795
      %v8212 = vpop.f32.mrb[0].mxu0
      %v8213 = vadd.f32 %v7872, %v8212
      %v8214 = vpop.f32.mrb[0].mxu0
      %v8215 = vpop.f32.mrb[0].mxu0
      %v8216 = vadd.f32 %v7872, %v8215
      %v8217 = vpop.f32.mrb[0].mxu0
      %8218 = vmatprep.mubr.bf16.mxu0 %v7800
      %8219 = vmatmul.mubr.bf16.gmra.mrb[0].mxu0 %v7799
      %v8220 = vpop.f32.mrb[0].mxu0
      %v8221 = vadd.f32 %v7872, %v8220
      %v8222 = vpop.f32.mrb[0].mxu0
      %v8223 = vpop.f32.mrb[0].mxu0
      %v8224 = vadd.f32 %v7872, %v8223
      %v8225 = vpop.f32.mrb[0].mxu0
      %8226 = vdwg.mxu0
      %8227 = vmatprep.subr.bf16.mxu0 0
      %8228 = vmatpush1.bf16.msra.mxu0 %v8018
      %8229 = vmatprep.subr.bf16.mxu0 0
      %8230 = vmatpush1.bf16.msra.mxu0 %v8019
      %8231 = vmatprep.subr.bf16.mxu0 0
      %8232 = vmatpush1.bf16.msra.mxu0 %v8020
      %8233 = vmatprep.subr.bf16.mxu0 0
      %8234 = vmatpush1.bf16.msra.mxu0 %v8021
      %8235 = vmatprep.subr.bf16.mxu0 0
      %8236 = vmatpush1.bf16.msra.mxu0 %v8022
      %8237 = vmatprep.subr.bf16.mxu0 0
      %8238 = vmatpush1.bf16.msra.mxu0 %v8023
      %8239 = vmatprep.subr.bf16.mxu0 0
      %8240 = vmatpush1.bf16.msra.mxu0 %v8024
      %8241 = vmatprep.subr.bf16.mxu0 0
      %8242 = vmatpush1.bf16.msra.mxu0 %v8025
      %8243 = vmatprep.subr.bf16.mxu0 0
      %8244 = vmatpush1.bf16.msra.mxu0 %v8026
      %8245 = vmatprep.subr.bf16.mxu0 0
      %8246 = vmatpush1.bf16.msra.mxu0 %v8027
      %8247 = vmatprep.subr.bf16.mxu0 0
      %8248 = vmatpush1.bf16.msra.mxu0 %v8028
      %8249 = vmatprep.subr.bf16.mxu0 0
      %8250 = vmatpush1.bf16.msra.mxu0 %v8029
      %8251 = vmatprep.subr.bf16.mxu0 0
      %8252 = vmatpush1.bf16.msra.mxu0 %v8030
      %8253 = vmatprep.subr.bf16.mxu0 0
      %8254 = vmatpush1.bf16.msra.mxu0 %v8031
      %8255 = vmatprep.subr.bf16.mxu0 0
      %8256 = vmatpush1.bf16.msra.mxu0 %v8032
      %8257 = vmatprep.subr.bf16.mxu0 0
      %8258 = vmatpush1.bf16.msra.mxu0 %v8033
      %8259 = vmatprep.mubr.bf16.mxu0 %v7742
      %8260 = vmatmul.mubr.bf16.gmra.mrb[0].mxu0 %v7741
      %v8261 = vpop.f32.mrb[0].mxu0
      %v8262 = vadd.f32 %v8101, %v8261
      %v8263 = vpop.f32.mrb[0].mxu0
      %v8264 = vpop.f32.mrb[0].mxu0
      %v8265 = vadd.f32 %v8104, %v8264
      %v8266 = vpop.f32.mrb[0].mxu0
      %8267 = vmatprep.mubr.bf16.mxu0 %v7746
      %8268 = vmatmul.mubr.bf16.gmra.mrb[0].mxu0 %v7745
      %v8269 = vpop.f32.mrb[0].mxu0
      %v8270 = vadd.f32 %v8109, %v8269
      %v8271 = vpop.f32.mrb[0].mxu0
      %v8272 = vpop.f32.mrb[0].mxu0
      %v8273 = vadd.f32 %v8112, %v8272
      %v8274 = vpop.f32.mrb[0].mxu0
      %8275 = vmatprep.mubr.bf16.mxu0 %v7750
      %8276 = vmatmul.mubr.bf16.gmra.mrb[0].mxu0 %v7749
      %v8277 = vpop.f32.mrb[0].mxu0
      %v8278 = vadd.f32 %v8117, %v8277
      %v8279 = vpop.f32.mrb[0].mxu0
      %v8280 = vpop.f32.mrb[0].mxu0
      %v8281 = vadd.f32 %v8120, %v8280
      %v8282 = vpop.f32.mrb[0].mxu0
      %8283 = vmatprep.mubr.bf16.mxu0 %v7754
      %8284 = vmatmul.mubr.bf16.gmra.mrb[0].mxu0 %v7753
      %v8285 = vpop.f32.mrb[0].mxu0
      %v8286 = vadd.f32 %v8125, %v8285
      %v8287 = vpop.f32.mrb[0].mxu0
      %v8288 = vpop.f32.mrb[0].mxu0
      %v8289 = vadd.f32 %v8128, %v8288
      %v8290 = vpop.f32.mrb[0].mxu0
      %8291 = vmatprep.mubr.bf16.mxu0 %v7758
      %8292 = vmatmul.mubr.bf16.gmra.mrb[0].mxu0 %v7757
      %v8293 = vpop.f32.mrb[0].mxu0
      %v8294 = vadd.f32 %v8133, %v8293
      %v8295 = vpop.f32.mrb[0].mxu0
      %v8296 = vpop.f32.mrb[0].mxu0
      %v8297 = vadd.f32 %v8136, %v8296
      %v8298 = vpop.f32.mrb[0].mxu0
      %8299 = vmatprep.mubr.bf16.mxu0 %v7762
      %8300 = vmatmul.mubr.bf16.gmra.mrb[0].mxu0 %v7761
      %v8301 = vpop.f32.mrb[0].mxu0
      %v8302 = vadd.f32 %v8141, %v8301
      %v8303 = vpop.f32.mrb[0].mxu0
      %v8304 = vpop.f32.mrb[0].mxu0
      %v8305 = vadd.f32 %v8144, %v8304
      %v8306 = vpop.f32.mrb[0].mxu0
      %8307 = vmatprep.mubr.bf16.mxu0 %v7766
      %8308 = vmatmul.mubr.bf16.gmra.mrb[0].mxu0 %v7765
      %v8309 = vpop.f32.mrb[0].mxu0
      %v8310 = vadd.f32 %v8149, %v8309
      %v8311 = vpop.f32.mrb[0].mxu0
      %v8312 = vpop.f32.mrb[0].mxu0
      %v8313 = vadd.f32 %v8152, %v8312
      %v8314 = vpop.f32.mrb[0].mxu0
      %8315 = vmatprep.mubr.bf16.mxu0 %v7770
      %8316 = vmatmul.mubr.bf16.gmra.mrb[0].mxu0 %v7769
      %v8317 = vpop.f32.mrb[0].mxu0
      %v8318 = vadd.f32 %v8157, %v8317
      %v8319 = vpop.f32.mrb[0].mxu0
      %v8320 = vpop.f32.mrb[0].mxu0
      %v8321 = vadd.f32 %v8160, %v8320
      %v8322 = vpop.f32.mrb[0].mxu0
      %8323 = vmatprep.mubr.bf16.mxu0 %v7774
      %8324 = vmatmul.mubr.bf16.gmra.mrb[0].mxu0 %v7773
      %v8325 = vpop.f32.mrb[0].mxu0
      %v8326 = vadd.f32 %v8165, %v8325
      %v8327 = vpop.f32.mrb[0].mxu0
      %v8328 = vpop.f32.mrb[0].mxu0
      %v8329 = vadd.f32 %v8168, %v8328
      %v8330 = vpop.f32.mrb[0].mxu0
      %8331 = vmatprep.mubr.bf16.mxu0 %v7778
      %8332 = vmatmul.mubr.bf16.gmra.mrb[0].mxu0 %v7777
      %v8333 = vpop.f32.mrb[0].mxu0
      %v8334 = vadd.f32 %v8173, %v8333
      %v8335 = vpop.f32.mrb[0].mxu0
      %v8336 = vpop.f32.mrb[0].mxu0
      %v8337 = vadd.f32 %v8176, %v8336
      %v8338 = vpop.f32.mrb[0].mxu0
      %8339 = vmatprep.mubr.bf16.mxu0 %v7782
      %8340 = vmatmul.mubr.bf16.gmra.mrb[0].mxu0 %v7781
      %v8341 = vpop.f32.mrb[0].mxu0
      %v8342 = vadd.f32 %v8181, %v8341
      %v8343 = vpop.f32.mrb[0].mxu0
      %v8344 = vpop.f32.mrb[0].mxu0
      %v8345 = vadd.f32 %v8184, %v8344
      %v8346 = vpop.f32.mrb[0].mxu0
      %8347 = vmatprep.mubr.bf16.mxu0 %v7786
      %8348 = vmatmul.mubr.bf16.gmra.mrb[0].mxu0 %v7785
      %v8349 = vpop.f32.mrb[0].mxu0
      %v8350 = vadd.f32 %v8189, %v8349
      %v8351 = vpop.f32.mrb[0].mxu0
      %v8352 = vpop.f32.mrb[0].mxu0
      %v8353 = vadd.f32 %v8192, %v8352
      %v8354 = vpop.f32.mrb[0].mxu0
      %8355 = vmatprep.mubr.bf16.mxu0 %v7790
      %8356 = vmatmul.mubr.bf16.gmra.mrb[0].mxu0 %v7789
      %v8357 = vpop.f32.mrb[0].mxu0
      %v8358 = vadd.f32 %v8197, %v8357
      %v8359 = vpop.f32.mrb[0].mxu0
      %v8360 = vpop.f32.mrb[0].mxu0
      %v8361 = vadd.f32 %v8200, %v8360
      %v8362 = vpop.f32.mrb[0].mxu0
      %8363 = vmatprep.mubr.bf16.mxu0 %v7794
      %8364 = vmatmul.mubr.bf16.gmra.mrb[0].mxu0 %v7793
      %v8365 = vpop.f32.mrb[0].mxu0
      %v8366 = vadd.f32 %v8205, %v8365
      %v8367 = vpop.f32.mrb[0].mxu0
      %v8368 = vpop.f32.mrb[0].mxu0
      %v8369 = vadd.f32 %v8208, %v8368
      %v8370 = vpop.f32.mrb[0].mxu0
      %8371 = vmatprep.mubr.bf16.mxu0 %v7798
      %8372 = vmatmul.mubr.bf16.gmra.mrb[0].mxu0 %v7797
      %v8373 = vpop.f32.mrb[0].mxu0
      %v8374 = vadd.f32 %v8213, %v8373
      %v8375 = vpop.f32.mrb[0].mxu0
      %v8376 = vpop.f32.mrb[0].mxu0
      %v8377 = vadd.f32 %v8216, %v8376
      %v8378 = vpop.f32.mrb[0].mxu0
      %8379 = vmatprep.mubr.bf16.mxu0 %v7802
      %8380 = vmatmul.mubr.bf16.gmra.mrb[0].mxu0 %v7801
      %v8381 = vpop.f32.mrb[0].mxu0
      %v8382 = vadd.f32 %v8221, %v8381
      %v8383 = vpop.f32.mrb[0].mxu0
      %v8384 = vpop.f32.mrb[0].mxu0
      %v8385 = vadd.f32 %v8224, %v8384
      %v8386 = vpop.f32.mrb[0].mxu0
      %8387 = vdwg.mxu0
      %v8388 = vadd.f32 %v3205, %v8262
      %v8389 = vadd.f32 %v3206, %v8265
      %v8390 = vadd.f32 %v3207, %v8270
      %v8391 = vadd.f32 %v3208, %v8273
      %v8392 = vadd.f32 %v3209, %v8278
      %v8393 = vadd.f32 %v3210, %v8281
      %v8394 = vadd.f32 %v3211, %v8286
      %v8395 = vadd.f32 %v3212, %v8289
      %v8396 = vadd.f32 %v3213, %v8294
      %v8397 = vadd.f32 %v3214, %v8297
      %v8398 = vadd.f32 %v3215, %v8302
      %v8399 = vadd.f32 %v3216, %v8305
      %v8400 = vadd.f32 %v3217, %v8310
      %v8401 = vadd.f32 %v3218, %v8313
      %v8402 = vadd.f32 %v3219, %v8318
      %v8403 = vadd.f32 %v3220, %v8321
      %v8404 = vadd.f32 %v3221, %v8326
      %v8405 = vadd.f32 %v3222, %v8329
      %v8406 = vadd.f32 %v3223, %v8334
      %v8407 = vadd.f32 %v3224, %v8337
      %v8408 = vadd.f32 %v3225, %v8342
      %v8409 = vadd.f32 %v3226, %v8345
      %v8410 = vadd.f32 %v3227, %v8350
      %v8411 = vadd.f32 %v3228, %v8353
      %v8412 = vadd.f32 %v3229, %v8358
      %v8413 = vadd.f32 %v3230, %v8361
      %v8414 = vadd.f32 %v3231, %v8366
      %v8415 = vadd.f32 %v3232, %v8369
      %v8416 = vadd.f32 %v3233, %v8374
      %v8417 = vadd.f32 %v3234, %v8377
      %v8418 = vadd.f32 %v3235, %v8382
      %v8419 = vadd.f32 %v3236, %v8385
      %8420 = vst [vmem:[%s447] sm:$0xff] %v8388
      %8421 = vst [vmem:[%s447 + $0x8] sm:$0xff] %v8389
      %8422 = vst [vmem:[%s447 + $0x10] sm:$0xff] %v8390
      %8423 = vst [vmem:[%s447 + $0x18] sm:$0xff] %v8391
      %8424 = vst [vmem:[%s447 + $0x20] sm:$0xff] %v8392
      %8425 = vst [vmem:[%s447 + $0x28] sm:$0xff] %v8393
      %8426 = vst [vmem:[%s447 + $0x30] sm:$0xff] %v8394
      %8427 = vst [vmem:[%s447 + $0x38] sm:$0xff] %v8395
      %8428 = vst [vmem:[%s447 + $0x40] sm:$0xff] %v8396
      %8429 = vst [vmem:[%s447 + $0x48] sm:$0xff] %v8397
      %8430 = vst [vmem:[%s447 + $0x50] sm:$0xff] %v8398
      %8431 = vst [vmem:[%s447 + $0x58] sm:$0xff] %v8399
      %8432 = vst [vmem:[%s447 + $0x60] sm:$0xff] %v8400
      %8433 = vst [vmem:[%s447 + $0x68] sm:$0xff] %v8401
      %8434 = vst [vmem:[%s447 + $0x70] sm:$0xff] %v8402
      %8435 = vst [vmem:[%s447 + $0x78] sm:$0xff] %v8403
      %8436 = vst [vmem:[%s447 + $0x80] sm:$0xff] %v8404
      %8437 = vst [vmem:[%s447 + $0x88] sm:$0xff] %v8405
      %8438 = vst [vmem:[%s447 + $0x90] sm:$0xff] %v8406
      %8439 = vst [vmem:[%s447 + $0x98] sm:$0xff] %v8407
      %8440 = vst [vmem:[%s447 + $0xa0] sm:$0xff] %v8408
      %8441 = vst [vmem:[%s447 + $0xa8] sm:$0xff] %v8409
      %8442 = vst [vmem:[%s447 + $0xb0] sm:$0xff] %v8410
      %8443 = vst [vmem:[%s447 + $0xb8] sm:$0xff] %v8411
      %8444 = vst [vmem:[%s447 + $0xc0] sm:$0xff] %v8412
      %8445 = vst [vmem:[%s447 + $0xc8] sm:$0xff] %v8413
      %8446 = vst [vmem:[%s447 + $0xd0] sm:$0xff] %v8414
      %8447 = vst [vmem:[%s447 + $0xd8] sm:$0xff] %v8415
      %8448 = vst [vmem:[%s447 + $0xe0] sm:$0xff] %v8416
      %8449 = vst [vmem:[%s447 + $0xe8] sm:$0xff] %v8417
      %8450 = vst [vmem:[%s447 + $0xf0] sm:$0xff] %v8418
      %8451 = vst [vmem:[%s447 + $0xf8] sm:$0xff] %v8419
      %s8452 = smul.u32 2, %s24
      %p8453 = scmp.lt.s32.totalorder %s8452, 3
      %s8454 = scalar_select %p8453, %s8452, 3
      %s8455 = smul.addr %s8454, 16
      %s8456 = smul.addr %s8455, 8
      %s8457 = scalar_lea.vmem %s13, %s8456
      // Predicated region
      $region80: #{vision_transformer_forward.5} parent=71 // pred_check
        %p8458 = pneg %p320
      $region81: #{vision_transformer_forward.5} parent=71 // pred_check_branch
        %8460 = sbr.rel (%p8458) target = $region83
      $region82: #{vision_transformer_forward.5} parent=71 // pred_region
        %s8461 = smul.u32 2, %s24
      $region83: #{vision_transformer_forward.5} parent=71 // pred_fallthru
        _
    $region72: #{vision_transformer_forward.5} parent=5 // pred_fallthru
      _
    %p8462 = scmp.le.s32.totalorder 2, %s19
    // Predicated region
    $region84: #{vision_transformer_forward.5} parent=5 // pred_check
      %p8463 = pneg %p8462
    $region85: #{vision_transformer_forward.5} parent=5 // pred_check_branch
      %8465 = sbr.rel (%p8463) target = $region87
    $region86: #{vision_transformer_forward.5} parent=5 // pred_region
      %s8466 = ssub.s32 %s19, 2
      // Predicated region
      $region88: #{vision_transformer_forward.5} parent=86 // pred_check
        %p8467 = pneg %p326
      $region89: #{vision_transformer_forward.5} parent=86 // pred_check_branch
        %8469 = sbr.rel (%p8467) target = $region91
      $region90: #{vision_transformer_forward.5} parent=86 // pred_region
        %s8470 = smul.u32 2, %s25
        %p8471 = scmp.lt.s32.totalorder %s8470, 3
        %s8472 = scalar_select %p8471, %s8470, 3
        %s8473 = smul.addr %s8472, 16
        %s8474 = smul.addr %s8473, 8
        %s8475 = scalar_lea.vmem %s13, %s8474
      $region91: #{vision_transformer_forward.5} parent=86 // pred_fallthru
        _
    $region87: #{vision_transformer_forward.5} parent=5 // pred_fallthru
      _
  $region6: #{vision_transformer_forward.5} parent=0 // loop_footer
    %s23 = sadd.s32 1, %s19
  $region7: #{vision_transformer_forward.5} parent=0 // loop_footer_branch
    %18 = sbr.rel target = $region3
  $region8: #{vision_transformer_forward.5} parent=0 // loop_exit
    _

</llo_original>
